<compile_context>
chip_gen: v5e
topology: v5e:2x2
jax: 0.10.0
libtpu: 0.0.40
codegen_flags: <defaults>
</compile_context>

<pallas_src>
import functools

import jax
import jax.numpy as jnp
from jax.experimental import pallas as pl
from jax.experimental.pallas import tpu as pltpu


def _round_up(v, m):
    return (v + m - 1) // m * m


# --------------------------------------------------------------------------
# Kernel 1: M-tiled GEMM with fused bias + activation (conv1-as-GEMM).
# --------------------------------------------------------------------------


def _gemm_bias_act_kernel(x_ref, w_ref, b_ref, o_ref, *, act):
    y = jnp.dot(x_ref[...], w_ref[...], preferred_element_type=jnp.float32)
    y = y + b_ref[...]
    if act == "leaky_relu":
        y = jnp.where(y > 0, y, 0.01 * y)     # nn.LeakyReLU default slope
    elif act == "relu":
        y = jnp.maximum(y, 0.0)
    o_ref[...] = y.astype(o_ref.dtype)


def gemm_bias_act(x, w, b, act, out_dtype=jnp.bfloat16, tm=512):
    """x: [M, K] bf16, w: [K, N] bf16, b: [1, N] f32 -> [M, N] out_dtype.

    M is tiled on a "parallel" grid axis (double-buffered pipelining, megacore
    on v7x, bounded VMEM footprint on every generation).  K / N stay whole
    (they are small for VoxNet: K <= 128 here, N = 32).
    """
    m, k = x.shape
    n = w.shape[1]
    tm = min(tm, _round_up(m, 8))
    m_pad = _round_up(m, tm)
    if m_pad != m:
        x = jnp.pad(x, ((0, m_pad - m), (0, 0)))
    flops = 2 * m_pad * k * n
    bytes_accessed = 2 * (m_pad * k + k * n + m_pad * n) + 4 * n
    out = pl.pallas_call(
        functools.partial(_gemm_bias_act_kernel, act=act),
        out_shape=jax.ShapeDtypeStruct((m_pad, n), out_dtype),
        grid=(m_pad // tm,),
        in_specs=[
            pl.BlockSpec((tm, k), lambda i: (i, 0)),
            pl.BlockSpec((k, n), lambda i: (0, 0)),
            pl.BlockSpec((1, n), lambda i: (0, 0)),
        ],
        out_specs=pl.BlockSpec((tm, n), lambda i: (i, 0)),
        compiler_params=pltpu.CompilerParams(
            dimension_semantics=("parallel",)),
        cost_estimate=pl.CostEstimate(
            flops=flops, transcendentals=0, bytes_accessed=bytes_accessed),
    )(x, w, b)
    return out[:m]


# --------------------------------------------------------------------------
# Kernel 2: fused Conv3d + BN(eval) + LeakyReLU with in-kernel patch
# extraction (used for conv2 [stride 1] and conv3 [stride 2]).
# --------------------------------------------------------------------------


def _conv3d_kernel(x_ref, w_ref, b_ref, o_ref, *, k, stride, dims, cin, cout):
    do_, ho_, wo_ = dims
    m = do_ * ho_ * wo_
    acc = jnp.zeros((m, cout), jnp.float32)
    for dz in range(k):
        for dy in range(k):
            taps = []
            for dx in range(k):
                if stride == 1:
                    p = x_ref[0, dz:dz + do_, dy:dy + ho_, dx:dx + wo_, :]
                else:
                    # stride == 2: input block is W-paired [1,Dp,Hp,Wq,2*cin];
                    # D/H strides become leading-dim split + even-row select,
                    # the W stride becomes a static channel-phase slice.
                    c0 = (dx % 2) * cin
                    p = x_ref[0, dz:dz + 2 * do_, dy:dy + 2 * ho_,
                              dx // 2:dx // 2 + wo_, c0:c0 + cin]
                    p = p.reshape(do_, 2, 2 * ho_, wo_, cin)[:, 0]
                    p = p.reshape(do_, ho_, 2, wo_, cin)[:, :, 0]
                taps.append(p)
            cols = jnp.concatenate(taps, axis=-1).reshape(m, k * cin)
            acc = acc + jnp.dot(cols, w_ref[dz, dy],
                                preferred_element_type=jnp.float32)
    y = acc + b_ref[...]
    y = jnp.where(y > 0, y, 0.01 * y)            # LeakyReLU(0.01)
    o_ref[0] = y.reshape(do_, ho_, wo_, cout).astype(o_ref.dtype)


def conv3d_bn_lrelu(x, w, b, *, k, stride, padding):
    """x: [N, D, H, W, C] bf16 (channels-last); w: [k, k, k*C, C_out] bf16;
    b: [1, C_out] f32 (conv bias with eval-BN folded in).  Returns NDHWC bf16."""
    n, d, h, wd, c = x.shape
    cout = w.shape[-1]
    if padding:
        x = jnp.pad(x, ((0, 0), (padding, padding), (padding, padding),
                        (padding, padding), (0, 0)))
        d, h, wd = d + 2 * padding, h + 2 * padding, wd + 2 * padding
    do_ = (d - k) // stride + 1
    ho_ = (h - k) // stride + 1
    wo_ = (wd - k) // stride + 1

    if stride == 1:
        x_in = x
    else:
        # Pad D/H/W so the in-kernel unit-stride slice+reshape tricks stay in
        # bounds, then fold the W stride phase into the channel dim -- a free,
        # layout-preserving reshape for a channels-last array.
        d_t = max(d, 2 * do_ + 2)
        h_t = max(h, 2 * ho_ + 2)
        w_t = max(wd + (wd % 2), 2 * wo_ + 2)
        x = jnp.pad(x, ((0, 0), (0, d_t - d), (0, h_t - h),
                        (0, w_t - wd), (0, 0)))
        x_in = x.reshape(n, d_t, h_t, w_t // 2, 2 * c)

    in_block = (1,) + x_in.shape[1:]
    out_shape = (n, do_, ho_, wo_, cout)
    flops = 2 * n * do_ * ho_ * wo_ * (k ** 3) * c * cout
    bytes_accessed = 2 * (x_in.size + w.size + n * do_ * ho_ * wo_ * cout)
    return pl.pallas_call(
        functools.partial(_conv3d_kernel, k=k, stride=stride,
                          dims=(do_, ho_, wo_), cin=c, cout=cout),
        out_shape=jax.ShapeDtypeStruct(out_shape, jnp.bfloat16),
        grid=(n,),
        in_specs=[
            pl.BlockSpec(in_block, lambda i: (i, 0, 0, 0, 0)),
            pl.BlockSpec(w.shape, lambda i: (0, 0, 0, 0)),
            pl.BlockSpec(b.shape, lambda i: (0, 0)),
        ],
        out_specs=pl.BlockSpec((1, do_, ho_, wo_, cout),
                               lambda i: (i, 0, 0, 0, 0)),
        compiler_params=pltpu.CompilerParams(
            dimension_semantics=("parallel",)),
        cost_estimate=pl.CostEstimate(
            flops=flops, transcendentals=0, bytes_accessed=bytes_accessed),
    )(x_in, w, b)


# --------------------------------------------------------------------------
# Kernel 3: fused head (fc1 + ReLU + fc2) in a single pallas_call.
# --------------------------------------------------------------------------


def _head_kernel(x_ref, w1_ref, b1_ref, w2_ref, b2_ref, o_ref):
    h = jnp.dot(x_ref[...], w1_ref[...], preferred_element_type=jnp.float32)
    h = jnp.maximum(h + b1_ref[...], 0.0)
    y = jnp.dot(h.astype(jnp.bfloat16), w2_ref[...],
                preferred_element_type=jnp.float32)
    o_ref[...] = y + b2_ref[...]


def head_fc(x, w1, b1, w2, b2):
    n = x.shape[0]
    nc = w2.shape[1]
    vmem = pl.BlockSpec(memory_space=pltpu.MemorySpace.VMEM)
    return pl.pallas_call(
        _head_kernel,
        out_shape=jax.ShapeDtypeStruct((n, nc), jnp.float32),
        in_specs=[vmem] * 5,
        out_specs=vmem,
    )(x, w1, b1, w2, b2)


# ------------------------------- JAX glue ---------------------------------


def conv1_bn_lrelu(x, w, b, *, k=5, stride=2):
    """conv1 (C_in=1): host-side im2col (tiny) -> tiled fused GEMM kernel."""
    n, d, h, wd = x.shape
    do_ = (d - k) // stride + 1
    ho_ = (h - k) // stride + 1
    wo_ = (wd - k) // stride + 1
    taps = []
    for dz in range(k):
        for dy in range(k):
            for dx in range(k):
                taps.append(
                    x[:, dz:dz + stride * (do_ - 1) + 1:stride,
                      dy:dy + stride * (ho_ - 1) + 1:stride,
                      dx:dx + stride * (wo_ - 1) + 1:stride])
    cols = jnp.stack(taps, axis=-1)                       # [N,Do,Ho,Wo,k^3]
    kp = w.shape[0]                                        # K padded to 128
    cols = jnp.pad(cols, ((0, 0),) * 4 + ((0, kp - k ** 3),))
    cols = cols.reshape(n * do_ * ho_ * wo_, kp).astype(jnp.bfloat16)
    cout = w.shape[1]
    y = gemm_bias_act(cols, w, b, act="leaky_relu")
    return y.reshape(n, do_, ho_, wo_, cout)               # channels-last


def voxnet_forward(x_ncdhw, params):
    n = x_ncdhw.shape[0]
    # NCDHW with C == 1 -> NDHW (a free reshape); channels-last from here on.
    x = x_ncdhw.reshape((n,) + x_ncdhw.shape[2:])
    x = conv1_bn_lrelu(x, params["conv1"]["w"], params["conv1"]["b"])
    x = conv3d_bn_lrelu(x, params["conv2"]["w"], params["conv2"]["b"],
                        k=3, stride=1, padding=0)
    x = conv3d_bn_lrelu(x, params["conv3"]["w"], params["conv3"]["b"],
                        k=3, stride=2, padding=1)
    # NDHWC flatten; PyTorch's NCDHW view(N,-1) order is absorbed into the
    # row permutation of fc1's weight (see make_fc1_params).
    x = x.reshape(n, -1)
    return head_fc(x, params["fc1"]["w"], params["fc1"]["b"],
                   params["fc2"]["w"], params["fc2"]["b"])


# --------------------------- parameter creation ----------------------------


_BN_EPS = 1e-5
_BN_SCALE = 1.0 / (1.0 + _BN_EPS) ** 0.5   # eval BN: gamma=1, mean=0, var=1


def _xavier_uniform(key, shape, fan_in, fan_out):
    bound = (6.0 / (fan_in + fan_out)) ** 0.5
    return jax.random.uniform(key, shape, jnp.float32, -bound, bound)


def _bias_uniform(key, shape, fan_in):
    bound = 1.0 / (fan_in ** 0.5)
    return jax.random.uniform(key, shape, jnp.float32, -bound, bound)


def make_conv1_params(key, c_out=32, k=5):
    kw, kb = jax.random.split(key)
    fan_in, fan_out = k ** 3, c_out * k ** 3
    w_pt = _xavier_uniform(kw, (c_out, 1, k, k, k), fan_in, fan_out)
    b = _bias_uniform(kb, (c_out,), fan_in)
    # [C_out, 1, kd, kh, kw] -> GEMM weight [k^3, C_out]; fold BN; pad K->128.
    w = w_pt.reshape(c_out, k ** 3).T * _BN_SCALE
    w = jnp.pad(w, ((0, 128 - k ** 3), (0, 0)))
    return {"w": w.astype(jnp.bfloat16),
            "b": (b * _BN_SCALE).reshape(1, c_out)}


def make_conv_params(key, c_in, c_out, k):
    kw, kb = jax.random.split(key)
    fan_in, fan_out = c_in * k ** 3, c_out * k ** 3
    w_pt = _xavier_uniform(kw, (c_out, c_in, k, k, k), fan_in, fan_out)
    b = _bias_uniform(kb, (c_out,), fan_in)
    # [C_out, C_in, kd, kh, kw] -> [kd, kh, kw*C_in, C_out] (matches the
    # (dx, c) patch order built in-kernel); fold eval-BN scale into weights.
    w = jnp.transpose(w_pt, (2, 3, 4, 1, 0)).reshape(k, k, k * c_in, c_out)
    return {"w": (w * _BN_SCALE).astype(jnp.bfloat16),
            "b": (b * _BN_SCALE).reshape(1, c_out)}


def make_fc1_params(key, conv_out_dims, c, d_out=64):
    d3, h3, w3 = conv_out_dims
    f = c * d3 * h3 * w3
    kw, kb = jax.random.split(key)
    w_pt = _xavier_uniform(kw, (d_out, f), f, d_out)       # PyTorch [64, F]
    b = _bias_uniform(kb, (d_out,), f)
    # Permute input features from PyTorch NCDHW flatten order (c, d, h, w)
    # to our channels-last flatten order (d, h, w, c).
    w = w_pt.reshape(d_out, c, d3, h3, w3).transpose(0, 2, 3, 4, 1)
    w = w.reshape(d_out, f).T                               # [F, 64]
    return {"w": w.astype(jnp.bfloat16), "b": b.reshape(1, d_out)}


def make_fc2_params(key, d_in, num_classes):
    kw, kb = jax.random.split(key)
    w = _xavier_uniform(kw, (num_classes, d_in), d_in, num_classes).T
    b = _bias_uniform(kb, (num_classes,), d_in)
    return {"w": w.astype(jnp.bfloat16), "b": b.reshape(1, num_classes)}


def make_voxnet_params(key, num_classes, input_shape):
    # Replicate the shape inference done in VoxNet.__init__.
    d, h, w = input_shape
    d1, h1, w1 = [(s - 5) // 2 + 1 for s in (d, h, w)]          # conv1 k5 s2
    d2, h2, w2 = [s - 2 for s in (d1, h1, w1)]                  # conv2 k3 s1
    d3, h3, w3 = [(s + 2 - 3) // 2 + 1 for s in (d2, h2, w2)]   # conv3 k3 s2 p1
    k1, k2, k3, k4, k5 = jax.random.split(key, 5)
    return {
        "conv1": make_conv1_params(k1),
        "conv2": make_conv_params(k2, 32, 32, 3),
        "conv3": make_conv_params(k3, 32, 32, 3),
        "fc1": make_fc1_params(k4, (d3, h3, w3), 32),
        "fc2": make_fc2_params(k5, 64, num_classes),
    }


# ---------------------------------- main -----------------------------------


if __name__ == "__main__":
    num_classes = 10
    input_shape = (16, 16, 16)          # small smoke-test size (default 32^3)
    batch = 2

    key = jax.random.PRNGKey(0)
    k_params, k_x = jax.random.split(key)
    params = make_voxnet_params(k_params, num_classes, input_shape)
    x = jax.random.normal(k_x, (batch, 1) + input_shape, dtype=jnp.float32)

    fwd = jax.jit(voxnet_forward)
    out = jax.block_until_ready(fwd(x, params))

    assert out.shape == (batch, num_classes), out.shape
    assert jnp.all(jnp.isfinite(out))
    print("KERNEL_OK")
</pallas_src>

<mosaic_0001>
module attributes {stable_mosaic.version = 11 : i64} {
  func.func @_gemm_bias_act_kernel(%arg0: i32, %arg1: memref<432x128xbf16, #tpu.memory_space<vmem>>, %arg2: memref<128x32xbf16, #tpu.memory_space<vmem>>, %arg3: memref<1x32xf32, #tpu.memory_space<vmem>>, %arg4: memref<432x32xbf16, #tpu.memory_space<vmem>>) attributes {dimension_semantics = [#tpu.dimension_semantics<parallel>], iteration_bounds = array<i64: 1>, scalar_prefetch = 0 : i64, scratch_operands = 0 : i64, tpu.core_type = #tpu.core_type<tc>, window_params = [{transform_indices = @transform_0, window_bounds = array<i64: 432, 128>}, {pipeline_mode = #tpu.pipeline_mode<synchronous>, transform_indices = @transform_1, window_bounds = array<i64: 128, 32>}, {pipeline_mode = #tpu.pipeline_mode<synchronous>, transform_indices = @transform_2, window_bounds = array<i64: 1, 32>}, {transform_indices = @transform_3, window_bounds = array<i64: 432, 32>}]} {
    %c0 = arith.constant 0 : index
    %c0_0 = arith.constant 0 : index
    %0 = vector.load %arg1[%c0, %c0_0] : memref<432x128xbf16, #tpu.memory_space<vmem>>, vector<432x128xbf16>
    %c0_1 = arith.constant 0 : index
    %c0_2 = arith.constant 0 : index
    %1 = vector.load %arg2[%c0_1, %c0_2] : memref<128x32xbf16, #tpu.memory_space<vmem>>, vector<128x32xbf16>
    %cst = arith.constant dense<0.000000e+00> : vector<432x32xf32>
    %2 = tpu.matmul %0, %1, %cst {dimension_numbers = #tpu.dot_dimension_numbers<[1], [0], [0], [1], [0, 0, 1, 1], [], []>} : vector<432x128xbf16>, vector<128x32xbf16>, vector<432x32xf32> -> vector<432x32xf32>
    %c0_3 = arith.constant 0 : index
    %c0_4 = arith.constant 0 : index
    %3 = vector.load %arg3[%c0_3, %c0_4] : memref<1x32xf32, #tpu.memory_space<vmem>>, vector<1x32xf32>
    %4 = vector.broadcast %3 : vector<1x32xf32> to vector<432x32xf32>
    %5 = arith.addf %2, %4 : vector<432x32xf32>
    %cst_5 = arith.constant 0.000000e+00 : f32
    %6 = vector.broadcast %cst_5 : f32 to vector<432x32xf32>
    %7 = arith.cmpf ogt, %5, %6 : vector<432x32xf32>
    %cst_6 = arith.constant 0.00999999977 : f32
    %8 = vector.broadcast %cst_6 : f32 to vector<432x32xf32>
    %9 = arith.mulf %8, %5 : vector<432x32xf32>
    %10 = arith.select %7, %5, %9 : vector<432x32xi1>, vector<432x32xf32>
    %11 = arith.truncf %10 : vector<432x32xf32> to vector<432x32xbf16>
    %c0_7 = arith.constant 0 : index
    %c0_8 = arith.constant 0 : index
    %12 = vector.load %arg4[%c0_7, %c0_8] : memref<432x32xbf16, #tpu.memory_space<vmem>>, vector<432x32xbf16>
    tpu.vector_store %arg4[%c0_7, %c0_8], %11 {strides = array<i32>} : memref<432x32xbf16, #tpu.memory_space<vmem>>, vector<432x32xbf16>,
    return
  }
  func.func @transform_0(%arg0: i32) -> (i32, i32) {
    %c0_i32 = arith.constant 0 : i32
    %c0_i32_0 = arith.constant 0 : i32
    return %arg0, %c0_i32 : i32, i32
  }
  func.func @transform_1(%arg0: i32) -> (i32, i32) {
    %c0_i32 = arith.constant 0 : i32
    %c0_i32_0 = arith.constant 0 : i32
    %c0_i32_1 = arith.constant 0 : i32
    return %c0_i32, %c0_i32_0 : i32, i32
  }
  func.func @transform_2(%arg0: i32) -> (i32, i32) {
    %c0_i32 = arith.constant 0 : i32
    %c0_i32_0 = arith.constant 0 : i32
    %c0_i32_1 = arith.constant 0 : i32
    return %c0_i32, %c0_i32_0 : i32, i32
  }
  func.func @transform_3(%arg0: i32) -> (i32, i32) {
    %c0_i32 = arith.constant 0 : i32
    %c0_i32_0 = arith.constant 0 : i32
    return %arg0, %c0_i32 : i32, i32
  }
}

module attributes {stable_mosaic.version = 11 : i64} {
  func.func @_conv3d_kernel(%arg0: i32, %arg1: memref<1x6x6x6x32xbf16, #tpu.memory_space<vmem>>, %arg2: memref<3x3x96x32xbf16, #tpu.memory_space<vmem>>, %arg3: memref<1x32xf32, #tpu.memory_space<vmem>>, %arg4: memref<1x4x4x4x32xbf16, #tpu.memory_space<vmem>>) attributes {dimension_semantics = [#tpu.dimension_semantics<parallel>], iteration_bounds = array<i64: 2>, scalar_prefetch = 0 : i64, scratch_operands = 0 : i64, tpu.core_type = #tpu.core_type<tc>, window_params = [{transform_indices = @transform_0, window_bounds = array<i64: 1, 6, 6, 6, 32>}, {pipeline_mode = #tpu.pipeline_mode<synchronous>, transform_indices = @transform_1, window_bounds = array<i64: 3, 3, 96, 32>}, {pipeline_mode = #tpu.pipeline_mode<synchronous>, transform_indices = @transform_2, window_bounds = array<i64: 1, 32>}, {transform_indices = @transform_3, window_bounds = array<i64: 1, 4, 4, 4, 32>}]} {
    %cst = arith.constant 0.000000e+00 : f32
    %0 = vector.broadcast %cst : f32 to vector<64x32xf32>
    %c0 = arith.constant 0 : index
    %c0_0 = arith.constant 0 : index
    %c0_1 = arith.constant 0 : index
    %c0_2 = arith.constant 0 : index
    %c0_3 = arith.constant 0 : index
    %1 = vector.load %arg1[%c0, %c0_0, %c0_1, %c0_2, %c0_3] : memref<1x6x6x6x32xbf16, #tpu.memory_space<vmem>>, vector<1x4x4x4x32xbf16>
    %2 = vector.shape_cast %1 : vector<1x4x4x4x32xbf16> to vector<4x4x4x32xbf16>
    %c0_4 = arith.constant 0 : index
    %c0_5 = arith.constant 0 : index
    %c0_6 = arith.constant 0 : index
    %c1 = arith.constant 1 : index
    %c0_7 = arith.constant 0 : index
    %3 = vector.load %arg1[%c0_4, %c0_5, %c0_6, %c1, %c0_7] : memref<1x6x6x6x32xbf16, #tpu.memory_space<vmem>>, vector<1x4x4x4x32xbf16>
    %4 = vector.shape_cast %3 : vector<1x4x4x4x32xbf16> to vector<4x4x4x32xbf16>
    %c0_8 = arith.constant 0 : index
    %c0_9 = arith.constant 0 : index
    %c0_10 = arith.constant 0 : index
    %c2 = arith.constant 2 : index
    %c0_11 = arith.constant 0 : index
    %5 = vector.load %arg1[%c0_8, %c0_9, %c0_10, %c2, %c0_11] : memref<1x6x6x6x32xbf16, #tpu.memory_space<vmem>>, vector<1x4x4x4x32xbf16>
    %6 = vector.shape_cast %5 : vector<1x4x4x4x32xbf16> to vector<4x4x4x32xbf16>
    %7 = tpu.concatenate %2, %4, %6 in 3 : vector<4x4x4x32xbf16>, vector<4x4x4x32xbf16>, vector<4x4x4x32xbf16> -> vector<4x4x4x96xbf16>
    %8 = vector.shape_cast %7 : vector<4x4x4x96xbf16> to vector<64x96xbf16>
    %c0_12 = arith.constant 0 : index
    %c0_13 = arith.constant 0 : index
    %c0_14 = arith.constant 0 : index
    %c0_15 = arith.constant 0 : index
    %9 = vector.load %arg2[%c0_12, %c0_13, %c0_14, %c0_15] : memref<3x3x96x32xbf16, #tpu.memory_space<vmem>>, vector<1x1x96x32xbf16>
    %10 = vector.shape_cast %9 : vector<1x1x96x32xbf16> to vector<96x32xbf16>
    %cst_16 = arith.constant dense<0.000000e+00> : vector<64x32xf32>
    %11 = tpu.matmul %8, %10, %cst_16 {dimension_numbers = #tpu.dot_dimension_numbers<[1], [0], [0], [1], [0, 0, 1, 1], [], []>} : vector<64x96xbf16>, vector<96x32xbf16>, vector<64x32xf32> -> vector<64x32xf32>
    %12 = arith.addf %0, %11 : vector<64x32xf32>
    %c0_17 = arith.constant 0 : index
    %c0_18 = arith.constant 0 : index
    %c1_19 = arith.constant 1 : index
    %c0_20 = arith.constant 0 : index
    %c0_21 = arith.constant 0 : index
    %13 = vector.load %arg1[%c0_17, %c0_18, %c1_19, %c0_20, %c0_21] : memref<1x6x6x6x32xbf16, #tpu.memory_space<vmem>>, vector<1x4x4x4x32xbf16>
    %14 = vector.shape_cast %13 : vector<1x4x4x4x32xbf16> to vector<4x4x4x32xbf16>
    %c0_22 = arith.constant 0 : index
    %c0_23 = arith.constant 0 : index
    %c1_24 = arith.constant 1 : index
    %c1_25 = arith.constant 1 : index
    %c0_26 = arith.constant 0 : index
    %15 = vector.load %arg1[%c0_22, %c0_23, %c1_24, %c1_25, %c0_26] : memref<1x6x6x6x32xbf16, #tpu.memory_space<vmem>>, vector<1x4x4x4x32xbf16>
    %16 = vector.shape_cast %15 : vector<1x4x4x4x32xbf16> to vector<4x4x4x32xbf16>
    %c0_27 = arith.constant 0 : index
    %c0_28 = arith.constant 0 : index
    %c1_29 = arith.constant 1 : index
    %c2_30 = arith.constant 2 : index
    %c0_31 = arith.constant 0 : index
    %17 = vector.load %arg1[%c0_27, %c0_28, %c1_29, %c2_30, %c0_31] : memref<1x6x6x6x32xbf16, #tpu.memory_space<vmem>>, vector<1x4x4x4x32xbf16>
    %18 = vector.shape_cast %17 : vector<1x4x4x4x32xbf16> to vector<4x4x4x32xbf16>
    %19 = tpu.concatenate %14, %16, %18 in 3 : vector<4x4x4x32xbf16>, vector<4x4x4x32xbf16>, vector<4x4x4x32xbf16> -> vector<4x4x4x96xbf16>
    %20 = vector.shape_cast %19 : vector<4x4x4x96xbf16> to vector<64x96xbf16>
    %c0_32 = arith.constant 0 : index
    %c1_33 = arith.constant 1 : index
    %c0_34 = arith.constant 0 : index
    %c0_35 = arith.constant 0 : index
    %21 = vector.load %arg2[%c0_32, %c1_33, %c0_34, %c0_35] : memref<3x3x96x32xbf16, #tpu.memory_space<vmem>>, vector<1x1x96x32xbf16>
    %22 = vector.shape_cast %21 : vector<1x1x96x32xbf16> to vector<96x32xbf16>
    %cst_36 = arith.constant dense<0.000000e+00> : vector<64x32xf32>
    %23 = tpu.matmul %20, %22, %cst_36 {dimension_numbers = #tpu.dot_dimension_numbers<[1], [0], [0], [1], [0, 0, 1, 1], [], []>} : vector<64x96xbf16>, vector<96x32xbf16>, vector<64x32xf32> -> vector<64x32xf32>
    %24 = arith.addf %12, %23 : vector<64x32xf32>
    %c0_37 = arith.constant 0 : index
    %c0_38 = arith.constant 0 : index
    %c2_39 = arith.constant 2 : index
    %c0_40 = arith.constant 0 : index
    %c0_41 = arith.constant 0 : index
    %25 = vector.load %arg1[%c0_37, %c0_38, %c2_39, %c0_40, %c0_41] : memref<1x6x6x6x32xbf16, #tpu.memory_space<vmem>>, vector<1x4x4x4x32xbf16>
    %26 = vector.shape_cast %25 : vector<1x4x4x4x32xbf16> to vector<4x4x4x32xbf16>
    %c0_42 = arith.constant 0 : index
    %c0_43 = arith.constant 0 : index
    %c2_44 = arith.constant 2 : index
    %c1_45 = arith.constant 1 : index
    %c0_46 = arith.constant 0 : index
    %27 = vector.load %arg1[%c0_42, %c0_43, %c2_44, %c1_45, %c0_46] : memref<1x6x6x6x32xbf16, #tpu.memory_space<vmem>>, vector<1x4x4x4x32xbf16>
    %28 = vector.shape_cast %27 : vector<1x4x4x4x32xbf16> to vector<4x4x4x32xbf16>
    %c0_47 = arith.constant 0 : index
    %c0_48 = arith.constant 0 : index
    %c2_49 = arith.constant 2 : index
    %c2_50 = arith.constant 2 : index
    %c0_51 = arith.constant 0 : index
    %29 = vector.load %arg1[%c0_47, %c0_48, %c2_49, %c2_50, %c0_51] : memref<1x6x6x6x32xbf16, #tpu.memory_space<vmem>>, vector<1x4x4x4x32xbf16>
    %30 = vector.shape_cast %29 : vector<1x4x4x4x32xbf16> to vector<4x4x4x32xbf16>
    %31 = tpu.concatenate %26, %28, %30 in 3 : vector<4x4x4x32xbf16>, vector<4x4x4x32xbf16>, vector<4x4x4x32xbf16> -> vector<4x4x4x96xbf16>
    %32 = vector.shape_cast %31 : vector<4x4x4x96xbf16> to vector<64x96xbf16>
    %c0_52 = arith.constant 0 : index
    %c2_53 = arith.constant 2 : index
    %c0_54 = arith.constant 0 : index
    %c0_55 = arith.constant 0 : index
    %33 = vector.load %arg2[%c0_52, %c2_53, %c0_54, %c0_55] : memref<3x3x96x32xbf16, #tpu.memory_space<vmem>>, vector<1x1x96x32xbf16>
    %34 = vector.shape_cast %33 : vector<1x1x96x32xbf16> to vector<96x32xbf16>
    %cst_56 = arith.constant dense<0.000000e+00> : vector<64x32xf32>
    %35 = tpu.matmul %32, %34, %cst_56 {dimension_numbers = #tpu.dot_dimension_numbers<[1], [0], [0], [1], [0, 0, 1, 1], [], []>} : vector<64x96xbf16>, vector<96x32xbf16>, vector<64x32xf32> -> vector<64x32xf32>
    %36 = arith.addf %24, %35 : vector<64x32xf32>
    %c0_57 = arith.constant 0 : index
    %c1_58 = arith.constant 1 : index
    %c0_59 = arith.constant 0 : index
    %c0_60 = arith.constant 0 : index
    %c0_61 = arith.constant 0 : index
    %37 = vector.load %arg1[%c0_57, %c1_58, %c0_59, %c0_60, %c0_61] : memref<1x6x6x6x32xbf16, #tpu.memory_space<vmem>>, vector<1x4x4x4x32xbf16>
    %38 = vector.shape_cast %37 : vector<1x4x4x4x32xbf16> to vector<4x4x4x32xbf16>
    %c0_62 = arith.constant 0 : index
    %c1_63 = arith.constant 1 : index
    %c0_64 = arith.constant 0 : index
    %c1_65 = arith.constant 1 : index
    %c0_66 = arith.constant 0 : index
    %39 = vector.load %arg1[%c0_62, %c1_63, %c0_64, %c1_65, %c0_66] : memref<1x6x6x6x32xbf16, #tpu.memory_space<vmem>>, vector<1x4x4x4x32xbf16>
    %40 = vector.shape_cast %39 : vector<1x4x4x4x32xbf16> to vector<4x4x4x32xbf16>
    %c0_67 = arith.constant 0 : index
    %c1_68 = arith.constant 1 : index
    %c0_69 = arith.constant 0 : index
    %c2_70 = arith.constant 2 : index
    %c0_71 = arith.constant 0 : index
    %41 = vector.load %arg1[%c0_67, %c1_68, %c0_69, %c2_70, %c0_71] : memref<1x6x6x6x32xbf16, #tpu.memory_space<vmem>>, vector<1x4x4x4x32xbf16>
    %42 = vector.shape_cast %41 : vector<1x4x4x4x32xbf16> to vector<4x4x4x32xbf16>
    %43 = tpu.concatenate %38, %40, %42 in 3 : vector<4x4x4x32xbf16>, vector<4x4x4x32xbf16>, vector<4x4x4x32xbf16> -> vector<4x4x4x96xbf16>
    %44 = vector.shape_cast %43 : vector<4x4x4x96xbf16> to vector<64x96xbf16>
    %c1_72 = arith.constant 1 : index
    %c0_73 = arith.constant 0 : index
    %c0_74 = arith.constant 0 : index
    %c0_75 = arith.constant 0 : index
    %45 = vector.load %arg2[%c1_72, %c0_73, %c0_74, %c0_75] : memref<3x3x96x32xbf16, #tpu.memory_space<vmem>>, vector<1x1x96x32xbf16>
    %46 = vector.shape_cast %45 : vector<1x1x96x32xbf16> to vector<96x32xbf16>
    %cst_76 = arith.constant dense<0.000000e+00> : vector<64x32xf32>
    %47 = tpu.matmul %44, %46, %cst_76 {dimension_numbers = #tpu.dot_dimension_numbers<[1], [0], [0], [1], [0, 0, 1, 1], [], []>} : vector<64x96xbf16>, vector<96x32xbf16>, vector<64x32xf32> -> vector<64x32xf32>
    %48 = arith.addf %36, %47 : vector<64x32xf32>
    %c0_77 = arith.constant 0 : index
    %c1_78 = arith.constant 1 : index
    %c1_79 = arith.constant 1 : index
    %c0_80 = arith.constant 0 : index
    %c0_81 = arith.constant 0 : index
    %49 = vector.load %arg1[%c0_77, %c1_78, %c1_79, %c0_80, %c0_81] : memref<1x6x6x6x32xbf16, #tpu.memory_space<vmem>>, vector<1x4x4x4x32xbf16>
    %50 = vector.shape_cast %49 : vector<1x4x4x4x32xbf16> to vector<4x4x4x32xbf16>
    %c0_82 = arith.constant 0 : index
    %c1_83 = arith.constant 1 : index
    %c1_84 = arith.constant 1 : index
    %c1_85 = arith.constant 1 : index
    %c0_86 = arith.constant 0 : index
    %51 = vector.load %arg1[%c0_82, %c1_83, %c1_84, %c1_85, %c0_86] : memref<1x6x6x6x32xbf16, #tpu.memory_space<vmem>>, vector<1x4x4x4x32xbf16>
    %52 = vector.shape_cast %51 : vector<1x4x4x4x32xbf16> to vector<4x4x4x32xbf16>
    %c0_87 = arith.constant 0 : index
    %c1_88 = arith.constant 1 : index
    %c1_89 = arith.constant 1 : index
    %c2_90 = arith.constant 2 : index
    %c0_91 = arith.constant 0 : index
    %53 = vector.load %arg1[%c0_87, %c1_88, %c1_89, %c2_90, %c0_91] : memref<1x6x6x6x32xbf16, #tpu.memory_space<vmem>>, vector<1x4x4x4x32xbf16>
    %54 = vector.shape_cast %53 : vector<1x4x4x4x32xbf16> to vector<4x4x4x32xbf16>
    %55 = tpu.concatenate %50, %52, %54 in 3 : vector<4x4x4x32xbf16>, vector<4x4x4x32xbf16>, vector<4x4x4x32xbf16> -> vector<4x4x4x96xbf16>
    %56 = vector.shape_cast %55 : vector<4x4x4x96xbf16> to vector<64x96xbf16>
    %c1_92 = arith.constant 1 : index
    %c1_93 = arith.constant 1 : index
    %c0_94 = arith.constant 0 : index
    %c0_95 = arith.constant 0 : index
    %57 = vector.load %arg2[%c1_92, %c1_93, %c0_94, %c0_95] : memref<3x3x96x32xbf16, #tpu.memory_space<vmem>>, vector<1x1x96x32xbf16>
    %58 = vector.shape_cast %57 : vector<1x1x96x32xbf16> to vector<96x32xbf16>
    %cst_96 = arith.constant dense<0.000000e+00> : vector<64x32xf32>
    %59 = tpu.matmul %56, %58, %cst_96 {dimension_numbers = #tpu.dot_dimension_numbers<[1], [0], [0], [1], [0, 0, 1, 1], [], []>} : vector<64x96xbf16>, vector<96x32xbf16>, vector<64x32xf32> -> vector<64x32xf32>
    %60 = arith.addf %48, %59 : vector<64x32xf32>
    %c0_97 = arith.constant 0 : index
    %c1_98 = arith.constant 1 : index
    %c2_99 = arith.constant 2 : index
    %c0_100 = arith.constant 0 : index
    %c0_101 = arith.constant 0 : index
    %61 = vector.load %arg1[%c0_97, %c1_98, %c2_99, %c0_100, %c0_101] : memref<1x6x6x6x32xbf16, #tpu.memory_space<vmem>>, vector<1x4x4x4x32xbf16>
    %62 = vector.shape_cast %61 : vector<1x4x4x4x32xbf16> to vector<4x4x4x32xbf16>
    %c0_102 = arith.constant 0 : index
    %c1_103 = arith.constant 1 : index
    %c2_104 = arith.constant 2 : index
    %c1_105 = arith.constant 1 : index
    %c0_106 = arith.constant 0 : index
    %63 = vector.load %arg1[%c0_102, %c1_103, %c2_104, %c1_105, %c0_106] : memref<1x6x6x6x32xbf16, #tpu.memory_space<vmem>>, vector<1x4x4x4x32xbf16>
    %64 = vector.shape_cast %63 : vector<1x4x4x4x32xbf16> to vector<4x4x4x32xbf16>
    %c0_107 = arith.constant 0 : index
    %c1_108 = arith.constant 1 : index
    %c2_109 = arith.constant 2 : index
    %c2_110 = arith.constant 2 : index
    %c0_111 = arith.constant 0 : index
    %65 = vector.load %arg1[%c0_107, %c1_108, %c2_109, %c2_110, %c0_111] : memref<1x6x6x6x32xbf16, #tpu.memory_space<vmem>>, vector<1x4x4x4x32xbf16>
    %66 = vector.shape_cast %65 : vector<1x4x4x4x32xbf16> to vector<4x4x4x32xbf16>
    %67 = tpu.concatenate %62, %64, %66 in 3 : vector<4x4x4x32xbf16>, vector<4x4x4x32xbf16>, vector<4x4x4x32xbf16> -> vector<4x4x4x96xbf16>
    %68 = vector.shape_cast %67 : vector<4x4x4x96xbf16> to vector<64x96xbf16>
    %c1_112 = arith.constant 1 : index
    %c2_113 = arith.constant 2 : index
    %c0_114 = arith.constant 0 : index
    %c0_115 = arith.constant 0 : index
    %69 = vector.load %arg2[%c1_112, %c2_113, %c0_114, %c0_115] : memref<3x3x96x32xbf16, #tpu.memory_space<vmem>>, vector<1x1x96x32xbf16>
    %70 = vector.shape_cast %69 : vector<1x1x96x32xbf16> to vector<96x32xbf16>
    %cst_116 = arith.constant dense<0.000000e+00> : vector<64x32xf32>
    %71 = tpu.matmul %68, %70, %cst_116 {dimension_numbers = #tpu.dot_dimension_numbers<[1], [0], [0], [1], [0, 0, 1, 1], [], []>} : vector<64x96xbf16>, vector<96x32xbf16>, vector<64x32xf32> -> vector<64x32xf32>
    %72 = arith.addf %60, %71 : vector<64x32xf32>
    %c0_117 = arith.constant 0 : index
    %c2_118 = arith.constant 2 : index
    %c0_119 = arith.constant 0 : index
    %c0_120 = arith.constant 0 : index
    %c0_121 = arith.constant 0 : index
    %73 = vector.load %arg1[%c0_117, %c2_118, %c0_119, %c0_120, %c0_121] : memref<1x6x6x6x32xbf16, #tpu.memory_space<vmem>>, vector<1x4x4x4x32xbf16>
    %74 = vector.shape_cast %73 : vector<1x4x4x4x32xbf16> to vector<4x4x4x32xbf16>
    %c0_122 = arith.constant 0 : index
    %c2_123 = arith.constant 2 : index
    %c0_124 = arith.constant 0 : index
    %c1_125 = arith.constant 1 : index
    %c0_126 = arith.constant 0 : index
    %75 = vector.load %arg1[%c0_122, %c2_123, %c0_124, %c1_125, %c0_126] : memref<1x6x6x6x32xbf16, #tpu.memory_space<vmem>>, vector<1x4x4x4x32xbf16>
    %76 = vector.shape_cast %75 : vector<1x4x4x4x32xbf16> to vector<4x4x4x32xbf16>
    %c0_127 = arith.constant 0 : index
    %c2_128 = arith.constant 2 : index
    %c0_129 = arith.constant 0 : index
    %c2_130 = arith.constant 2 : index
    %c0_131 = arith.constant 0 : index
    %77 = vector.load %arg1[%c0_127, %c2_128, %c0_129, %c2_130, %c0_131] : memref<1x6x6x6x32xbf16, #tpu.memory_space<vmem>>, vector<1x4x4x4x32xbf16>
    %78 = vector.shape_cast %77 : vector<1x4x4x4x32xbf16> to vector<4x4x4x32xbf16>
    %79 = tpu.concatenate %74, %76, %78 in 3 : vector<4x4x4x32xbf16>, vector<4x4x4x32xbf16>, vector<4x4x4x32xbf16> -> vector<4x4x4x96xbf16>
    %80 = vector.shape_cast %79 : vector<4x4x4x96xbf16> to vector<64x96xbf16>
    %c2_132 = arith.constant 2 : index
    %c0_133 = arith.constant 0 : index
    %c0_134 = arith.constant 0 : index
    %c0_135 = arith.constant 0 : index
    %81 = vector.load %arg2[%c2_132, %c0_133, %c0_134, %c0_135] : memref<3x3x96x32xbf16, #tpu.memory_space<vmem>>, vector<1x1x96x32xbf16>
    %82 = vector.shape_cast %81 : vector<1x1x96x32xbf16> to vector<96x32xbf16>
    %cst_136 = arith.constant dense<0.000000e+00> : vector<64x32xf32>
    %83 = tpu.matmul %80, %82, %cst_136 {dimension_numbers = #tpu.dot_dimension_numbers<[1], [0], [0], [1], [0, 0, 1, 1], [], []>} : vector<64x96xbf16>, vector<96x32xbf16>, vector<64x32xf32> -> vector<64x32xf32>
    %84 = arith.addf %72, %83 : vector<64x32xf32>
    %c0_137 = arith.constant 0 : index
    %c2_138 = arith.constant 2 : index
    %c1_139 = arith.constant 1 : index
    %c0_140 = arith.constant 0 : index
    %c0_141 = arith.constant 0 : index
    %85 = vector.load %arg1[%c0_137, %c2_138, %c1_139, %c0_140, %c0_141] : memref<1x6x6x6x32xbf16, #tpu.memory_space<vmem>>, vector<1x4x4x4x32xbf16>
    %86 = vector.shape_cast %85 : vector<1x4x4x4x32xbf16> to vector<4x4x4x32xbf16>
    %c0_142 = arith.constant 0 : index
    %c2_143 = arith.constant 2 : index
    %c1_144 = arith.constant 1 : index
    %c1_145 = arith.constant 1 : index
    %c0_146 = arith.constant 0 : index
    %87 = vector.load %arg1[%c0_142, %c2_143, %c1_144, %c1_145, %c0_146] : memref<1x6x6x6x32xbf16, #tpu.memory_space<vmem>>, vector<1x4x4x4x32xbf16>
    %88 = vector.shape_cast %87 : vector<1x4x4x4x32xbf16> to vector<4x4x4x32xbf16>
    %c0_147 = arith.constant 0 : index
    %c2_148 = arith.constant 2 : index
    %c1_149 = arith.constant 1 : index
    %c2_150 = arith.constant 2 : index
    %c0_151 = arith.constant 0 : index
    %89 = vector.load %arg1[%c0_147, %c2_148, %c1_149, %c2_150, %c0_151] : memref<1x6x6x6x32xbf16, #tpu.memory_space<vmem>>, vector<1x4x4x4x32xbf16>
    %90 = vector.shape_cast %89 : vector<1x4x4x4x32xbf16> to vector<4x4x4x32xbf16>
    %91 = tpu.concatenate %86, %88, %90 in 3 : vector<4x4x4x32xbf16>, vector<4x4x4x32xbf16>, vector<4x4x4x32xbf16> -> vector<4x4x4x96xbf16>
    %92 = vector.shape_cast %91 : vector<4x4x4x96xbf16> to vector<64x96xbf16>
    %c2_152 = arith.constant 2 : index
    %c1_153 = arith.constant 1 : index
    %c0_154 = arith.constant 0 : index
    %c0_155 = arith.constant 0 : index
    %93 = vector.load %arg2[%c2_152, %c1_153, %c0_154, %c0_155] : memref<3x3x96x32xbf16, #tpu.memory_space<vmem>>, vector<1x1x96x32xbf16>
    %94 = vector.shape_cast %93 : vector<1x1x96x32xbf16> to vector<96x32xbf16>
    %cst_156 = arith.constant dense<0.000000e+00> : vector<64x32xf32>
    %95 = tpu.matmul %92, %94, %cst_156 {dimension_numbers = #tpu.dot_dimension_numbers<[1], [0], [0], [1], [0, 0, 1, 1], [], []>} : vector<64x96xbf16>, vector<96x32xbf16>, vector<64x32xf32> -> vector<64x32xf32>
    %96 = arith.addf %84, %95 : vector<64x32xf32>
    %c0_157 = arith.constant 0 : index
    %c2_158 = arith.constant 2 : index
    %c2_159 = arith.constant 2 : index
    %c0_160 = arith.constant 0 : index
    %c0_161 = arith.constant 0 : index
    %97 = vector.load %arg1[%c0_157, %c2_158, %c2_159, %c0_160, %c0_161] : memref<1x6x6x6x32xbf16, #tpu.memory_space<vmem>>, vector<1x4x4x4x32xbf16>
    %98 = vector.shape_cast %97 : vector<1x4x4x4x32xbf16> to vector<4x4x4x32xbf16>
    %c0_162 = arith.constant 0 : index
    %c2_163 = arith.constant 2 : index
    %c2_164 = arith.constant 2 : index
    %c1_165 = arith.constant 1 : index
    %c0_166 = arith.constant 0 : index
    %99 = vector.load %arg1[%c0_162, %c2_163, %c2_164, %c1_165, %c0_166] : memref<1x6x6x6x32xbf16, #tpu.memory_space<vmem>>, vector<1x4x4x4x32xbf16>
    %100 = vector.shape_cast %99 : vector<1x4x4x4x32xbf16> to vector<4x4x4x32xbf16>
    %c0_167 = arith.constant 0 : index
    %c2_168 = arith.constant 2 : index
    %c2_169 = arith.constant 2 : index
    %c2_170 = arith.constant 2 : index
    %c0_171 = arith.constant 0 : index
    %101 = vector.load %arg1[%c0_167, %c2_168, %c2_169, %c2_170, %c0_171] : memref<1x6x6x6x32xbf16, #tpu.memory_space<vmem>>, vector<1x4x4x4x32xbf16>
    %102 = vector.shape_cast %101 : vector<1x4x4x4x32xbf16> to vector<4x4x4x32xbf16>
    %103 = tpu.concatenate %98, %100, %102 in 3 : vector<4x4x4x32xbf16>, vector<4x4x4x32xbf16>, vector<4x4x4x32xbf16> -> vector<4x4x4x96xbf16>
    %104 = vector.shape_cast %103 : vector<4x4x4x96xbf16> to vector<64x96xbf16>
    %c2_172 = arith.constant 2 : index
    %c2_173 = arith.constant 2 : index
    %c0_174 = arith.constant 0 : index
    %c0_175 = arith.constant 0 : index
    %105 = vector.load %arg2[%c2_172, %c2_173, %c0_174, %c0_175] : memref<3x3x96x32xbf16, #tpu.memory_space<vmem>>, vector<1x1x96x32xbf16>
    %106 = vector.shape_cast %105 : vector<1x1x96x32xbf16> to vector<96x32xbf16>
    %cst_176 = arith.constant dense<0.000000e+00> : vector<64x32xf32>
    %107 = tpu.matmul %104, %106, %cst_176 {dimension_numbers = #tpu.dot_dimension_numbers<[1], [0], [0], [1], [0, 0, 1, 1], [], []>} : vector<64x96xbf16>, vector<96x32xbf16>, vector<64x32xf32> -> vector<64x32xf32>
    %108 = arith.addf %96, %107 : vector<64x32xf32>
    %c0_177 = arith.constant 0 : index
    %c0_178 = arith.constant 0 : index
    %109 = vector.load %arg3[%c0_177, %c0_178] : memref<1x32xf32, #tpu.memory_space<vmem>>, vector<1x32xf32>
    %110 = vector.broadcast %109 : vector<1x32xf32> to vector<64x32xf32>
    %111 = arith.addf %108, %110 : vector<64x32xf32>
    %cst_179 = arith.constant 0.000000e+00 : f32
    %112 = vector.broadcast %cst_179 : f32 to vector<64x32xf32>
    %113 = arith.cmpf ogt, %111, %112 : vector<64x32xf32>
    %cst_180 = arith.constant 0.00999999977 : f32
    %114 = vector.broadcast %cst_180 : f32 to vector<64x32xf32>
    %115 = arith.mulf %114, %111 : vector<64x32xf32>
    %116 = arith.select %113, %111, %115 : vector<64x32xi1>, vector<64x32xf32>
    %117 = vector.shape_cast %116 : vector<64x32xf32> to vector<4x4x4x32xf32>
    %118 = arith.truncf %117 : vector<4x4x4x32xf32> to vector<4x4x4x32xbf16>
    %c0_181 = arith.constant 0 : index
    %c0_182 = arith.constant 0 : index
    %c0_183 = arith.constant 0 : index
    %c0_184 = arith.constant 0 : index
    %c0_185 = arith.constant 0 : index
    %119 = vector.load %arg4[%c0_181, %c0_182, %c0_183, %c0_184, %c0_185] : memref<1x4x4x4x32xbf16, #tpu.memory_space<vmem>>, vector<1x4x4x4x32xbf16>
    %120 = vector.shape_cast %119 : vector<1x4x4x4x32xbf16> to vector<4x4x4x32xbf16>
    %121 = vector.shape_cast %118 : vector<4x4x4x32xbf16> to vector<1x4x4x4x32xbf16>
    tpu.vector_store %arg4[%c0_181, %c0_182, %c0_183, %c0_184, %c0_185], %121 {strides = array<i32>} : memref<1x4x4x4x32xbf16, #tpu.memory_space<vmem>>, vector<1x4x4x4x32xbf16>,
    return
  }
  func.func @transform_0(%arg0: i32) -> (i32, i32, i32, i32, i32) {
    %c0_i32 = arith.constant 0 : i32
    %c0_i32_0 = arith.constant 0 : i32
    %c0_i32_1 = arith.constant 0 : i32
    %c0_i32_2 = arith.constant 0 : i32
    %c0_i32_3 = arith.constant 0 : i32
    return %arg0, %c0_i32, %c0_i32_0, %c0_i32_1, %c0_i32_2 : i32, i32, i32, i32, i32
  }
  func.func @transform_1(%arg0: i32) -> (i32, i32, i32, i32) {
    %c0_i32 = arith.constant 0 : i32
    %c0_i32_0 = arith.constant 0 : i32
    %c0_i32_1 = arith.constant 0 : i32
    %c0_i32_2 = arith.constant 0 : i32
    %c0_i32_3 = arith.constant 0 : i32
    return %c0_i32, %c0_i32_0, %c0_i32_1, %c0_i32_2 : i32, i32, i32, i32
  }
  func.func @transform_2(%arg0: i32) -> (i32, i32) {
    %c0_i32 = arith.constant 0 : i32
    %c0_i32_0 = arith.constant 0 : i32
    %c0_i32_1 = arith.constant 0 : i32
    return %c0_i32, %c0_i32_0 : i32, i32
  }
  func.func @transform_3(%arg0: i32) -> (i32, i32, i32, i32, i32) {
    %c0_i32 = arith.constant 0 : i32
    %c0_i32_0 = arith.constant 0 : i32
    %c0_i32_1 = arith.constant 0 : i32
    %c0_i32_2 = arith.constant 0 : i32
    %c0_i32_3 = arith.constant 0 : i32
    return %arg0, %c0_i32, %c0_i32_0, %c0_i32_1, %c0_i32_2 : i32, i32, i32, i32, i32
  }
}

module attributes {stable_mosaic.version = 11 : i64} {
  func.func @_conv3d_kernel(%arg0: i32, %arg1: memref<1x6x6x3x64xbf16, #tpu.memory_space<vmem>>, %arg2: memref<3x3x96x32xbf16, #tpu.memory_space<vmem>>, %arg3: memref<1x32xf32, #tpu.memory_space<vmem>>, %arg4: memref<1x2x2x2x32xbf16, #tpu.memory_space<vmem>>) attributes {dimension_semantics = [#tpu.dimension_semantics<parallel>], iteration_bounds = array<i64: 2>, scalar_prefetch = 0 : i64, scratch_operands = 0 : i64, tpu.core_type = #tpu.core_type<tc>, window_params = [{transform_indices = @transform_0, window_bounds = array<i64: 1, 6, 6, 3, 64>}, {pipeline_mode = #tpu.pipeline_mode<synchronous>, transform_indices = @transform_1, window_bounds = array<i64: 3, 3, 96, 32>}, {pipeline_mode = #tpu.pipeline_mode<synchronous>, transform_indices = @transform_2, window_bounds = array<i64: 1, 32>}, {transform_indices = @transform_3, window_bounds = array<i64: 1, 2, 2, 2, 32>}]} {
    %cst = arith.constant 0.000000e+00 : f32
    %0 = vector.broadcast %cst : f32 to vector<8x32xf32>
    %c0 = arith.constant 0 : index
    %c0_0 = arith.constant 0 : index
    %c0_1 = arith.constant 0 : index
    %c0_2 = arith.constant 0 : index
    %c0_3 = arith.constant 0 : index
    %1 = vector.load %arg1[%c0, %c0_0, %c0_1, %c0_2, %c0_3] : memref<1x6x6x3x64xbf16, #tpu.memory_space<vmem>>, vector<1x4x4x2x32xbf16>
    %2 = vector.shape_cast %1 : vector<1x4x4x2x32xbf16> to vector<4x4x2x32xbf16>
    %3 = vector.shape_cast %2 : vector<4x4x2x32xbf16> to vector<2x2x4x2x32xbf16>
    %4 = vector.extract_strided_slice %3 {offsets = [0, 0, 0, 0, 0], sizes = [2, 1, 4, 2, 32], strides = [1, 1, 1, 1, 1]} : vector<2x2x4x2x32xbf16> to vector<2x1x4x2x32xbf16>
    %5 = vector.shape_cast %4 : vector<2x1x4x2x32xbf16> to vector<2x4x2x32xbf16>
    %6 = vector.shape_cast %5 : vector<2x4x2x32xbf16> to vector<2x2x2x2x32xbf16>
    %7 = vector.extract_strided_slice %6 {offsets = [0, 0, 0, 0, 0], sizes = [2, 2, 1, 2, 32], strides = [1, 1, 1, 1, 1]} : vector<2x2x2x2x32xbf16> to vector<2x2x1x2x32xbf16>
    %8 = vector.shape_cast %7 : vector<2x2x1x2x32xbf16> to vector<2x2x2x32xbf16>
    %c0_4 = arith.constant 0 : index
    %c0_5 = arith.constant 0 : index
    %c0_6 = arith.constant 0 : index
    %c0_7 = arith.constant 0 : index
    %c32 = arith.constant 32 : index
    %9 = vector.load %arg1[%c0_4, %c0_5, %c0_6, %c0_7, %c32] : memref<1x6x6x3x64xbf16, #tpu.memory_space<vmem>>, vector<1x4x4x2x32xbf16>
    %10 = vector.shape_cast %9 : vector<1x4x4x2x32xbf16> to vector<4x4x2x32xbf16>
    %11 = vector.shape_cast %10 : vector<4x4x2x32xbf16> to vector<2x2x4x2x32xbf16>
    %12 = vector.extract_strided_slice %11 {offsets = [0, 0, 0, 0, 0], sizes = [2, 1, 4, 2, 32], strides = [1, 1, 1, 1, 1]} : vector<2x2x4x2x32xbf16> to vector<2x1x4x2x32xbf16>
    %13 = vector.shape_cast %12 : vector<2x1x4x2x32xbf16> to vector<2x4x2x32xbf16>
    %14 = vector.shape_cast %13 : vector<2x4x2x32xbf16> to vector<2x2x2x2x32xbf16>
    %15 = vector.extract_strided_slice %14 {offsets = [0, 0, 0, 0, 0], sizes = [2, 2, 1, 2, 32], strides = [1, 1, 1, 1, 1]} : vector<2x2x2x2x32xbf16> to vector<2x2x1x2x32xbf16>
    %16 = vector.shape_cast %15 : vector<2x2x1x2x32xbf16> to vector<2x2x2x32xbf16>
    %c0_8 = arith.constant 0 : index
    %c0_9 = arith.constant 0 : index
    %c0_10 = arith.constant 0 : index
    %c1 = arith.constant 1 : index
    %c0_11 = arith.constant 0 : index
    %17 = vector.load %arg1[%c0_8, %c0_9, %c0_10, %c1, %c0_11] : memref<1x6x6x3x64xbf16, #tpu.memory_space<vmem>>, vector<1x4x4x2x32xbf16>
    %18 = vector.shape_cast %17 : vector<1x4x4x2x32xbf16> to vector<4x4x2x32xbf16>
    %19 = vector.shape_cast %18 : vector<4x4x2x32xbf16> to vector<2x2x4x2x32xbf16>
    %20 = vector.extract_strided_slice %19 {offsets = [0, 0, 0, 0, 0], sizes = [2, 1, 4, 2, 32], strides = [1, 1, 1, 1, 1]} : vector<2x2x4x2x32xbf16> to vector<2x1x4x2x32xbf16>
    %21 = vector.shape_cast %20 : vector<2x1x4x2x32xbf16> to vector<2x4x2x32xbf16>
    %22 = vector.shape_cast %21 : vector<2x4x2x32xbf16> to vector<2x2x2x2x32xbf16>
    %23 = vector.extract_strided_slice %22 {offsets = [0, 0, 0, 0, 0], sizes = [2, 2, 1, 2, 32], strides = [1, 1, 1, 1, 1]} : vector<2x2x2x2x32xbf16> to vector<2x2x1x2x32xbf16>
    %24 = vector.shape_cast %23 : vector<2x2x1x2x32xbf16> to vector<2x2x2x32xbf16>
    %25 = tpu.concatenate %8, %16, %24 in 3 : vector<2x2x2x32xbf16>, vector<2x2x2x32xbf16>, vector<2x2x2x32xbf16> -> vector<2x2x2x96xbf16>
    %26 = vector.shape_cast %25 : vector<2x2x2x96xbf16> to vector<8x96xbf16>
    %c0_12 = arith.constant 0 : index
    %c0_13 = arith.constant 0 : index
    %c0_14 = arith.constant 0 : index
    %c0_15 = arith.constant 0 : index
    %27 = vector.load %arg2[%c0_12, %c0_13, %c0_14, %c0_15] : memref<3x3x96x32xbf16, #tpu.memory_space<vmem>>, vector<1x1x96x32xbf16>
    %28 = vector.shape_cast %27 : vector<1x1x96x32xbf16> to vector<96x32xbf16>
    %cst_16 = arith.constant dense<0.000000e+00> : vector<8x32xf32>
    %29 = tpu.matmul %26, %28, %cst_16 {dimension_numbers = #tpu.dot_dimension_numbers<[1], [0], [0], [1], [0, 0, 1, 1], [], []>} : vector<8x96xbf16>, vector<96x32xbf16>, vector<8x32xf32> -> vector<8x32xf32>
    %30 = arith.addf %0, %29 : vector<8x32xf32>
    %c0_17 = arith.constant 0 : index
    %c0_18 = arith.constant 0 : index
    %c1_19 = arith.constant 1 : index
    %c0_20 = arith.constant 0 : index
    %c0_21 = arith.constant 0 : index
    %31 = vector.load %arg1[%c0_17, %c0_18, %c1_19, %c0_20, %c0_21] : memref<1x6x6x3x64xbf16, #tpu.memory_space<vmem>>, vector<1x4x4x2x32xbf16>
    %32 = vector.shape_cast %31 : vector<1x4x4x2x32xbf16> to vector<4x4x2x32xbf16>
    %33 = vector.shape_cast %32 : vector<4x4x2x32xbf16> to vector<2x2x4x2x32xbf16>
    %34 = vector.extract_strided_slice %33 {offsets = [0, 0, 0, 0, 0], sizes = [2, 1, 4, 2, 32], strides = [1, 1, 1, 1, 1]} : vector<2x2x4x2x32xbf16> to vector<2x1x4x2x32xbf16>
    %35 = vector.shape_cast %34 : vector<2x1x4x2x32xbf16> to vector<2x4x2x32xbf16>
    %36 = vector.shape_cast %35 : vector<2x4x2x32xbf16> to vector<2x2x2x2x32xbf16>
    %37 = vector.extract_strided_slice %36 {offsets = [0, 0, 0, 0, 0], sizes = [2, 2, 1, 2, 32], strides = [1, 1, 1, 1, 1]} : vector<2x2x2x2x32xbf16> to vector<2x2x1x2x32xbf16>
    %38 = vector.shape_cast %37 : vector<2x2x1x2x32xbf16> to vector<2x2x2x32xbf16>
    %c0_22 = arith.constant 0 : index
    %c0_23 = arith.constant 0 : index
    %c1_24 = arith.constant 1 : index
    %c0_25 = arith.constant 0 : index
    %c32_26 = arith.constant 32 : index
    %39 = vector.load %arg1[%c0_22, %c0_23, %c1_24, %c0_25, %c32_26] : memref<1x6x6x3x64xbf16, #tpu.memory_space<vmem>>, vector<1x4x4x2x32xbf16>
    %40 = vector.shape_cast %39 : vector<1x4x4x2x32xbf16> to vector<4x4x2x32xbf16>
    %41 = vector.shape_cast %40 : vector<4x4x2x32xbf16> to vector<2x2x4x2x32xbf16>
    %42 = vector.extract_strided_slice %41 {offsets = [0, 0, 0, 0, 0], sizes = [2, 1, 4, 2, 32], strides = [1, 1, 1, 1, 1]} : vector<2x2x4x2x32xbf16> to vector<2x1x4x2x32xbf16>
    %43 = vector.shape_cast %42 : vector<2x1x4x2x32xbf16> to vector<2x4x2x32xbf16>
    %44 = vector.shape_cast %43 : vector<2x4x2x32xbf16> to vector<2x2x2x2x32xbf16>
    %45 = vector.extract_strided_slice %44 {offsets = [0, 0, 0, 0, 0], sizes = [2, 2, 1, 2, 32], strides = [1, 1, 1, 1, 1]} : vector<2x2x2x2x32xbf16> to vector<2x2x1x2x32xbf16>
    %46 = vector.shape_cast %45 : vector<2x2x1x2x32xbf16> to vector<2x2x2x32xbf16>
    %c0_27 = arith.constant 0 : index
    %c0_28 = arith.constant 0 : index
    %c1_29 = arith.constant 1 : index
    %c1_30 = arith.constant 1 : index
    %c0_31 = arith.constant 0 : index
    %47 = vector.load %arg1[%c0_27, %c0_28, %c1_29, %c1_30, %c0_31] : memref<1x6x6x3x64xbf16, #tpu.memory_space<vmem>>, vector<1x4x4x2x32xbf16>
    %48 = vector.shape_cast %47 : vector<1x4x4x2x32xbf16> to vector<4x4x2x32xbf16>
    %49 = vector.shape_cast %48 : vector<4x4x2x32xbf16> to vector<2x2x4x2x32xbf16>
    %50 = vector.extract_strided_slice %49 {offsets = [0, 0, 0, 0, 0], sizes = [2, 1, 4, 2, 32], strides = [1, 1, 1, 1, 1]} : vector<2x2x4x2x32xbf16> to vector<2x1x4x2x32xbf16>
    %51 = vector.shape_cast %50 : vector<2x1x4x2x32xbf16> to vector<2x4x2x32xbf16>
    %52 = vector.shape_cast %51 : vector<2x4x2x32xbf16> to vector<2x2x2x2x32xbf16>
    %53 = vector.extract_strided_slice %52 {offsets = [0, 0, 0, 0, 0], sizes = [2, 2, 1, 2, 32], strides = [1, 1, 1, 1, 1]} : vector<2x2x2x2x32xbf16> to vector<2x2x1x2x32xbf16>
    %54 = vector.shape_cast %53 : vector<2x2x1x2x32xbf16> to vector<2x2x2x32xbf16>
    %55 = tpu.concatenate %38, %46, %54 in 3 : vector<2x2x2x32xbf16>, vector<2x2x2x32xbf16>, vector<2x2x2x32xbf16> -> vector<2x2x2x96xbf16>
    %56 = vector.shape_cast %55 : vector<2x2x2x96xbf16> to vector<8x96xbf16>
    %c0_32 = arith.constant 0 : index
    %c1_33 = arith.constant 1 : index
    %c0_34 = arith.constant 0 : index
    %c0_35 = arith.constant 0 : index
    %57 = vector.load %arg2[%c0_32, %c1_33, %c0_34, %c0_35] : memref<3x3x96x32xbf16, #tpu.memory_space<vmem>>, vector<1x1x96x32xbf16>
    %58 = vector.shape_cast %57 : vector<1x1x96x32xbf16> to vector<96x32xbf16>
    %cst_36 = arith.constant dense<0.000000e+00> : vector<8x32xf32>
    %59 = tpu.matmul %56, %58, %cst_36 {dimension_numbers = #tpu.dot_dimension_numbers<[1], [0], [0], [1], [0, 0, 1, 1], [], []>} : vector<8x96xbf16>, vector<96x32xbf16>, vector<8x32xf32> -> vector<8x32xf32>
    %60 = arith.addf %30, %59 : vector<8x32xf32>
    %c0_37 = arith.constant 0 : index
    %c0_38 = arith.constant 0 : index
    %c2 = arith.constant 2 : index
    %c0_39 = arith.constant 0 : index
    %c0_40 = arith.constant 0 : index
    %61 = vector.load %arg1[%c0_37, %c0_38, %c2, %c0_39, %c0_40] : memref<1x6x6x3x64xbf16, #tpu.memory_space<vmem>>, vector<1x4x4x2x32xbf16>
    %62 = vector.shape_cast %61 : vector<1x4x4x2x32xbf16> to vector<4x4x2x32xbf16>
    %63 = vector.shape_cast %62 : vector<4x4x2x32xbf16> to vector<2x2x4x2x32xbf16>
    %64 = vector.extract_strided_slice %63 {offsets = [0, 0, 0, 0, 0], sizes = [2, 1, 4, 2, 32], strides = [1, 1, 1, 1, 1]} : vector<2x2x4x2x32xbf16> to vector<2x1x4x2x32xbf16>
    %65 = vector.shape_cast %64 : vector<2x1x4x2x32xbf16> to vector<2x4x2x32xbf16>
    %66 = vector.shape_cast %65 : vector<2x4x2x32xbf16> to vector<2x2x2x2x32xbf16>
    %67 = vector.extract_strided_slice %66 {offsets = [0, 0, 0, 0, 0], sizes = [2, 2, 1, 2, 32], strides = [1, 1, 1, 1, 1]} : vector<2x2x2x2x32xbf16> to vector<2x2x1x2x32xbf16>
    %68 = vector.shape_cast %67 : vector<2x2x1x2x32xbf16> to vector<2x2x2x32xbf16>
    %c0_41 = arith.constant 0 : index
    %c0_42 = arith.constant 0 : index
    %c2_43 = arith.constant 2 : index
    %c0_44 = arith.constant 0 : index
    %c32_45 = arith.constant 32 : index
    %69 = vector.load %arg1[%c0_41, %c0_42, %c2_43, %c0_44, %c32_45] : memref<1x6x6x3x64xbf16, #tpu.memory_space<vmem>>, vector<1x4x4x2x32xbf16>
    %70 = vector.shape_cast %69 : vector<1x4x4x2x32xbf16> to vector<4x4x2x32xbf16>
    %71 = vector.shape_cast %70 : vector<4x4x2x32xbf16> to vector<2x2x4x2x32xbf16>
    %72 = vector.extract_strided_slice %71 {offsets = [0, 0, 0, 0, 0], sizes = [2, 1, 4, 2, 32], strides = [1, 1, 1, 1, 1]} : vector<2x2x4x2x32xbf16> to vector<2x1x4x2x32xbf16>
    %73 = vector.shape_cast %72 : vector<2x1x4x2x32xbf16> to vector<2x4x2x32xbf16>
    %74 = vector.shape_cast %73 : vector<2x4x2x32xbf16> to vector<2x2x2x2x32xbf16>
    %75 = vector.extract_strided_slice %74 {offsets = [0, 0, 0, 0, 0], sizes = [2, 2, 1, 2, 32], strides = [1, 1, 1, 1, 1]} : vector<2x2x2x2x32xbf16> to vector<2x2x1x2x32xbf16>
    %76 = vector.shape_cast %75 : vector<2x2x1x2x32xbf16> to vector<2x2x2x32xbf16>
    %c0_46 = arith.constant 0 : index
    %c0_47 = arith.constant 0 : index
    %c2_48 = arith.constant 2 : index
    %c1_49 = arith.constant 1 : index
    %c0_50 = arith.constant 0 : index
    %77 = vector.load %arg1[%c0_46, %c0_47, %c2_48, %c1_49, %c0_50] : memref<1x6x6x3x64xbf16, #tpu.memory_space<vmem>>, vector<1x4x4x2x32xbf16>
    %78 = vector.shape_cast %77 : vector<1x4x4x2x32xbf16> to vector<4x4x2x32xbf16>
    %79 = vector.shape_cast %78 : vector<4x4x2x32xbf16> to vector<2x2x4x2x32xbf16>
    %80 = vector.extract_strided_slice %79 {offsets = [0, 0, 0, 0, 0], sizes = [2, 1, 4, 2, 32], strides = [1, 1, 1, 1, 1]} : vector<2x2x4x2x32xbf16> to vector<2x1x4x2x32xbf16>
    %81 = vector.shape_cast %80 : vector<2x1x4x2x32xbf16> to vector<2x4x2x32xbf16>
    %82 = vector.shape_cast %81 : vector<2x4x2x32xbf16> to vector<2x2x2x2x32xbf16>
    %83 = vector.extract_strided_slice %82 {offsets = [0, 0, 0, 0, 0], sizes = [2, 2, 1, 2, 32], strides = [1, 1, 1, 1, 1]} : vector<2x2x2x2x32xbf16> to vector<2x2x1x2x32xbf16>
    %84 = vector.shape_cast %83 : vector<2x2x1x2x32xbf16> to vector<2x2x2x32xbf16>
    %85 = tpu.concatenate %68, %76, %84 in 3 : vector<2x2x2x32xbf16>, vector<2x2x2x32xbf16>, vector<2x2x2x32xbf16> -> vector<2x2x2x96xbf16>
    %86 = vector.shape_cast %85 : vector<2x2x2x96xbf16> to vector<8x96xbf16>
    %c0_51 = arith.constant 0 : index
    %c2_52 = arith.constant 2 : index
    %c0_53 = arith.constant 0 : index
    %c0_54 = arith.constant 0 : index
    %87 = vector.load %arg2[%c0_51, %c2_52, %c0_53, %c0_54] : memref<3x3x96x32xbf16, #tpu.memory_space<vmem>>, vector<1x1x96x32xbf16>
    %88 = vector.shape_cast %87 : vector<1x1x96x32xbf16> to vector<96x32xbf16>
    %cst_55 = arith.constant dense<0.000000e+00> : vector<8x32xf32>
    %89 = tpu.matmul %86, %88, %cst_55 {dimension_numbers = #tpu.dot_dimension_numbers<[1], [0], [0], [1], [0, 0, 1, 1], [], []>} : vector<8x96xbf16>, vector<96x32xbf16>, vector<8x32xf32> -> vector<8x32xf32>
    %90 = arith.addf %60, %89 : vector<8x32xf32>
    %c0_56 = arith.constant 0 : index
    %c1_57 = arith.constant 1 : index
    %c0_58 = arith.constant 0 : index
    %c0_59 = arith.constant 0 : index
    %c0_60 = arith.constant 0 : index
    %91 = vector.load %arg1[%c0_56, %c1_57, %c0_58, %c0_59, %c0_60] : memref<1x6x6x3x64xbf16, #tpu.memory_space<vmem>>, vector<1x4x4x2x32xbf16>
    %92 = vector.shape_cast %91 : vector<1x4x4x2x32xbf16> to vector<4x4x2x32xbf16>
    %93 = vector.shape_cast %92 : vector<4x4x2x32xbf16> to vector<2x2x4x2x32xbf16>
    %94 = vector.extract_strided_slice %93 {offsets = [0, 0, 0, 0, 0], sizes = [2, 1, 4, 2, 32], strides = [1, 1, 1, 1, 1]} : vector<2x2x4x2x32xbf16> to vector<2x1x4x2x32xbf16>
    %95 = vector.shape_cast %94 : vector<2x1x4x2x32xbf16> to vector<2x4x2x32xbf16>
    %96 = vector.shape_cast %95 : vector<2x4x2x32xbf16> to vector<2x2x2x2x32xbf16>
    %97 = vector.extract_strided_slice %96 {offsets = [0, 0, 0, 0, 0], sizes = [2, 2, 1, 2, 32], strides = [1, 1, 1, 1, 1]} : vector<2x2x2x2x32xbf16> to vector<2x2x1x2x32xbf16>
    %98 = vector.shape_cast %97 : vector<2x2x1x2x32xbf16> to vector<2x2x2x32xbf16>
    %c0_61 = arith.constant 0 : index
    %c1_62 = arith.constant 1 : index
    %c0_63 = arith.constant 0 : index
    %c0_64 = arith.constant 0 : index
    %c32_65 = arith.constant 32 : index
    %99 = vector.load %arg1[%c0_61, %c1_62, %c0_63, %c0_64, %c32_65] : memref<1x6x6x3x64xbf16, #tpu.memory_space<vmem>>, vector<1x4x4x2x32xbf16>
    %100 = vector.shape_cast %99 : vector<1x4x4x2x32xbf16> to vector<4x4x2x32xbf16>
    %101 = vector.shape_cast %100 : vector<4x4x2x32xbf16> to vector<2x2x4x2x32xbf16>
    %102 = vector.extract_strided_slice %101 {offsets = [0, 0, 0, 0, 0], sizes = [2, 1, 4, 2, 32], strides = [1, 1, 1, 1, 1]} : vector<2x2x4x2x32xbf16> to vector<2x1x4x2x32xbf16>
    %103 = vector.shape_cast %102 : vector<2x1x4x2x32xbf16> to vector<2x4x2x32xbf16>
    %104 = vector.shape_cast %103 : vector<2x4x2x32xbf16> to vector<2x2x2x2x32xbf16>
    %105 = vector.extract_strided_slice %104 {offsets = [0, 0, 0, 0, 0], sizes = [2, 2, 1, 2, 32], strides = [1, 1, 1, 1, 1]} : vector<2x2x2x2x32xbf16> to vector<2x2x1x2x32xbf16>
    %106 = vector.shape_cast %105 : vector<2x2x1x2x32xbf16> to vector<2x2x2x32xbf16>
    %c0_66 = arith.constant 0 : index
    %c1_67 = arith.constant 1 : index
    %c0_68 = arith.constant 0 : index
    %c1_69 = arith.constant 1 : index
    %c0_70 = arith.constant 0 : index
    %107 = vector.load %arg1[%c0_66, %c1_67, %c0_68, %c1_69, %c0_70] : memref<1x6x6x3x64xbf16, #tpu.memory_space<vmem>>, vector<1x4x4x2x32xbf16>
    %108 = vector.shape_cast %107 : vector<1x4x4x2x32xbf16> to vector<4x4x2x32xbf16>
    %109 = vector.shape_cast %108 : vector<4x4x2x32xbf16> to vector<2x2x4x2x32xbf16>
    %110 = vector.extract_strided_slice %109 {offsets = [0, 0, 0, 0, 0], sizes = [2, 1, 4, 2, 32], strides = [1, 1, 1, 1, 1]} : vector<2x2x4x2x32xbf16> to vector<2x1x4x2x32xbf16>
    %111 = vector.shape_cast %110 : vector<2x1x4x2x32xbf16> to vector<2x4x2x32xbf16>
    %112 = vector.shape_cast %111 : vector<2x4x2x32xbf16> to vector<2x2x2x2x32xbf16>
    %113 = vector.extract_strided_slice %112 {offsets = [0, 0, 0, 0, 0], sizes = [2, 2, 1, 2, 32], strides = [1, 1, 1, 1, 1]} : vector<2x2x2x2x32xbf16> to vector<2x2x1x2x32xbf16>
    %114 = vector.shape_cast %113 : vector<2x2x1x2x32xbf16> to vector<2x2x2x32xbf16>
    %115 = tpu.concatenate %98, %106, %114 in 3 : vector<2x2x2x32xbf16>, vector<2x2x2x32xbf16>, vector<2x2x2x32xbf16> -> vector<2x2x2x96xbf16>
    %116 = vector.shape_cast %115 : vector<2x2x2x96xbf16> to vector<8x96xbf16>
    %c1_71 = arith.constant 1 : index
    %c0_72 = arith.constant 0 : index
    %c0_73 = arith.constant 0 : index
    %c0_74 = arith.constant 0 : index
    %117 = vector.load %arg2[%c1_71, %c0_72, %c0_73, %c0_74] : memref<3x3x96x32xbf16, #tpu.memory_space<vmem>>, vector<1x1x96x32xbf16>
    %118 = vector.shape_cast %117 : vector<1x1x96x32xbf16> to vector<96x32xbf16>
    %cst_75 = arith.constant dense<0.000000e+00> : vector<8x32xf32>
    %119 = tpu.matmul %116, %118, %cst_75 {dimension_numbers = #tpu.dot_dimension_numbers<[1], [0], [0], [1], [0, 0, 1, 1], [], []>} : vector<8x96xbf16>, vector<96x32xbf16>, vector<8x32xf32> -> vector<8x32xf32>
    %120 = arith.addf %90, %119 : vector<8x32xf32>
    %c0_76 = arith.constant 0 : index
    %c1_77 = arith.constant 1 : index
    %c1_78 = arith.constant 1 : index
    %c0_79 = arith.constant 0 : index
    %c0_80 = arith.constant 0 : index
    %121 = vector.load %arg1[%c0_76, %c1_77, %c1_78, %c0_79, %c0_80] : memref<1x6x6x3x64xbf16, #tpu.memory_space<vmem>>, vector<1x4x4x2x32xbf16>
    %122 = vector.shape_cast %121 : vector<1x4x4x2x32xbf16> to vector<4x4x2x32xbf16>
    %123 = vector.shape_cast %122 : vector<4x4x2x32xbf16> to vector<2x2x4x2x32xbf16>
    %124 = vector.extract_strided_slice %123 {offsets = [0, 0, 0, 0, 0], sizes = [2, 1, 4, 2, 32], strides = [1, 1, 1, 1, 1]} : vector<2x2x4x2x32xbf16> to vector<2x1x4x2x32xbf16>
    %125 = vector.shape_cast %124 : vector<2x1x4x2x32xbf16> to vector<2x4x2x32xbf16>
    %126 = vector.shape_cast %125 : vector<2x4x2x32xbf16> to vector<2x2x2x2x32xbf16>
    %127 = vector.extract_strided_slice %126 {offsets = [0, 0, 0, 0, 0], sizes = [2, 2, 1, 2, 32], strides = [1, 1, 1, 1, 1]} : vector<2x2x2x2x32xbf16> to vector<2x2x1x2x32xbf16>
    %128 = vector.shape_cast %127 : vector<2x2x1x2x32xbf16> to vector<2x2x2x32xbf16>
    %c0_81 = arith.constant 0 : index
    %c1_82 = arith.constant 1 : index
    %c1_83 = arith.constant 1 : index
    %c0_84 = arith.constant 0 : index
    %c32_85 = arith.constant 32 : index
    %129 = vector.load %arg1[%c0_81, %c1_82, %c1_83, %c0_84, %c32_85] : memref<1x6x6x3x64xbf16, #tpu.memory_space<vmem>>, vector<1x4x4x2x32xbf16>
    %130 = vector.shape_cast %129 : vector<1x4x4x2x32xbf16> to vector<4x4x2x32xbf16>
    %131 = vector.shape_cast %130 : vector<4x4x2x32xbf16> to vector<2x2x4x2x32xbf16>
    %132 = vector.extract_strided_slice %131 {offsets = [0, 0, 0, 0, 0], sizes = [2, 1, 4, 2, 32], strides = [1, 1, 1, 1, 1]} : vector<2x2x4x2x32xbf16> to vector<2x1x4x2x32xbf16>
    %133 = vector.shape_cast %132 : vector<2x1x4x2x32xbf16> to vector<2x4x2x32xbf16>
    %134 = vector.shape_cast %133 : vector<2x4x2x32xbf16> to vector<2x2x2x2x32xbf16>
    %135 = vector.extract_strided_slice %134 {offsets = [0, 0, 0, 0, 0], sizes = [2, 2, 1, 2, 32], strides = [1, 1, 1, 1, 1]} : vector<2x2x2x2x32xbf16> to vector<2x2x1x2x32xbf16>
    %136 = vector.shape_cast %135 : vector<2x2x1x2x32xbf16> to vector<2x2x2x32xbf16>
    %c0_86 = arith.constant 0 : index
    %c1_87 = arith.constant 1 : index
    %c1_88 = arith.constant 1 : index
    %c1_89 = arith.constant 1 : index
    %c0_90 = arith.constant 0 : index
    %137 = vector.load %arg1[%c0_86, %c1_87, %c1_88, %c1_89, %c0_90] : memref<1x6x6x3x64xbf16, #tpu.memory_space<vmem>>, vector<1x4x4x2x32xbf16>
    %138 = vector.shape_cast %137 : vector<1x4x4x2x32xbf16> to vector<4x4x2x32xbf16>
    %139 = vector.shape_cast %138 : vector<4x4x2x32xbf16> to vector<2x2x4x2x32xbf16>
    %140 = vector.extract_strided_slice %139 {offsets = [0, 0, 0, 0, 0], sizes = [2, 1, 4, 2, 32], strides = [1, 1, 1, 1, 1]} : vector<2x2x4x2x32xbf16> to vector<2x1x4x2x32xbf16>
    %141 = vector.shape_cast %140 : vector<2x1x4x2x32xbf16> to vector<2x4x2x32xbf16>
    %142 = vector.shape_cast %141 : vector<2x4x2x32xbf16> to vector<2x2x2x2x32xbf16>
    %143 = vector.extract_strided_slice %142 {offsets = [0, 0, 0, 0, 0], sizes = [2, 2, 1, 2, 32], strides = [1, 1, 1, 1, 1]} : vector<2x2x2x2x32xbf16> to vector<2x2x1x2x32xbf16>
    %144 = vector.shape_cast %143 : vector<2x2x1x2x32xbf16> to vector<2x2x2x32xbf16>
    %145 = tpu.concatenate %128, %136, %144 in 3 : vector<2x2x2x32xbf16>, vector<2x2x2x32xbf16>, vector<2x2x2x32xbf16> -> vector<2x2x2x96xbf16>
    %146 = vector.shape_cast %145 : vector<2x2x2x96xbf16> to vector<8x96xbf16>
    %c1_91 = arith.constant 1 : index
    %c1_92 = arith.constant 1 : index
    %c0_93 = arith.constant 0 : index
    %c0_94 = arith.constant 0 : index
    %147 = vector.load %arg2[%c1_91, %c1_92, %c0_93, %c0_94] : memref<3x3x96x32xbf16, #tpu.memory_space<vmem>>, vector<1x1x96x32xbf16>
    %148 = vector.shape_cast %147 : vector<1x1x96x32xbf16> to vector<96x32xbf16>
    %cst_95 = arith.constant dense<0.000000e+00> : vector<8x32xf32>
    %149 = tpu.matmul %146, %148, %cst_95 {dimension_numbers = #tpu.dot_dimension_numbers<[1], [0], [0], [1], [0, 0, 1, 1], [], []>} : vector<8x96xbf16>, vector<96x32xbf16>, vector<8x32xf32> -> vector<8x32xf32>
    %150 = arith.addf %120, %149 : vector<8x32xf32>
    %c0_96 = arith.constant 0 : index
    %c1_97 = arith.constant 1 : index
    %c2_98 = arith.constant 2 : index
    %c0_99 = arith.constant 0 : index
    %c0_100 = arith.constant 0 : index
    %151 = vector.load %arg1[%c0_96, %c1_97, %c2_98, %c0_99, %c0_100] : memref<1x6x6x3x64xbf16, #tpu.memory_space<vmem>>, vector<1x4x4x2x32xbf16>
    %152 = vector.shape_cast %151 : vector<1x4x4x2x32xbf16> to vector<4x4x2x32xbf16>
    %153 = vector.shape_cast %152 : vector<4x4x2x32xbf16> to vector<2x2x4x2x32xbf16>
    %154 = vector.extract_strided_slice %153 {offsets = [0, 0, 0, 0, 0], sizes = [2, 1, 4, 2, 32], strides = [1, 1, 1, 1, 1]} : vector<2x2x4x2x32xbf16> to vector<2x1x4x2x32xbf16>
    %155 = vector.shape_cast %154 : vector<2x1x4x2x32xbf16> to vector<2x4x2x32xbf16>
    %156 = vector.shape_cast %155 : vector<2x4x2x32xbf16> to vector<2x2x2x2x32xbf16>
    %157 = vector.extract_strided_slice %156 {offsets = [0, 0, 0, 0, 0], sizes = [2, 2, 1, 2, 32], strides = [1, 1, 1, 1, 1]} : vector<2x2x2x2x32xbf16> to vector<2x2x1x2x32xbf16>
    %158 = vector.shape_cast %157 : vector<2x2x1x2x32xbf16> to vector<2x2x2x32xbf16>
    %c0_101 = arith.constant 0 : index
    %c1_102 = arith.constant 1 : index
    %c2_103 = arith.constant 2 : index
    %c0_104 = arith.constant 0 : index
    %c32_105 = arith.constant 32 : index
    %159 = vector.load %arg1[%c0_101, %c1_102, %c2_103, %c0_104, %c32_105] : memref<1x6x6x3x64xbf16, #tpu.memory_space<vmem>>, vector<1x4x4x2x32xbf16>
    %160 = vector.shape_cast %159 : vector<1x4x4x2x32xbf16> to vector<4x4x2x32xbf16>
    %161 = vector.shape_cast %160 : vector<4x4x2x32xbf16> to vector<2x2x4x2x32xbf16>
    %162 = vector.extract_strided_slice %161 {offsets = [0, 0, 0, 0, 0], sizes = [2, 1, 4, 2, 32], strides = [1, 1, 1, 1, 1]} : vector<2x2x4x2x32xbf16> to vector<2x1x4x2x32xbf16>
    %163 = vector.shape_cast %162 : vector<2x1x4x2x32xbf16> to vector<2x4x2x32xbf16>
    %164 = vector.shape_cast %163 : vector<2x4x2x32xbf16> to vector<2x2x2x2x32xbf16>
    %165 = vector.extract_strided_slice %164 {offsets = [0, 0, 0, 0, 0], sizes = [2, 2, 1, 2, 32], strides = [1, 1, 1, 1, 1]} : vector<2x2x2x2x32xbf16> to vector<2x2x1x2x32xbf16>
    %166 = vector.shape_cast %165 : vector<2x2x1x2x32xbf16> to vector<2x2x2x32xbf16>
    %c0_106 = arith.constant 0 : index
    %c1_107 = arith.constant 1 : index
    %c2_108 = arith.constant 2 : index
    %c1_109 = arith.constant 1 : index
    %c0_110 = arith.constant 0 : index
    %167 = vector.load %arg1[%c0_106, %c1_107, %c2_108, %c1_109, %c0_110] : memref<1x6x6x3x64xbf16, #tpu.memory_space<vmem>>, vector<1x4x4x2x32xbf16>
    %168 = vector.shape_cast %167 : vector<1x4x4x2x32xbf16> to vector<4x4x2x32xbf16>
    %169 = vector.shape_cast %168 : vector<4x4x2x32xbf16> to vector<2x2x4x2x32xbf16>
    %170 = vector.extract_strided_slice %169 {offsets = [0, 0, 0, 0, 0], sizes = [2, 1, 4, 2, 32], strides = [1, 1, 1, 1, 1]} : vector<2x2x4x2x32xbf16> to vector<2x1x4x2x32xbf16>
    %171 = vector.shape_cast %170 : vector<2x1x4x2x32xbf16> to vector<2x4x2x32xbf16>
    %172 = vector.shape_cast %171 : vector<2x4x2x32xbf16> to vector<2x2x2x2x32xbf16>
    %173 = vector.extract_strided_slice %172 {offsets = [0, 0, 0, 0, 0], sizes = [2, 2, 1, 2, 32], strides = [1, 1, 1, 1, 1]} : vector<2x2x2x2x32xbf16> to vector<2x2x1x2x32xbf16>
    %174 = vector.shape_cast %173 : vector<2x2x1x2x32xbf16> to vector<2x2x2x32xbf16>
    %175 = tpu.concatenate %158, %166, %174 in 3 : vector<2x2x2x32xbf16>, vector<2x2x2x32xbf16>, vector<2x2x2x32xbf16> -> vector<2x2x2x96xbf16>
    %176 = vector.shape_cast %175 : vector<2x2x2x96xbf16> to vector<8x96xbf16>
    %c1_111 = arith.constant 1 : index
    %c2_112 = arith.constant 2 : index
    %c0_113 = arith.constant 0 : index
    %c0_114 = arith.constant 0 : index
    %177 = vector.load %arg2[%c1_111, %c2_112, %c0_113, %c0_114] : memref<3x3x96x32xbf16, #tpu.memory_space<vmem>>, vector<1x1x96x32xbf16>
    %178 = vector.shape_cast %177 : vector<1x1x96x32xbf16> to vector<96x32xbf16>
    %cst_115 = arith.constant dense<0.000000e+00> : vector<8x32xf32>
    %179 = tpu.matmul %176, %178, %cst_115 {dimension_numbers = #tpu.dot_dimension_numbers<[1], [0], [0], [1], [0, 0, 1, 1], [], []>} : vector<8x96xbf16>, vector<96x32xbf16>, vector<8x32xf32> -> vector<8x32xf32>
    %180 = arith.addf %150, %179 : vector<8x32xf32>
    %c0_116 = arith.constant 0 : index
    %c2_117 = arith.constant 2 : index
    %c0_118 = arith.constant 0 : index
    %c0_119 = arith.constant 0 : index
    %c0_120 = arith.constant 0 : index
    %181 = vector.load %arg1[%c0_116, %c2_117, %c0_118, %c0_119, %c0_120] : memref<1x6x6x3x64xbf16, #tpu.memory_space<vmem>>, vector<1x4x4x2x32xbf16>
    %182 = vector.shape_cast %181 : vector<1x4x4x2x32xbf16> to vector<4x4x2x32xbf16>
    %183 = vector.shape_cast %182 : vector<4x4x2x32xbf16> to vector<2x2x4x2x32xbf16>
    %184 = vector.extract_strided_slice %183 {offsets = [0, 0, 0, 0, 0], sizes = [2, 1, 4, 2, 32], strides = [1, 1, 1, 1, 1]} : vector<2x2x4x2x32xbf16> to vector<2x1x4x2x32xbf16>
    %185 = vector.shape_cast %184 : vector<2x1x4x2x32xbf16> to vector<2x4x2x32xbf16>
    %186 = vector.shape_cast %185 : vector<2x4x2x32xbf16> to vector<2x2x2x2x32xbf16>
    %187 = vector.extract_strided_slice %186 {offsets = [0, 0, 0, 0, 0], sizes = [2, 2, 1, 2, 32], strides = [1, 1, 1, 1, 1]} : vector<2x2x2x2x32xbf16> to vector<2x2x1x2x32xbf16>
    %188 = vector.shape_cast %187 : vector<2x2x1x2x32xbf16> to vector<2x2x2x32xbf16>
    %c0_121 = arith.constant 0 : index
    %c2_122 = arith.constant 2 : index
    %c0_123 = arith.constant 0 : index
    %c0_124 = arith.constant 0 : index
    %c32_125 = arith.constant 32 : index
    %189 = vector.load %arg1[%c0_121, %c2_122, %c0_123, %c0_124, %c32_125] : memref<1x6x6x3x64xbf16, #tpu.memory_space<vmem>>, vector<1x4x4x2x32xbf16>
    %190 = vector.shape_cast %189 : vector<1x4x4x2x32xbf16> to vector<4x4x2x32xbf16>
    %191 = vector.shape_cast %190 : vector<4x4x2x32xbf16> to vector<2x2x4x2x32xbf16>
    %192 = vector.extract_strided_slice %191 {offsets = [0, 0, 0, 0, 0], sizes = [2, 1, 4, 2, 32], strides = [1, 1, 1, 1, 1]} : vector<2x2x4x2x32xbf16> to vector<2x1x4x2x32xbf16>
    %193 = vector.shape_cast %192 : vector<2x1x4x2x32xbf16> to vector<2x4x2x32xbf16>
    %194 = vector.shape_cast %193 : vector<2x4x2x32xbf16> to vector<2x2x2x2x32xbf16>
    %195 = vector.extract_strided_slice %194 {offsets = [0, 0, 0, 0, 0], sizes = [2, 2, 1, 2, 32], strides = [1, 1, 1, 1, 1]} : vector<2x2x2x2x32xbf16> to vector<2x2x1x2x32xbf16>
    %196 = vector.shape_cast %195 : vector<2x2x1x2x32xbf16> to vector<2x2x2x32xbf16>
    %c0_126 = arith.constant 0 : index
    %c2_127 = arith.constant 2 : index
    %c0_128 = arith.constant 0 : index
    %c1_129 = arith.constant 1 : index
    %c0_130 = arith.constant 0 : index
    %197 = vector.load %arg1[%c0_126, %c2_127, %c0_128, %c1_129, %c0_130] : memref<1x6x6x3x64xbf16, #tpu.memory_space<vmem>>, vector<1x4x4x2x32xbf16>
    %198 = vector.shape_cast %197 : vector<1x4x4x2x32xbf16> to vector<4x4x2x32xbf16>
    %199 = vector.shape_cast %198 : vector<4x4x2x32xbf16> to vector<2x2x4x2x32xbf16>
    %200 = vector.extract_strided_slice %199 {offsets = [0, 0, 0, 0, 0], sizes = [2, 1, 4, 2, 32], strides = [1, 1, 1, 1, 1]} : vector<2x2x4x2x32xbf16> to vector<2x1x4x2x32xbf16>
    %201 = vector.shape_cast %200 : vector<2x1x4x2x32xbf16> to vector<2x4x2x32xbf16>
    %202 = vector.shape_cast %201 : vector<2x4x2x32xbf16> to vector<2x2x2x2x32xbf16>
    %203 = vector.extract_strided_slice %202 {offsets = [0, 0, 0, 0, 0], sizes = [2, 2, 1, 2, 32], strides = [1, 1, 1, 1, 1]} : vector<2x2x2x2x32xbf16> to vector<2x2x1x2x32xbf16>
    %204 = vector.shape_cast %203 : vector<2x2x1x2x32xbf16> to vector<2x2x2x32xbf16>
    %205 = tpu.concatenate %188, %196, %204 in 3 : vector<2x2x2x32xbf16>, vector<2x2x2x32xbf16>, vector<2x2x2x32xbf16> -> vector<2x2x2x96xbf16>
    %206 = vector.shape_cast %205 : vector<2x2x2x96xbf16> to vector<8x96xbf16>
    %c2_131 = arith.constant 2 : index
    %c0_132 = arith.constant 0 : index
    %c0_133 = arith.constant 0 : index
    %c0_134 = arith.constant 0 : index
    %207 = vector.load %arg2[%c2_131, %c0_132, %c0_133, %c0_134] : memref<3x3x96x32xbf16, #tpu.memory_space<vmem>>, vector<1x1x96x32xbf16>
    %208 = vector.shape_cast %207 : vector<1x1x96x32xbf16> to vector<96x32xbf16>
    %cst_135 = arith.constant dense<0.000000e+00> : vector<8x32xf32>
    %209 = tpu.matmul %206, %208, %cst_135 {dimension_numbers = #tpu.dot_dimension_numbers<[1], [0], [0], [1], [0, 0, 1, 1], [], []>} : vector<8x96xbf16>, vector<96x32xbf16>, vector<8x32xf32> -> vector<8x32xf32>
    %210 = arith.addf %180, %209 : vector<8x32xf32>
    %c0_136 = arith.constant 0 : index
    %c2_137 = arith.constant 2 : index
    %c1_138 = arith.constant 1 : index
    %c0_139 = arith.constant 0 : index
    %c0_140 = arith.constant 0 : index
    %211 = vector.load %arg1[%c0_136, %c2_137, %c1_138, %c0_139, %c0_140] : memref<1x6x6x3x64xbf16, #tpu.memory_space<vmem>>, vector<1x4x4x2x32xbf16>
    %212 = vector.shape_cast %211 : vector<1x4x4x2x32xbf16> to vector<4x4x2x32xbf16>
    %213 = vector.shape_cast %212 : vector<4x4x2x32xbf16> to vector<2x2x4x2x32xbf16>
    %214 = vector.extract_strided_slice %213 {offsets = [0, 0, 0, 0, 0], sizes = [2, 1, 4, 2, 32], strides = [1, 1, 1, 1, 1]} : vector<2x2x4x2x32xbf16> to vector<2x1x4x2x32xbf16>
    %215 = vector.shape_cast %214 : vector<2x1x4x2x32xbf16> to vector<2x4x2x32xbf16>
    %216 = vector.shape_cast %215 : vector<2x4x2x32xbf16> to vector<2x2x2x2x32xbf16>
    %217 = vector.extract_strided_slice %216 {offsets = [0, 0, 0, 0, 0], sizes = [2, 2, 1, 2, 32], strides = [1, 1, 1, 1, 1]} : vector<2x2x2x2x32xbf16> to vector<2x2x1x2x32xbf16>
    %218 = vector.shape_cast %217 : vector<2x2x1x2x32xbf16> to vector<2x2x2x32xbf16>
    %c0_141 = arith.constant 0 : index
    %c2_142 = arith.constant 2 : index
    %c1_143 = arith.constant 1 : index
    %c0_144 = arith.constant 0 : index
    %c32_145 = arith.constant 32 : index
    %219 = vector.load %arg1[%c0_141, %c2_142, %c1_143, %c0_144, %c32_145] : memref<1x6x6x3x64xbf16, #tpu.memory_space<vmem>>, vector<1x4x4x2x32xbf16>
    %220 = vector.shape_cast %219 : vector<1x4x4x2x32xbf16> to vector<4x4x2x32xbf16>
    %221 = vector.shape_cast %220 : vector<4x4x2x32xbf16> to vector<2x2x4x2x32xbf16>
    %222 = vector.extract_strided_slice %221 {offsets = [0, 0, 0, 0, 0], sizes = [2, 1, 4, 2, 32], strides = [1, 1, 1, 1, 1]} : vector<2x2x4x2x32xbf16> to vector<2x1x4x2x32xbf16>
    %223 = vector.shape_cast %222 : vector<2x1x4x2x32xbf16> to vector<2x4x2x32xbf16>
    %224 = vector.shape_cast %223 : vector<2x4x2x32xbf16> to vector<2x2x2x2x32xbf16>
    %225 = vector.extract_strided_slice %224 {offsets = [0, 0, 0, 0, 0], sizes = [2, 2, 1, 2, 32], strides = [1, 1, 1, 1, 1]} : vector<2x2x2x2x32xbf16> to vector<2x2x1x2x32xbf16>
    %226 = vector.shape_cast %225 : vector<2x2x1x2x32xbf16> to vector<2x2x2x32xbf16>
    %c0_146 = arith.constant 0 : index
    %c2_147 = arith.constant 2 : index
    %c1_148 = arith.constant 1 : index
    %c1_149 = arith.constant 1 : index
    %c0_150 = arith.constant 0 : index
    %227 = vector.load %arg1[%c0_146, %c2_147, %c1_148, %c1_149, %c0_150] : memref<1x6x6x3x64xbf16, #tpu.memory_space<vmem>>, vector<1x4x4x2x32xbf16>
    %228 = vector.shape_cast %227 : vector<1x4x4x2x32xbf16> to vector<4x4x2x32xbf16>
    %229 = vector.shape_cast %228 : vector<4x4x2x32xbf16> to vector<2x2x4x2x32xbf16>
    %230 = vector.extract_strided_slice %229 {offsets = [0, 0, 0, 0, 0], sizes = [2, 1, 4, 2, 32], strides = [1, 1, 1, 1, 1]} : vector<2x2x4x2x32xbf16> to vector<2x1x4x2x32xbf16>
    %231 = vector.shape_cast %230 : vector<2x1x4x2x32xbf16> to vector<2x4x2x32xbf16>
    %232 = vector.shape_cast %231 : vector<2x4x2x32xbf16> to vector<2x2x2x2x32xbf16>
    %233 = vector.extract_strided_slice %232 {offsets = [0, 0, 0, 0, 0], sizes = [2, 2, 1, 2, 32], strides = [1, 1, 1, 1, 1]} : vector<2x2x2x2x32xbf16> to vector<2x2x1x2x32xbf16>
    %234 = vector.shape_cast %233 : vector<2x2x1x2x32xbf16> to vector<2x2x2x32xbf16>
    %235 = tpu.concatenate %218, %226, %234 in 3 : vector<2x2x2x32xbf16>, vector<2x2x2x32xbf16>, vector<2x2x2x32xbf16> -> vector<2x2x2x96xbf16>
    %236 = vector.shape_cast %235 : vector<2x2x2x96xbf16> to vector<8x96xbf16>
    %c2_151 = arith.constant 2 : index
    %c1_152 = arith.constant 1 : index
    %c0_153 = arith.constant 0 : index
    %c0_154 = arith.constant 0 : index
    %237 = vector.load %arg2[%c2_151, %c1_152, %c0_153, %c0_154] : memref<3x3x96x32xbf16, #tpu.memory_space<vmem>>, vector<1x1x96x32xbf16>
    %238 = vector.shape_cast %237 : vector<1x1x96x32xbf16> to vector<96x32xbf16>
    %cst_155 = arith.constant dense<0.000000e+00> : vector<8x32xf32>
    %239 = tpu.matmul %236, %238, %cst_155 {dimension_numbers = #tpu.dot_dimension_numbers<[1], [0], [0], [1], [0, 0, 1, 1], [], []>} : vector<8x96xbf16>, vector<96x32xbf16>, vector<8x32xf32> -> vector<8x32xf32>
    %240 = arith.addf %210, %239 : vector<8x32xf32>
    %c0_156 = arith.constant 0 : index
    %c2_157 = arith.constant 2 : index
    %c2_158 = arith.constant 2 : index
    %c0_159 = arith.constant 0 : index
    %c0_160 = arith.constant 0 : index
    %241 = vector.load %arg1[%c0_156, %c2_157, %c2_158, %c0_159, %c0_160] : memref<1x6x6x3x64xbf16, #tpu.memory_space<vmem>>, vector<1x4x4x2x32xbf16>
    %242 = vector.shape_cast %241 : vector<1x4x4x2x32xbf16> to vector<4x4x2x32xbf16>
    %243 = vector.shape_cast %242 : vector<4x4x2x32xbf16> to vector<2x2x4x2x32xbf16>
    %244 = vector.extract_strided_slice %243 {offsets = [0, 0, 0, 0, 0], sizes = [2, 1, 4, 2, 32], strides = [1, 1, 1, 1, 1]} : vector<2x2x4x2x32xbf16> to vector<2x1x4x2x32xbf16>
    %245 = vector.shape_cast %244 : vector<2x1x4x2x32xbf16> to vector<2x4x2x32xbf16>
    %246 = vector.shape_cast %245 : vector<2x4x2x32xbf16> to vector<2x2x2x2x32xbf16>
    %247 = vector.extract_strided_slice %246 {offsets = [0, 0, 0, 0, 0], sizes = [2, 2, 1, 2, 32], strides = [1, 1, 1, 1, 1]} : vector<2x2x2x2x32xbf16> to vector<2x2x1x2x32xbf16>
    %248 = vector.shape_cast %247 : vector<2x2x1x2x32xbf16> to vector<2x2x2x32xbf16>
    %c0_161 = arith.constant 0 : index
    %c2_162 = arith.constant 2 : index
    %c2_163 = arith.constant 2 : index
    %c0_164 = arith.constant 0 : index
    %c32_165 = arith.constant 32 : index
    %249 = vector.load %arg1[%c0_161, %c2_162, %c2_163, %c0_164, %c32_165] : memref<1x6x6x3x64xbf16, #tpu.memory_space<vmem>>, vector<1x4x4x2x32xbf16>
    %250 = vector.shape_cast %249 : vector<1x4x4x2x32xbf16> to vector<4x4x2x32xbf16>
    %251 = vector.shape_cast %250 : vector<4x4x2x32xbf16> to vector<2x2x4x2x32xbf16>
    %252 = vector.extract_strided_slice %251 {offsets = [0, 0, 0, 0, 0], sizes = [2, 1, 4, 2, 32], strides = [1, 1, 1, 1, 1]} : vector<2x2x4x2x32xbf16> to vector<2x1x4x2x32xbf16>
    %253 = vector.shape_cast %252 : vector<2x1x4x2x32xbf16> to vector<2x4x2x32xbf16>
    %254 = vector.shape_cast %253 : vector<2x4x2x32xbf16> to vector<2x2x2x2x32xbf16>
    %255 = vector.extract_strided_slice %254 {offsets = [0, 0, 0, 0, 0], sizes = [2, 2, 1, 2, 32], strides = [1, 1, 1, 1, 1]} : vector<2x2x2x2x32xbf16> to vector<2x2x1x2x32xbf16>
    %256 = vector.shape_cast %255 : vector<2x2x1x2x32xbf16> to vector<2x2x2x32xbf16>
    %c0_166 = arith.constant 0 : index
    %c2_167 = arith.constant 2 : index
    %c2_168 = arith.constant 2 : index
    %c1_169 = arith.constant 1 : index
    %c0_170 = arith.constant 0 : index
    %257 = vector.load %arg1[%c0_166, %c2_167, %c2_168, %c1_169, %c0_170] : memref<1x6x6x3x64xbf16, #tpu.memory_space<vmem>>, vector<1x4x4x2x32xbf16>
    %258 = vector.shape_cast %257 : vector<1x4x4x2x32xbf16> to vector<4x4x2x32xbf16>
    %259 = vector.shape_cast %258 : vector<4x4x2x32xbf16> to vector<2x2x4x2x32xbf16>
    %260 = vector.extract_strided_slice %259 {offsets = [0, 0, 0, 0, 0], sizes = [2, 1, 4, 2, 32], strides = [1, 1, 1, 1, 1]} : vector<2x2x4x2x32xbf16> to vector<2x1x4x2x32xbf16>
    %261 = vector.shape_cast %260 : vector<2x1x4x2x32xbf16> to vector<2x4x2x32xbf16>
    %262 = vector.shape_cast %261 : vector<2x4x2x32xbf16> to vector<2x2x2x2x32xbf16>
    %263 = vector.extract_strided_slice %262 {offsets = [0, 0, 0, 0, 0], sizes = [2, 2, 1, 2, 32], strides = [1, 1, 1, 1, 1]} : vector<2x2x2x2x32xbf16> to vector<2x2x1x2x32xbf16>
    %264 = vector.shape_cast %263 : vector<2x2x1x2x32xbf16> to vector<2x2x2x32xbf16>
    %265 = tpu.concatenate %248, %256, %264 in 3 : vector<2x2x2x32xbf16>, vector<2x2x2x32xbf16>, vector<2x2x2x32xbf16> -> vector<2x2x2x96xbf16>
    %266 = vector.shape_cast %265 : vector<2x2x2x96xbf16> to vector<8x96xbf16>
    %c2_171 = arith.constant 2 : index
    %c2_172 = arith.constant 2 : index
    %c0_173 = arith.constant 0 : index
    %c0_174 = arith.constant 0 : index
    %267 = vector.load %arg2[%c2_171, %c2_172, %c0_173, %c0_174] : memref<3x3x96x32xbf16, #tpu.memory_space<vmem>>, vector<1x1x96x32xbf16>
    %268 = vector.shape_cast %267 : vector<1x1x96x32xbf16> to vector<96x32xbf16>
    %cst_175 = arith.constant dense<0.000000e+00> : vector<8x32xf32>
    %269 = tpu.matmul %266, %268, %cst_175 {dimension_numbers = #tpu.dot_dimension_numbers<[1], [0], [0], [1], [0, 0, 1, 1], [], []>} : vector<8x96xbf16>, vector<96x32xbf16>, vector<8x32xf32> -> vector<8x32xf32>
    %270 = arith.addf %240, %269 : vector<8x32xf32>
    %c0_176 = arith.constant 0 : index
    %c0_177 = arith.constant 0 : index
    %271 = vector.load %arg3[%c0_176, %c0_177] : memref<1x32xf32, #tpu.memory_space<vmem>>, vector<1x32xf32>
    %272 = vector.broadcast %271 : vector<1x32xf32> to vector<8x32xf32>
    %273 = arith.addf %270, %272 : vector<8x32xf32>
    %cst_178 = arith.constant 0.000000e+00 : f32
    %274 = vector.broadcast %cst_178 : f32 to vector<8x32xf32>
    %275 = arith.cmpf ogt, %273, %274 : vector<8x32xf32>
    %cst_179 = arith.constant 0.00999999977 : f32
    %276 = vector.broadcast %cst_179 : f32 to vector<8x32xf32>
    %277 = arith.mulf %276, %273 : vector<8x32xf32>
    %278 = arith.select %275, %273, %277 : vector<8x32xi1>, vector<8x32xf32>
    %279 = vector.shape_cast %278 : vector<8x32xf32> to vector<2x2x2x32xf32>
    %280 = arith.truncf %279 : vector<2x2x2x32xf32> to vector<2x2x2x32xbf16>
    %c0_180 = arith.constant 0 : index
    %c0_181 = arith.constant 0 : index
    %c0_182 = arith.constant 0 : index
    %c0_183 = arith.constant 0 : index
    %c0_184 = arith.constant 0 : index
    %281 = vector.load %arg4[%c0_180, %c0_181, %c0_182, %c0_183, %c0_184] : memref<1x2x2x2x32xbf16, #tpu.memory_space<vmem>>, vector<1x2x2x2x32xbf16>
    %282 = vector.shape_cast %281 : vector<1x2x2x2x32xbf16> to vector<2x2x2x32xbf16>
    %283 = vector.shape_cast %280 : vector<2x2x2x32xbf16> to vector<1x2x2x2x32xbf16>
    tpu.vector_store %arg4[%c0_180, %c0_181, %c0_182, %c0_183, %c0_184], %283 {strides = array<i32>} : memref<1x2x2x2x32xbf16, #tpu.memory_space<vmem>>, vector<1x2x2x2x32xbf16>,
    return
  }
  func.func @transform_0(%arg0: i32) -> (i32, i32, i32, i32, i32) {
    %c0_i32 = arith.constant 0 : i32
    %c0_i32_0 = arith.constant 0 : i32
    %c0_i32_1 = arith.constant 0 : i32
    %c0_i32_2 = arith.constant 0 : i32
    %c0_i32_3 = arith.constant 0 : i32
    return %arg0, %c0_i32, %c0_i32_0, %c0_i32_1, %c0_i32_2 : i32, i32, i32, i32, i32
  }
  func.func @transform_1(%arg0: i32) -> (i32, i32, i32, i32) {
    %c0_i32 = arith.constant 0 : i32
    %c0_i32_0 = arith.constant 0 : i32
    %c0_i32_1 = arith.constant 0 : i32
    %c0_i32_2 = arith.constant 0 : i32
    %c0_i32_3 = arith.constant 0 : i32
    return %c0_i32, %c0_i32_0, %c0_i32_1, %c0_i32_2 : i32, i32, i32, i32
  }
  func.func @transform_2(%arg0: i32) -> (i32, i32) {
    %c0_i32 = arith.constant 0 : i32
    %c0_i32_0 = arith.constant 0 : i32
    %c0_i32_1 = arith.constant 0 : i32
    return %c0_i32, %c0_i32_0 : i32, i32
  }
  func.func @transform_3(%arg0: i32) -> (i32, i32, i32, i32, i32) {
    %c0_i32 = arith.constant 0 : i32
    %c0_i32_0 = arith.constant 0 : i32
    %c0_i32_1 = arith.constant 0 : i32
    %c0_i32_2 = arith.constant 0 : i32
    %c0_i32_3 = arith.constant 0 : i32
    return %arg0, %c0_i32, %c0_i32_0, %c0_i32_1, %c0_i32_2 : i32, i32, i32, i32, i32
  }
}

module attributes {stable_mosaic.version = 11 : i64} {
  func.func @_head_kernel(%arg0: memref<2x256xbf16, #tpu.memory_space<vmem>>, %arg1: memref<256x64xbf16, #tpu.memory_space<vmem>>, %arg2: memref<1x64xf32, #tpu.memory_space<vmem>>, %arg3: memref<64x10xbf16, #tpu.memory_space<vmem>>, %arg4: memref<1x10xf32, #tpu.memory_space<vmem>>, %arg5: memref<2x10xf32, #tpu.memory_space<vmem>>) attributes {dimension_semantics = [], scalar_prefetch = 0 : i64, scratch_operands = 0 : i64, tpu.core_type = #tpu.core_type<tc>} {
    %c0 = arith.constant 0 : index
    %c0_0 = arith.constant 0 : index
    %0 = vector.load %arg0[%c0, %c0_0] : memref<2x256xbf16, #tpu.memory_space<vmem>>, vector<2x256xbf16>
    %c0_1 = arith.constant 0 : index
    %c0_2 = arith.constant 0 : index
    %1 = vector.load %arg1[%c0_1, %c0_2] : memref<256x64xbf16, #tpu.memory_space<vmem>>, vector<256x64xbf16>
    %cst = arith.constant dense<0.000000e+00> : vector<2x64xf32>
    %2 = tpu.matmul %0, %1, %cst {dimension_numbers = #tpu.dot_dimension_numbers<[1], [0], [0], [1], [0, 0, 1, 1], [], []>} : vector<2x256xbf16>, vector<256x64xbf16>, vector<2x64xf32> -> vector<2x64xf32>
    %c0_3 = arith.constant 0 : index
    %c0_4 = arith.constant 0 : index
    %3 = vector.load %arg2[%c0_3, %c0_4] : memref<1x64xf32, #tpu.memory_space<vmem>>, vector<1x64xf32>
    %4 = vector.broadcast %3 : vector<1x64xf32> to vector<2x64xf32>
    %5 = arith.addf %2, %4 : vector<2x64xf32>
    %cst_5 = arith.constant 0.000000e+00 : f32
    %6 = vector.broadcast %cst_5 : f32 to vector<2x64xf32>
    %7 = arith.maximumf %5, %6 : vector<2x64xf32>
    %8 = arith.truncf %7 : vector<2x64xf32> to vector<2x64xbf16>
    %c0_6 = arith.constant 0 : index
    %c0_7 = arith.constant 0 : index
    %9 = vector.load %arg3[%c0_6, %c0_7] : memref<64x10xbf16, #tpu.memory_space<vmem>>, vector<64x10xbf16>
    %cst_8 = arith.constant dense<0.000000e+00> : vector<2x10xf32>
    %10 = tpu.matmul %8, %9, %cst_8 {dimension_numbers = #tpu.dot_dimension_numbers<[1], [0], [0], [1], [0, 0, 1, 1], [], []>} : vector<2x64xbf16>, vector<64x10xbf16>, vector<2x10xf32> -> vector<2x10xf32>
    %c0_9 = arith.constant 0 : index
    %c0_10 = arith.constant 0 : index
    %11 = vector.load %arg4[%c0_9, %c0_10] : memref<1x10xf32, #tpu.memory_space<vmem>>, vector<1x10xf32>
    %12 = vector.broadcast %11 : vector<1x10xf32> to vector<2x10xf32>
    %13 = arith.addf %10, %12 : vector<2x10xf32>
    %c0_11 = arith.constant 0 : index
    %c0_12 = arith.constant 0 : index
    %14 = vector.load %arg5[%c0_11, %c0_12] : memref<2x10xf32, #tpu.memory_space<vmem>>, vector<2x10xf32>
    tpu.vector_store %arg5[%c0_11, %c0_12], %13 {strides = array<i32>} : memref<2x10xf32, #tpu.memory_space<vmem>>, vector<2x10xf32>,
    return
  }
}

</mosaic_0001>

<llo_original>
// kernel: voxnet_forward.4
$region0: #{voxnet_forward.4}
  #allocation0 [shape = 'u32[]', space=smem, size = 0x4, offset = 0x4, fixed_abs, tag = 'smem constant byte address 0x4 - core index']
  #allocation1 [shape = 'u32[72,128]{1,0:T(1,128)}', space=vmem, size = 0x9000, scoped, tag = 'internal scratch']
  %s0 = inlined_call_operand.vmem [shape: bf16[432,128], index: 0, kind: input, shape index: {}]
  %s1 = inlined_call_operand.vmem [shape: bf16[128,32], index: 1, kind: input, shape index: {}]
  %s2 = inlined_call_operand.vmem [shape: f32[1,32], index: 2, kind: input, shape index: {}]
  %s3 = inlined_call_operand.vmem [shape: bf16[432,32], index: 3, kind: output, shape index: {}]
  %s4 = sld [smem:[#allocation0]]
  $region22: #{voxnet_forward.4} parent=0
    _
  %s6 = ssub.s32 1, %s4
  %s7 = scalar_select 0, %s6, %s4
  // Predicated region
  $region2: #{voxnet_forward.4} parent=0 // pred_check
    _
  $region3: #{voxnet_forward.4} parent=0 // pred_check_branch
    %9 = sbr.rel (0) target = $region5
  $region4: #{voxnet_forward.4} parent=0 // pred_region
    _
  $region5: #{voxnet_forward.4} parent=0 // pred_fallthru
    _
  // Predicated region
  $region6: #{voxnet_forward.4} parent=0 // pred_check
    _
  $region7: #{voxnet_forward.4} parent=0 // pred_check_branch
    %11 = sbr.rel (0) target = $region9
  $region8: #{voxnet_forward.4} parent=0 // pred_region
    _
  $region9: #{voxnet_forward.4} parent=0 // pred_fallthru
    _
  // Predicated region
  $region10: #{voxnet_forward.4} parent=0 // pred_check
    _
  $region11: #{voxnet_forward.4} parent=0 // pred_check_branch
    %13 = sbr.rel (0) target = $region13
  $region12: #{voxnet_forward.4} parent=0 // pred_region
    _
  $region13: #{voxnet_forward.4} parent=0 // pred_fallthru
    _
  %v14 = vld [vmem:[%s0] sm:$0xf]
  %v15 = vld [vmem:[%s0 + $0x4] sm:$0xf]
  %v16 = vld [vmem:[%s0 + $0x8] sm:$0xf]
  %v17 = vld [vmem:[%s0 + $0xc] sm:$0xf]
  %v18 = vld [vmem:[%s0 + $0x10] sm:$0xf]
  %v19 = vld [vmem:[%s0 + $0x14] sm:$0xf]
  %v20 = vld [vmem:[%s0 + $0x18] sm:$0xf]
  %v21 = vld [vmem:[%s0 + $0x1c] sm:$0xf]
  %v22 = vld [vmem:[%s0 + $0x20] sm:$0xf]
  %v23 = vld [vmem:[%s0 + $0x24] sm:$0xf]
  %v24 = vld [vmem:[%s0 + $0x28] sm:$0xf]
  %v25 = vld [vmem:[%s0 + $0x2c] sm:$0xf]
  %v26 = vld [vmem:[%s0 + $0x30] sm:$0xf]
  %v27 = vld [vmem:[%s0 + $0x34] sm:$0xf]
  %v28 = vld [vmem:[%s0 + $0x38] sm:$0xf]
  %v29 = vld [vmem:[%s0 + $0x3c] sm:$0xf]
  %v30 = vld [vmem:[%s0 + $0x40] sm:$0xf]
  %v31 = vld [vmem:[%s0 + $0x44] sm:$0xf]
  %v32 = vld [vmem:[%s0 + $0x48] sm:$0xf]
  %v33 = vld [vmem:[%s0 + $0x4c] sm:$0xf]
  %v34 = vld [vmem:[%s0 + $0x50] sm:$0xf]
  %v35 = vld [vmem:[%s0 + $0x54] sm:$0xf]
  %v36 = vld [vmem:[%s0 + $0x58] sm:$0xf]
  %v37 = vld [vmem:[%s0 + $0x5c] sm:$0xf]
  %v38 = vld [vmem:[%s0 + $0x60] sm:$0xf]
  %v39 = vld [vmem:[%s0 + $0x64] sm:$0xf]
  %v40 = vld [vmem:[%s0 + $0x68] sm:$0xf]
  %v41 = vld [vmem:[%s0 + $0x6c] sm:$0xf]
  %v42 = vld [vmem:[%s0 + $0x70] sm:$0xf]
  %v43 = vld [vmem:[%s0 + $0x74] sm:$0xf]
  %v44 = vld [vmem:[%s0 + $0x78] sm:$0xf]
  %v45 = vld [vmem:[%s0 + $0x7c] sm:$0xf]
  %v46 = vld [vmem:[%s0 + $0x80] sm:$0xf]
  %v47 = vld [vmem:[%s0 + $0x84] sm:$0xf]
  %v48 = vld [vmem:[%s0 + $0x88] sm:$0xf]
  %v49 = vld [vmem:[%s0 + $0x8c] sm:$0xf]
  %v50 = vld [vmem:[%s0 + $0x90] sm:$0xf]
  %v51 = vld [vmem:[%s0 + $0x94] sm:$0xf]
  %v52 = vld [vmem:[%s0 + $0x98] sm:$0xf]
  %v53 = vld [vmem:[%s0 + $0x9c] sm:$0xf]
  %v54 = vld [vmem:[%s0 + $0xa0] sm:$0xf]
  %v55 = vld [vmem:[%s0 + $0xa4] sm:$0xf]
  %v56 = vld [vmem:[%s0 + $0xa8] sm:$0xf]
  %v57 = vld [vmem:[%s0 + $0xac] sm:$0xf]
  %v58 = vld [vmem:[%s0 + $0xb0] sm:$0xf]
  %v59 = vld [vmem:[%s0 + $0xb4] sm:$0xf]
  %v60 = vld [vmem:[%s0 + $0xb8] sm:$0xf]
  %v61 = vld [vmem:[%s0 + $0xbc] sm:$0xf]
  %v62 = vld [vmem:[%s0 + $0xc0] sm:$0xf]
  %v63 = vld [vmem:[%s0 + $0xc4] sm:$0xf]
  %v64 = vld [vmem:[%s0 + $0xc8] sm:$0xf]
  %v65 = vld [vmem:[%s0 + $0xcc] sm:$0xf]
  %v66 = vld [vmem:[%s0 + $0xd0] sm:$0xf]
  %v67 = vld [vmem:[%s0 + $0xd4] sm:$0xf]
  %v68 = vld [vmem:[%s1] sm:$0xf]
  %v69 = vld [vmem:[%s1 + $0x4] sm:$0xf]
  %v70 = vld [vmem:[%s1 + $0x8] sm:$0xf]
  %v71 = vld [vmem:[%s1 + $0xc] sm:$0xf]
  %v72 = vld [vmem:[%s1 + $0x10] sm:$0xf]
  %v73 = vld [vmem:[%s1 + $0x14] sm:$0xf]
  %v74 = vld [vmem:[%s1 + $0x18] sm:$0xf]
  %v75 = vld [vmem:[%s1 + $0x1c] sm:$0xf]
  %v76 = vld [vmem:[%s1 + $0x20] sm:$0xf]
  %v77 = vld [vmem:[%s1 + $0x24] sm:$0xf]
  %v78 = vld [vmem:[%s1 + $0x28] sm:$0xf]
  %v79 = vld [vmem:[%s1 + $0x2c] sm:$0xf]
  %v80 = vld [vmem:[%s1 + $0x30] sm:$0xf]
  %v81 = vld [vmem:[%s1 + $0x34] sm:$0xf]
  %v82 = vld [vmem:[%s1 + $0x38] sm:$0xf]
  %v83 = vld [vmem:[%s1 + $0x3c] sm:$0xf]
  %v84 = vld [vmem:[%s2] sm:$0x1]
  %v86 = vperm.slane %v84, 0
  %v142 = vunpack.c.l.b16 %v14
  %v143 = vunpack.c.l.b16 %v15
  %v144 = vunpack.c.l.b16 %v16
  %v145 = vunpack.c.l.b16 %v17
  %v146 = vunpack.c.l.b16 %v18
  %v147 = vunpack.c.l.b16 %v19
  %v148 = vunpack.c.l.b16 %v20
  %v149 = vunpack.c.l.b16 %v21
  %v150 = vunpack.c.l.b16 %v22
  %v151 = vunpack.c.l.b16 %v23
  %v152 = vunpack.c.l.b16 %v24
  %v153 = vunpack.c.l.b16 %v25
  %v154 = vunpack.c.l.b16 %v26
  %v155 = vunpack.c.l.b16 %v27
  %v156 = vunpack.c.l.b16 %v28
  %v157 = vunpack.c.l.b16 %v29
  %v158 = vunpack.c.l.b16 %v30
  %v159 = vunpack.c.l.b16 %v31
  %v160 = vunpack.c.l.b16 %v32
  %v161 = vunpack.c.l.b16 %v33
  %v162 = vunpack.c.l.b16 %v34
  %v163 = vunpack.c.l.b16 %v35
  %v164 = vunpack.c.l.b16 %v36
  %v165 = vunpack.c.l.b16 %v37
  %v166 = vunpack.c.l.b16 %v38
  %v167 = vunpack.c.l.b16 %v39
  %v168 = vunpack.c.l.b16 %v40
  %v169 = vunpack.c.l.b16 %v41
  %v170 = vunpack.c.l.b16 %v42
  %v171 = vunpack.c.l.b16 %v43
  %v172 = vunpack.c.l.b16 %v44
  %v173 = vunpack.c.l.b16 %v45
  %v174 = vunpack.c.l.b16 %v46
  %v175 = vunpack.c.l.b16 %v47
  %v176 = vunpack.c.l.b16 %v48
  %v177 = vunpack.c.l.b16 %v49
  %v178 = vunpack.c.l.b16 %v50
  %v179 = vunpack.c.l.b16 %v51
  %v180 = vunpack.c.l.b16 %v52
  %v181 = vunpack.c.l.b16 %v53
  %v182 = vunpack.c.l.b16 %v54
  %v183 = vunpack.c.l.b16 %v55
  %v184 = vunpack.c.l.b16 %v56
  %v185 = vunpack.c.l.b16 %v57
  %v186 = vunpack.c.l.b16 %v58
  %v187 = vunpack.c.l.b16 %v59
  %v188 = vunpack.c.l.b16 %v60
  %v189 = vunpack.c.l.b16 %v61
  %v190 = vunpack.c.l.b16 %v62
  %v191 = vunpack.c.l.b16 %v63
  %v192 = vunpack.c.l.b16 %v64
  %v193 = vunpack.c.l.b16 %v65
  %v194 = vunpack.c.l.b16 %v66
  %v195 = vunpack.c.l.b16 %v67
  %v196 = vpack.c.b16 %v143, %v142
  %v197 = vpack.c.b16 %v145, %v144
  %v198 = vpack.c.b16 %v147, %v146
  %v199 = vpack.c.b16 %v149, %v148
  %v200 = vpack.c.b16 %v151, %v150
  %v201 = vpack.c.b16 %v153, %v152
  %v202 = vpack.c.b16 %v155, %v154
  %v203 = vpack.c.b16 %v157, %v156
  %v204 = vpack.c.b16 %v159, %v158
  %v205 = vpack.c.b16 %v161, %v160
  %v206 = vpack.c.b16 %v163, %v162
  %v207 = vpack.c.b16 %v165, %v164
  %v208 = vpack.c.b16 %v167, %v166
  %v209 = vpack.c.b16 %v169, %v168
  %v210 = vpack.c.b16 %v171, %v170
  %v211 = vpack.c.b16 %v173, %v172
  %v212 = vpack.c.b16 %v175, %v174
  %v213 = vpack.c.b16 %v177, %v176
  %v214 = vpack.c.b16 %v179, %v178
  %v215 = vpack.c.b16 %v181, %v180
  %v216 = vpack.c.b16 %v183, %v182
  %v217 = vpack.c.b16 %v185, %v184
  %v218 = vpack.c.b16 %v187, %v186
  %v219 = vpack.c.b16 %v189, %v188
  %v220 = vpack.c.b16 %v191, %v190
  %v221 = vpack.c.b16 %v193, %v192
  %v222 = vpack.c.b16 %v195, %v194
  %v266 = vunpack.c.l.b16 %v68
  %v267 = vunpack.c.l.b16 %v69
  %v268 = vunpack.c.l.b16 %v70
  %v269 = vunpack.c.l.b16 %v71
  %v270 = vunpack.c.l.b16 %v72
  %v271 = vunpack.c.l.b16 %v73
  %v272 = vunpack.c.l.b16 %v74
  %v273 = vunpack.c.l.b16 %v75
  %v274 = vunpack.c.l.b16 %v76
  %v275 = vunpack.c.l.b16 %v77
  %v276 = vunpack.c.l.b16 %v78
  %v277 = vunpack.c.l.b16 %v79
  %v278 = vunpack.c.l.b16 %v80
  %v279 = vunpack.c.l.b16 %v81
  %v280 = vunpack.c.l.b16 %v82
  %v281 = vunpack.c.l.b16 %v83
  %v282 = vpack.c.b16 %v267, %v266
  %v283 = vpack.c.b16 %v269, %v268
  %v284 = vpack.c.b16 %v271, %v270
  %v285 = vpack.c.b16 %v273, %v272
  %v286 = vpack.c.b16 %v275, %v274
  %v287 = vpack.c.b16 %v277, %v276
  %v288 = vpack.c.b16 %v279, %v278
  %v289 = vpack.c.b16 %v281, %v280
  %298 = vmatpush.bf16.msra.mxu0 %v289
  %299 = vmatpush.bf16.msra.mxu0 %v288
  %300 = vmatpush.bf16.msra.mxu0 %v287
  %301 = vmatpush.bf16.msra.mxu0 %v286
  %302 = vmatpush.bf16.msra.mxu0 %v285
  %303 = vmatpush.bf16.msra.mxu0 %v284
  %304 = vmatpush.bf16.msra.mxu0 %v283
  %305 = vmatpush.bf16.msra.mxu0 %v282
  %306 = vmatmul.bf16.gmra.mxu0 %v196
  %v307 = vpop.f32.mrf.mxu0
  %v308 = vadd.f32 %v86, %v307
  %v309 = vpop.f32.mrf.mxu0
  %v310 = vadd.f32 %v86, %v309
  %311 = vmatmul.bf16.gmra.mxu0 %v197
  %v312 = vpop.f32.mrf.mxu0
  %v313 = vadd.f32 %v86, %v312
  %v314 = vpop.f32.mrf.mxu0
  %v315 = vadd.f32 %v86, %v314
  %316 = vmatmul.bf16.gmra.mxu0 %v198
  %v317 = vpop.f32.mrf.mxu0
  %v318 = vadd.f32 %v86, %v317
  %v319 = vpop.f32.mrf.mxu0
  %v320 = vadd.f32 %v86, %v319
  %321 = vmatmul.bf16.gmra.mxu0 %v199
  %v322 = vpop.f32.mrf.mxu0
  %v323 = vadd.f32 %v86, %v322
  %v324 = vpop.f32.mrf.mxu0
  %v325 = vadd.f32 %v86, %v324
  %326 = vmatmul.bf16.gmra.mxu0 %v200
  %v327 = vpop.f32.mrf.mxu0
  %v328 = vadd.f32 %v86, %v327
  %v329 = vpop.f32.mrf.mxu0
  %v330 = vadd.f32 %v86, %v329
  %331 = vmatmul.bf16.gmra.mxu0 %v201
  %v332 = vpop.f32.mrf.mxu0
  %v333 = vadd.f32 %v86, %v332
  %v334 = vpop.f32.mrf.mxu0
  %v335 = vadd.f32 %v86, %v334
  %336 = vmatmul.bf16.gmra.mxu0 %v202
  %v337 = vpop.f32.mrf.mxu0
  %v338 = vadd.f32 %v86, %v337
  %v339 = vpop.f32.mrf.mxu0
  %v340 = vadd.f32 %v86, %v339
  %341 = vmatmul.bf16.gmra.mxu0 %v203
  %v342 = vpop.f32.mrf.mxu0
  %v343 = vadd.f32 %v86, %v342
  %v344 = vpop.f32.mrf.mxu0
  %v345 = vadd.f32 %v86, %v344
  %346 = vmatmul.bf16.gmra.mxu0 %v204
  %v347 = vpop.f32.mrf.mxu0
  %v348 = vadd.f32 %v86, %v347
  %v349 = vpop.f32.mrf.mxu0
  %v350 = vadd.f32 %v86, %v349
  %351 = vmatmul.bf16.gmra.mxu0 %v205
  %v352 = vpop.f32.mrf.mxu0
  %v353 = vadd.f32 %v86, %v352
  %v354 = vpop.f32.mrf.mxu0
  %v355 = vadd.f32 %v86, %v354
  %356 = vmatmul.bf16.gmra.mxu0 %v206
  %v357 = vpop.f32.mrf.mxu0
  %v358 = vadd.f32 %v86, %v357
  %v359 = vpop.f32.mrf.mxu0
  %v360 = vadd.f32 %v86, %v359
  %361 = vmatmul.bf16.gmra.mxu0 %v207
  %v362 = vpop.f32.mrf.mxu0
  %v363 = vadd.f32 %v86, %v362
  %v364 = vpop.f32.mrf.mxu0
  %v365 = vadd.f32 %v86, %v364
  %366 = vmatmul.bf16.gmra.mxu0 %v208
  %v367 = vpop.f32.mrf.mxu0
  %v368 = vadd.f32 %v86, %v367
  %v369 = vpop.f32.mrf.mxu0
  %v370 = vadd.f32 %v86, %v369
  %371 = vmatmul.bf16.gmra.mxu0 %v209
  %v372 = vpop.f32.mrf.mxu0
  %v373 = vadd.f32 %v86, %v372
  %v374 = vpop.f32.mrf.mxu0
  %v375 = vadd.f32 %v86, %v374
  %376 = vmatmul.bf16.gmra.mxu0 %v210
  %v377 = vpop.f32.mrf.mxu0
  %v378 = vadd.f32 %v86, %v377
  %v379 = vpop.f32.mrf.mxu0
  %v380 = vadd.f32 %v86, %v379
  %381 = vmatmul.bf16.gmra.mxu0 %v211
  %v382 = vpop.f32.mrf.mxu0
  %v383 = vadd.f32 %v86, %v382
  %v384 = vpop.f32.mrf.mxu0
  %v385 = vadd.f32 %v86, %v384
  %386 = vmatmul.bf16.gmra.mxu0 %v212
  %v387 = vpop.f32.mrf.mxu0
  %v388 = vadd.f32 %v86, %v387
  %v389 = vpop.f32.mrf.mxu0
  %v390 = vadd.f32 %v86, %v389
  %391 = vmatmul.bf16.gmra.mxu0 %v213
  %v392 = vpop.f32.mrf.mxu0
  %v393 = vadd.f32 %v86, %v392
  %v394 = vpop.f32.mrf.mxu0
  %v395 = vadd.f32 %v86, %v394
  %396 = vmatmul.bf16.gmra.mxu0 %v214
  %v397 = vpop.f32.mrf.mxu0
  %v398 = vadd.f32 %v86, %v397
  %v399 = vpop.f32.mrf.mxu0
  %v400 = vadd.f32 %v86, %v399
  %401 = vmatmul.bf16.gmra.mxu0 %v215
  %v402 = vpop.f32.mrf.mxu0
  %v403 = vadd.f32 %v86, %v402
  %v404 = vpop.f32.mrf.mxu0
  %v405 = vadd.f32 %v86, %v404
  %406 = vmatmul.bf16.gmra.mxu0 %v216
  %v407 = vpop.f32.mrf.mxu0
  %v408 = vadd.f32 %v86, %v407
  %v409 = vpop.f32.mrf.mxu0
  %v410 = vadd.f32 %v86, %v409
  %411 = vmatmul.bf16.gmra.mxu0 %v217
  %v412 = vpop.f32.mrf.mxu0
  %v413 = vadd.f32 %v86, %v412
  %v414 = vpop.f32.mrf.mxu0
  %v415 = vadd.f32 %v86, %v414
  %416 = vmatmul.bf16.gmra.mxu0 %v218
  %v417 = vpop.f32.mrf.mxu0
  %v418 = vadd.f32 %v86, %v417
  %v419 = vpop.f32.mrf.mxu0
  %v420 = vadd.f32 %v86, %v419
  %421 = vmatmul.bf16.gmra.mxu0 %v219
  %v422 = vpop.f32.mrf.mxu0
  %v423 = vadd.f32 %v86, %v422
  %v424 = vpop.f32.mrf.mxu0
  %v425 = vadd.f32 %v86, %v424
  %426 = vmatmul.bf16.gmra.mxu0 %v220
  %v427 = vpop.f32.mrf.mxu0
  %v428 = vadd.f32 %v86, %v427
  %v429 = vpop.f32.mrf.mxu0
  %v430 = vadd.f32 %v86, %v429
  %431 = vmatmul.bf16.gmra.mxu0 %v221
  %v432 = vpop.f32.mrf.mxu0
  %v433 = vadd.f32 %v86, %v432
  %v434 = vpop.f32.mrf.mxu0
  %v435 = vadd.f32 %v86, %v434
  %436 = vmatmul.bf16.gmra.mxu0 %v222
  %v437 = vpop.f32.mrf.mxu0
  %v438 = vadd.f32 %v86, %v437
  %v439 = vpop.f32.mrf.mxu0
  %v440 = vadd.f32 %v86, %v439
  %441 = vdwg.mxu0
  %vm442 = vcmp.gt.f32.partialorder %v308, 0.0
  %vm443 = vcmp.gt.f32.partialorder %v310, 0.0
  %vm444 = vcmp.gt.f32.partialorder %v313, 0.0
  %vm445 = vcmp.gt.f32.partialorder %v315, 0.0
  %vm446 = vcmp.gt.f32.partialorder %v318, 0.0
  %vm447 = vcmp.gt.f32.partialorder %v320, 0.0
  %vm448 = vcmp.gt.f32.partialorder %v323, 0.0
  %vm449 = vcmp.gt.f32.partialorder %v325, 0.0
  %vm450 = vcmp.gt.f32.partialorder %v328, 0.0
  %vm451 = vcmp.gt.f32.partialorder %v330, 0.0
  %vm452 = vcmp.gt.f32.partialorder %v333, 0.0
  %vm453 = vcmp.gt.f32.partialorder %v335, 0.0
  %vm454 = vcmp.gt.f32.partialorder %v338, 0.0
  %vm455 = vcmp.gt.f32.partialorder %v340, 0.0
  %vm456 = vcmp.gt.f32.partialorder %v343, 0.0
  %vm457 = vcmp.gt.f32.partialorder %v345, 0.0
  %vm458 = vcmp.gt.f32.partialorder %v348, 0.0
  %vm459 = vcmp.gt.f32.partialorder %v350, 0.0
  %vm460 = vcmp.gt.f32.partialorder %v353, 0.0
  %vm461 = vcmp.gt.f32.partialorder %v355, 0.0
  %vm462 = vcmp.gt.f32.partialorder %v358, 0.0
  %vm463 = vcmp.gt.f32.partialorder %v360, 0.0
  %vm464 = vcmp.gt.f32.partialorder %v363, 0.0
  %vm465 = vcmp.gt.f32.partialorder %v365, 0.0
  %vm466 = vcmp.gt.f32.partialorder %v368, 0.0
  %vm467 = vcmp.gt.f32.partialorder %v370, 0.0
  %vm468 = vcmp.gt.f32.partialorder %v373, 0.0
  %vm469 = vcmp.gt.f32.partialorder %v375, 0.0
  %vm470 = vcmp.gt.f32.partialorder %v378, 0.0
  %vm471 = vcmp.gt.f32.partialorder %v380, 0.0
  %vm472 = vcmp.gt.f32.partialorder %v383, 0.0
  %vm473 = vcmp.gt.f32.partialorder %v385, 0.0
  %vm474 = vcmp.gt.f32.partialorder %v388, 0.0
  %vm475 = vcmp.gt.f32.partialorder %v390, 0.0
  %vm476 = vcmp.gt.f32.partialorder %v393, 0.0
  %vm477 = vcmp.gt.f32.partialorder %v395, 0.0
  %vm478 = vcmp.gt.f32.partialorder %v398, 0.0
  %vm479 = vcmp.gt.f32.partialorder %v400, 0.0
  %vm480 = vcmp.gt.f32.partialorder %v403, 0.0
  %vm481 = vcmp.gt.f32.partialorder %v405, 0.0
  %vm482 = vcmp.gt.f32.partialorder %v408, 0.0
  %vm483 = vcmp.gt.f32.partialorder %v410, 0.0
  %vm484 = vcmp.gt.f32.partialorder %v413, 0.0
  %vm485 = vcmp.gt.f32.partialorder %v415, 0.0
  %vm486 = vcmp.gt.f32.partialorder %v418, 0.0
  %vm487 = vcmp.gt.f32.partialorder %v420, 0.0
  %vm488 = vcmp.gt.f32.partialorder %v423, 0.0
  %vm489 = vcmp.gt.f32.partialorder %v425, 0.0
  %vm490 = vcmp.gt.f32.partialorder %v428, 0.0
  %vm491 = vcmp.gt.f32.partialorder %v430, 0.0
  %vm492 = vcmp.gt.f32.partialorder %v433, 0.0
  %vm493 = vcmp.gt.f32.partialorder %v435, 0.0
  %vm494 = vcmp.gt.f32.partialorder %v438, 0.0
  %vm495 = vcmp.gt.f32.partialorder %v440, 0.0
  %v496 = vmul.f32 %v308, 0.01
  %v497 = vmul.f32 %v310, 0.01
  %v498 = vmul.f32 %v313, 0.01
  %v499 = vmul.f32 %v315, 0.01
  %v500 = vmul.f32 %v318, 0.01
  %v501 = vmul.f32 %v320, 0.01
  %v502 = vmul.f32 %v323, 0.01
  %v503 = vmul.f32 %v325, 0.01
  %v504 = vmul.f32 %v328, 0.01
  %v505 = vmul.f32 %v330, 0.01
  %v506 = vmul.f32 %v333, 0.01
  %v507 = vmul.f32 %v335, 0.01
  %v508 = vmul.f32 %v338, 0.01
  %v509 = vmul.f32 %v340, 0.01
  %v510 = vmul.f32 %v343, 0.01
  %v511 = vmul.f32 %v345, 0.01
  %v512 = vmul.f32 %v348, 0.01
  %v513 = vmul.f32 %v350, 0.01
  %v514 = vmul.f32 %v353, 0.01
  %v515 = vmul.f32 %v355, 0.01
  %v516 = vmul.f32 %v358, 0.01
  %v517 = vmul.f32 %v360, 0.01
  %v518 = vmul.f32 %v363, 0.01
  %v519 = vmul.f32 %v365, 0.01
  %v520 = vmul.f32 %v368, 0.01
  %v521 = vmul.f32 %v370, 0.01
  %v522 = vmul.f32 %v373, 0.01
  %v523 = vmul.f32 %v375, 0.01
  %v524 = vmul.f32 %v378, 0.01
  %v525 = vmul.f32 %v380, 0.01
  %v526 = vmul.f32 %v383, 0.01
  %v527 = vmul.f32 %v385, 0.01
  %v528 = vmul.f32 %v388, 0.01
  %v529 = vmul.f32 %v390, 0.01
  %v530 = vmul.f32 %v393, 0.01
  %v531 = vmul.f32 %v395, 0.01
  %v532 = vmul.f32 %v398, 0.01
  %v533 = vmul.f32 %v400, 0.01
  %v534 = vmul.f32 %v403, 0.01
  %v535 = vmul.f32 %v405, 0.01
  %v536 = vmul.f32 %v408, 0.01
  %v537 = vmul.f32 %v410, 0.01
  %v538 = vmul.f32 %v413, 0.01
  %v539 = vmul.f32 %v415, 0.01
  %v540 = vmul.f32 %v418, 0.01
  %v541 = vmul.f32 %v420, 0.01
  %v542 = vmul.f32 %v423, 0.01
  %v543 = vmul.f32 %v425, 0.01
  %v544 = vmul.f32 %v428, 0.01
  %v545 = vmul.f32 %v430, 0.01
  %v546 = vmul.f32 %v433, 0.01
  %v547 = vmul.f32 %v435, 0.01
  %v548 = vmul.f32 %v438, 0.01
  %v549 = vmul.f32 %v440, 0.01
  %v550 = vsel %vm442, %v308, %v496
  %v551 = vsel %vm443, %v310, %v497
  %v552 = vsel %vm444, %v313, %v498
  %v553 = vsel %vm445, %v315, %v499
  %v554 = vsel %vm446, %v318, %v500
  %v555 = vsel %vm447, %v320, %v501
  %v556 = vsel %vm448, %v323, %v502
  %v557 = vsel %vm449, %v325, %v503
  %v558 = vsel %vm450, %v328, %v504
  %v559 = vsel %vm451, %v330, %v505
  %v560 = vsel %vm452, %v333, %v506
  %v561 = vsel %vm453, %v335, %v507
  %v562 = vsel %vm454, %v338, %v508
  %v563 = vsel %vm455, %v340, %v509
  %v564 = vsel %vm456, %v343, %v510
  %v565 = vsel %vm457, %v345, %v511
  %v566 = vsel %vm458, %v348, %v512
  %v567 = vsel %vm459, %v350, %v513
  %v568 = vsel %vm460, %v353, %v514
  %v569 = vsel %vm461, %v355, %v515
  %v570 = vsel %vm462, %v358, %v516
  %v571 = vsel %vm463, %v360, %v517
  %v572 = vsel %vm464, %v363, %v518
  %v573 = vsel %vm465, %v365, %v519
  %v574 = vsel %vm466, %v368, %v520
  %v575 = vsel %vm467, %v370, %v521
  %v576 = vsel %vm468, %v373, %v522
  %v577 = vsel %vm469, %v375, %v523
  %v578 = vsel %vm470, %v378, %v524
  %v579 = vsel %vm471, %v380, %v525
  %v580 = vsel %vm472, %v383, %v526
  %v581 = vsel %vm473, %v385, %v527
  %v582 = vsel %vm474, %v388, %v528
  %v583 = vsel %vm475, %v390, %v529
  %v584 = vsel %vm476, %v393, %v530
  %v585 = vsel %vm477, %v395, %v531
  %v586 = vsel %vm478, %v398, %v532
  %v587 = vsel %vm479, %v400, %v533
  %v588 = vsel %vm480, %v403, %v534
  %v589 = vsel %vm481, %v405, %v535
  %v590 = vsel %vm482, %v408, %v536
  %v591 = vsel %vm483, %v410, %v537
  %v592 = vsel %vm484, %v413, %v538
  %v593 = vsel %vm485, %v415, %v539
  %v594 = vsel %vm486, %v418, %v540
  %v595 = vsel %vm487, %v420, %v541
  %v596 = vsel %vm488, %v423, %v542
  %v597 = vsel %vm489, %v425, %v543
  %v598 = vsel %vm490, %v428, %v544
  %v599 = vsel %vm491, %v430, %v545
  %v600 = vsel %vm492, %v433, %v546
  %v601 = vsel %vm493, %v435, %v547
  %v602 = vsel %vm494, %v438, %v548
  %v603 = vsel %vm495, %v440, %v549
  %v604 = vpack.c.bf16 %v550, %v550
  %v605 = vpack.c.bf16 %v551, %v551
  %v606 = vpack.c.bf16 %v552, %v552
  %v607 = vpack.c.bf16 %v553, %v553
  %v608 = vpack.c.bf16 %v554, %v554
  %v609 = vpack.c.bf16 %v555, %v555
  %v610 = vpack.c.bf16 %v556, %v556
  %v611 = vpack.c.bf16 %v557, %v557
  %v612 = vpack.c.bf16 %v558, %v558
  %v613 = vpack.c.bf16 %v559, %v559
  %v614 = vpack.c.bf16 %v560, %v560
  %v615 = vpack.c.bf16 %v561, %v561
  %v616 = vpack.c.bf16 %v562, %v562
  %v617 = vpack.c.bf16 %v563, %v563
  %v618 = vpack.c.bf16 %v564, %v564
  %v619 = vpack.c.bf16 %v565, %v565
  %v620 = vpack.c.bf16 %v566, %v566
  %v621 = vpack.c.bf16 %v567, %v567
  %v622 = vpack.c.bf16 %v568, %v568
  %v623 = vpack.c.bf16 %v569, %v569
  %v624 = vpack.c.bf16 %v570, %v570
  %v625 = vpack.c.bf16 %v571, %v571
  %v626 = vpack.c.bf16 %v572, %v572
  %v627 = vpack.c.bf16 %v573, %v573
  %v628 = vpack.c.bf16 %v574, %v574
  %v629 = vpack.c.bf16 %v575, %v575
  %v630 = vpack.c.bf16 %v576, %v576
  %v631 = vpack.c.bf16 %v577, %v577
  %v632 = vpack.c.bf16 %v578, %v578
  %v633 = vpack.c.bf16 %v579, %v579
  %v634 = vpack.c.bf16 %v580, %v580
  %v635 = vpack.c.bf16 %v581, %v581
  %v636 = vpack.c.bf16 %v582, %v582
  %v637 = vpack.c.bf16 %v583, %v583
  %v638 = vpack.c.bf16 %v584, %v584
  %v639 = vpack.c.bf16 %v585, %v585
  %v640 = vpack.c.bf16 %v586, %v586
  %v641 = vpack.c.bf16 %v587, %v587
  %v642 = vpack.c.bf16 %v588, %v588
  %v643 = vpack.c.bf16 %v589, %v589
  %v644 = vpack.c.bf16 %v590, %v590
  %v645 = vpack.c.bf16 %v591, %v591
  %v646 = vpack.c.bf16 %v592, %v592
  %v647 = vpack.c.bf16 %v593, %v593
  %v648 = vpack.c.bf16 %v594, %v594
  %v649 = vpack.c.bf16 %v595, %v595
  %v650 = vpack.c.bf16 %v596, %v596
  %v651 = vpack.c.bf16 %v597, %v597
  %v652 = vpack.c.bf16 %v598, %v598
  %v653 = vpack.c.bf16 %v599, %v599
  %v654 = vpack.c.bf16 %v600, %v600
  %v655 = vpack.c.bf16 %v601, %v601
  %v656 = vpack.c.bf16 %v602, %v602
  %v657 = vpack.c.bf16 %v603, %v603
  %vm658 = vcmask 257024
  %659 = vst.msk [vmem:[%s3] sm:$0xf] %vm658, %v604
  %660 = vst.msk [vmem:[%s3 + $0x4] sm:$0xf] %vm658, %v605
  %661 = vst.msk [vmem:[%s3 + $0x8] sm:$0xf] %vm658, %v606
  %662 = vst.msk [vmem:[%s3 + $0xc] sm:$0xf] %vm658, %v607
  %663 = vst.msk [vmem:[%s3 + $0x10] sm:$0xf] %vm658, %v608
  %664 = vst.msk [vmem:[%s3 + $0x14] sm:$0xf] %vm658, %v609
  %665 = vst.msk [vmem:[%s3 + $0x18] sm:$0xf] %vm658, %v610
  %666 = vst.msk [vmem:[%s3 + $0x1c] sm:$0xf] %vm658, %v611
  %667 = vst.msk [vmem:[%s3 + $0x20] sm:$0xf] %vm658, %v612
  %668 = vst.msk [vmem:[%s3 + $0x24] sm:$0xf] %vm658, %v613
  %669 = vst.msk [vmem:[%s3 + $0x28] sm:$0xf] %vm658, %v614
  %670 = vst.msk [vmem:[%s3 + $0x2c] sm:$0xf] %vm658, %v615
  %671 = vst.msk [vmem:[%s3 + $0x30] sm:$0xf] %vm658, %v616
  %672 = vst.msk [vmem:[%s3 + $0x34] sm:$0xf] %vm658, %v617
  %673 = vst.msk [vmem:[%s3 + $0x38] sm:$0xf] %vm658, %v618
  %674 = vst.msk [vmem:[%s3 + $0x3c] sm:$0xf] %vm658, %v619
  %675 = vst.msk [vmem:[%s3 + $0x40] sm:$0xf] %vm658, %v620
  %676 = vst.msk [vmem:[%s3 + $0x44] sm:$0xf] %vm658, %v621
  %677 = vst.msk [vmem:[%s3 + $0x48] sm:$0xf] %vm658, %v622
  %678 = vst.msk [vmem:[%s3 + $0x4c] sm:$0xf] %vm658, %v623
  %679 = vst.msk [vmem:[%s3 + $0x50] sm:$0xf] %vm658, %v624
  %680 = vst.msk [vmem:[%s3 + $0x54] sm:$0xf] %vm658, %v625
  %681 = vst.msk [vmem:[%s3 + $0x58] sm:$0xf] %vm658, %v626
  %682 = vst.msk [vmem:[%s3 + $0x5c] sm:$0xf] %vm658, %v627
  %683 = vst.msk [vmem:[%s3 + $0x60] sm:$0xf] %vm658, %v628
  %684 = vst.msk [vmem:[%s3 + $0x64] sm:$0xf] %vm658, %v629
  %685 = vst.msk [vmem:[%s3 + $0x68] sm:$0xf] %vm658, %v630
  %686 = vst.msk [vmem:[%s3 + $0x6c] sm:$0xf] %vm658, %v631
  %687 = vst.msk [vmem:[%s3 + $0x70] sm:$0xf] %vm658, %v632
  %688 = vst.msk [vmem:[%s3 + $0x74] sm:$0xf] %vm658, %v633
  %689 = vst.msk [vmem:[%s3 + $0x78] sm:$0xf] %vm658, %v634
  %690 = vst.msk [vmem:[%s3 + $0x7c] sm:$0xf] %vm658, %v635
  %691 = vst.msk [vmem:[%s3 + $0x80] sm:$0xf] %vm658, %v636
  %692 = vst.msk [vmem:[%s3 + $0x84] sm:$0xf] %vm658, %v637
  %693 = vst.msk [vmem:[%s3 + $0x88] sm:$0xf] %vm658, %v638
  %694 = vst.msk [vmem:[%s3 + $0x8c] sm:$0xf] %vm658, %v639
  %695 = vst.msk [vmem:[%s3 + $0x90] sm:$0xf] %vm658, %v640
  %696 = vst.msk [vmem:[%s3 + $0x94] sm:$0xf] %vm658, %v641
  %697 = vst.msk [vmem:[%s3 + $0x98] sm:$0xf] %vm658, %v642
  %698 = vst.msk [vmem:[%s3 + $0x9c] sm:$0xf] %vm658, %v643
  %699 = vst.msk [vmem:[%s3 + $0xa0] sm:$0xf] %vm658, %v644
  %700 = vst.msk [vmem:[%s3 + $0xa4] sm:$0xf] %vm658, %v645
  %701 = vst.msk [vmem:[%s3 + $0xa8] sm:$0xf] %vm658, %v646
  %702 = vst.msk [vmem:[%s3 + $0xac] sm:$0xf] %vm658, %v647
  %703 = vst.msk [vmem:[%s3 + $0xb0] sm:$0xf] %vm658, %v648
  %704 = vst.msk [vmem:[%s3 + $0xb4] sm:$0xf] %vm658, %v649
  %705 = vst.msk [vmem:[%s3 + $0xb8] sm:$0xf] %vm658, %v650
  %706 = vst.msk [vmem:[%s3 + $0xbc] sm:$0xf] %vm658, %v651
  %707 = vst.msk [vmem:[%s3 + $0xc0] sm:$0xf] %vm658, %v652
  %708 = vst.msk [vmem:[%s3 + $0xc4] sm:$0xf] %vm658, %v653
  %709 = vst.msk [vmem:[%s3 + $0xc8] sm:$0xf] %vm658, %v654
  %710 = vst.msk [vmem:[%s3 + $0xcc] sm:$0xf] %vm658, %v655
  %711 = vst.msk [vmem:[%s3 + $0xd0] sm:$0xf] %vm658, %v656
  %712 = vst.msk [vmem:[%s3 + $0xd4] sm:$0xf] %vm658, %v657
  // Predicated region
  $region14: #{voxnet_forward.4} parent=0 // pred_check
    _
  $region15: #{voxnet_forward.4} parent=0 // pred_check_branch
    %714 = sbr.rel (0) target = $region17
  $region16: #{voxnet_forward.4} parent=0 // pred_region
    _
  $region17: #{voxnet_forward.4} parent=0 // pred_fallthru
    _
  // Predicated region
  $region18: #{voxnet_forward.4} parent=0 // pred_check
    _
  $region19: #{voxnet_forward.4} parent=0 // pred_check_branch
    %716 = sbr.rel (0) target = $region21
  $region20: #{voxnet_forward.4} parent=0 // pred_region
    _
  $region21: #{voxnet_forward.4} parent=0 // pred_fallthru
    _

// kernel: voxnet_forward.7
$region0: #{voxnet_forward.7}
  #allocation0 [shape = 'u32[]', space=smem, size = 0x4, offset = 0x4, fixed_abs, tag = 'smem constant byte address 0x4 - core index']
  #allocation1 [shape = 'u32[72,128]{1,0:T(1,128)}', space=vmem, size = 0x9000, scoped, tag = 'internal scratch']
  %s0 = inlined_call_operand.vmem [shape: bf16[2,256], index: 0, kind: input, shape index: {}]
  %s1 = inlined_call_operand.vmem [shape: bf16[256,64], index: 1, kind: input, shape index: {}]
  %s2 = inlined_call_operand.vmem [shape: f32[1,64], index: 2, kind: input, shape index: {}]
  %s3 = inlined_call_operand.vmem [shape: bf16[64,10], index: 3, kind: input, shape index: {}]
  %s4 = inlined_call_operand.vmem [shape: f32[1,10], index: 4, kind: input, shape index: {}]
  %s5 = inlined_call_operand.hbm [shape: f32[2,10], index: 5, kind: output, shape index: {}]
  %s6 = sld [smem:[#allocation0]]
  $region30: #{voxnet_forward.7} parent=0
    _
  %s8 = ssub.s32 1, %s6
  %s9 = scalar_select 0, %s8, %s6
  $region1: #{voxnet_forward.7} parent=0
    #allocation2 [shape = 'u8[1024]{0}', space=vmem, size = 0x400, scoped, tag = 'output window, operand 0, single buffered']
    #allocation3 [shape = 's32[1]{0}', space=sflag, size = 0x4, scoped, tag = 'scoped memory for voxnet_forward.7']
    %10 = vsyncpa [#allocation3], 0
    // Predicated region
    $region2: #{voxnet_forward.7} parent=1 // pred_check
      _
    $region3: #{voxnet_forward.7} parent=1 // pred_check_branch
      %12 = sbr.rel (0) target = $region5
    $region4: #{voxnet_forward.7} parent=1 // pred_region
      _
    $region5: #{voxnet_forward.7} parent=1 // pred_fallthru
      _
    // Predicated region
    $region6: #{voxnet_forward.7} parent=1 // pred_check
      _
    $region7: #{voxnet_forward.7} parent=1 // pred_check_branch
      %14 = sbr.rel (0) target = $region9
    $region8: #{voxnet_forward.7} parent=1 // pred_region
      _
    $region9: #{voxnet_forward.7} parent=1 // pred_fallthru
      _
    // Predicated region
    $region10: #{voxnet_forward.7} parent=1 // pred_check
      _
    $region11: #{voxnet_forward.7} parent=1 // pred_check_branch
      %16 = sbr.rel (0) target = $region13
    $region12: #{voxnet_forward.7} parent=1 // pred_region
      _
    $region13: #{voxnet_forward.7} parent=1 // pred_fallthru
      _
    // Predicated region
    $region14: #{voxnet_forward.7} parent=1 // pred_check
      _
    $region15: #{voxnet_forward.7} parent=1 // pred_check_branch
      %18 = sbr.rel (0) target = $region17
    $region16: #{voxnet_forward.7} parent=1 // pred_region
      _
    $region17: #{voxnet_forward.7} parent=1 // pred_fallthru
      _
    // Predicated region
    $region18: #{voxnet_forward.7} parent=1 // pred_check
      _
    $region19: #{voxnet_forward.7} parent=1 // pred_check_branch
      %20 = sbr.rel (0) target = $region21
    $region20: #{voxnet_forward.7} parent=1 // pred_region
      _
    $region21: #{voxnet_forward.7} parent=1 // pred_fallthru
      _
    %v22 = vld [vmem:[%s0] sm:$0x3]
    %v23 = vld [vmem:[%s1] sm:$0xf]
    %v24 = vld [vmem:[%s1 + $0x4] sm:$0xf]
    %v25 = vld [vmem:[%s1 + $0x8] sm:$0xf]
    %v26 = vld [vmem:[%s1 + $0xc] sm:$0xf]
    %v27 = vld [vmem:[%s1 + $0x10] sm:$0xf]
    %v28 = vld [vmem:[%s1 + $0x14] sm:$0xf]
    %v29 = vld [vmem:[%s1 + $0x18] sm:$0xf]
    %v30 = vld [vmem:[%s1 + $0x1c] sm:$0xf]
    %v31 = vld [vmem:[%s1 + $0x20] sm:$0xf]
    %v32 = vld [vmem:[%s1 + $0x24] sm:$0xf]
    %v33 = vld [vmem:[%s1 + $0x28] sm:$0xf]
    %v34 = vld [vmem:[%s1 + $0x2c] sm:$0xf]
    %v35 = vld [vmem:[%s1 + $0x30] sm:$0xf]
    %v36 = vld [vmem:[%s1 + $0x34] sm:$0xf]
    %v37 = vld [vmem:[%s1 + $0x38] sm:$0xf]
    %v38 = vld [vmem:[%s1 + $0x3c] sm:$0xf]
    %v39 = vld [vmem:[%s1 + $0x40] sm:$0xf]
    %v40 = vld [vmem:[%s1 + $0x44] sm:$0xf]
    %v41 = vld [vmem:[%s1 + $0x48] sm:$0xf]
    %v42 = vld [vmem:[%s1 + $0x4c] sm:$0xf]
    %v43 = vld [vmem:[%s1 + $0x50] sm:$0xf]
    %v44 = vld [vmem:[%s1 + $0x54] sm:$0xf]
    %v45 = vld [vmem:[%s1 + $0x58] sm:$0xf]
    %v46 = vld [vmem:[%s1 + $0x5c] sm:$0xf]
    %v47 = vld [vmem:[%s1 + $0x60] sm:$0xf]
    %v48 = vld [vmem:[%s1 + $0x64] sm:$0xf]
    %v49 = vld [vmem:[%s1 + $0x68] sm:$0xf]
    %v50 = vld [vmem:[%s1 + $0x6c] sm:$0xf]
    %v51 = vld [vmem:[%s1 + $0x70] sm:$0xf]
    %v52 = vld [vmem:[%s1 + $0x74] sm:$0xf]
    %v53 = vld [vmem:[%s1 + $0x78] sm:$0xf]
    %v54 = vld [vmem:[%s1 + $0x7c] sm:$0xf]
    %v55 = vld [vmem:[%s2] sm:$0x1]
    %v57 = vperm.slane %v55, 0
    %60 = vst [vmem:[#allocation1] ss:$9 sm:$0xff] %v22
    %v61 = vld [vmem:[#allocation1] sm:$0xff]
    %v62 = vld [vmem:[#allocation1 + $0x9] sm:$0xff]
    %v97 = vunpack.c.l.b16 %v23
    %v98 = vunpack.c.l.b16 %v24
    %v99 = vunpack.c.l.b16 %v25
    %v100 = vunpack.c.l.b16 %v26
    %v101 = vunpack.c.l.b16 %v27
    %v102 = vunpack.c.l.b16 %v28
    %v103 = vunpack.c.l.b16 %v29
    %v104 = vunpack.c.l.b16 %v30
    %v105 = vunpack.c.l.b16 %v31
    %v106 = vunpack.c.l.b16 %v32
    %v107 = vunpack.c.l.b16 %v33
    %v108 = vunpack.c.l.b16 %v34
    %v109 = vunpack.c.l.b16 %v35
    %v110 = vunpack.c.l.b16 %v36
    %v111 = vunpack.c.l.b16 %v37
    %v112 = vunpack.c.l.b16 %v38
    %v113 = vunpack.c.l.b16 %v39
    %v114 = vunpack.c.l.b16 %v40
    %v115 = vunpack.c.l.b16 %v41
    %v116 = vunpack.c.l.b16 %v42
    %v117 = vunpack.c.l.b16 %v43
    %v118 = vunpack.c.l.b16 %v44
    %v119 = vunpack.c.l.b16 %v45
    %v120 = vunpack.c.l.b16 %v46
    %v121 = vunpack.c.l.b16 %v47
    %v122 = vunpack.c.l.b16 %v48
    %v123 = vunpack.c.l.b16 %v49
    %v124 = vunpack.c.l.b16 %v50
    %v125 = vunpack.c.l.b16 %v51
    %v126 = vunpack.c.l.b16 %v52
    %v127 = vunpack.c.l.b16 %v53
    %v128 = vunpack.c.l.b16 %v54
    %v129 = vpack.c.b16 %v98, %v97
    %v130 = vpack.c.b16 %v100, %v99
    %v131 = vpack.c.b16 %v102, %v101
    %v132 = vpack.c.b16 %v104, %v103
    %v133 = vpack.c.b16 %v106, %v105
    %v134 = vpack.c.b16 %v108, %v107
    %v135 = vpack.c.b16 %v110, %v109
    %v136 = vpack.c.b16 %v112, %v111
    %v137 = vpack.c.b16 %v114, %v113
    %v138 = vpack.c.b16 %v116, %v115
    %v139 = vpack.c.b16 %v118, %v117
    %v140 = vpack.c.b16 %v120, %v119
    %v141 = vpack.c.b16 %v122, %v121
    %v142 = vpack.c.b16 %v124, %v123
    %v143 = vpack.c.b16 %v126, %v125
    %v144 = vpack.c.b16 %v128, %v127
    %161 = vmatpush.bf16.msra.mxu0 %v136
    %162 = vmatpush.bf16.msra.mxu0 %v135
    %163 = vmatpush.bf16.msra.mxu0 %v134
    %164 = vmatpush.bf16.msra.mxu0 %v133
    %165 = vmatpush.bf16.msra.mxu0 %v132
    %166 = vmatpush.bf16.msra.mxu0 %v131
    %167 = vmatpush.bf16.msra.mxu0 %v130
    %168 = vmatpush.bf16.msra.mxu0 %v129
    %169 = vmatmul.bf16.gmra.mxu0 %v61
    %v170 = vpop.f32.mrf.mxu0
    %v171 = vadd.f32 %v57, %v170
    %v172 = vpop.f32.mrf.mxu0
    %173 = vdwg.mxu0
    %174 = vmatpush.bf16.msra.mxu0 %v144
    %175 = vmatpush.bf16.msra.mxu0 %v143
    %176 = vmatpush.bf16.msra.mxu0 %v142
    %177 = vmatpush.bf16.msra.mxu0 %v141
    %178 = vmatpush.bf16.msra.mxu0 %v140
    %179 = vmatpush.bf16.msra.mxu0 %v139
    %180 = vmatpush.bf16.msra.mxu0 %v138
    %181 = vmatpush.bf16.msra.mxu0 %v137
    %182 = vmatmul.bf16.gmra.mxu0 %v62
    %v183 = vpop.f32.mrf.mxu0
    %v184 = vadd.f32 %v171, %v183
    %v185 = vpop.f32.mrf.mxu0
    %186 = vdwg.mxu0
    %v187 = vmax.f32 %v184, 0.0
    %v188 = vpack.c.bf16 %v187, %v187
    %v189 = vld [vmem:[%s3] sm:$0xf]
    %v190 = vld [vmem:[%s3 + $0x4] sm:$0xf]
    %v191 = vld [vmem:[%s3 + $0x8] sm:$0xf]
    %v192 = vld [vmem:[%s3 + $0xc] sm:$0xf]
    %v193 = vld [vmem:[%s3 + $0x10] sm:$0xf]
    %v194 = vld [vmem:[%s3 + $0x14] sm:$0xf]
    %v195 = vld [vmem:[%s3 + $0x18] sm:$0xf]
    %v196 = vld [vmem:[%s3 + $0x1c] sm:$0xf]
    %v197 = vld [vmem:[%s4] sm:$0x1]
    %v199 = vperm.slane %v197, 0
    %v209 = vunpack.c.l.b16 %v189
    %v210 = vunpack.c.l.b16 %v190
    %v211 = vunpack.c.l.b16 %v191
    %v212 = vunpack.c.l.b16 %v192
    %v213 = vunpack.c.l.b16 %v193
    %v214 = vunpack.c.l.b16 %v194
    %v215 = vunpack.c.l.b16 %v195
    %v216 = vunpack.c.l.b16 %v196
    %v217 = vpack.c.b16 %v210, %v209
    %v218 = vpack.c.b16 %v212, %v211
    %v219 = vpack.c.b16 %v214, %v213
    %v220 = vpack.c.b16 %v216, %v215
    %vm225 = vcmask 523264
    %v227 = vsel %vm225, %v188, 0
    %229 = vmatpush.bf16.msra.mxu0 0
    %230 = vmatpush.bf16.msra.mxu0 0
    %231 = vmatpush.bf16.msra.mxu0 0
    %232 = vmatpush.bf16.msra.mxu0 0
    %233 = vmatpush.bf16.msra.mxu0 %v220
    %234 = vmatpush.bf16.msra.mxu0 %v219
    %235 = vmatpush.bf16.msra.mxu0 %v218
    %236 = vmatpush.bf16.msra.mxu0 %v217
    %237 = vmatmul.bf16.gmra.mxu0 %v227
    %v238 = vpop.f32.mrf.mxu0
    %v239 = vadd.f32 %v199, %v238
    %v240 = vpop.f32.mrf.mxu0
    %241 = vdwg.mxu0
    %vm242 = vcmask 74752
    %243 = vst.msk [vmem:[#allocation2] sm:$0x3] %vm242, %v239
    // Predicated region
    $region22: #{voxnet_forward.7} parent=1 // pred_check
      _
    $region23: #{voxnet_forward.7} parent=1 // pred_check_branch
      %245 = sbr.rel (0) target = $region25
    $region24: #{voxnet_forward.7} parent=1 // pred_region
      %247 = vsyncadd [#allocation3], 0
      %s249 = sshll.u32 [#allocation2], 4
      %s250 = int_to_ptr.vmem [resolvable:$true] %s249
      %s251 = sshll.u32 %s5, 4
      %s252 = int_to_ptr.hbm [resolvable:$true] %s251
      %254 = dma.vmem_to_hbm [thread:$0]  %s250, 32, %s252, [#allocation3]
    $region25: #{voxnet_forward.7} parent=1 // pred_fallthru
      _
    // Predicated region
    $region26: #{voxnet_forward.7} parent=1 // pred_check
      _
    $region27: #{voxnet_forward.7} parent=1 // pred_check_branch
      %256 = sbr.rel (0) target = $region29
    $region28: #{voxnet_forward.7} parent=1 // pred_region
      %258 = dma.done [#allocation3], 32
    $region29: #{voxnet_forward.7} parent=1 // pred_fallthru
      _
    %259 = vsyncpa [#allocation3], 1

// kernel: voxnet_forward.6
$region0: #{voxnet_forward.6}
  #allocation0 [shape = 'u32[]', space=smem, size = 0x4, offset = 0x4, fixed_abs, tag = 'smem constant byte address 0x4 - core index']
  #allocation1 [shape = 'u32[72,128]{1,0:T(1,128)}', space=vmem, size = 0x9000, scoped, tag = 'internal scratch']
  %s0 = inlined_call_operand.vmem [shape: bf16[2,6,6,3,64], index: 0, kind: input, shape index: {}]
  %s1 = inlined_call_operand.vmem [shape: bf16[3,3,96,32], index: 1, kind: input, shape index: {}]
  %s2 = inlined_call_operand.vmem [shape: f32[1,32], index: 2, kind: input, shape index: {}]
  %s3 = inlined_call_operand.vmem [shape: bf16[2,2,2,2,32], index: 3, kind: output, shape index: {}]
  %s4 = sld [smem:[#allocation0]]
  $region45: #{voxnet_forward.6} parent=0
    _
  %s6 = ssub.s32 1, %s4
  %s7 = scalar_select 0, %s6, %s4
  loop: start=0, step=1, limit=4
  $region2: #{voxnet_forward.6} parent=0 // loop_pre_header
    _
  $region3: #{voxnet_forward.6} parent=0 // loop_header
    %s9 = sphi 0, %s13
    %p10 = scmp.ge.s32.totalorder %s9, 4
    %s19 = sphi 0, %s21
    %s22 = sphi 0, %s19
    %s23 = sphi 0, %s22
    %s39 = sphi 0, %s23
    %s43 = sphi 0, %s43
    %s45 = sphi 0, %s43
    %s46 = sphi 0, %s45
    %s60 = sphi 0, %s46
    %s64 = sphi 0, %s64
    %s66 = sphi 0, %s64
    %s67 = sphi 0, %s66
    %s81 = sphi 0, %s67
    %s87 = sphi 0, %s89
    %s90 = sphi 0, %s87
    %s91 = sphi 0, %s90
    %s107 = sphi 0, %s91
  $region4: #{voxnet_forward.6} parent=0 // loop_header_branch
    %12 = sbr.rel (%p10) target = $region8
  $region5: #{voxnet_forward.6} parent=0 // loop_body
    %s14 = ssub.s32 %s9, 1
    %s15 = ssub.s32 %s9, 2
    %s16 = sadd.s32 %s9, 1
    %s17 = ssub.s32 %s9, %s16
    %p18 = scmp.eq.s32.totalorder %s17, 0
    %s20 = sadd.s32 %s19, 1
    %s21 = scalar_select %p18, %s19, %s20
    %p24 = pneg %p18
    %p25 = scmp.eq.s32.totalorder %s9, 1
    %p26 = por %p24, %p25
    %p27 = scmp.ne.s32.totalorder %s19, %s22
    %p28 = scmp.eq.s32.totalorder %s9, 0
    %p29 = por %p27, %p28
    %p30 = scmp.ne.s32.totalorder %s19, %s22
    %p31 = scmp.eq.s32.totalorder %s14, 1
    %p32 = por %p30, %p31
    %p33 = scmp.ne.s32.totalorder %s22, %s23
    %p34 = scmp.eq.s32.totalorder %s14, 0
    %p35 = por %p33, %p34
    %p36 = scmp.ne.s32.totalorder %s22, %s23
    %p37 = scmp.eq.s32.totalorder %s15, 1
    %p38 = por %p36, %p37
    %p40 = scmp.ne.s32.totalorder %s23, %s39
    %p41 = scmp.eq.s32.totalorder %s15, 0
    %p42 = por %p40, %p41
    %s44 = sadd.s32 %s43, 1
    %p47 = scmp.eq.s32.totalorder %s9, 1
    %p48 = scmp.ne.s32.totalorder %s43, %s45
    %p49 = scmp.eq.s32.totalorder %s9, 0
    %p50 = por %p48, %p49
    %p51 = scmp.ne.s32.totalorder %s43, %s45
    %p52 = scmp.eq.s32.totalorder %s14, 1
    %p53 = por %p51, %p52
    %p54 = scmp.ne.s32.totalorder %s45, %s46
    %p55 = scmp.eq.s32.totalorder %s14, 0
    %p56 = por %p54, %p55
    %p57 = scmp.ne.s32.totalorder %s45, %s46
    %p58 = scmp.eq.s32.totalorder %s15, 1
    %p59 = por %p57, %p58
    %p61 = scmp.ne.s32.totalorder %s46, %s60
    %p62 = scmp.eq.s32.totalorder %s15, 0
    %p63 = por %p61, %p62
    %s65 = sadd.s32 %s64, 1
    %p68 = scmp.eq.s32.totalorder %s9, 1
    %p69 = scmp.ne.s32.totalorder %s64, %s66
    %p70 = scmp.eq.s32.totalorder %s9, 0
    %p71 = por %p69, %p70
    %p72 = scmp.ne.s32.totalorder %s64, %s66
    %p73 = scmp.eq.s32.totalorder %s14, 1
    %p74 = por %p72, %p73
    %p75 = scmp.ne.s32.totalorder %s66, %s67
    %p76 = scmp.eq.s32.totalorder %s14, 0
    %p77 = por %p75, %p76
    %p78 = scmp.ne.s32.totalorder %s66, %s67
    %p79 = scmp.eq.s32.totalorder %s15, 1
    %p80 = por %p78, %p79
    %p82 = scmp.ne.s32.totalorder %s67, %s81
    %p83 = scmp.eq.s32.totalorder %s15, 0
    %p84 = por %p82, %p83
    %s85 = ssub.s32 %s9, %s16
    %p86 = scmp.eq.s32.totalorder %s85, 0
    %s88 = sadd.s32 %s87, 1
    %s89 = scalar_select %p86, %s87, %s88
    %p92 = pneg %p86
    %p93 = scmp.eq.s32.totalorder %s9, 1
    %p94 = por %p92, %p93
    %p95 = scmp.ne.s32.totalorder %s87, %s90
    %p96 = scmp.eq.s32.totalorder %s9, 0
    %p97 = por %p95, %p96
    %p98 = scmp.ne.s32.totalorder %s87, %s90
    %p99 = scmp.eq.s32.totalorder %s14, 1
    %p100 = por %p98, %p99
    %p101 = scmp.ne.s32.totalorder %s90, %s91
    %p102 = scmp.eq.s32.totalorder %s14, 0
    %p103 = por %p101, %p102
    %p104 = scmp.ne.s32.totalorder %s90, %s91
    %p105 = scmp.eq.s32.totalorder %s15, 1
    %p106 = por %p104, %p105
    %p108 = scmp.ne.s32.totalorder %s91, %s107
    %p109 = scmp.eq.s32.totalorder %s15, 0
    %p110 = por %p108, %p109
    %p111 = scmp.le.s32.totalorder 1, %s9
    %p112 = scmp.lt.s32.totalorder %s9, 3
    %p113 = pnand %p111, %p112
    %p114 = pneg %p113
    // Predicated region
    $region9: #{voxnet_forward.6} parent=5 // pred_check
      _
    $region10: #{voxnet_forward.6} parent=5 // pred_check_branch
      %116 = sbr.rel (%p113) target = $region12
    $region11: #{voxnet_forward.6} parent=5 // pred_region
      %s117 = ssub.s32 %s9, 1
      // Predicated region
      $region13: #{voxnet_forward.6} parent=11 // pred_check
        %p118 = pneg %p56
      $region14: #{voxnet_forward.6} parent=11 // pred_check_branch
        %120 = sbr.rel (%p118) target = $region16
      $region15: #{voxnet_forward.6} parent=11 // pred_region
        _
      $region16: #{voxnet_forward.6} parent=11 // pred_fallthru
        _
      // Predicated region
      $region17: #{voxnet_forward.6} parent=11 // pred_check
        %p121 = pneg %p77
      $region18: #{voxnet_forward.6} parent=11 // pred_check_branch
        %123 = sbr.rel (%p121) target = $region20
      $region19: #{voxnet_forward.6} parent=11 // pred_region
        _
      $region20: #{voxnet_forward.6} parent=11 // pred_fallthru
        _
    $region12: #{voxnet_forward.6} parent=5 // pred_fallthru
      _
    %p124 = scmp.lt.s32.totalorder %s9, 2
    // Predicated region
    $region21: #{voxnet_forward.6} parent=5 // pred_check
      %p125 = pneg %p124
    $region22: #{voxnet_forward.6} parent=5 // pred_check_branch
      %127 = sbr.rel (%p125) target = $region24
    $region23: #{voxnet_forward.6} parent=5 // pred_region
      // Predicated region
      $region25: #{voxnet_forward.6} parent=23 // pred_check
        %p128 = pneg %p29
      $region26: #{voxnet_forward.6} parent=23 // pred_check_branch
        %130 = sbr.rel (%p128) target = $region28
      $region27: #{voxnet_forward.6} parent=23 // pred_region
        %p131 = scmp.lt.s32.totalorder %s9, 1
        %s132 = scalar_select %p131, %s9, 1
        %s133 = smul.addr %s132, 36
        %s134 = smul.addr %s133, 2
        %s135 = scalar_lea.vmem %s0, %s134
      $region28: #{voxnet_forward.6} parent=23 // pred_fallthru
        _
    $region24: #{voxnet_forward.6} parent=5 // pred_fallthru
      _
    %p136 = scmp.le.s32.totalorder 1, %s9
    %p137 = scmp.lt.s32.totalorder %s9, 3
    %p138 = pnand %p136, %p137
    %p139 = pneg %p138
    // Predicated region
    $region29: #{voxnet_forward.6} parent=5 // pred_check
      _
    $region30: #{voxnet_forward.6} parent=5 // pred_check_branch
      %141 = sbr.rel (%p138) target = $region32
    $region31: #{voxnet_forward.6} parent=5 // pred_region
      %s142 = ssub.s32 %s9, 1
      %p143 = scmp.lt.s32.totalorder %s14, 1
      %s144 = scalar_select %p143, %s14, 1
      %s145 = smul.addr %s144, 36
      %s146 = smul.addr %s145, 2
      %s147 = scalar_lea.vmem %s0, %s146
      %p148 = pneg %p35
      %p149 = pneg %p32
      %p150 = pneg %p56
      %p151 = pneg %p53
      %p152 = pneg %p77
      %p153 = pneg %p74
      %p154 = pneg %p103
      %p155 = pneg %p100
      %p156 = scmp.lt.s32.totalorder %s14, 1
      %s157 = scalar_select %p156, %s14, 1
      %s158 = smul.addr %s157, 4
      %s159 = scalar_lea.vmem %s3, %s158
      %p160 = scmp.lt.s32.totalorder %s14, 1
      %s161 = scalar_select %p160, %s14, 1
      %s162 = smul.addr %s161, 36
      %s163 = smul.addr %s162, 2
      %s164 = scalar_lea.vmem %s0, %s163
      %p165 = scmp.lt.s32.totalorder %s14, 1
      %s166 = scalar_select %p165, %s14, 1
      %s167 = smul.addr %s166, 4
      %s168 = scalar_lea.vmem %s3, %s167
      %v170 = vld [vmem:[%s164] sm:$0x1]
      %v171 = vld [vmem:[%s164 + $0x4] sm:$0x1]
      %v172 = vld [vmem:[%s164 + $0x18] sm:$0x1]
      %v173 = vld [vmem:[%s164 + $0x1c] sm:$0x1]
      %v174 = vld [vmem:[%s164] sm:$0x3]
      %v175 = vld [vmem:[%s164 + $0x4] sm:$0x3]
      %v176 = vld [vmem:[%s164 + $0x18] sm:$0x3]
      %v177 = vld [vmem:[%s164 + $0x1c] sm:$0x3]
      %179 = vst [vmem:[#allocation1] ss:$4 sm:$0xff] %v174
      %v180 = vld.sshfl [vmem:[#allocation1] sm:$0xff pattern:$0x73625140]
      %s182 = scalar_lea.vmem [#allocation1], 32
      %183 = vst [vmem:[%s182] ss:$4 sm:$0xff] %v175
      %v184 = vld.sshfl [vmem:[#allocation1 + $0x20] sm:$0xff pattern:$0x73625140]
      %186 = vst [vmem:[#allocation1] ss:$4 sm:$0xff] %v176
      %v187 = vld.sshfl [vmem:[#allocation1] sm:$0xff pattern:$0x73625140]
      %189 = vst [vmem:[%s182] ss:$4 sm:$0xff] %v177
      %v190 = vld.sshfl [vmem:[#allocation1 + $0x20] sm:$0xff pattern:$0x73625140]
      %v191 = vshrl.u32 %v180, 16
      %v193 = vshll.u32 %v180, 16
      %v195 = vrot.slane %v193, 1
      %v196 = vor.u32 %v191, %v195
      %v197 = vshrl.u32 %v184, 16
      %v199 = vshll.u32 %v184, 16
      %v201 = vrot.slane %v199, 1
      %v202 = vor.u32 %v197, %v201
      %v203 = vshrl.u32 %v187, 16
      %v205 = vshll.u32 %v187, 16
      %v207 = vrot.slane %v205, 1
      %v208 = vor.u32 %v203, %v207
      %v209 = vshrl.u32 %v190, 16
      %v211 = vshll.u32 %v190, 16
      %v213 = vrot.slane %v211, 1
      %v214 = vor.u32 %v209, %v213
      %215 = vrot.lane.b32.xlu0 %v196, 64
      %v216 = vpop.permute.xlu0 %215
      %217 = vrot.lane.b32.xlu0 %v202, 64
      %v218 = vpop.permute.xlu0 %217
      %219 = vrot.lane.b32.xlu0 %v208, 64
      %v220 = vpop.permute.xlu0 %219
      %221 = vrot.lane.b32.xlu0 %v214, 64
      %v222 = vpop.permute.xlu0 %221
      %vm227 = vcmask 523264
      %v229 = vsel %vm227, %v170, %v216
      %v231 = vsel %vm227, %v171, %v218
      %v233 = vsel %vm227, %v172, %v220
      %v235 = vsel %vm227, %v173, %v222
      %v236 = vld [vmem:[%s1] sm:$0xf]
      %v237 = vld [vmem:[%s1 + $0x4] sm:$0xf]
      %v238 = vld [vmem:[%s1 + $0x8] sm:$0xf]
      %v239 = vld [vmem:[%s1 + $0xc] sm:$0xf]
      %v240 = vld [vmem:[%s1 + $0x10] sm:$0xf]
      %v241 = vld [vmem:[%s1 + $0x14] sm:$0xf]
      %v242 = vld [vmem:[%s1 + $0x18] sm:$0xf]
      %v243 = vld [vmem:[%s1 + $0x1c] sm:$0xf]
      %v244 = vld [vmem:[%s1 + $0x20] sm:$0xf]
      %v245 = vld [vmem:[%s1 + $0x24] sm:$0xf]
      %v246 = vld [vmem:[%s1 + $0x28] sm:$0xf]
      %v247 = vld [vmem:[%s1 + $0x2c] sm:$0xf]
      %s248 = scalar_lea.vmem %s164, 2
      %v249 = vld [vmem:[%s248] sm:$0x1]
      %v250 = vld [vmem:[%s248 + $0x4] sm:$0x1]
      %v251 = vld [vmem:[%s248 + $0x18] sm:$0x1]
      %v252 = vld [vmem:[%s248 + $0x1c] sm:$0x1]
      %v253 = vld [vmem:[%s248] sm:$0x3]
      %v254 = vld [vmem:[%s248 + $0x4] sm:$0x3]
      %v255 = vld [vmem:[%s248 + $0x18] sm:$0x3]
      %v256 = vld [vmem:[%s248 + $0x1c] sm:$0x3]
      %258 = vst [vmem:[#allocation1] ss:$4 sm:$0xff] %v253
      %v259 = vld.sshfl [vmem:[#allocation1] sm:$0xff pattern:$0x73625140]
      %s261 = scalar_lea.vmem [#allocation1], 32
      %262 = vst [vmem:[%s261] ss:$4 sm:$0xff] %v254
      %v263 = vld.sshfl [vmem:[#allocation1 + $0x20] sm:$0xff pattern:$0x73625140]
      %265 = vst [vmem:[#allocation1] ss:$4 sm:$0xff] %v255
      %v266 = vld.sshfl [vmem:[#allocation1] sm:$0xff pattern:$0x73625140]
      %268 = vst [vmem:[%s261] ss:$4 sm:$0xff] %v256
      %v269 = vld.sshfl [vmem:[#allocation1 + $0x20] sm:$0xff pattern:$0x73625140]
      %v270 = vshrl.u32 %v259, 16
      %v272 = vshll.u32 %v259, 16
      %v274 = vrot.slane %v272, 1
      %v275 = vor.u32 %v270, %v274
      %v276 = vshrl.u32 %v263, 16
      %v278 = vshll.u32 %v263, 16
      %v280 = vrot.slane %v278, 1
      %v281 = vor.u32 %v276, %v280
      %v282 = vshrl.u32 %v266, 16
      %v284 = vshll.u32 %v266, 16
      %v286 = vrot.slane %v284, 1
      %v287 = vor.u32 %v282, %v286
      %v288 = vshrl.u32 %v269, 16
      %v290 = vshll.u32 %v269, 16
      %v292 = vrot.slane %v290, 1
      %v293 = vor.u32 %v288, %v292
      %294 = vrot.lane.b32.xlu0 %v275, 64
      %v295 = vpop.permute.xlu0 %294
      %296 = vrot.lane.b32.xlu0 %v281, 64
      %v297 = vpop.permute.xlu0 %296
      %298 = vrot.lane.b32.xlu0 %v287, 64
      %v299 = vpop.permute.xlu0 %298
      %300 = vrot.lane.b32.xlu0 %v293, 64
      %v301 = vpop.permute.xlu0 %300
      %v307 = vsel %vm227, %v249, %v295
      %v309 = vsel %vm227, %v250, %v297
      %v311 = vsel %vm227, %v251, %v299
      %v313 = vsel %vm227, %v252, %v301
      %s314 = scalar_lea.vmem %s1, 48
      %v315 = vld [vmem:[%s314] sm:$0xf]
      %v316 = vld [vmem:[%s314 + $0x4] sm:$0xf]
      %v317 = vld [vmem:[%s314 + $0x8] sm:$0xf]
      %v318 = vld [vmem:[%s314 + $0xc] sm:$0xf]
      %v319 = vld [vmem:[%s314 + $0x10] sm:$0xf]
      %v320 = vld [vmem:[%s314 + $0x14] sm:$0xf]
      %v321 = vld [vmem:[%s314 + $0x18] sm:$0xf]
      %v322 = vld [vmem:[%s314 + $0x1c] sm:$0xf]
      %v323 = vld [vmem:[%s314 + $0x20] sm:$0xf]
      %v324 = vld [vmem:[%s314 + $0x24] sm:$0xf]
      %v325 = vld [vmem:[%s314 + $0x28] sm:$0xf]
      %v326 = vld [vmem:[%s314 + $0x2c] sm:$0xf]
      %327 = vst [vmem:[#allocation1] ss:$9 sm:$0xff] %v307
      %s328 = scalar_lea.vmem [#allocation1], 1
      %329 = vst [vmem:[%s328] ss:$9 sm:$0xff] %v309
      %s330 = scalar_lea.vmem [#allocation1], 2
      %331 = vst [vmem:[%s330] ss:$9 sm:$0xff] %v311
      %s332 = scalar_lea.vmem [#allocation1], 3
      %333 = vst [vmem:[%s332] ss:$9 sm:$0xff] %v313
      %v334 = vld [vmem:[#allocation1] sm:$0xff]
      %v347 = vunpack.c.l.b16 %v315
      %v348 = vunpack.c.l.b16 %v316
      %v349 = vunpack.c.l.b16 %v317
      %v350 = vunpack.c.l.b16 %v318
      %v351 = vunpack.c.l.b16 %v319
      %v352 = vunpack.c.l.b16 %v320
      %v353 = vunpack.c.l.b16 %v321
      %v354 = vunpack.c.l.b16 %v322
      %v355 = vunpack.c.l.b16 %v323
      %v356 = vunpack.c.l.b16 %v324
      %v357 = vunpack.c.l.b16 %v325
      %v358 = vunpack.c.l.b16 %v326
      %v359 = vpack.c.b16 %v348, %v347
      %v360 = vpack.c.b16 %v350, %v349
      %v361 = vpack.c.b16 %v352, %v351
      %v362 = vpack.c.b16 %v354, %v353
      %v363 = vpack.c.b16 %v356, %v355
      %v364 = vpack.c.b16 %v358, %v357
      %vm371 = vcmask 785408
      %v372 = vsel %vm371, %v334, 0
      %374 = vmatpush.bf16.msra.mxu0 0
      %375 = vmatpush.bf16.msra.mxu0 0
      %376 = vmatpush.bf16.msra.mxu0 %v364
      %377 = vmatpush.bf16.msra.mxu0 %v363
      %378 = vmatpush.bf16.msra.mxu0 %v362
      %379 = vmatpush.bf16.msra.mxu0 %v361
      %380 = vmatpush.bf16.msra.mxu0 %v360
      %381 = vmatpush.bf16.msra.mxu0 %v359
      %382 = vmatmul.bf16.gmra.mxu0 %v372
      %v383 = vpop.f32.mrf.mxu0
      %v384 = vadd.f32 0.0, %v383
      %v385 = vpop.f32.mrf.mxu0
      %386 = vdwg.mxu0
      %387 = vst [vmem:[#allocation1] ss:$9 sm:$0xff] %v229
      %s388 = scalar_lea.vmem [#allocation1], 1
      %389 = vst [vmem:[%s388] ss:$9 sm:$0xff] %v231
      %s390 = scalar_lea.vmem [#allocation1], 2
      %391 = vst [vmem:[%s390] ss:$9 sm:$0xff] %v233
      %s392 = scalar_lea.vmem [#allocation1], 3
      %393 = vst [vmem:[%s392] ss:$9 sm:$0xff] %v235
      %v394 = vld [vmem:[#allocation1] sm:$0xff]
      %v407 = vunpack.c.l.b16 %v236
      %v408 = vunpack.c.l.b16 %v237
      %v409 = vunpack.c.l.b16 %v238
      %v410 = vunpack.c.l.b16 %v239
      %v411 = vunpack.c.l.b16 %v240
      %v412 = vunpack.c.l.b16 %v241
      %v413 = vunpack.c.l.b16 %v242
      %v414 = vunpack.c.l.b16 %v243
      %v415 = vunpack.c.l.b16 %v244
      %v416 = vunpack.c.l.b16 %v245
      %v417 = vunpack.c.l.b16 %v246
      %v418 = vunpack.c.l.b16 %v247
      %v419 = vpack.c.b16 %v408, %v407
      %v420 = vpack.c.b16 %v410, %v409
      %v421 = vpack.c.b16 %v412, %v411
      %v422 = vpack.c.b16 %v414, %v413
      %v423 = vpack.c.b16 %v416, %v415
      %v424 = vpack.c.b16 %v418, %v417
      %v431 = vsel %vm371, %v394, 0
      %433 = vmatpush.bf16.msra.mxu0 0
      %434 = vmatpush.bf16.msra.mxu0 0
      %435 = vmatpush.bf16.msra.mxu0 %v424
      %436 = vmatpush.bf16.msra.mxu0 %v423
      %437 = vmatpush.bf16.msra.mxu0 %v422
      %438 = vmatpush.bf16.msra.mxu0 %v421
      %439 = vmatpush.bf16.msra.mxu0 %v420
      %440 = vmatpush.bf16.msra.mxu0 %v419
      %441 = vmatmul.bf16.gmra.mxu0 %v431
      %v442 = vpop.f32.mrf.mxu0
      %v443 = vadd.f32 %v384, %v442
      %v444 = vpop.f32.mrf.mxu0
      %445 = vdwg.mxu0
      %s446 = scalar_lea.vmem %s164, 4
      %v447 = vld [vmem:[%s446] sm:$0x1]
      %v448 = vld [vmem:[%s446 + $0x4] sm:$0x1]
      %v449 = vld [vmem:[%s446 + $0x18] sm:$0x1]
      %v450 = vld [vmem:[%s446 + $0x1c] sm:$0x1]
      %v451 = vld [vmem:[%s446] sm:$0x3]
      %v452 = vld [vmem:[%s446 + $0x4] sm:$0x3]
      %v453 = vld [vmem:[%s446 + $0x18] sm:$0x3]
      %v454 = vld [vmem:[%s446 + $0x1c] sm:$0x3]
      %456 = vst [vmem:[#allocation1] ss:$4 sm:$0xff] %v451
      %v457 = vld.sshfl [vmem:[#allocation1] sm:$0xff pattern:$0x73625140]
      %s459 = scalar_lea.vmem [#allocation1], 32
      %460 = vst [vmem:[%s459] ss:$4 sm:$0xff] %v452
      %v461 = vld.sshfl [vmem:[#allocation1 + $0x20] sm:$0xff pattern:$0x73625140]
      %463 = vst [vmem:[#allocation1] ss:$4 sm:$0xff] %v453
      %v464 = vld.sshfl [vmem:[#allocation1] sm:$0xff pattern:$0x73625140]
      %466 = vst [vmem:[%s459] ss:$4 sm:$0xff] %v454
      %v467 = vld.sshfl [vmem:[#allocation1 + $0x20] sm:$0xff pattern:$0x73625140]
      %v468 = vshrl.u32 %v457, 16
      %v470 = vshll.u32 %v457, 16
      %v472 = vrot.slane %v470, 1
      %v473 = vor.u32 %v468, %v472
      %v474 = vshrl.u32 %v461, 16
      %v476 = vshll.u32 %v461, 16
      %v478 = vrot.slane %v476, 1
      %v479 = vor.u32 %v474, %v478
      %v480 = vshrl.u32 %v464, 16
      %v482 = vshll.u32 %v464, 16
      %v484 = vrot.slane %v482, 1
      %v485 = vor.u32 %v480, %v484
      %v486 = vshrl.u32 %v467, 16
      %v488 = vshll.u32 %v467, 16
      %v490 = vrot.slane %v488, 1
      %v491 = vor.u32 %v486, %v490
      %492 = vrot.lane.b32.xlu0 %v473, 64
      %v493 = vpop.permute.xlu0 %492
      %494 = vrot.lane.b32.xlu0 %v479, 64
      %v495 = vpop.permute.xlu0 %494
      %496 = vrot.lane.b32.xlu0 %v485, 64
      %v497 = vpop.permute.xlu0 %496
      %498 = vrot.lane.b32.xlu0 %v491, 64
      %v499 = vpop.permute.xlu0 %498
      %v505 = vsel %vm227, %v447, %v493
      %v507 = vsel %vm227, %v448, %v495
      %v509 = vsel %vm227, %v449, %v497
      %v511 = vsel %vm227, %v450, %v499
      %s512 = scalar_lea.vmem %s1, 96
      %v513 = vld [vmem:[%s512] sm:$0xf]
      %v514 = vld [vmem:[%s512 + $0x4] sm:$0xf]
      %v515 = vld [vmem:[%s512 + $0x8] sm:$0xf]
      %v516 = vld [vmem:[%s512 + $0xc] sm:$0xf]
      %v517 = vld [vmem:[%s512 + $0x10] sm:$0xf]
      %v518 = vld [vmem:[%s512 + $0x14] sm:$0xf]
      %v519 = vld [vmem:[%s512 + $0x18] sm:$0xf]
      %v520 = vld [vmem:[%s512 + $0x1c] sm:$0xf]
      %v521 = vld [vmem:[%s512 + $0x20] sm:$0xf]
      %v522 = vld [vmem:[%s512 + $0x24] sm:$0xf]
      %v523 = vld [vmem:[%s512 + $0x28] sm:$0xf]
      %v524 = vld [vmem:[%s512 + $0x2c] sm:$0xf]
      %525 = vst [vmem:[#allocation1] ss:$9 sm:$0xff] %v505
      %s526 = scalar_lea.vmem [#allocation1], 1
      %527 = vst [vmem:[%s526] ss:$9 sm:$0xff] %v507
      %s528 = scalar_lea.vmem [#allocation1], 2
      %529 = vst [vmem:[%s528] ss:$9 sm:$0xff] %v509
      %s530 = scalar_lea.vmem [#allocation1], 3
      %531 = vst [vmem:[%s530] ss:$9 sm:$0xff] %v511
      %v532 = vld [vmem:[#allocation1] sm:$0xff]
      %v545 = vunpack.c.l.b16 %v513
      %v546 = vunpack.c.l.b16 %v514
      %v547 = vunpack.c.l.b16 %v515
      %v548 = vunpack.c.l.b16 %v516
      %v549 = vunpack.c.l.b16 %v517
      %v550 = vunpack.c.l.b16 %v518
      %v551 = vunpack.c.l.b16 %v519
      %v552 = vunpack.c.l.b16 %v520
      %v553 = vunpack.c.l.b16 %v521
      %v554 = vunpack.c.l.b16 %v522
      %v555 = vunpack.c.l.b16 %v523
      %v556 = vunpack.c.l.b16 %v524
      %v557 = vpack.c.b16 %v546, %v545
      %v558 = vpack.c.b16 %v548, %v547
      %v559 = vpack.c.b16 %v550, %v549
      %v560 = vpack.c.b16 %v552, %v551
      %v561 = vpack.c.b16 %v554, %v553
      %v562 = vpack.c.b16 %v556, %v555
      %v569 = vsel %vm371, %v532, 0
      %571 = vmatpush.bf16.msra.mxu0 0
      %572 = vmatpush.bf16.msra.mxu0 0
      %573 = vmatpush.bf16.msra.mxu0 %v562
      %574 = vmatpush.bf16.msra.mxu0 %v561
      %575 = vmatpush.bf16.msra.mxu0 %v560
      %576 = vmatpush.bf16.msra.mxu0 %v559
      %577 = vmatpush.bf16.msra.mxu0 %v558
      %578 = vmatpush.bf16.msra.mxu0 %v557
      %579 = vmatmul.bf16.gmra.mxu0 %v569
      %v580 = vpop.f32.mrf.mxu0
      %v581 = vadd.f32 0.0, %v580
      %v582 = vpop.f32.mrf.mxu0
      %583 = vdwg.mxu0
      %v584 = vadd.f32 %v443, %v581
      %s585 = scalar_lea.vmem %s164, 12
      %v586 = vld [vmem:[%s585] sm:$0x1]
      %v587 = vld [vmem:[%s585 + $0x4] sm:$0x1]
      %v588 = vld [vmem:[%s585 + $0x18] sm:$0x1]
      %v589 = vld [vmem:[%s585 + $0x1c] sm:$0x1]
      %v590 = vld [vmem:[%s585] sm:$0x3]
      %v591 = vld [vmem:[%s585 + $0x4] sm:$0x3]
      %v592 = vld [vmem:[%s585 + $0x18] sm:$0x3]
      %v593 = vld [vmem:[%s585 + $0x1c] sm:$0x3]
      %595 = vst [vmem:[#allocation1] ss:$4 sm:$0xff] %v590
      %v596 = vld.sshfl [vmem:[#allocation1] sm:$0xff pattern:$0x73625140]
      %s598 = scalar_lea.vmem [#allocation1], 32
      %599 = vst [vmem:[%s598] ss:$4 sm:$0xff] %v591
      %v600 = vld.sshfl [vmem:[#allocation1 + $0x20] sm:$0xff pattern:$0x73625140]
      %602 = vst [vmem:[#allocation1] ss:$4 sm:$0xff] %v592
      %v603 = vld.sshfl [vmem:[#allocation1] sm:$0xff pattern:$0x73625140]
      %605 = vst [vmem:[%s598] ss:$4 sm:$0xff] %v593
      %v606 = vld.sshfl [vmem:[#allocation1 + $0x20] sm:$0xff pattern:$0x73625140]
      %v607 = vshrl.u32 %v596, 16
      %v609 = vshll.u32 %v596, 16
      %v611 = vrot.slane %v609, 1
      %v612 = vor.u32 %v607, %v611
      %v613 = vshrl.u32 %v600, 16
      %v615 = vshll.u32 %v600, 16
      %v617 = vrot.slane %v615, 1
      %v618 = vor.u32 %v613, %v617
      %v619 = vshrl.u32 %v603, 16
      %v621 = vshll.u32 %v603, 16
      %v623 = vrot.slane %v621, 1
      %v624 = vor.u32 %v619, %v623
      %v625 = vshrl.u32 %v606, 16
      %v627 = vshll.u32 %v606, 16
      %v629 = vrot.slane %v627, 1
      %v630 = vor.u32 %v625, %v629
      %631 = vrot.lane.b32.xlu0 %v612, 64
      %v632 = vpop.permute.xlu0 %631
      %633 = vrot.lane.b32.xlu0 %v618, 64
      %v634 = vpop.permute.xlu0 %633
      %635 = vrot.lane.b32.xlu0 %v624, 64
      %v636 = vpop.permute.xlu0 %635
      %637 = vrot.lane.b32.xlu0 %v630, 64
      %v638 = vpop.permute.xlu0 %637
      %v644 = vsel %vm227, %v586, %v632
      %v646 = vsel %vm227, %v587, %v634
      %v648 = vsel %vm227, %v588, %v636
      %v650 = vsel %vm227, %v589, %v638
      %s651 = scalar_lea.vmem %s1, 144
      %v652 = vld [vmem:[%s651] sm:$0xf]
      %v653 = vld [vmem:[%s651 + $0x4] sm:$0xf]
      %v654 = vld [vmem:[%s651 + $0x8] sm:$0xf]
      %v655 = vld [vmem:[%s651 + $0xc] sm:$0xf]
      %v656 = vld [vmem:[%s651 + $0x10] sm:$0xf]
      %v657 = vld [vmem:[%s651 + $0x14] sm:$0xf]
      %v658 = vld [vmem:[%s651 + $0x18] sm:$0xf]
      %v659 = vld [vmem:[%s651 + $0x1c] sm:$0xf]
      %v660 = vld [vmem:[%s651 + $0x20] sm:$0xf]
      %v661 = vld [vmem:[%s651 + $0x24] sm:$0xf]
      %v662 = vld [vmem:[%s651 + $0x28] sm:$0xf]
      %v663 = vld [vmem:[%s651 + $0x2c] sm:$0xf]
      %664 = vst [vmem:[#allocation1] ss:$9 sm:$0xff] %v644
      %s665 = scalar_lea.vmem [#allocation1], 1
      %666 = vst [vmem:[%s665] ss:$9 sm:$0xff] %v646
      %s667 = scalar_lea.vmem [#allocation1], 2
      %668 = vst [vmem:[%s667] ss:$9 sm:$0xff] %v648
      %s669 = scalar_lea.vmem [#allocation1], 3
      %670 = vst [vmem:[%s669] ss:$9 sm:$0xff] %v650
      %v671 = vld [vmem:[#allocation1] sm:$0xff]
      %v684 = vunpack.c.l.b16 %v652
      %v685 = vunpack.c.l.b16 %v653
      %v686 = vunpack.c.l.b16 %v654
      %v687 = vunpack.c.l.b16 %v655
      %v688 = vunpack.c.l.b16 %v656
      %v689 = vunpack.c.l.b16 %v657
      %v690 = vunpack.c.l.b16 %v658
      %v691 = vunpack.c.l.b16 %v659
      %v692 = vunpack.c.l.b16 %v660
      %v693 = vunpack.c.l.b16 %v661
      %v694 = vunpack.c.l.b16 %v662
      %v695 = vunpack.c.l.b16 %v663
      %v696 = vpack.c.b16 %v685, %v684
      %v697 = vpack.c.b16 %v687, %v686
      %v698 = vpack.c.b16 %v689, %v688
      %v699 = vpack.c.b16 %v691, %v690
      %v700 = vpack.c.b16 %v693, %v692
      %v701 = vpack.c.b16 %v695, %v694
      %v708 = vsel %vm371, %v671, 0
      %710 = vmatpush.bf16.msra.mxu0 0
      %711 = vmatpush.bf16.msra.mxu0 0
      %712 = vmatpush.bf16.msra.mxu0 %v701
      %713 = vmatpush.bf16.msra.mxu0 %v700
      %714 = vmatpush.bf16.msra.mxu0 %v699
      %715 = vmatpush.bf16.msra.mxu0 %v698
      %716 = vmatpush.bf16.msra.mxu0 %v697
      %717 = vmatpush.bf16.msra.mxu0 %v696
      %718 = vmatmul.bf16.gmra.mxu0 %v708
      %v719 = vpop.f32.mrf.mxu0
      %v720 = vadd.f32 0.0, %v719
      %v721 = vpop.f32.mrf.mxu0
      %722 = vdwg.mxu0
      %v723 = vadd.f32 %v584, %v720
      %s724 = scalar_lea.vmem %s164, 14
      %v725 = vld [vmem:[%s724] sm:$0x1]
      %v726 = vld [vmem:[%s724 + $0x4] sm:$0x1]
      %v727 = vld [vmem:[%s724 + $0x18] sm:$0x1]
      %v728 = vld [vmem:[%s724 + $0x1c] sm:$0x1]
      %v729 = vld [vmem:[%s724] sm:$0x3]
      %v730 = vld [vmem:[%s724 + $0x4] sm:$0x3]
      %v731 = vld [vmem:[%s724 + $0x18] sm:$0x3]
      %v732 = vld [vmem:[%s724 + $0x1c] sm:$0x3]
      %734 = vst [vmem:[#allocation1] ss:$4 sm:$0xff] %v729
      %v735 = vld.sshfl [vmem:[#allocation1] sm:$0xff pattern:$0x73625140]
      %s737 = scalar_lea.vmem [#allocation1], 32
      %738 = vst [vmem:[%s737] ss:$4 sm:$0xff] %v730
      %v739 = vld.sshfl [vmem:[#allocation1 + $0x20] sm:$0xff pattern:$0x73625140]
      %741 = vst [vmem:[#allocation1] ss:$4 sm:$0xff] %v731
      %v742 = vld.sshfl [vmem:[#allocation1] sm:$0xff pattern:$0x73625140]
      %744 = vst [vmem:[%s737] ss:$4 sm:$0xff] %v732
      %v745 = vld.sshfl [vmem:[#allocation1 + $0x20] sm:$0xff pattern:$0x73625140]
      %v746 = vshrl.u32 %v735, 16
      %v748 = vshll.u32 %v735, 16
      %v750 = vrot.slane %v748, 1
      %v751 = vor.u32 %v746, %v750
      %v752 = vshrl.u32 %v739, 16
      %v754 = vshll.u32 %v739, 16
      %v756 = vrot.slane %v754, 1
      %v757 = vor.u32 %v752, %v756
      %v758 = vshrl.u32 %v742, 16
      %v760 = vshll.u32 %v742, 16
      %v762 = vrot.slane %v760, 1
      %v763 = vor.u32 %v758, %v762
      %v764 = vshrl.u32 %v745, 16
      %v766 = vshll.u32 %v745, 16
      %v768 = vrot.slane %v766, 1
      %v769 = vor.u32 %v764, %v768
      %770 = vrot.lane.b32.xlu0 %v751, 64
      %v771 = vpop.permute.xlu0 %770
      %772 = vrot.lane.b32.xlu0 %v757, 64
      %v773 = vpop.permute.xlu0 %772
      %774 = vrot.lane.b32.xlu0 %v763, 64
      %v775 = vpop.permute.xlu0 %774
      %776 = vrot.lane.b32.xlu0 %v769, 64
      %v777 = vpop.permute.xlu0 %776
      %v783 = vsel %vm227, %v725, %v771
      %v785 = vsel %vm227, %v726, %v773
      %v787 = vsel %vm227, %v727, %v775
      %v789 = vsel %vm227, %v728, %v777
      %s790 = scalar_lea.vmem %s1, 192
      %v791 = vld [vmem:[%s790] sm:$0xf]
      %v792 = vld [vmem:[%s790 + $0x4] sm:$0xf]
      %v793 = vld [vmem:[%s790 + $0x8] sm:$0xf]
      %v794 = vld [vmem:[%s790 + $0xc] sm:$0xf]
      %v795 = vld [vmem:[%s790 + $0x10] sm:$0xf]
      %v796 = vld [vmem:[%s790 + $0x14] sm:$0xf]
      %v797 = vld [vmem:[%s790 + $0x18] sm:$0xf]
      %v798 = vld [vmem:[%s790 + $0x1c] sm:$0xf]
      %v799 = vld [vmem:[%s790 + $0x20] sm:$0xf]
      %v800 = vld [vmem:[%s790 + $0x24] sm:$0xf]
      %v801 = vld [vmem:[%s790 + $0x28] sm:$0xf]
      %v802 = vld [vmem:[%s790 + $0x2c] sm:$0xf]
      %803 = vst [vmem:[#allocation1] ss:$9 sm:$0xff] %v783
      %s804 = scalar_lea.vmem [#allocation1], 1
      %805 = vst [vmem:[%s804] ss:$9 sm:$0xff] %v785
      %s806 = scalar_lea.vmem [#allocation1], 2
      %807 = vst [vmem:[%s806] ss:$9 sm:$0xff] %v787
      %s808 = scalar_lea.vmem [#allocation1], 3
      %809 = vst [vmem:[%s808] ss:$9 sm:$0xff] %v789
      %v810 = vld [vmem:[#allocation1] sm:$0xff]
      %v823 = vunpack.c.l.b16 %v791
      %v824 = vunpack.c.l.b16 %v792
      %v825 = vunpack.c.l.b16 %v793
      %v826 = vunpack.c.l.b16 %v794
      %v827 = vunpack.c.l.b16 %v795
      %v828 = vunpack.c.l.b16 %v796
      %v829 = vunpack.c.l.b16 %v797
      %v830 = vunpack.c.l.b16 %v798
      %v831 = vunpack.c.l.b16 %v799
      %v832 = vunpack.c.l.b16 %v800
      %v833 = vunpack.c.l.b16 %v801
      %v834 = vunpack.c.l.b16 %v802
      %v835 = vpack.c.b16 %v824, %v823
      %v836 = vpack.c.b16 %v826, %v825
      %v837 = vpack.c.b16 %v828, %v827
      %v838 = vpack.c.b16 %v830, %v829
      %v839 = vpack.c.b16 %v832, %v831
      %v840 = vpack.c.b16 %v834, %v833
      %v847 = vsel %vm371, %v810, 0
      %849 = vmatpush.bf16.msra.mxu0 0
      %850 = vmatpush.bf16.msra.mxu0 0
      %851 = vmatpush.bf16.msra.mxu0 %v840
      %852 = vmatpush.bf16.msra.mxu0 %v839
      %853 = vmatpush.bf16.msra.mxu0 %v838
      %854 = vmatpush.bf16.msra.mxu0 %v837
      %855 = vmatpush.bf16.msra.mxu0 %v836
      %856 = vmatpush.bf16.msra.mxu0 %v835
      %857 = vmatmul.bf16.gmra.mxu0 %v847
      %v858 = vpop.f32.mrf.mxu0
      %v859 = vadd.f32 0.0, %v858
      %v860 = vpop.f32.mrf.mxu0
      %861 = vdwg.mxu0
      %v862 = vadd.f32 %v723, %v859
      %s863 = scalar_lea.vmem %s164, 16
      %v864 = vld [vmem:[%s863] sm:$0x1]
      %v865 = vld [vmem:[%s863 + $0x4] sm:$0x1]
      %v866 = vld [vmem:[%s863 + $0x18] sm:$0x1]
      %v867 = vld [vmem:[%s863 + $0x1c] sm:$0x1]
      %v868 = vld [vmem:[%s863] sm:$0x3]
      %v869 = vld [vmem:[%s863 + $0x4] sm:$0x3]
      %v870 = vld [vmem:[%s863 + $0x18] sm:$0x3]
      %v871 = vld [vmem:[%s863 + $0x1c] sm:$0x3]
      %873 = vst [vmem:[#allocation1] ss:$4 sm:$0xff] %v868
      %v874 = vld.sshfl [vmem:[#allocation1] sm:$0xff pattern:$0x73625140]
      %s876 = scalar_lea.vmem [#allocation1], 32
      %877 = vst [vmem:[%s876] ss:$4 sm:$0xff] %v869
      %v878 = vld.sshfl [vmem:[#allocation1 + $0x20] sm:$0xff pattern:$0x73625140]
      %880 = vst [vmem:[#allocation1] ss:$4 sm:$0xff] %v870
      %v881 = vld.sshfl [vmem:[#allocation1] sm:$0xff pattern:$0x73625140]
      %883 = vst [vmem:[%s876] ss:$4 sm:$0xff] %v871
      %v884 = vld.sshfl [vmem:[#allocation1 + $0x20] sm:$0xff pattern:$0x73625140]
      %v885 = vshrl.u32 %v874, 16
      %v887 = vshll.u32 %v874, 16
      %v889 = vrot.slane %v887, 1
      %v890 = vor.u32 %v885, %v889
      %v891 = vshrl.u32 %v878, 16
      %v893 = vshll.u32 %v878, 16
      %v895 = vrot.slane %v893, 1
      %v896 = vor.u32 %v891, %v895
      %v897 = vshrl.u32 %v881, 16
      %v899 = vshll.u32 %v881, 16
      %v901 = vrot.slane %v899, 1
      %v902 = vor.u32 %v897, %v901
      %v903 = vshrl.u32 %v884, 16
      %v905 = vshll.u32 %v884, 16
      %v907 = vrot.slane %v905, 1
      %v908 = vor.u32 %v903, %v907
      %909 = vrot.lane.b32.xlu0 %v890, 64
      %v910 = vpop.permute.xlu0 %909
      %911 = vrot.lane.b32.xlu0 %v896, 64
      %v912 = vpop.permute.xlu0 %911
      %913 = vrot.lane.b32.xlu0 %v902, 64
      %v914 = vpop.permute.xlu0 %913
      %915 = vrot.lane.b32.xlu0 %v908, 64
      %v916 = vpop.permute.xlu0 %915
      %v922 = vsel %vm227, %v864, %v910
      %v924 = vsel %vm227, %v865, %v912
      %v926 = vsel %vm227, %v866, %v914
      %v928 = vsel %vm227, %v867, %v916
      %s929 = scalar_lea.vmem %s1, 240
      %v930 = vld [vmem:[%s929] sm:$0xf]
      %v931 = vld [vmem:[%s929 + $0x4] sm:$0xf]
      %v932 = vld [vmem:[%s929 + $0x8] sm:$0xf]
      %v933 = vld [vmem:[%s929 + $0xc] sm:$0xf]
      %v934 = vld [vmem:[%s929 + $0x10] sm:$0xf]
      %v935 = vld [vmem:[%s929 + $0x14] sm:$0xf]
      %v936 = vld [vmem:[%s929 + $0x18] sm:$0xf]
      %v937 = vld [vmem:[%s929 + $0x1c] sm:$0xf]
      %v938 = vld [vmem:[%s929 + $0x20] sm:$0xf]
      %v939 = vld [vmem:[%s929 + $0x24] sm:$0xf]
      %v940 = vld [vmem:[%s929 + $0x28] sm:$0xf]
      %v941 = vld [vmem:[%s929 + $0x2c] sm:$0xf]
      %942 = vst [vmem:[#allocation1] ss:$9 sm:$0xff] %v922
      %s943 = scalar_lea.vmem [#allocation1], 1
      %944 = vst [vmem:[%s943] ss:$9 sm:$0xff] %v924
      %s945 = scalar_lea.vmem [#allocation1], 2
      %946 = vst [vmem:[%s945] ss:$9 sm:$0xff] %v926
      %s947 = scalar_lea.vmem [#allocation1], 3
      %948 = vst [vmem:[%s947] ss:$9 sm:$0xff] %v928
      %v949 = vld [vmem:[#allocation1] sm:$0xff]
      %v962 = vunpack.c.l.b16 %v930
      %v963 = vunpack.c.l.b16 %v931
      %v964 = vunpack.c.l.b16 %v932
      %v965 = vunpack.c.l.b16 %v933
      %v966 = vunpack.c.l.b16 %v934
      %v967 = vunpack.c.l.b16 %v935
      %v968 = vunpack.c.l.b16 %v936
      %v969 = vunpack.c.l.b16 %v937
      %v970 = vunpack.c.l.b16 %v938
      %v971 = vunpack.c.l.b16 %v939
      %v972 = vunpack.c.l.b16 %v940
      %v973 = vunpack.c.l.b16 %v941
      %v974 = vpack.c.b16 %v963, %v962
      %v975 = vpack.c.b16 %v965, %v964
      %v976 = vpack.c.b16 %v967, %v966
      %v977 = vpack.c.b16 %v969, %v968
      %v978 = vpack.c.b16 %v971, %v970
      %v979 = vpack.c.b16 %v973, %v972
      %v986 = vsel %vm371, %v949, 0
      %988 = vmatpush.bf16.msra.mxu0 0
      %989 = vmatpush.bf16.msra.mxu0 0
      %990 = vmatpush.bf16.msra.mxu0 %v979
      %991 = vmatpush.bf16.msra.mxu0 %v978
      %992 = vmatpush.bf16.msra.mxu0 %v977
      %993 = vmatpush.bf16.msra.mxu0 %v976
      %994 = vmatpush.bf16.msra.mxu0 %v975
      %995 = vmatpush.bf16.msra.mxu0 %v974
      %996 = vmatmul.bf16.gmra.mxu0 %v986
      %v997 = vpop.f32.mrf.mxu0
      %v998 = vadd.f32 0.0, %v997
      %v999 = vpop.f32.mrf.mxu0
      %1000 = vdwg.mxu0
      %v1001 = vadd.f32 %v862, %v998
      %s1002 = scalar_lea.vmem %s164, 24
      %v1003 = vld [vmem:[%s1002] sm:$0x1]
      %v1004 = vld [vmem:[%s1002 + $0x4] sm:$0x1]
      %v1005 = vld [vmem:[%s1002 + $0x18] sm:$0x1]
      %v1006 = vld [vmem:[%s1002 + $0x1c] sm:$0x1]
      %v1007 = vld [vmem:[%s1002] sm:$0x3]
      %v1008 = vld [vmem:[%s1002 + $0x4] sm:$0x3]
      %v1009 = vld [vmem:[%s1002 + $0x18] sm:$0x3]
      %v1010 = vld [vmem:[%s1002 + $0x1c] sm:$0x3]
      %1012 = vst [vmem:[#allocation1] ss:$4 sm:$0xff] %v1007
      %v1013 = vld.sshfl [vmem:[#allocation1] sm:$0xff pattern:$0x73625140]
      %s1015 = scalar_lea.vmem [#allocation1], 32
      %1016 = vst [vmem:[%s1015] ss:$4 sm:$0xff] %v1008
      %v1017 = vld.sshfl [vmem:[#allocation1 + $0x20] sm:$0xff pattern:$0x73625140]
      %1019 = vst [vmem:[#allocation1] ss:$4 sm:$0xff] %v1009
      %v1020 = vld.sshfl [vmem:[#allocation1] sm:$0xff pattern:$0x73625140]
      %1022 = vst [vmem:[%s1015] ss:$4 sm:$0xff] %v1010
      %v1023 = vld.sshfl [vmem:[#allocation1 + $0x20] sm:$0xff pattern:$0x73625140]
      %v1024 = vshrl.u32 %v1013, 16
      %v1026 = vshll.u32 %v1013, 16
      %v1028 = vrot.slane %v1026, 1
      %v1029 = vor.u32 %v1024, %v1028
      %v1030 = vshrl.u32 %v1017, 16
      %v1032 = vshll.u32 %v1017, 16
      %v1034 = vrot.slane %v1032, 1
      %v1035 = vor.u32 %v1030, %v1034
      %v1036 = vshrl.u32 %v1020, 16
      %v1038 = vshll.u32 %v1020, 16
      %v1040 = vrot.slane %v1038, 1
      %v1041 = vor.u32 %v1036, %v1040
      %v1042 = vshrl.u32 %v1023, 16
      %v1044 = vshll.u32 %v1023, 16
      %v1046 = vrot.slane %v1044, 1
      %v1047 = vor.u32 %v1042, %v1046
      %1048 = vrot.lane.b32.xlu0 %v1029, 64
      %v1049 = vpop.permute.xlu0 %1048
      %1050 = vrot.lane.b32.xlu0 %v1035, 64
      %v1051 = vpop.permute.xlu0 %1050
      %1052 = vrot.lane.b32.xlu0 %v1041, 64
      %v1053 = vpop.permute.xlu0 %1052
      %1054 = vrot.lane.b32.xlu0 %v1047, 64
      %v1055 = vpop.permute.xlu0 %1054
      %v1061 = vsel %vm227, %v1003, %v1049
      %v1063 = vsel %vm227, %v1004, %v1051
      %v1065 = vsel %vm227, %v1005, %v1053
      %v1067 = vsel %vm227, %v1006, %v1055
      %s1068 = scalar_lea.vmem %s1, 288
      %v1069 = vld [vmem:[%s1068] sm:$0xf]
      %v1070 = vld [vmem:[%s1068 + $0x4] sm:$0xf]
      %v1071 = vld [vmem:[%s1068 + $0x8] sm:$0xf]
      %v1072 = vld [vmem:[%s1068 + $0xc] sm:$0xf]
      %v1073 = vld [vmem:[%s1068 + $0x10] sm:$0xf]
      %v1074 = vld [vmem:[%s1068 + $0x14] sm:$0xf]
      %v1075 = vld [vmem:[%s1068 + $0x18] sm:$0xf]
      %v1076 = vld [vmem:[%s1068 + $0x1c] sm:$0xf]
      %v1077 = vld [vmem:[%s1068 + $0x20] sm:$0xf]
      %v1078 = vld [vmem:[%s1068 + $0x24] sm:$0xf]
      %v1079 = vld [vmem:[%s1068 + $0x28] sm:$0xf]
      %v1080 = vld [vmem:[%s1068 + $0x2c] sm:$0xf]
      %1081 = vst [vmem:[#allocation1] ss:$9 sm:$0xff] %v1061
      %s1082 = scalar_lea.vmem [#allocation1], 1
      %1083 = vst [vmem:[%s1082] ss:$9 sm:$0xff] %v1063
      %s1084 = scalar_lea.vmem [#allocation1], 2
      %1085 = vst [vmem:[%s1084] ss:$9 sm:$0xff] %v1065
      %s1086 = scalar_lea.vmem [#allocation1], 3
      %1087 = vst [vmem:[%s1086] ss:$9 sm:$0xff] %v1067
      %v1088 = vld [vmem:[#allocation1] sm:$0xff]
      %v1101 = vunpack.c.l.b16 %v1069
      %v1102 = vunpack.c.l.b16 %v1070
      %v1103 = vunpack.c.l.b16 %v1071
      %v1104 = vunpack.c.l.b16 %v1072
      %v1105 = vunpack.c.l.b16 %v1073
      %v1106 = vunpack.c.l.b16 %v1074
      %v1107 = vunpack.c.l.b16 %v1075
      %v1108 = vunpack.c.l.b16 %v1076
      %v1109 = vunpack.c.l.b16 %v1077
      %v1110 = vunpack.c.l.b16 %v1078
      %v1111 = vunpack.c.l.b16 %v1079
      %v1112 = vunpack.c.l.b16 %v1080
      %v1113 = vpack.c.b16 %v1102, %v1101
      %v1114 = vpack.c.b16 %v1104, %v1103
      %v1115 = vpack.c.b16 %v1106, %v1105
      %v1116 = vpack.c.b16 %v1108, %v1107
      %v1117 = vpack.c.b16 %v1110, %v1109
      %v1118 = vpack.c.b16 %v1112, %v1111
      %v1125 = vsel %vm371, %v1088, 0
      %1127 = vmatpush.bf16.msra.mxu0 0
      %1128 = vmatpush.bf16.msra.mxu0 0
      %1129 = vmatpush.bf16.msra.mxu0 %v1118
      %1130 = vmatpush.bf16.msra.mxu0 %v1117
      %1131 = vmatpush.bf16.msra.mxu0 %v1116
      %1132 = vmatpush.bf16.msra.mxu0 %v1115
      %1133 = vmatpush.bf16.msra.mxu0 %v1114
      %1134 = vmatpush.bf16.msra.mxu0 %v1113
      %1135 = vmatmul.bf16.gmra.mxu0 %v1125
      %v1136 = vpop.f32.mrf.mxu0
      %v1137 = vadd.f32 0.0, %v1136
      %v1138 = vpop.f32.mrf.mxu0
      %1139 = vdwg.mxu0
      %v1140 = vadd.f32 %v1001, %v1137
      %s1141 = scalar_lea.vmem %s164, 26
      %v1142 = vld [vmem:[%s1141] sm:$0x1]
      %v1143 = vld [vmem:[%s1141 + $0x4] sm:$0x1]
      %v1144 = vld [vmem:[%s1141 + $0x18] sm:$0x1]
      %v1145 = vld [vmem:[%s1141 + $0x1c] sm:$0x1]
      %v1146 = vld [vmem:[%s1141] sm:$0x3]
      %v1147 = vld [vmem:[%s1141 + $0x4] sm:$0x3]
      %v1148 = vld [vmem:[%s1141 + $0x18] sm:$0x3]
      %v1149 = vld [vmem:[%s1141 + $0x1c] sm:$0x3]
      %1151 = vst [vmem:[#allocation1] ss:$4 sm:$0xff] %v1146
      %v1152 = vld.sshfl [vmem:[#allocation1] sm:$0xff pattern:$0x73625140]
      %s1154 = scalar_lea.vmem [#allocation1], 32
      %1155 = vst [vmem:[%s1154] ss:$4 sm:$0xff] %v1147
      %v1156 = vld.sshfl [vmem:[#allocation1 + $0x20] sm:$0xff pattern:$0x73625140]
      %1158 = vst [vmem:[#allocation1] ss:$4 sm:$0xff] %v1148
      %v1159 = vld.sshfl [vmem:[#allocation1] sm:$0xff pattern:$0x73625140]
      %1161 = vst [vmem:[%s1154] ss:$4 sm:$0xff] %v1149
      %v1162 = vld.sshfl [vmem:[#allocation1 + $0x20] sm:$0xff pattern:$0x73625140]
      %v1163 = vshrl.u32 %v1152, 16
      %v1165 = vshll.u32 %v1152, 16
      %v1167 = vrot.slane %v1165, 1
      %v1168 = vor.u32 %v1163, %v1167
      %v1169 = vshrl.u32 %v1156, 16
      %v1171 = vshll.u32 %v1156, 16
      %v1173 = vrot.slane %v1171, 1
      %v1174 = vor.u32 %v1169, %v1173
      %v1175 = vshrl.u32 %v1159, 16
      %v1177 = vshll.u32 %v1159, 16
      %v1179 = vrot.slane %v1177, 1
      %v1180 = vor.u32 %v1175, %v1179
      %v1181 = vshrl.u32 %v1162, 16
      %v1183 = vshll.u32 %v1162, 16
      %v1185 = vrot.slane %v1183, 1
      %v1186 = vor.u32 %v1181, %v1185
      %1187 = vrot.lane.b32.xlu0 %v1168, 64
      %v1188 = vpop.permute.xlu0 %1187
      %1189 = vrot.lane.b32.xlu0 %v1174, 64
      %v1190 = vpop.permute.xlu0 %1189
      %1191 = vrot.lane.b32.xlu0 %v1180, 64
      %v1192 = vpop.permute.xlu0 %1191
      %1193 = vrot.lane.b32.xlu0 %v1186, 64
      %v1194 = vpop.permute.xlu0 %1193
      %v1200 = vsel %vm227, %v1142, %v1188
      %v1202 = vsel %vm227, %v1143, %v1190
      %v1204 = vsel %vm227, %v1144, %v1192
      %v1206 = vsel %vm227, %v1145, %v1194
      %s1207 = scalar_lea.vmem %s1, 336
      %v1208 = vld [vmem:[%s1207] sm:$0xf]
      %v1209 = vld [vmem:[%s1207 + $0x4] sm:$0xf]
      %v1210 = vld [vmem:[%s1207 + $0x8] sm:$0xf]
      %v1211 = vld [vmem:[%s1207 + $0xc] sm:$0xf]
      %v1212 = vld [vmem:[%s1207 + $0x10] sm:$0xf]
      %v1213 = vld [vmem:[%s1207 + $0x14] sm:$0xf]
      %v1214 = vld [vmem:[%s1207 + $0x18] sm:$0xf]
      %v1215 = vld [vmem:[%s1207 + $0x1c] sm:$0xf]
      %v1216 = vld [vmem:[%s1207 + $0x20] sm:$0xf]
      %v1217 = vld [vmem:[%s1207 + $0x24] sm:$0xf]
      %v1218 = vld [vmem:[%s1207 + $0x28] sm:$0xf]
      %v1219 = vld [vmem:[%s1207 + $0x2c] sm:$0xf]
      %1220 = vst [vmem:[#allocation1] ss:$9 sm:$0xff] %v1200
      %s1221 = scalar_lea.vmem [#allocation1], 1
      %1222 = vst [vmem:[%s1221] ss:$9 sm:$0xff] %v1202
      %s1223 = scalar_lea.vmem [#allocation1], 2
      %1224 = vst [vmem:[%s1223] ss:$9 sm:$0xff] %v1204
      %s1225 = scalar_lea.vmem [#allocation1], 3
      %1226 = vst [vmem:[%s1225] ss:$9 sm:$0xff] %v1206
      %v1227 = vld [vmem:[#allocation1] sm:$0xff]
      %v1240 = vunpack.c.l.b16 %v1208
      %v1241 = vunpack.c.l.b16 %v1209
      %v1242 = vunpack.c.l.b16 %v1210
      %v1243 = vunpack.c.l.b16 %v1211
      %v1244 = vunpack.c.l.b16 %v1212
      %v1245 = vunpack.c.l.b16 %v1213
      %v1246 = vunpack.c.l.b16 %v1214
      %v1247 = vunpack.c.l.b16 %v1215
      %v1248 = vunpack.c.l.b16 %v1216
      %v1249 = vunpack.c.l.b16 %v1217
      %v1250 = vunpack.c.l.b16 %v1218
      %v1251 = vunpack.c.l.b16 %v1219
      %v1252 = vpack.c.b16 %v1241, %v1240
      %v1253 = vpack.c.b16 %v1243, %v1242
      %v1254 = vpack.c.b16 %v1245, %v1244
      %v1255 = vpack.c.b16 %v1247, %v1246
      %v1256 = vpack.c.b16 %v1249, %v1248
      %v1257 = vpack.c.b16 %v1251, %v1250
      %v1264 = vsel %vm371, %v1227, 0
      %1266 = vmatpush.bf16.msra.mxu0 0
      %1267 = vmatpush.bf16.msra.mxu0 0
      %1268 = vmatpush.bf16.msra.mxu0 %v1257
      %1269 = vmatpush.bf16.msra.mxu0 %v1256
      %1270 = vmatpush.bf16.msra.mxu0 %v1255
      %1271 = vmatpush.bf16.msra.mxu0 %v1254
      %1272 = vmatpush.bf16.msra.mxu0 %v1253
      %1273 = vmatpush.bf16.msra.mxu0 %v1252
      %1274 = vmatmul.bf16.gmra.mxu0 %v1264
      %v1275 = vpop.f32.mrf.mxu0
      %v1276 = vadd.f32 0.0, %v1275
      %v1277 = vpop.f32.mrf.mxu0
      %1278 = vdwg.mxu0
      %v1279 = vadd.f32 %v1140, %v1276
      %s1280 = scalar_lea.vmem %s164, 28
      %v1281 = vld [vmem:[%s1280] sm:$0x1]
      %v1282 = vld [vmem:[%s1280 + $0x4] sm:$0x1]
      %v1283 = vld [vmem:[%s1280 + $0x18] sm:$0x1]
      %v1284 = vld [vmem:[%s1280 + $0x1c] sm:$0x1]
      %v1285 = vld [vmem:[%s1280] sm:$0x3]
      %v1286 = vld [vmem:[%s1280 + $0x4] sm:$0x3]
      %v1287 = vld [vmem:[%s1280 + $0x18] sm:$0x3]
      %v1288 = vld [vmem:[%s1280 + $0x1c] sm:$0x3]
      %1290 = vst [vmem:[#allocation1] ss:$4 sm:$0xff] %v1285
      %v1291 = vld.sshfl [vmem:[#allocation1] sm:$0xff pattern:$0x73625140]
      %s1293 = scalar_lea.vmem [#allocation1], 32
      %1294 = vst [vmem:[%s1293] ss:$4 sm:$0xff] %v1286
      %v1295 = vld.sshfl [vmem:[#allocation1 + $0x20] sm:$0xff pattern:$0x73625140]
      %1297 = vst [vmem:[#allocation1] ss:$4 sm:$0xff] %v1287
      %v1298 = vld.sshfl [vmem:[#allocation1] sm:$0xff pattern:$0x73625140]
      %1300 = vst [vmem:[%s1293] ss:$4 sm:$0xff] %v1288
      %v1301 = vld.sshfl [vmem:[#allocation1 + $0x20] sm:$0xff pattern:$0x73625140]
      %v1302 = vshrl.u32 %v1291, 16
      %v1304 = vshll.u32 %v1291, 16
      %v1306 = vrot.slane %v1304, 1
      %v1307 = vor.u32 %v1302, %v1306
      %v1308 = vshrl.u32 %v1295, 16
      %v1310 = vshll.u32 %v1295, 16
      %v1312 = vrot.slane %v1310, 1
      %v1313 = vor.u32 %v1308, %v1312
      %v1314 = vshrl.u32 %v1298, 16
      %v1316 = vshll.u32 %v1298, 16
      %v1318 = vrot.slane %v1316, 1
      %v1319 = vor.u32 %v1314, %v1318
      %v1320 = vshrl.u32 %v1301, 16
      %v1322 = vshll.u32 %v1301, 16
      %v1324 = vrot.slane %v1322, 1
      %v1325 = vor.u32 %v1320, %v1324
      %1326 = vrot.lane.b32.xlu0 %v1307, 64
      %v1327 = vpop.permute.xlu0 %1326
      %1328 = vrot.lane.b32.xlu0 %v1313, 64
      %v1329 = vpop.permute.xlu0 %1328
      %1330 = vrot.lane.b32.xlu0 %v1319, 64
      %v1331 = vpop.permute.xlu0 %1330
      %1332 = vrot.lane.b32.xlu0 %v1325, 64
      %v1333 = vpop.permute.xlu0 %1332
      %v1339 = vsel %vm227, %v1281, %v1327
      %v1341 = vsel %vm227, %v1282, %v1329
      %v1343 = vsel %vm227, %v1283, %v1331
      %v1345 = vsel %vm227, %v1284, %v1333
      %s1346 = scalar_lea.vmem %s1, 384
      %v1347 = vld [vmem:[%s1346] sm:$0xf]
      %v1348 = vld [vmem:[%s1346 + $0x4] sm:$0xf]
      %v1349 = vld [vmem:[%s1346 + $0x8] sm:$0xf]
      %v1350 = vld [vmem:[%s1346 + $0xc] sm:$0xf]
      %v1351 = vld [vmem:[%s1346 + $0x10] sm:$0xf]
      %v1352 = vld [vmem:[%s1346 + $0x14] sm:$0xf]
      %v1353 = vld [vmem:[%s1346 + $0x18] sm:$0xf]
      %v1354 = vld [vmem:[%s1346 + $0x1c] sm:$0xf]
      %v1355 = vld [vmem:[%s1346 + $0x20] sm:$0xf]
      %v1356 = vld [vmem:[%s1346 + $0x24] sm:$0xf]
      %v1357 = vld [vmem:[%s1346 + $0x28] sm:$0xf]
      %v1358 = vld [vmem:[%s1346 + $0x2c] sm:$0xf]
      %1359 = vst [vmem:[#allocation1] ss:$9 sm:$0xff] %v1339
      %s1360 = scalar_lea.vmem [#allocation1], 1
      %1361 = vst [vmem:[%s1360] ss:$9 sm:$0xff] %v1341
      %s1362 = scalar_lea.vmem [#allocation1], 2
      %1363 = vst [vmem:[%s1362] ss:$9 sm:$0xff] %v1343
      %s1364 = scalar_lea.vmem [#allocation1], 3
      %1365 = vst [vmem:[%s1364] ss:$9 sm:$0xff] %v1345
      %v1366 = vld [vmem:[#allocation1] sm:$0xff]
      %v1379 = vunpack.c.l.b16 %v1347
      %v1380 = vunpack.c.l.b16 %v1348
      %v1381 = vunpack.c.l.b16 %v1349
      %v1382 = vunpack.c.l.b16 %v1350
      %v1383 = vunpack.c.l.b16 %v1351
      %v1384 = vunpack.c.l.b16 %v1352
      %v1385 = vunpack.c.l.b16 %v1353
      %v1386 = vunpack.c.l.b16 %v1354
      %v1387 = vunpack.c.l.b16 %v1355
      %v1388 = vunpack.c.l.b16 %v1356
      %v1389 = vunpack.c.l.b16 %v1357
      %v1390 = vunpack.c.l.b16 %v1358
      %v1391 = vpack.c.b16 %v1380, %v1379
      %v1392 = vpack.c.b16 %v1382, %v1381
      %v1393 = vpack.c.b16 %v1384, %v1383
      %v1394 = vpack.c.b16 %v1386, %v1385
      %v1395 = vpack.c.b16 %v1388, %v1387
      %v1396 = vpack.c.b16 %v1390, %v1389
      %v1403 = vsel %vm371, %v1366, 0
      %1405 = vmatpush.bf16.msra.mxu0 0
      %1406 = vmatpush.bf16.msra.mxu0 0
      %1407 = vmatpush.bf16.msra.mxu0 %v1396
      %1408 = vmatpush.bf16.msra.mxu0 %v1395
      %1409 = vmatpush.bf16.msra.mxu0 %v1394
      %1410 = vmatpush.bf16.msra.mxu0 %v1393
      %1411 = vmatpush.bf16.msra.mxu0 %v1392
      %1412 = vmatpush.bf16.msra.mxu0 %v1391
      %1413 = vmatmul.bf16.gmra.mxu0 %v1403
      %v1414 = vpop.f32.mrf.mxu0
      %v1415 = vadd.f32 0.0, %v1414
      %v1416 = vpop.f32.mrf.mxu0
      %1417 = vdwg.mxu0
      %v1418 = vadd.f32 %v1279, %v1415
      %v1419 = vld [vmem:[%s2] sm:$0x1]
      %v1421 = vperm.slane %v1419, 0
      %v1423 = vadd.f32 %v1418, %v1421
      %vm1424 = vcmp.gt.f32.partialorder %v1423, 0.0
      %v1425 = vmul.f32 %v1423, 0.01
      %v1426 = vsel %vm1424, %v1423, %v1425
      %v1428 = vrot.slane %v1426, 2
      %v1429 = vrot.slane %v1426, 4
      %v1430 = vrot.slane %v1426, 6
      %v1434 = vpack.c.bf16 %v1426, %v1426
      %v1435 = vpack.c.bf16 %v1428, %v1428
      %v1436 = vpack.c.bf16 %v1429, %v1429
      %v1437 = vpack.c.bf16 %v1430, %v1430
      %vm1438 = vcmask 253952
      %1439 = vst.msk [vmem:[%s168] sm:$0x1] %vm1438, %v1434
      %1440 = vst.msk [vmem:[%s168 + $0x1] sm:$0x1] %vm1438, %v1435
      %1441 = vst.msk [vmem:[%s168 + $0x2] sm:$0x1] %vm1438, %v1436
      %1442 = vst.msk [vmem:[%s168 + $0x3] sm:$0x1] %vm1438, %v1437
      %p1443 = scmp.lt.s32.totalorder %s14, 1
      %s1444 = scalar_select %p1443, %s14, 1
      %s1445 = smul.addr %s1444, 4
      %s1446 = scalar_lea.vmem %s3, %s1445
      // Predicated region
      $region33: #{voxnet_forward.6} parent=31 // pred_check
        %p1447 = pneg %p100
      $region34: #{voxnet_forward.6} parent=31 // pred_check_branch
        %1449 = sbr.rel (%p1447) target = $region36
      $region35: #{voxnet_forward.6} parent=31 // pred_region
        _
      $region36: #{voxnet_forward.6} parent=31 // pred_fallthru
        _
    $region32: #{voxnet_forward.6} parent=5 // pred_fallthru
      _
    %p1450 = scmp.le.s32.totalorder 2, %s9
    // Predicated region
    $region37: #{voxnet_forward.6} parent=5 // pred_check
      %p1451 = pneg %p1450
    $region38: #{voxnet_forward.6} parent=5 // pred_check_branch
      %1453 = sbr.rel (%p1451) target = $region40
    $region39: #{voxnet_forward.6} parent=5 // pred_region
      %s1454 = ssub.s32 %s9, 2
      // Predicated region
      $region41: #{voxnet_forward.6} parent=39 // pred_check
        %p1455 = pneg %p106
      $region42: #{voxnet_forward.6} parent=39 // pred_check_branch
        %1457 = sbr.rel (%p1455) target = $region44
      $region43: #{voxnet_forward.6} parent=39 // pred_region
        %p1458 = scmp.lt.s32.totalorder %s15, 1
        %s1459 = scalar_select %p1458, %s15, 1
        %s1460 = smul.addr %s1459, 4
        %s1461 = scalar_lea.vmem %s3, %s1460
      $region44: #{voxnet_forward.6} parent=39 // pred_fallthru
        _
    $region40: #{voxnet_forward.6} parent=5 // pred_fallthru
      _
  $region6: #{voxnet_forward.6} parent=0 // loop_footer
    %s13 = sadd.s32 1, %s9
  $region7: #{voxnet_forward.6} parent=0 // loop_footer_branch
    %8 = sbr.rel target = $region3
  $region8: #{voxnet_forward.6} parent=0 // loop_exit
    _

// kernel: voxnet_forward.5
$region0: #{voxnet_forward.5}
  #allocation0 [shape = 'u32[]', space=smem, size = 0x4, offset = 0x4, fixed_abs, tag = 'smem constant byte address 0x4 - core index']
  #allocation1 [shape = 'u32[72,128]{1,0:T(1,128)}', space=vmem, size = 0x9000, scoped, tag = 'internal scratch']
  %s0 = inlined_call_operand.vmem [shape: bf16[2,6,6,6,32], index: 0, kind: input, shape index: {}]
  %s1 = inlined_call_operand.vmem [shape: bf16[3,3,96,32], index: 1, kind: input, shape index: {}]
  %s2 = inlined_call_operand.vmem [shape: f32[1,32], index: 2, kind: input, shape index: {}]
  %s3 = inlined_call_operand.vmem [shape: bf16[2,4,4,4,32], index: 3, kind: output, shape index: {}]
  %s4 = sld [smem:[#allocation0]]
  $region45: #{voxnet_forward.5} parent=0
    _
  %s6 = ssub.s32 1, %s4
  %s7 = scalar_select 0, %s6, %s4
  loop: start=0, step=1, limit=4
  $region2: #{voxnet_forward.5} parent=0 // loop_pre_header
    _
  $region3: #{voxnet_forward.5} parent=0 // loop_header
    %s9 = sphi 0, %s13
    %p10 = scmp.ge.s32.totalorder %s9, 4
    %s19 = sphi 0, %s21
    %s22 = sphi 0, %s19
    %s23 = sphi 0, %s22
    %s39 = sphi 0, %s23
    %s43 = sphi 0, %s43
    %s45 = sphi 0, %s43
    %s46 = sphi 0, %s45
    %s60 = sphi 0, %s46
    %s64 = sphi 0, %s64
    %s66 = sphi 0, %s64
    %s67 = sphi 0, %s66
    %s81 = sphi 0, %s67
    %s87 = sphi 0, %s89
    %s90 = sphi 0, %s87
    %s91 = sphi 0, %s90
    %s107 = sphi 0, %s91
  $region4: #{voxnet_forward.5} parent=0 // loop_header_branch
    %12 = sbr.rel (%p10) target = $region8
  $region5: #{voxnet_forward.5} parent=0 // loop_body
    %s14 = ssub.s32 %s9, 1
    %s15 = ssub.s32 %s9, 2
    %s16 = sadd.s32 %s9, 1
    %s17 = ssub.s32 %s9, %s16
    %p18 = scmp.eq.s32.totalorder %s17, 0
    %s20 = sadd.s32 %s19, 1
    %s21 = scalar_select %p18, %s19, %s20
    %p24 = pneg %p18
    %p25 = scmp.eq.s32.totalorder %s9, 1
    %p26 = por %p24, %p25
    %p27 = scmp.ne.s32.totalorder %s19, %s22
    %p28 = scmp.eq.s32.totalorder %s9, 0
    %p29 = por %p27, %p28
    %p30 = scmp.ne.s32.totalorder %s19, %s22
    %p31 = scmp.eq.s32.totalorder %s14, 1
    %p32 = por %p30, %p31
    %p33 = scmp.ne.s32.totalorder %s22, %s23
    %p34 = scmp.eq.s32.totalorder %s14, 0
    %p35 = por %p33, %p34
    %p36 = scmp.ne.s32.totalorder %s22, %s23
    %p37 = scmp.eq.s32.totalorder %s15, 1
    %p38 = por %p36, %p37
    %p40 = scmp.ne.s32.totalorder %s23, %s39
    %p41 = scmp.eq.s32.totalorder %s15, 0
    %p42 = por %p40, %p41
    %s44 = sadd.s32 %s43, 1
    %p47 = scmp.eq.s32.totalorder %s9, 1
    %p48 = scmp.ne.s32.totalorder %s43, %s45
    %p49 = scmp.eq.s32.totalorder %s9, 0
    %p50 = por %p48, %p49
    %p51 = scmp.ne.s32.totalorder %s43, %s45
    %p52 = scmp.eq.s32.totalorder %s14, 1
    %p53 = por %p51, %p52
    %p54 = scmp.ne.s32.totalorder %s45, %s46
    %p55 = scmp.eq.s32.totalorder %s14, 0
    %p56 = por %p54, %p55
    %p57 = scmp.ne.s32.totalorder %s45, %s46
    %p58 = scmp.eq.s32.totalorder %s15, 1
    %p59 = por %p57, %p58
    %p61 = scmp.ne.s32.totalorder %s46, %s60
    %p62 = scmp.eq.s32.totalorder %s15, 0
    %p63 = por %p61, %p62
    %s65 = sadd.s32 %s64, 1
    %p68 = scmp.eq.s32.totalorder %s9, 1
    %p69 = scmp.ne.s32.totalorder %s64, %s66
    %p70 = scmp.eq.s32.totalorder %s9, 0
    %p71 = por %p69, %p70
    %p72 = scmp.ne.s32.totalorder %s64, %s66
    %p73 = scmp.eq.s32.totalorder %s14, 1
    %p74 = por %p72, %p73
    %p75 = scmp.ne.s32.totalorder %s66, %s67
    %p76 = scmp.eq.s32.totalorder %s14, 0
    %p77 = por %p75, %p76
    %p78 = scmp.ne.s32.totalorder %s66, %s67
    %p79 = scmp.eq.s32.totalorder %s15, 1
    %p80 = por %p78, %p79
    %p82 = scmp.ne.s32.totalorder %s67, %s81
    %p83 = scmp.eq.s32.totalorder %s15, 0
    %p84 = por %p82, %p83
    %s85 = ssub.s32 %s9, %s16
    %p86 = scmp.eq.s32.totalorder %s85, 0
    %s88 = sadd.s32 %s87, 1
    %s89 = scalar_select %p86, %s87, %s88
    %p92 = pneg %p86
    %p93 = scmp.eq.s32.totalorder %s9, 1
    %p94 = por %p92, %p93
    %p95 = scmp.ne.s32.totalorder %s87, %s90
    %p96 = scmp.eq.s32.totalorder %s9, 0
    %p97 = por %p95, %p96
    %p98 = scmp.ne.s32.totalorder %s87, %s90
    %p99 = scmp.eq.s32.totalorder %s14, 1
    %p100 = por %p98, %p99
    %p101 = scmp.ne.s32.totalorder %s90, %s91
    %p102 = scmp.eq.s32.totalorder %s14, 0
    %p103 = por %p101, %p102
    %p104 = scmp.ne.s32.totalorder %s90, %s91
    %p105 = scmp.eq.s32.totalorder %s15, 1
    %p106 = por %p104, %p105
    %p108 = scmp.ne.s32.totalorder %s91, %s107
    %p109 = scmp.eq.s32.totalorder %s15, 0
    %p110 = por %p108, %p109
    %p111 = scmp.le.s32.totalorder 1, %s9
    %p112 = scmp.lt.s32.totalorder %s9, 3
    %p113 = pnand %p111, %p112
    %p114 = pneg %p113
    // Predicated region
    $region9: #{voxnet_forward.5} parent=5 // pred_check
      _
    $region10: #{voxnet_forward.5} parent=5 // pred_check_branch
      %116 = sbr.rel (%p113) target = $region12
    $region11: #{voxnet_forward.5} parent=5 // pred_region
      %s117 = ssub.s32 %s9, 1
      // Predicated region
      $region13: #{voxnet_forward.5} parent=11 // pred_check
        %p118 = pneg %p56
      $region14: #{voxnet_forward.5} parent=11 // pred_check_branch
        %120 = sbr.rel (%p118) target = $region16
      $region15: #{voxnet_forward.5} parent=11 // pred_region
        _
      $region16: #{voxnet_forward.5} parent=11 // pred_fallthru
        _
      // Predicated region
      $region17: #{voxnet_forward.5} parent=11 // pred_check
        %p121 = pneg %p77
      $region18: #{voxnet_forward.5} parent=11 // pred_check_branch
        %123 = sbr.rel (%p121) target = $region20
      $region19: #{voxnet_forward.5} parent=11 // pred_region
        _
      $region20: #{voxnet_forward.5} parent=11 // pred_fallthru
        _
    $region12: #{voxnet_forward.5} parent=5 // pred_fallthru
      _
    %p124 = scmp.lt.s32.totalorder %s9, 2
    // Predicated region
    $region21: #{voxnet_forward.5} parent=5 // pred_check
      %p125 = pneg %p124
    $region22: #{voxnet_forward.5} parent=5 // pred_check_branch
      %127 = sbr.rel (%p125) target = $region24
    $region23: #{voxnet_forward.5} parent=5 // pred_region
      // Predicated region
      $region25: #{voxnet_forward.5} parent=23 // pred_check
        %p128 = pneg %p29
      $region26: #{voxnet_forward.5} parent=23 // pred_check_branch
        %130 = sbr.rel (%p128) target = $region28
      $region27: #{voxnet_forward.5} parent=23 // pred_region
        %p131 = scmp.lt.s32.totalorder %s9, 1
        %s132 = scalar_select %p131, %s9, 1
        %s133 = smul.addr %s132, 36
        %s134 = smul.addr %s133, 4
        %s135 = scalar_lea.vmem %s0, %s134
      $region28: #{voxnet_forward.5} parent=23 // pred_fallthru
        _
    $region24: #{voxnet_forward.5} parent=5 // pred_fallthru
      _
    %p136 = scmp.le.s32.totalorder 1, %s9
    %p137 = scmp.lt.s32.totalorder %s9, 3
    %p138 = pnand %p136, %p137
    %p139 = pneg %p138
    // Predicated region
    $region29: #{voxnet_forward.5} parent=5 // pred_check
      _
    $region30: #{voxnet_forward.5} parent=5 // pred_check_branch
      %141 = sbr.rel (%p138) target = $region32
    $region31: #{voxnet_forward.5} parent=5 // pred_region
      %s142 = ssub.s32 %s9, 1
      %p143 = scmp.lt.s32.totalorder %s14, 1
      %s144 = scalar_select %p143, %s14, 1
      %s145 = smul.addr %s144, 36
      %s146 = smul.addr %s145, 4
      %s147 = scalar_lea.vmem %s0, %s146
      %p148 = pneg %p35
      %p149 = pneg %p32
      %p150 = pneg %p56
      %p151 = pneg %p53
      %p152 = pneg %p77
      %p153 = pneg %p74
      %p154 = pneg %p103
      %p155 = pneg %p100
      %p156 = scmp.lt.s32.totalorder %s14, 1
      %s157 = scalar_select %p156, %s14, 1
      %s158 = smul.addr %s157, 16
      %s159 = smul.addr %s158, 2
      %s160 = scalar_lea.vmem %s3, %s159
      %p161 = scmp.lt.s32.totalorder %s14, 1
      %s162 = scalar_select %p161, %s14, 1
      %s163 = smul.addr %s162, 36
      %s164 = smul.addr %s163, 4
      %s165 = scalar_lea.vmem %s0, %s164
      %p166 = scmp.lt.s32.totalorder %s14, 1
      %s167 = scalar_select %p166, %s14, 1
      %s168 = smul.addr %s167, 16
      %s169 = smul.addr %s168, 2
      %s170 = scalar_lea.vmem %s3, %s169
      %v172 = vld [vmem:[%s165] sm:$0x3]
      %v173 = vld [vmem:[%s165 + $0x4] sm:$0x3]
      %v174 = vld [vmem:[%s165 + $0x8] sm:$0x3]
      %v175 = vld [vmem:[%s165 + $0xc] sm:$0x3]
      %v176 = vld [vmem:[%s165 + $0x18] sm:$0x3]
      %v177 = vld [vmem:[%s165 + $0x1c] sm:$0x3]
      %v178 = vld [vmem:[%s165 + $0x20] sm:$0x3]
      %v179 = vld [vmem:[%s165 + $0x24] sm:$0x3]
      %v180 = vld [vmem:[%s165 + $0x30] sm:$0x3]
      %v181 = vld [vmem:[%s165 + $0x34] sm:$0x3]
      %v182 = vld [vmem:[%s165 + $0x38] sm:$0x3]
      %v183 = vld [vmem:[%s165 + $0x3c] sm:$0x3]
      %v184 = vld [vmem:[%s165 + $0x48] sm:$0x3]
      %v185 = vld [vmem:[%s165 + $0x4c] sm:$0x3]
      %v186 = vld [vmem:[%s165 + $0x50] sm:$0x3]
      %v187 = vld [vmem:[%s165 + $0x54] sm:$0x3]
      %v188 = vld [vmem:[%s165] sm:$0x7]
      %v189 = vld [vmem:[%s165 + $0x4] sm:$0x7]
      %v190 = vld [vmem:[%s165 + $0x8] sm:$0x7]
      %v191 = vld [vmem:[%s165 + $0xc] sm:$0x7]
      %v192 = vld [vmem:[%s165 + $0x18] sm:$0x7]
      %v193 = vld [vmem:[%s165 + $0x1c] sm:$0x7]
      %v194 = vld [vmem:[%s165 + $0x20] sm:$0x7]
      %v195 = vld [vmem:[%s165 + $0x24] sm:$0x7]
      %v196 = vld [vmem:[%s165 + $0x30] sm:$0x7]
      %v197 = vld [vmem:[%s165 + $0x34] sm:$0x7]
      %v198 = vld [vmem:[%s165 + $0x38] sm:$0x7]
      %v199 = vld [vmem:[%s165 + $0x3c] sm:$0x7]
      %v200 = vld [vmem:[%s165 + $0x48] sm:$0x7]
      %v201 = vld [vmem:[%s165 + $0x4c] sm:$0x7]
      %v202 = vld [vmem:[%s165 + $0x50] sm:$0x7]
      %v203 = vld [vmem:[%s165 + $0x54] sm:$0x7]
      %v204 = vld [vmem:[%s165] sm:$0x6]
      %v205 = vld [vmem:[%s165 + $0x4] sm:$0x6]
      %v206 = vld [vmem:[%s165 + $0x8] sm:$0x6]
      %v207 = vld [vmem:[%s165 + $0xc] sm:$0x6]
      %v208 = vld [vmem:[%s165 + $0x18] sm:$0x6]
      %v209 = vld [vmem:[%s165 + $0x1c] sm:$0x6]
      %v210 = vld [vmem:[%s165 + $0x20] sm:$0x6]
      %v211 = vld [vmem:[%s165 + $0x24] sm:$0x6]
      %v212 = vld [vmem:[%s165 + $0x30] sm:$0x6]
      %v213 = vld [vmem:[%s165 + $0x34] sm:$0x6]
      %v214 = vld [vmem:[%s165 + $0x38] sm:$0x6]
      %v215 = vld [vmem:[%s165 + $0x3c] sm:$0x6]
      %v216 = vld [vmem:[%s165 + $0x48] sm:$0x6]
      %v217 = vld [vmem:[%s165 + $0x4c] sm:$0x6]
      %v218 = vld [vmem:[%s165 + $0x50] sm:$0x6]
      %v219 = vld [vmem:[%s165 + $0x54] sm:$0x6]
      %v236 = vunpack.c.l.b16 %v188
      %v237 = vunpack.c.l.b16 %v189
      %v238 = vunpack.c.l.b16 %v190
      %v239 = vunpack.c.l.b16 %v191
      %v240 = vunpack.c.l.b16 %v192
      %v241 = vunpack.c.l.b16 %v193
      %v242 = vunpack.c.l.b16 %v194
      %v243 = vunpack.c.l.b16 %v195
      %v244 = vunpack.c.l.b16 %v196
      %v245 = vunpack.c.l.b16 %v197
      %v246 = vunpack.c.l.b16 %v198
      %v247 = vunpack.c.l.b16 %v199
      %v248 = vunpack.c.l.b16 %v200
      %v249 = vunpack.c.l.b16 %v201
      %v250 = vunpack.c.l.b16 %v202
      %v251 = vunpack.c.l.b16 %v203
      %v252 = vpack.c.b16 %v236, %v236
      %v253 = vpack.c.b16 %v237, %v237
      %v254 = vpack.c.b16 %v238, %v238
      %v255 = vpack.c.b16 %v239, %v239
      %v256 = vpack.c.b16 %v240, %v240
      %v257 = vpack.c.b16 %v241, %v241
      %v258 = vpack.c.b16 %v242, %v242
      %v259 = vpack.c.b16 %v243, %v243
      %v260 = vpack.c.b16 %v244, %v244
      %v261 = vpack.c.b16 %v245, %v245
      %v262 = vpack.c.b16 %v246, %v246
      %v263 = vpack.c.b16 %v247, %v247
      %v264 = vpack.c.b16 %v248, %v248
      %v265 = vpack.c.b16 %v249, %v249
      %v266 = vpack.c.b16 %v250, %v250
      %v267 = vpack.c.b16 %v251, %v251
      %v269 = vshrl.u32 %v252, 16
      %v271 = vshll.u32 %v252, 16
      %v273 = vrot.slane %v271, 1
      %v274 = vor.u32 %v269, %v273
      %v276 = vshrl.u32 %v253, 16
      %v278 = vshll.u32 %v253, 16
      %v280 = vrot.slane %v278, 1
      %v281 = vor.u32 %v276, %v280
      %v283 = vshrl.u32 %v254, 16
      %v285 = vshll.u32 %v254, 16
      %v287 = vrot.slane %v285, 1
      %v288 = vor.u32 %v283, %v287
      %v290 = vshrl.u32 %v255, 16
      %v292 = vshll.u32 %v255, 16
      %v294 = vrot.slane %v292, 1
      %v295 = vor.u32 %v290, %v294
      %v297 = vshrl.u32 %v256, 16
      %v299 = vshll.u32 %v256, 16
      %v301 = vrot.slane %v299, 1
      %v302 = vor.u32 %v297, %v301
      %v304 = vshrl.u32 %v257, 16
      %v306 = vshll.u32 %v257, 16
      %v308 = vrot.slane %v306, 1
      %v309 = vor.u32 %v304, %v308
      %v311 = vshrl.u32 %v258, 16
      %v313 = vshll.u32 %v258, 16
      %v315 = vrot.slane %v313, 1
      %v316 = vor.u32 %v311, %v315
      %v318 = vshrl.u32 %v259, 16
      %v320 = vshll.u32 %v259, 16
      %v322 = vrot.slane %v320, 1
      %v323 = vor.u32 %v318, %v322
      %v325 = vshrl.u32 %v260, 16
      %v327 = vshll.u32 %v260, 16
      %v329 = vrot.slane %v327, 1
      %v330 = vor.u32 %v325, %v329
      %v332 = vshrl.u32 %v261, 16
      %v334 = vshll.u32 %v261, 16
      %v336 = vrot.slane %v334, 1
      %v337 = vor.u32 %v332, %v336
      %v339 = vshrl.u32 %v262, 16
      %v341 = vshll.u32 %v262, 16
      %v343 = vrot.slane %v341, 1
      %v344 = vor.u32 %v339, %v343
      %v346 = vshrl.u32 %v263, 16
      %v348 = vshll.u32 %v263, 16
      %v350 = vrot.slane %v348, 1
      %v351 = vor.u32 %v346, %v350
      %v353 = vshrl.u32 %v264, 16
      %v355 = vshll.u32 %v264, 16
      %v357 = vrot.slane %v355, 1
      %v358 = vor.u32 %v353, %v357
      %v360 = vshrl.u32 %v265, 16
      %v362 = vshll.u32 %v265, 16
      %v364 = vrot.slane %v362, 1
      %v365 = vor.u32 %v360, %v364
      %v367 = vshrl.u32 %v266, 16
      %v369 = vshll.u32 %v266, 16
      %v371 = vrot.slane %v369, 1
      %v372 = vor.u32 %v367, %v371
      %v374 = vshrl.u32 %v267, 16
      %v376 = vshll.u32 %v267, 16
      %v378 = vrot.slane %v376, 1
      %v379 = vor.u32 %v374, %v378
      %380 = vrot.lane.b32.xlu0 %v274, 32
      %v381 = vpop.permute.xlu0 %380
      %382 = vrot.lane.b32.xlu0 %v281, 32
      %v383 = vpop.permute.xlu0 %382
      %384 = vrot.lane.b32.xlu0 %v288, 32
      %v385 = vpop.permute.xlu0 %384
      %386 = vrot.lane.b32.xlu0 %v295, 32
      %v387 = vpop.permute.xlu0 %386
      %388 = vrot.lane.b32.xlu0 %v302, 32
      %v389 = vpop.permute.xlu0 %388
      %390 = vrot.lane.b32.xlu0 %v309, 32
      %v391 = vpop.permute.xlu0 %390
      %392 = vrot.lane.b32.xlu0 %v316, 32
      %v393 = vpop.permute.xlu0 %392
      %394 = vrot.lane.b32.xlu0 %v323, 32
      %v395 = vpop.permute.xlu0 %394
      %396 = vrot.lane.b32.xlu0 %v330, 32
      %v397 = vpop.permute.xlu0 %396
      %398 = vrot.lane.b32.xlu0 %v337, 32
      %v399 = vpop.permute.xlu0 %398
      %400 = vrot.lane.b32.xlu0 %v344, 32
      %v401 = vpop.permute.xlu0 %400
      %402 = vrot.lane.b32.xlu0 %v351, 32
      %v403 = vpop.permute.xlu0 %402
      %404 = vrot.lane.b32.xlu0 %v358, 32
      %v405 = vpop.permute.xlu0 %404
      %406 = vrot.lane.b32.xlu0 %v365, 32
      %v407 = vpop.permute.xlu0 %406
      %408 = vrot.lane.b32.xlu0 %v372, 32
      %v409 = vpop.permute.xlu0 %408
      %410 = vrot.lane.b32.xlu0 %v379, 32
      %v411 = vpop.permute.xlu0 %410
      %v428 = vunpack.c.l.b16 %v204
      %v429 = vunpack.c.l.b16 %v205
      %v430 = vunpack.c.l.b16 %v206
      %v431 = vunpack.c.l.b16 %v207
      %v432 = vunpack.c.l.b16 %v208
      %v433 = vunpack.c.l.b16 %v209
      %v434 = vunpack.c.l.b16 %v210
      %v435 = vunpack.c.l.b16 %v211
      %v436 = vunpack.c.l.b16 %v212
      %v437 = vunpack.c.l.b16 %v213
      %v438 = vunpack.c.l.b16 %v214
      %v439 = vunpack.c.l.b16 %v215
      %v440 = vunpack.c.l.b16 %v216
      %v441 = vunpack.c.l.b16 %v217
      %v442 = vunpack.c.l.b16 %v218
      %v443 = vunpack.c.l.b16 %v219
      %v444 = vpack.c.b16 %v428, %v428
      %v445 = vpack.c.b16 %v429, %v429
      %v446 = vpack.c.b16 %v430, %v430
      %v447 = vpack.c.b16 %v431, %v431
      %v448 = vpack.c.b16 %v432, %v432
      %v449 = vpack.c.b16 %v433, %v433
      %v450 = vpack.c.b16 %v434, %v434
      %v451 = vpack.c.b16 %v435, %v435
      %v452 = vpack.c.b16 %v436, %v436
      %v453 = vpack.c.b16 %v437, %v437
      %v454 = vpack.c.b16 %v438, %v438
      %v455 = vpack.c.b16 %v439, %v439
      %v456 = vpack.c.b16 %v440, %v440
      %v457 = vpack.c.b16 %v441, %v441
      %v458 = vpack.c.b16 %v442, %v442
      %v459 = vpack.c.b16 %v443, %v443
      %v460 = vrot.slane %v444, 1
      %v461 = vrot.slane %v445, 1
      %v462 = vrot.slane %v446, 1
      %v463 = vrot.slane %v447, 1
      %v464 = vrot.slane %v448, 1
      %v465 = vrot.slane %v449, 1
      %v466 = vrot.slane %v450, 1
      %v467 = vrot.slane %v451, 1
      %v468 = vrot.slane %v452, 1
      %v469 = vrot.slane %v453, 1
      %v470 = vrot.slane %v454, 1
      %v471 = vrot.slane %v455, 1
      %v472 = vrot.slane %v456, 1
      %v473 = vrot.slane %v457, 1
      %v474 = vrot.slane %v458, 1
      %v475 = vrot.slane %v459, 1
      %476 = vrot.lane.b32.xlu0 %v460, 64
      %v477 = vpop.permute.xlu0 %476
      %478 = vrot.lane.b32.xlu0 %v461, 64
      %v479 = vpop.permute.xlu0 %478
      %480 = vrot.lane.b32.xlu0 %v462, 64
      %v481 = vpop.permute.xlu0 %480
      %482 = vrot.lane.b32.xlu0 %v463, 64
      %v483 = vpop.permute.xlu0 %482
      %484 = vrot.lane.b32.xlu0 %v464, 64
      %v485 = vpop.permute.xlu0 %484
      %486 = vrot.lane.b32.xlu0 %v465, 64
      %v487 = vpop.permute.xlu0 %486
      %488 = vrot.lane.b32.xlu0 %v466, 64
      %v489 = vpop.permute.xlu0 %488
      %490 = vrot.lane.b32.xlu0 %v467, 64
      %v491 = vpop.permute.xlu0 %490
      %492 = vrot.lane.b32.xlu0 %v468, 64
      %v493 = vpop.permute.xlu0 %492
      %494 = vrot.lane.b32.xlu0 %v469, 64
      %v495 = vpop.permute.xlu0 %494
      %496 = vrot.lane.b32.xlu0 %v470, 64
      %v497 = vpop.permute.xlu0 %496
      %498 = vrot.lane.b32.xlu0 %v471, 64
      %v499 = vpop.permute.xlu0 %498
      %500 = vrot.lane.b32.xlu0 %v472, 64
      %v501 = vpop.permute.xlu0 %500
      %502 = vrot.lane.b32.xlu0 %v473, 64
      %v503 = vpop.permute.xlu0 %502
      %504 = vrot.lane.b32.xlu0 %v474, 64
      %v505 = vpop.permute.xlu0 %504
      %506 = vrot.lane.b32.xlu0 %v475, 64
      %v507 = vpop.permute.xlu0 %506
      %vm508 = vcmask 261120
      %v511 = vsel %vm508, %v172, %v381
      %v514 = vsel %vm508, %v173, %v383
      %v517 = vsel %vm508, %v174, %v385
      %v520 = vsel %vm508, %v175, %v387
      %v523 = vsel %vm508, %v176, %v389
      %v526 = vsel %vm508, %v177, %v391
      %v529 = vsel %vm508, %v178, %v393
      %v532 = vsel %vm508, %v179, %v395
      %v535 = vsel %vm508, %v180, %v397
      %v538 = vsel %vm508, %v181, %v399
      %v541 = vsel %vm508, %v182, %v401
      %v544 = vsel %vm508, %v183, %v403
      %v547 = vsel %vm508, %v184, %v405
      %v550 = vsel %vm508, %v185, %v407
      %v553 = vsel %vm508, %v186, %v409
      %v556 = vsel %vm508, %v187, %v411
      %vm557 = vcmask 523264
      %v559 = vsel %vm557, %v511, %v477
      %v561 = vsel %vm557, %v514, %v479
      %v563 = vsel %vm557, %v517, %v481
      %v565 = vsel %vm557, %v520, %v483
      %v567 = vsel %vm557, %v523, %v485
      %v569 = vsel %vm557, %v526, %v487
      %v571 = vsel %vm557, %v529, %v489
      %v573 = vsel %vm557, %v532, %v491
      %v575 = vsel %vm557, %v535, %v493
      %v577 = vsel %vm557, %v538, %v495
      %v579 = vsel %vm557, %v541, %v497
      %v581 = vsel %vm557, %v544, %v499
      %v583 = vsel %vm557, %v547, %v501
      %v585 = vsel %vm557, %v550, %v503
      %v587 = vsel %vm557, %v553, %v505
      %v589 = vsel %vm557, %v556, %v507
      %v590 = vld [vmem:[%s1] sm:$0xf]
      %v591 = vld [vmem:[%s1 + $0x4] sm:$0xf]
      %v592 = vld [vmem:[%s1 + $0x8] sm:$0xf]
      %v593 = vld [vmem:[%s1 + $0xc] sm:$0xf]
      %v594 = vld [vmem:[%s1 + $0x10] sm:$0xf]
      %v595 = vld [vmem:[%s1 + $0x14] sm:$0xf]
      %v596 = vld [vmem:[%s1 + $0x18] sm:$0xf]
      %v597 = vld [vmem:[%s1 + $0x1c] sm:$0xf]
      %v598 = vld [vmem:[%s1 + $0x20] sm:$0xf]
      %v599 = vld [vmem:[%s1 + $0x24] sm:$0xf]
      %v600 = vld [vmem:[%s1 + $0x28] sm:$0xf]
      %v601 = vld [vmem:[%s1 + $0x2c] sm:$0xf]
      %s602 = scalar_lea.vmem %s165, 4
      %v603 = vld [vmem:[%s602] sm:$0x3]
      %v604 = vld [vmem:[%s602 + $0x4] sm:$0x3]
      %v605 = vld [vmem:[%s602 + $0x8] sm:$0x3]
      %v606 = vld [vmem:[%s602 + $0xc] sm:$0x3]
      %v607 = vld [vmem:[%s602 + $0x18] sm:$0x3]
      %v608 = vld [vmem:[%s602 + $0x1c] sm:$0x3]
      %v609 = vld [vmem:[%s602 + $0x20] sm:$0x3]
      %v610 = vld [vmem:[%s602 + $0x24] sm:$0x3]
      %v611 = vld [vmem:[%s602 + $0x30] sm:$0x3]
      %v612 = vld [vmem:[%s602 + $0x34] sm:$0x3]
      %v613 = vld [vmem:[%s602 + $0x38] sm:$0x3]
      %v614 = vld [vmem:[%s602 + $0x3c] sm:$0x3]
      %v615 = vld [vmem:[%s602 + $0x48] sm:$0x3]
      %v616 = vld [vmem:[%s602 + $0x4c] sm:$0x3]
      %v617 = vld [vmem:[%s602 + $0x50] sm:$0x3]
      %v618 = vld [vmem:[%s602 + $0x54] sm:$0x3]
      %v619 = vld [vmem:[%s602] sm:$0x7]
      %v620 = vld [vmem:[%s602 + $0x4] sm:$0x7]
      %v621 = vld [vmem:[%s602 + $0x8] sm:$0x7]
      %v622 = vld [vmem:[%s602 + $0xc] sm:$0x7]
      %v623 = vld [vmem:[%s602 + $0x18] sm:$0x7]
      %v624 = vld [vmem:[%s602 + $0x1c] sm:$0x7]
      %v625 = vld [vmem:[%s602 + $0x20] sm:$0x7]
      %v626 = vld [vmem:[%s602 + $0x24] sm:$0x7]
      %v627 = vld [vmem:[%s602 + $0x30] sm:$0x7]
      %v628 = vld [vmem:[%s602 + $0x34] sm:$0x7]
      %v629 = vld [vmem:[%s602 + $0x38] sm:$0x7]
      %v630 = vld [vmem:[%s602 + $0x3c] sm:$0x7]
      %v631 = vld [vmem:[%s602 + $0x48] sm:$0x7]
      %v632 = vld [vmem:[%s602 + $0x4c] sm:$0x7]
      %v633 = vld [vmem:[%s602 + $0x50] sm:$0x7]
      %v634 = vld [vmem:[%s602 + $0x54] sm:$0x7]
      %v635 = vld [vmem:[%s602] sm:$0x6]
      %v636 = vld [vmem:[%s602 + $0x4] sm:$0x6]
      %v637 = vld [vmem:[%s602 + $0x8] sm:$0x6]
      %v638 = vld [vmem:[%s602 + $0xc] sm:$0x6]
      %v639 = vld [vmem:[%s602 + $0x18] sm:$0x6]
      %v640 = vld [vmem:[%s602 + $0x1c] sm:$0x6]
      %v641 = vld [vmem:[%s602 + $0x20] sm:$0x6]
      %v642 = vld [vmem:[%s602 + $0x24] sm:$0x6]
      %v643 = vld [vmem:[%s602 + $0x30] sm:$0x6]
      %v644 = vld [vmem:[%s602 + $0x34] sm:$0x6]
      %v645 = vld [vmem:[%s602 + $0x38] sm:$0x6]
      %v646 = vld [vmem:[%s602 + $0x3c] sm:$0x6]
      %v647 = vld [vmem:[%s602 + $0x48] sm:$0x6]
      %v648 = vld [vmem:[%s602 + $0x4c] sm:$0x6]
      %v649 = vld [vmem:[%s602 + $0x50] sm:$0x6]
      %v650 = vld [vmem:[%s602 + $0x54] sm:$0x6]
      %v667 = vunpack.c.l.b16 %v619
      %v668 = vunpack.c.l.b16 %v620
      %v669 = vunpack.c.l.b16 %v621
      %v670 = vunpack.c.l.b16 %v622
      %v671 = vunpack.c.l.b16 %v623
      %v672 = vunpack.c.l.b16 %v624
      %v673 = vunpack.c.l.b16 %v625
      %v674 = vunpack.c.l.b16 %v626
      %v675 = vunpack.c.l.b16 %v627
      %v676 = vunpack.c.l.b16 %v628
      %v677 = vunpack.c.l.b16 %v629
      %v678 = vunpack.c.l.b16 %v630
      %v679 = vunpack.c.l.b16 %v631
      %v680 = vunpack.c.l.b16 %v632
      %v681 = vunpack.c.l.b16 %v633
      %v682 = vunpack.c.l.b16 %v634
      %v683 = vpack.c.b16 %v667, %v667
      %v684 = vpack.c.b16 %v668, %v668
      %v685 = vpack.c.b16 %v669, %v669
      %v686 = vpack.c.b16 %v670, %v670
      %v687 = vpack.c.b16 %v671, %v671
      %v688 = vpack.c.b16 %v672, %v672
      %v689 = vpack.c.b16 %v673, %v673
      %v690 = vpack.c.b16 %v674, %v674
      %v691 = vpack.c.b16 %v675, %v675
      %v692 = vpack.c.b16 %v676, %v676
      %v693 = vpack.c.b16 %v677, %v677
      %v694 = vpack.c.b16 %v678, %v678
      %v695 = vpack.c.b16 %v679, %v679
      %v696 = vpack.c.b16 %v680, %v680
      %v697 = vpack.c.b16 %v681, %v681
      %v698 = vpack.c.b16 %v682, %v682
      %v700 = vshrl.u32 %v683, 16
      %v702 = vshll.u32 %v683, 16
      %v704 = vrot.slane %v702, 1
      %v705 = vor.u32 %v700, %v704
      %v707 = vshrl.u32 %v684, 16
      %v709 = vshll.u32 %v684, 16
      %v711 = vrot.slane %v709, 1
      %v712 = vor.u32 %v707, %v711
      %v714 = vshrl.u32 %v685, 16
      %v716 = vshll.u32 %v685, 16
      %v718 = vrot.slane %v716, 1
      %v719 = vor.u32 %v714, %v718
      %v721 = vshrl.u32 %v686, 16
      %v723 = vshll.u32 %v686, 16
      %v725 = vrot.slane %v723, 1
      %v726 = vor.u32 %v721, %v725
      %v728 = vshrl.u32 %v687, 16
      %v730 = vshll.u32 %v687, 16
      %v732 = vrot.slane %v730, 1
      %v733 = vor.u32 %v728, %v732
      %v735 = vshrl.u32 %v688, 16
      %v737 = vshll.u32 %v688, 16
      %v739 = vrot.slane %v737, 1
      %v740 = vor.u32 %v735, %v739
      %v742 = vshrl.u32 %v689, 16
      %v744 = vshll.u32 %v689, 16
      %v746 = vrot.slane %v744, 1
      %v747 = vor.u32 %v742, %v746
      %v749 = vshrl.u32 %v690, 16
      %v751 = vshll.u32 %v690, 16
      %v753 = vrot.slane %v751, 1
      %v754 = vor.u32 %v749, %v753
      %v756 = vshrl.u32 %v691, 16
      %v758 = vshll.u32 %v691, 16
      %v760 = vrot.slane %v758, 1
      %v761 = vor.u32 %v756, %v760
      %v763 = vshrl.u32 %v692, 16
      %v765 = vshll.u32 %v692, 16
      %v767 = vrot.slane %v765, 1
      %v768 = vor.u32 %v763, %v767
      %v770 = vshrl.u32 %v693, 16
      %v772 = vshll.u32 %v693, 16
      %v774 = vrot.slane %v772, 1
      %v775 = vor.u32 %v770, %v774
      %v777 = vshrl.u32 %v694, 16
      %v779 = vshll.u32 %v694, 16
      %v781 = vrot.slane %v779, 1
      %v782 = vor.u32 %v777, %v781
      %v784 = vshrl.u32 %v695, 16
      %v786 = vshll.u32 %v695, 16
      %v788 = vrot.slane %v786, 1
      %v789 = vor.u32 %v784, %v788
      %v791 = vshrl.u32 %v696, 16
      %v793 = vshll.u32 %v696, 16
      %v795 = vrot.slane %v793, 1
      %v796 = vor.u32 %v791, %v795
      %v798 = vshrl.u32 %v697, 16
      %v800 = vshll.u32 %v697, 16
      %v802 = vrot.slane %v800, 1
      %v803 = vor.u32 %v798, %v802
      %v805 = vshrl.u32 %v698, 16
      %v807 = vshll.u32 %v698, 16
      %v809 = vrot.slane %v807, 1
      %v810 = vor.u32 %v805, %v809
      %811 = vrot.lane.b32.xlu0 %v705, 32
      %v812 = vpop.permute.xlu0 %811
      %813 = vrot.lane.b32.xlu0 %v712, 32
      %v814 = vpop.permute.xlu0 %813
      %815 = vrot.lane.b32.xlu0 %v719, 32
      %v816 = vpop.permute.xlu0 %815
      %817 = vrot.lane.b32.xlu0 %v726, 32
      %v818 = vpop.permute.xlu0 %817
      %819 = vrot.lane.b32.xlu0 %v733, 32
      %v820 = vpop.permute.xlu0 %819
      %821 = vrot.lane.b32.xlu0 %v740, 32
      %v822 = vpop.permute.xlu0 %821
      %823 = vrot.lane.b32.xlu0 %v747, 32
      %v824 = vpop.permute.xlu0 %823
      %825 = vrot.lane.b32.xlu0 %v754, 32
      %v826 = vpop.permute.xlu0 %825
      %827 = vrot.lane.b32.xlu0 %v761, 32
      %v828 = vpop.permute.xlu0 %827
      %829 = vrot.lane.b32.xlu0 %v768, 32
      %v830 = vpop.permute.xlu0 %829
      %831 = vrot.lane.b32.xlu0 %v775, 32
      %v832 = vpop.permute.xlu0 %831
      %833 = vrot.lane.b32.xlu0 %v782, 32
      %v834 = vpop.permute.xlu0 %833
      %835 = vrot.lane.b32.xlu0 %v789, 32
      %v836 = vpop.permute.xlu0 %835
      %837 = vrot.lane.b32.xlu0 %v796, 32
      %v838 = vpop.permute.xlu0 %837
      %839 = vrot.lane.b32.xlu0 %v803, 32
      %v840 = vpop.permute.xlu0 %839
      %841 = vrot.lane.b32.xlu0 %v810, 32
      %v842 = vpop.permute.xlu0 %841
      %v859 = vunpack.c.l.b16 %v635
      %v860 = vunpack.c.l.b16 %v636
      %v861 = vunpack.c.l.b16 %v637
      %v862 = vunpack.c.l.b16 %v638
      %v863 = vunpack.c.l.b16 %v639
      %v864 = vunpack.c.l.b16 %v640
      %v865 = vunpack.c.l.b16 %v641
      %v866 = vunpack.c.l.b16 %v642
      %v867 = vunpack.c.l.b16 %v643
      %v868 = vunpack.c.l.b16 %v644
      %v869 = vunpack.c.l.b16 %v645
      %v870 = vunpack.c.l.b16 %v646
      %v871 = vunpack.c.l.b16 %v647
      %v872 = vunpack.c.l.b16 %v648
      %v873 = vunpack.c.l.b16 %v649
      %v874 = vunpack.c.l.b16 %v650
      %v875 = vpack.c.b16 %v859, %v859
      %v876 = vpack.c.b16 %v860, %v860
      %v877 = vpack.c.b16 %v861, %v861
      %v878 = vpack.c.b16 %v862, %v862
      %v879 = vpack.c.b16 %v863, %v863
      %v880 = vpack.c.b16 %v864, %v864
      %v881 = vpack.c.b16 %v865, %v865
      %v882 = vpack.c.b16 %v866, %v866
      %v883 = vpack.c.b16 %v867, %v867
      %v884 = vpack.c.b16 %v868, %v868
      %v885 = vpack.c.b16 %v869, %v869
      %v886 = vpack.c.b16 %v870, %v870
      %v887 = vpack.c.b16 %v871, %v871
      %v888 = vpack.c.b16 %v872, %v872
      %v889 = vpack.c.b16 %v873, %v873
      %v890 = vpack.c.b16 %v874, %v874
      %v891 = vrot.slane %v875, 1
      %v892 = vrot.slane %v876, 1
      %v893 = vrot.slane %v877, 1
      %v894 = vrot.slane %v878, 1
      %v895 = vrot.slane %v879, 1
      %v896 = vrot.slane %v880, 1
      %v897 = vrot.slane %v881, 1
      %v898 = vrot.slane %v882, 1
      %v899 = vrot.slane %v883, 1
      %v900 = vrot.slane %v884, 1
      %v901 = vrot.slane %v885, 1
      %v902 = vrot.slane %v886, 1
      %v903 = vrot.slane %v887, 1
      %v904 = vrot.slane %v888, 1
      %v905 = vrot.slane %v889, 1
      %v906 = vrot.slane %v890, 1
      %907 = vrot.lane.b32.xlu0 %v891, 64
      %v908 = vpop.permute.xlu0 %907
      %909 = vrot.lane.b32.xlu0 %v892, 64
      %v910 = vpop.permute.xlu0 %909
      %911 = vrot.lane.b32.xlu0 %v893, 64
      %v912 = vpop.permute.xlu0 %911
      %913 = vrot.lane.b32.xlu0 %v894, 64
      %v914 = vpop.permute.xlu0 %913
      %915 = vrot.lane.b32.xlu0 %v895, 64
      %v916 = vpop.permute.xlu0 %915
      %917 = vrot.lane.b32.xlu0 %v896, 64
      %v918 = vpop.permute.xlu0 %917
      %919 = vrot.lane.b32.xlu0 %v897, 64
      %v920 = vpop.permute.xlu0 %919
      %921 = vrot.lane.b32.xlu0 %v898, 64
      %v922 = vpop.permute.xlu0 %921
      %923 = vrot.lane.b32.xlu0 %v899, 64
      %v924 = vpop.permute.xlu0 %923
      %925 = vrot.lane.b32.xlu0 %v900, 64
      %v926 = vpop.permute.xlu0 %925
      %927 = vrot.lane.b32.xlu0 %v901, 64
      %v928 = vpop.permute.xlu0 %927
      %929 = vrot.lane.b32.xlu0 %v902, 64
      %v930 = vpop.permute.xlu0 %929
      %931 = vrot.lane.b32.xlu0 %v903, 64
      %v932 = vpop.permute.xlu0 %931
      %933 = vrot.lane.b32.xlu0 %v904, 64
      %v934 = vpop.permute.xlu0 %933
      %935 = vrot.lane.b32.xlu0 %v905, 64
      %v936 = vpop.permute.xlu0 %935
      %937 = vrot.lane.b32.xlu0 %v906, 64
      %v938 = vpop.permute.xlu0 %937
      %v941 = vsel %vm508, %v603, %v812
      %v944 = vsel %vm508, %v604, %v814
      %v947 = vsel %vm508, %v605, %v816
      %v950 = vsel %vm508, %v606, %v818
      %v953 = vsel %vm508, %v607, %v820
      %v956 = vsel %vm508, %v608, %v822
      %v959 = vsel %vm508, %v609, %v824
      %v962 = vsel %vm508, %v610, %v826
      %v965 = vsel %vm508, %v611, %v828
      %v968 = vsel %vm508, %v612, %v830
      %v971 = vsel %vm508, %v613, %v832
      %v974 = vsel %vm508, %v614, %v834
      %v977 = vsel %vm508, %v615, %v836
      %v980 = vsel %vm508, %v616, %v838
      %v983 = vsel %vm508, %v617, %v840
      %v986 = vsel %vm508, %v618, %v842
      %v988 = vsel %vm557, %v941, %v908
      %v990 = vsel %vm557, %v944, %v910
      %v992 = vsel %vm557, %v947, %v912
      %v994 = vsel %vm557, %v950, %v914
      %v996 = vsel %vm557, %v953, %v916
      %v998 = vsel %vm557, %v956, %v918
      %v1000 = vsel %vm557, %v959, %v920
      %v1002 = vsel %vm557, %v962, %v922
      %v1004 = vsel %vm557, %v965, %v924
      %v1006 = vsel %vm557, %v968, %v926
      %v1008 = vsel %vm557, %v971, %v928
      %v1010 = vsel %vm557, %v974, %v930
      %v1012 = vsel %vm557, %v977, %v932
      %v1014 = vsel %vm557, %v980, %v934
      %v1016 = vsel %vm557, %v983, %v936
      %v1018 = vsel %vm557, %v986, %v938
      %s1019 = scalar_lea.vmem %s1, 48
      %v1020 = vld [vmem:[%s1019] sm:$0xf]
      %v1021 = vld [vmem:[%s1019 + $0x4] sm:$0xf]
      %v1022 = vld [vmem:[%s1019 + $0x8] sm:$0xf]
      %v1023 = vld [vmem:[%s1019 + $0xc] sm:$0xf]
      %v1024 = vld [vmem:[%s1019 + $0x10] sm:$0xf]
      %v1025 = vld [vmem:[%s1019 + $0x14] sm:$0xf]
      %v1026 = vld [vmem:[%s1019 + $0x18] sm:$0xf]
      %v1027 = vld [vmem:[%s1019 + $0x1c] sm:$0xf]
      %v1028 = vld [vmem:[%s1019 + $0x20] sm:$0xf]
      %v1029 = vld [vmem:[%s1019 + $0x24] sm:$0xf]
      %v1030 = vld [vmem:[%s1019 + $0x28] sm:$0xf]
      %v1031 = vld [vmem:[%s1019 + $0x2c] sm:$0xf]
      %1032 = vst [vmem:[#allocation1] ss:$4 sm:$0xff] %v988
      %s1033 = scalar_lea.vmem [#allocation1], 1
      %1034 = vst [vmem:[%s1033] ss:$4 sm:$0xff] %v990
      %s1035 = scalar_lea.vmem [#allocation1], 2
      %1036 = vst [vmem:[%s1035] ss:$4 sm:$0xff] %v992
      %s1037 = scalar_lea.vmem [#allocation1], 3
      %1038 = vst [vmem:[%s1037] ss:$4 sm:$0xff] %v994
      %s1039 = scalar_lea.vmem [#allocation1], 32
      %1040 = vst [vmem:[%s1039] ss:$4 sm:$0xff] %v996
      %s1041 = scalar_lea.vmem [#allocation1], 33
      %1042 = vst [vmem:[%s1041] ss:$4 sm:$0xff] %v998
      %s1043 = scalar_lea.vmem [#allocation1], 34
      %1044 = vst [vmem:[%s1043] ss:$4 sm:$0xff] %v1000
      %s1045 = scalar_lea.vmem [#allocation1], 35
      %1046 = vst [vmem:[%s1045] ss:$4 sm:$0xff] %v1002
      %v1047 = vld.sshfl [vmem:[#allocation1] sm:$0xff pattern:$0x73625140]
      %v1048 = vld.sshfl [vmem:[#allocation1 + $0x20] sm:$0xff pattern:$0x73625140]
      %1049 = vst [vmem:[#allocation1] ss:$4 sm:$0xff] %v1004
      %1050 = vst [vmem:[%s1033] ss:$4 sm:$0xff] %v1006
      %1051 = vst [vmem:[%s1035] ss:$4 sm:$0xff] %v1008
      %1052 = vst [vmem:[%s1037] ss:$4 sm:$0xff] %v1010
      %1053 = vst [vmem:[%s1039] ss:$4 sm:$0xff] %v1012
      %1054 = vst [vmem:[%s1041] ss:$4 sm:$0xff] %v1014
      %1055 = vst [vmem:[%s1043] ss:$4 sm:$0xff] %v1016
      %1056 = vst [vmem:[%s1045] ss:$4 sm:$0xff] %v1018
      %v1057 = vld.sshfl [vmem:[#allocation1] sm:$0xff pattern:$0x73625140]
      %v1058 = vld.sshfl [vmem:[#allocation1 + $0x20] sm:$0xff pattern:$0x73625140]
      %v1071 = vunpack.c.l.b16 %v1020
      %v1072 = vunpack.c.l.b16 %v1021
      %v1073 = vunpack.c.l.b16 %v1022
      %v1074 = vunpack.c.l.b16 %v1023
      %v1075 = vunpack.c.l.b16 %v1024
      %v1076 = vunpack.c.l.b16 %v1025
      %v1077 = vunpack.c.l.b16 %v1026
      %v1078 = vunpack.c.l.b16 %v1027
      %v1079 = vunpack.c.l.b16 %v1028
      %v1080 = vunpack.c.l.b16 %v1029
      %v1081 = vunpack.c.l.b16 %v1030
      %v1082 = vunpack.c.l.b16 %v1031
      %v1083 = vpack.c.b16 %v1072, %v1071
      %v1084 = vpack.c.b16 %v1074, %v1073
      %v1085 = vpack.c.b16 %v1076, %v1075
      %v1086 = vpack.c.b16 %v1078, %v1077
      %v1087 = vpack.c.b16 %v1080, %v1079
      %v1088 = vpack.c.b16 %v1082, %v1081
      %vm1095 = vcmask 785408
      %v1096 = vsel %vm1095, %v1047, 0
      %v1098 = vsel %vm1095, %v1048, 0
      %v1100 = vsel %vm1095, %v1057, 0
      %v1102 = vsel %vm1095, %v1058, 0
      %1104 = vmatpush.bf16.msra.mxu0 0
      %1105 = vmatpush.bf16.msra.mxu0 0
      %1106 = vmatpush.bf16.msra.mxu0 %v1088
      %1107 = vmatpush.bf16.msra.mxu0 %v1087
      %1108 = vmatpush.bf16.msra.mxu0 %v1086
      %1109 = vmatpush.bf16.msra.mxu0 %v1085
      %1110 = vmatpush.bf16.msra.mxu0 %v1084
      %1111 = vmatpush.bf16.msra.mxu0 %v1083
      %1112 = vmatmul.bf16.gmra.mxu0 %v1096
      %v1113 = vpop.f32.mrf.mxu0
      %v1114 = vadd.f32 0.0, %v1113
      %v1115 = vpop.f32.mrf.mxu0
      %v1116 = vadd.f32 0.0, %v1115
      %1117 = vmatmul.bf16.gmra.mxu0 %v1098
      %v1118 = vpop.f32.mrf.mxu0
      %v1119 = vadd.f32 0.0, %v1118
      %v1120 = vpop.f32.mrf.mxu0
      %v1121 = vadd.f32 0.0, %v1120
      %1122 = vmatmul.bf16.gmra.mxu0 %v1100
      %v1123 = vpop.f32.mrf.mxu0
      %v1124 = vadd.f32 0.0, %v1123
      %v1125 = vpop.f32.mrf.mxu0
      %v1126 = vadd.f32 0.0, %v1125
      %1127 = vmatmul.bf16.gmra.mxu0 %v1102
      %v1128 = vpop.f32.mrf.mxu0
      %v1129 = vadd.f32 0.0, %v1128
      %v1130 = vpop.f32.mrf.mxu0
      %v1131 = vadd.f32 0.0, %v1130
      %1132 = vdwg.mxu0
      %1133 = vst [vmem:[#allocation1] ss:$4 sm:$0xff] %v559
      %s1134 = scalar_lea.vmem [#allocation1], 1
      %1135 = vst [vmem:[%s1134] ss:$4 sm:$0xff] %v561
      %s1136 = scalar_lea.vmem [#allocation1], 2
      %1137 = vst [vmem:[%s1136] ss:$4 sm:$0xff] %v563
      %s1138 = scalar_lea.vmem [#allocation1], 3
      %1139 = vst [vmem:[%s1138] ss:$4 sm:$0xff] %v565
      %s1140 = scalar_lea.vmem [#allocation1], 32
      %1141 = vst [vmem:[%s1140] ss:$4 sm:$0xff] %v567
      %s1142 = scalar_lea.vmem [#allocation1], 33
      %1143 = vst [vmem:[%s1142] ss:$4 sm:$0xff] %v569
      %s1144 = scalar_lea.vmem [#allocation1], 34
      %1145 = vst [vmem:[%s1144] ss:$4 sm:$0xff] %v571
      %s1146 = scalar_lea.vmem [#allocation1], 35
      %1147 = vst [vmem:[%s1146] ss:$4 sm:$0xff] %v573
      %v1148 = vld.sshfl [vmem:[#allocation1] sm:$0xff pattern:$0x73625140]
      %v1149 = vld.sshfl [vmem:[#allocation1 + $0x20] sm:$0xff pattern:$0x73625140]
      %1150 = vst [vmem:[#allocation1] ss:$4 sm:$0xff] %v575
      %1151 = vst [vmem:[%s1134] ss:$4 sm:$0xff] %v577
      %1152 = vst [vmem:[%s1136] ss:$4 sm:$0xff] %v579
      %1153 = vst [vmem:[%s1138] ss:$4 sm:$0xff] %v581
      %1154 = vst [vmem:[%s1140] ss:$4 sm:$0xff] %v583
      %1155 = vst [vmem:[%s1142] ss:$4 sm:$0xff] %v585
      %1156 = vst [vmem:[%s1144] ss:$4 sm:$0xff] %v587
      %1157 = vst [vmem:[%s1146] ss:$4 sm:$0xff] %v589
      %v1158 = vld.sshfl [vmem:[#allocation1] sm:$0xff pattern:$0x73625140]
      %v1159 = vld.sshfl [vmem:[#allocation1 + $0x20] sm:$0xff pattern:$0x73625140]
      %v1172 = vunpack.c.l.b16 %v590
      %v1173 = vunpack.c.l.b16 %v591
      %v1174 = vunpack.c.l.b16 %v592
      %v1175 = vunpack.c.l.b16 %v593
      %v1176 = vunpack.c.l.b16 %v594
      %v1177 = vunpack.c.l.b16 %v595
      %v1178 = vunpack.c.l.b16 %v596
      %v1179 = vunpack.c.l.b16 %v597
      %v1180 = vunpack.c.l.b16 %v598
      %v1181 = vunpack.c.l.b16 %v599
      %v1182 = vunpack.c.l.b16 %v600
      %v1183 = vunpack.c.l.b16 %v601
      %v1184 = vpack.c.b16 %v1173, %v1172
      %v1185 = vpack.c.b16 %v1175, %v1174
      %v1186 = vpack.c.b16 %v1177, %v1176
      %v1187 = vpack.c.b16 %v1179, %v1178
      %v1188 = vpack.c.b16 %v1181, %v1180
      %v1189 = vpack.c.b16 %v1183, %v1182
      %v1196 = vsel %vm1095, %v1148, 0
      %v1198 = vsel %vm1095, %v1149, 0
      %v1200 = vsel %vm1095, %v1158, 0
      %v1202 = vsel %vm1095, %v1159, 0
      %1204 = vmatpush.bf16.msra.mxu0 0
      %1205 = vmatpush.bf16.msra.mxu0 0
      %1206 = vmatpush.bf16.msra.mxu0 %v1189
      %1207 = vmatpush.bf16.msra.mxu0 %v1188
      %1208 = vmatpush.bf16.msra.mxu0 %v1187
      %1209 = vmatpush.bf16.msra.mxu0 %v1186
      %1210 = vmatpush.bf16.msra.mxu0 %v1185
      %1211 = vmatpush.bf16.msra.mxu0 %v1184
      %1212 = vmatmul.bf16.gmra.mxu0 %v1196
      %v1213 = vpop.f32.mrf.mxu0
      %v1214 = vadd.f32 %v1114, %v1213
      %v1215 = vpop.f32.mrf.mxu0
      %v1216 = vadd.f32 %v1116, %v1215
      %1217 = vmatmul.bf16.gmra.mxu0 %v1198
      %v1218 = vpop.f32.mrf.mxu0
      %v1219 = vadd.f32 %v1119, %v1218
      %v1220 = vpop.f32.mrf.mxu0
      %v1221 = vadd.f32 %v1121, %v1220
      %1222 = vmatmul.bf16.gmra.mxu0 %v1200
      %v1223 = vpop.f32.mrf.mxu0
      %v1224 = vadd.f32 %v1124, %v1223
      %v1225 = vpop.f32.mrf.mxu0
      %v1226 = vadd.f32 %v1126, %v1225
      %1227 = vmatmul.bf16.gmra.mxu0 %v1202
      %v1228 = vpop.f32.mrf.mxu0
      %v1229 = vadd.f32 %v1129, %v1228
      %v1230 = vpop.f32.mrf.mxu0
      %v1231 = vadd.f32 %v1131, %v1230
      %1232 = vdwg.mxu0
      %s1233 = scalar_lea.vmem %s165, 8
      %v1234 = vld [vmem:[%s1233] sm:$0x3]
      %v1235 = vld [vmem:[%s1233 + $0x4] sm:$0x3]
      %v1236 = vld [vmem:[%s1233 + $0x8] sm:$0x3]
      %v1237 = vld [vmem:[%s1233 + $0xc] sm:$0x3]
      %v1238 = vld [vmem:[%s1233 + $0x18] sm:$0x3]
      %v1239 = vld [vmem:[%s1233 + $0x1c] sm:$0x3]
      %v1240 = vld [vmem:[%s1233 + $0x20] sm:$0x3]
      %v1241 = vld [vmem:[%s1233 + $0x24] sm:$0x3]
      %v1242 = vld [vmem:[%s1233 + $0x30] sm:$0x3]
      %v1243 = vld [vmem:[%s1233 + $0x34] sm:$0x3]
      %v1244 = vld [vmem:[%s1233 + $0x38] sm:$0x3]
      %v1245 = vld [vmem:[%s1233 + $0x3c] sm:$0x3]
      %v1246 = vld [vmem:[%s1233 + $0x48] sm:$0x3]
      %v1247 = vld [vmem:[%s1233 + $0x4c] sm:$0x3]
      %v1248 = vld [vmem:[%s1233 + $0x50] sm:$0x3]
      %v1249 = vld [vmem:[%s1233 + $0x54] sm:$0x3]
      %v1250 = vld [vmem:[%s1233] sm:$0x7]
      %v1251 = vld [vmem:[%s1233 + $0x4] sm:$0x7]
      %v1252 = vld [vmem:[%s1233 + $0x8] sm:$0x7]
      %v1253 = vld [vmem:[%s1233 + $0xc] sm:$0x7]
      %v1254 = vld [vmem:[%s1233 + $0x18] sm:$0x7]
      %v1255 = vld [vmem:[%s1233 + $0x1c] sm:$0x7]
      %v1256 = vld [vmem:[%s1233 + $0x20] sm:$0x7]
      %v1257 = vld [vmem:[%s1233 + $0x24] sm:$0x7]
      %v1258 = vld [vmem:[%s1233 + $0x30] sm:$0x7]
      %v1259 = vld [vmem:[%s1233 + $0x34] sm:$0x7]
      %v1260 = vld [vmem:[%s1233 + $0x38] sm:$0x7]
      %v1261 = vld [vmem:[%s1233 + $0x3c] sm:$0x7]
      %v1262 = vld [vmem:[%s1233 + $0x48] sm:$0x7]
      %v1263 = vld [vmem:[%s1233 + $0x4c] sm:$0x7]
      %v1264 = vld [vmem:[%s1233 + $0x50] sm:$0x7]
      %v1265 = vld [vmem:[%s1233 + $0x54] sm:$0x7]
      %v1266 = vld [vmem:[%s1233] sm:$0x6]
      %v1267 = vld [vmem:[%s1233 + $0x4] sm:$0x6]
      %v1268 = vld [vmem:[%s1233 + $0x8] sm:$0x6]
      %v1269 = vld [vmem:[%s1233 + $0xc] sm:$0x6]
      %v1270 = vld [vmem:[%s1233 + $0x18] sm:$0x6]
      %v1271 = vld [vmem:[%s1233 + $0x1c] sm:$0x6]
      %v1272 = vld [vmem:[%s1233 + $0x20] sm:$0x6]
      %v1273 = vld [vmem:[%s1233 + $0x24] sm:$0x6]
      %v1274 = vld [vmem:[%s1233 + $0x30] sm:$0x6]
      %v1275 = vld [vmem:[%s1233 + $0x34] sm:$0x6]
      %v1276 = vld [vmem:[%s1233 + $0x38] sm:$0x6]
      %v1277 = vld [vmem:[%s1233 + $0x3c] sm:$0x6]
      %v1278 = vld [vmem:[%s1233 + $0x48] sm:$0x6]
      %v1279 = vld [vmem:[%s1233 + $0x4c] sm:$0x6]
      %v1280 = vld [vmem:[%s1233 + $0x50] sm:$0x6]
      %v1281 = vld [vmem:[%s1233 + $0x54] sm:$0x6]
      %v1298 = vunpack.c.l.b16 %v1250
      %v1299 = vunpack.c.l.b16 %v1251
      %v1300 = vunpack.c.l.b16 %v1252
      %v1301 = vunpack.c.l.b16 %v1253
      %v1302 = vunpack.c.l.b16 %v1254
      %v1303 = vunpack.c.l.b16 %v1255
      %v1304 = vunpack.c.l.b16 %v1256
      %v1305 = vunpack.c.l.b16 %v1257
      %v1306 = vunpack.c.l.b16 %v1258
      %v1307 = vunpack.c.l.b16 %v1259
      %v1308 = vunpack.c.l.b16 %v1260
      %v1309 = vunpack.c.l.b16 %v1261
      %v1310 = vunpack.c.l.b16 %v1262
      %v1311 = vunpack.c.l.b16 %v1263
      %v1312 = vunpack.c.l.b16 %v1264
      %v1313 = vunpack.c.l.b16 %v1265
      %v1314 = vpack.c.b16 %v1298, %v1298
      %v1315 = vpack.c.b16 %v1299, %v1299
      %v1316 = vpack.c.b16 %v1300, %v1300
      %v1317 = vpack.c.b16 %v1301, %v1301
      %v1318 = vpack.c.b16 %v1302, %v1302
      %v1319 = vpack.c.b16 %v1303, %v1303
      %v1320 = vpack.c.b16 %v1304, %v1304
      %v1321 = vpack.c.b16 %v1305, %v1305
      %v1322 = vpack.c.b16 %v1306, %v1306
      %v1323 = vpack.c.b16 %v1307, %v1307
      %v1324 = vpack.c.b16 %v1308, %v1308
      %v1325 = vpack.c.b16 %v1309, %v1309
      %v1326 = vpack.c.b16 %v1310, %v1310
      %v1327 = vpack.c.b16 %v1311, %v1311
      %v1328 = vpack.c.b16 %v1312, %v1312
      %v1329 = vpack.c.b16 %v1313, %v1313
      %v1331 = vshrl.u32 %v1314, 16
      %v1333 = vshll.u32 %v1314, 16
      %v1335 = vrot.slane %v1333, 1
      %v1336 = vor.u32 %v1331, %v1335
      %v1338 = vshrl.u32 %v1315, 16
      %v1340 = vshll.u32 %v1315, 16
      %v1342 = vrot.slane %v1340, 1
      %v1343 = vor.u32 %v1338, %v1342
      %v1345 = vshrl.u32 %v1316, 16
      %v1347 = vshll.u32 %v1316, 16
      %v1349 = vrot.slane %v1347, 1
      %v1350 = vor.u32 %v1345, %v1349
      %v1352 = vshrl.u32 %v1317, 16
      %v1354 = vshll.u32 %v1317, 16
      %v1356 = vrot.slane %v1354, 1
      %v1357 = vor.u32 %v1352, %v1356
      %v1359 = vshrl.u32 %v1318, 16
      %v1361 = vshll.u32 %v1318, 16
      %v1363 = vrot.slane %v1361, 1
      %v1364 = vor.u32 %v1359, %v1363
      %v1366 = vshrl.u32 %v1319, 16
      %v1368 = vshll.u32 %v1319, 16
      %v1370 = vrot.slane %v1368, 1
      %v1371 = vor.u32 %v1366, %v1370
      %v1373 = vshrl.u32 %v1320, 16
      %v1375 = vshll.u32 %v1320, 16
      %v1377 = vrot.slane %v1375, 1
      %v1378 = vor.u32 %v1373, %v1377
      %v1380 = vshrl.u32 %v1321, 16
      %v1382 = vshll.u32 %v1321, 16
      %v1384 = vrot.slane %v1382, 1
      %v1385 = vor.u32 %v1380, %v1384
      %v1387 = vshrl.u32 %v1322, 16
      %v1389 = vshll.u32 %v1322, 16
      %v1391 = vrot.slane %v1389, 1
      %v1392 = vor.u32 %v1387, %v1391
      %v1394 = vshrl.u32 %v1323, 16
      %v1396 = vshll.u32 %v1323, 16
      %v1398 = vrot.slane %v1396, 1
      %v1399 = vor.u32 %v1394, %v1398
      %v1401 = vshrl.u32 %v1324, 16
      %v1403 = vshll.u32 %v1324, 16
      %v1405 = vrot.slane %v1403, 1
      %v1406 = vor.u32 %v1401, %v1405
      %v1408 = vshrl.u32 %v1325, 16
      %v1410 = vshll.u32 %v1325, 16
      %v1412 = vrot.slane %v1410, 1
      %v1413 = vor.u32 %v1408, %v1412
      %v1415 = vshrl.u32 %v1326, 16
      %v1417 = vshll.u32 %v1326, 16
      %v1419 = vrot.slane %v1417, 1
      %v1420 = vor.u32 %v1415, %v1419
      %v1422 = vshrl.u32 %v1327, 16
      %v1424 = vshll.u32 %v1327, 16
      %v1426 = vrot.slane %v1424, 1
      %v1427 = vor.u32 %v1422, %v1426
      %v1429 = vshrl.u32 %v1328, 16
      %v1431 = vshll.u32 %v1328, 16
      %v1433 = vrot.slane %v1431, 1
      %v1434 = vor.u32 %v1429, %v1433
      %v1436 = vshrl.u32 %v1329, 16
      %v1438 = vshll.u32 %v1329, 16
      %v1440 = vrot.slane %v1438, 1
      %v1441 = vor.u32 %v1436, %v1440
      %1442 = vrot.lane.b32.xlu0 %v1336, 32
      %v1443 = vpop.permute.xlu0 %1442
      %1444 = vrot.lane.b32.xlu0 %v1343, 32
      %v1445 = vpop.permute.xlu0 %1444
      %1446 = vrot.lane.b32.xlu0 %v1350, 32
      %v1447 = vpop.permute.xlu0 %1446
      %1448 = vrot.lane.b32.xlu0 %v1357, 32
      %v1449 = vpop.permute.xlu0 %1448
      %1450 = vrot.lane.b32.xlu0 %v1364, 32
      %v1451 = vpop.permute.xlu0 %1450
      %1452 = vrot.lane.b32.xlu0 %v1371, 32
      %v1453 = vpop.permute.xlu0 %1452
      %1454 = vrot.lane.b32.xlu0 %v1378, 32
      %v1455 = vpop.permute.xlu0 %1454
      %1456 = vrot.lane.b32.xlu0 %v1385, 32
      %v1457 = vpop.permute.xlu0 %1456
      %1458 = vrot.lane.b32.xlu0 %v1392, 32
      %v1459 = vpop.permute.xlu0 %1458
      %1460 = vrot.lane.b32.xlu0 %v1399, 32
      %v1461 = vpop.permute.xlu0 %1460
      %1462 = vrot.lane.b32.xlu0 %v1406, 32
      %v1463 = vpop.permute.xlu0 %1462
      %1464 = vrot.lane.b32.xlu0 %v1413, 32
      %v1465 = vpop.permute.xlu0 %1464
      %1466 = vrot.lane.b32.xlu0 %v1420, 32
      %v1467 = vpop.permute.xlu0 %1466
      %1468 = vrot.lane.b32.xlu0 %v1427, 32
      %v1469 = vpop.permute.xlu0 %1468
      %1470 = vrot.lane.b32.xlu0 %v1434, 32
      %v1471 = vpop.permute.xlu0 %1470
      %1472 = vrot.lane.b32.xlu0 %v1441, 32
      %v1473 = vpop.permute.xlu0 %1472
      %v1490 = vunpack.c.l.b16 %v1266
      %v1491 = vunpack.c.l.b16 %v1267
      %v1492 = vunpack.c.l.b16 %v1268
      %v1493 = vunpack.c.l.b16 %v1269
      %v1494 = vunpack.c.l.b16 %v1270
      %v1495 = vunpack.c.l.b16 %v1271
      %v1496 = vunpack.c.l.b16 %v1272
      %v1497 = vunpack.c.l.b16 %v1273
      %v1498 = vunpack.c.l.b16 %v1274
      %v1499 = vunpack.c.l.b16 %v1275
      %v1500 = vunpack.c.l.b16 %v1276
      %v1501 = vunpack.c.l.b16 %v1277
      %v1502 = vunpack.c.l.b16 %v1278
      %v1503 = vunpack.c.l.b16 %v1279
      %v1504 = vunpack.c.l.b16 %v1280
      %v1505 = vunpack.c.l.b16 %v1281
      %v1506 = vpack.c.b16 %v1490, %v1490
      %v1507 = vpack.c.b16 %v1491, %v1491
      %v1508 = vpack.c.b16 %v1492, %v1492
      %v1509 = vpack.c.b16 %v1493, %v1493
      %v1510 = vpack.c.b16 %v1494, %v1494
      %v1511 = vpack.c.b16 %v1495, %v1495
      %v1512 = vpack.c.b16 %v1496, %v1496
      %v1513 = vpack.c.b16 %v1497, %v1497
      %v1514 = vpack.c.b16 %v1498, %v1498
      %v1515 = vpack.c.b16 %v1499, %v1499
      %v1516 = vpack.c.b16 %v1500, %v1500
      %v1517 = vpack.c.b16 %v1501, %v1501
      %v1518 = vpack.c.b16 %v1502, %v1502
      %v1519 = vpack.c.b16 %v1503, %v1503
      %v1520 = vpack.c.b16 %v1504, %v1504
      %v1521 = vpack.c.b16 %v1505, %v1505
      %v1522 = vrot.slane %v1506, 1
      %v1523 = vrot.slane %v1507, 1
      %v1524 = vrot.slane %v1508, 1
      %v1525 = vrot.slane %v1509, 1
      %v1526 = vrot.slane %v1510, 1
      %v1527 = vrot.slane %v1511, 1
      %v1528 = vrot.slane %v1512, 1
      %v1529 = vrot.slane %v1513, 1
      %v1530 = vrot.slane %v1514, 1
      %v1531 = vrot.slane %v1515, 1
      %v1532 = vrot.slane %v1516, 1
      %v1533 = vrot.slane %v1517, 1
      %v1534 = vrot.slane %v1518, 1
      %v1535 = vrot.slane %v1519, 1
      %v1536 = vrot.slane %v1520, 1
      %v1537 = vrot.slane %v1521, 1
      %1538 = vrot.lane.b32.xlu0 %v1522, 64
      %v1539 = vpop.permute.xlu0 %1538
      %1540 = vrot.lane.b32.xlu0 %v1523, 64
      %v1541 = vpop.permute.xlu0 %1540
      %1542 = vrot.lane.b32.xlu0 %v1524, 64
      %v1543 = vpop.permute.xlu0 %1542
      %1544 = vrot.lane.b32.xlu0 %v1525, 64
      %v1545 = vpop.permute.xlu0 %1544
      %1546 = vrot.lane.b32.xlu0 %v1526, 64
      %v1547 = vpop.permute.xlu0 %1546
      %1548 = vrot.lane.b32.xlu0 %v1527, 64
      %v1549 = vpop.permute.xlu0 %1548
      %1550 = vrot.lane.b32.xlu0 %v1528, 64
      %v1551 = vpop.permute.xlu0 %1550
      %1552 = vrot.lane.b32.xlu0 %v1529, 64
      %v1553 = vpop.permute.xlu0 %1552
      %1554 = vrot.lane.b32.xlu0 %v1530, 64
      %v1555 = vpop.permute.xlu0 %1554
      %1556 = vrot.lane.b32.xlu0 %v1531, 64
      %v1557 = vpop.permute.xlu0 %1556
      %1558 = vrot.lane.b32.xlu0 %v1532, 64
      %v1559 = vpop.permute.xlu0 %1558
      %1560 = vrot.lane.b32.xlu0 %v1533, 64
      %v1561 = vpop.permute.xlu0 %1560
      %1562 = vrot.lane.b32.xlu0 %v1534, 64
      %v1563 = vpop.permute.xlu0 %1562
      %1564 = vrot.lane.b32.xlu0 %v1535, 64
      %v1565 = vpop.permute.xlu0 %1564
      %1566 = vrot.lane.b32.xlu0 %v1536, 64
      %v1567 = vpop.permute.xlu0 %1566
      %1568 = vrot.lane.b32.xlu0 %v1537, 64
      %v1569 = vpop.permute.xlu0 %1568
      %v1572 = vsel %vm508, %v1234, %v1443
      %v1575 = vsel %vm508, %v1235, %v1445
      %v1578 = vsel %vm508, %v1236, %v1447
      %v1581 = vsel %vm508, %v1237, %v1449
      %v1584 = vsel %vm508, %v1238, %v1451
      %v1587 = vsel %vm508, %v1239, %v1453
      %v1590 = vsel %vm508, %v1240, %v1455
      %v1593 = vsel %vm508, %v1241, %v1457
      %v1596 = vsel %vm508, %v1242, %v1459
      %v1599 = vsel %vm508, %v1243, %v1461
      %v1602 = vsel %vm508, %v1244, %v1463
      %v1605 = vsel %vm508, %v1245, %v1465
      %v1608 = vsel %vm508, %v1246, %v1467
      %v1611 = vsel %vm508, %v1247, %v1469
      %v1614 = vsel %vm508, %v1248, %v1471
      %v1617 = vsel %vm508, %v1249, %v1473
      %v1619 = vsel %vm557, %v1572, %v1539
      %v1621 = vsel %vm557, %v1575, %v1541
      %v1623 = vsel %vm557, %v1578, %v1543
      %v1625 = vsel %vm557, %v1581, %v1545
      %v1627 = vsel %vm557, %v1584, %v1547
      %v1629 = vsel %vm557, %v1587, %v1549
      %v1631 = vsel %vm557, %v1590, %v1551
      %v1633 = vsel %vm557, %v1593, %v1553
      %v1635 = vsel %vm557, %v1596, %v1555
      %v1637 = vsel %vm557, %v1599, %v1557
      %v1639 = vsel %vm557, %v1602, %v1559
      %v1641 = vsel %vm557, %v1605, %v1561
      %v1643 = vsel %vm557, %v1608, %v1563
      %v1645 = vsel %vm557, %v1611, %v1565
      %v1647 = vsel %vm557, %v1614, %v1567
      %v1649 = vsel %vm557, %v1617, %v1569
      %s1650 = scalar_lea.vmem %s1, 96
      %v1651 = vld [vmem:[%s1650] sm:$0xf]
      %v1652 = vld [vmem:[%s1650 + $0x4] sm:$0xf]
      %v1653 = vld [vmem:[%s1650 + $0x8] sm:$0xf]
      %v1654 = vld [vmem:[%s1650 + $0xc] sm:$0xf]
      %v1655 = vld [vmem:[%s1650 + $0x10] sm:$0xf]
      %v1656 = vld [vmem:[%s1650 + $0x14] sm:$0xf]
      %v1657 = vld [vmem:[%s1650 + $0x18] sm:$0xf]
      %v1658 = vld [vmem:[%s1650 + $0x1c] sm:$0xf]
      %v1659 = vld [vmem:[%s1650 + $0x20] sm:$0xf]
      %v1660 = vld [vmem:[%s1650 + $0x24] sm:$0xf]
      %v1661 = vld [vmem:[%s1650 + $0x28] sm:$0xf]
      %v1662 = vld [vmem:[%s1650 + $0x2c] sm:$0xf]
      %1663 = vst [vmem:[#allocation1] ss:$4 sm:$0xff] %v1619
      %s1664 = scalar_lea.vmem [#allocation1], 1
      %1665 = vst [vmem:[%s1664] ss:$4 sm:$0xff] %v1621
      %s1666 = scalar_lea.vmem [#allocation1], 2
      %1667 = vst [vmem:[%s1666] ss:$4 sm:$0xff] %v1623
      %s1668 = scalar_lea.vmem [#allocation1], 3
      %1669 = vst [vmem:[%s1668] ss:$4 sm:$0xff] %v1625
      %s1670 = scalar_lea.vmem [#allocation1], 32
      %1671 = vst [vmem:[%s1670] ss:$4 sm:$0xff] %v1627
      %s1672 = scalar_lea.vmem [#allocation1], 33
      %1673 = vst [vmem:[%s1672] ss:$4 sm:$0xff] %v1629
      %s1674 = scalar_lea.vmem [#allocation1], 34
      %1675 = vst [vmem:[%s1674] ss:$4 sm:$0xff] %v1631
      %s1676 = scalar_lea.vmem [#allocation1], 35
      %1677 = vst [vmem:[%s1676] ss:$4 sm:$0xff] %v1633
      %v1678 = vld.sshfl [vmem:[#allocation1] sm:$0xff pattern:$0x73625140]
      %v1679 = vld.sshfl [vmem:[#allocation1 + $0x20] sm:$0xff pattern:$0x73625140]
      %1680 = vst [vmem:[#allocation1] ss:$4 sm:$0xff] %v1635
      %1681 = vst [vmem:[%s1664] ss:$4 sm:$0xff] %v1637
      %1682 = vst [vmem:[%s1666] ss:$4 sm:$0xff] %v1639
      %1683 = vst [vmem:[%s1668] ss:$4 sm:$0xff] %v1641
      %1684 = vst [vmem:[%s1670] ss:$4 sm:$0xff] %v1643
      %1685 = vst [vmem:[%s1672] ss:$4 sm:$0xff] %v1645
      %1686 = vst [vmem:[%s1674] ss:$4 sm:$0xff] %v1647
      %1687 = vst [vmem:[%s1676] ss:$4 sm:$0xff] %v1649
      %v1688 = vld.sshfl [vmem:[#allocation1] sm:$0xff pattern:$0x73625140]
      %v1689 = vld.sshfl [vmem:[#allocation1 + $0x20] sm:$0xff pattern:$0x73625140]
      %v1702 = vunpack.c.l.b16 %v1651
      %v1703 = vunpack.c.l.b16 %v1652
      %v1704 = vunpack.c.l.b16 %v1653
      %v1705 = vunpack.c.l.b16 %v1654
      %v1706 = vunpack.c.l.b16 %v1655
      %v1707 = vunpack.c.l.b16 %v1656
      %v1708 = vunpack.c.l.b16 %v1657
      %v1709 = vunpack.c.l.b16 %v1658
      %v1710 = vunpack.c.l.b16 %v1659
      %v1711 = vunpack.c.l.b16 %v1660
      %v1712 = vunpack.c.l.b16 %v1661
      %v1713 = vunpack.c.l.b16 %v1662
      %v1714 = vpack.c.b16 %v1703, %v1702
      %v1715 = vpack.c.b16 %v1705, %v1704
      %v1716 = vpack.c.b16 %v1707, %v1706
      %v1717 = vpack.c.b16 %v1709, %v1708
      %v1718 = vpack.c.b16 %v1711, %v1710
      %v1719 = vpack.c.b16 %v1713, %v1712
      %v1726 = vsel %vm1095, %v1678, 0
      %v1728 = vsel %vm1095, %v1679, 0
      %v1730 = vsel %vm1095, %v1688, 0
      %v1732 = vsel %vm1095, %v1689, 0
      %1734 = vmatpush.bf16.msra.mxu0 0
      %1735 = vmatpush.bf16.msra.mxu0 0
      %1736 = vmatpush.bf16.msra.mxu0 %v1719
      %1737 = vmatpush.bf16.msra.mxu0 %v1718
      %1738 = vmatpush.bf16.msra.mxu0 %v1717
      %1739 = vmatpush.bf16.msra.mxu0 %v1716
      %1740 = vmatpush.bf16.msra.mxu0 %v1715
      %1741 = vmatpush.bf16.msra.mxu0 %v1714
      %1742 = vmatmul.bf16.gmra.mxu0 %v1726
      %v1743 = vpop.f32.mrf.mxu0
      %v1744 = vadd.f32 0.0, %v1743
      %v1745 = vpop.f32.mrf.mxu0
      %v1746 = vadd.f32 0.0, %v1745
      %1747 = vmatmul.bf16.gmra.mxu0 %v1728
      %v1748 = vpop.f32.mrf.mxu0
      %v1749 = vadd.f32 0.0, %v1748
      %v1750 = vpop.f32.mrf.mxu0
      %v1751 = vadd.f32 0.0, %v1750
      %1752 = vmatmul.bf16.gmra.mxu0 %v1730
      %v1753 = vpop.f32.mrf.mxu0
      %v1754 = vadd.f32 0.0, %v1753
      %v1755 = vpop.f32.mrf.mxu0
      %v1756 = vadd.f32 0.0, %v1755
      %1757 = vmatmul.bf16.gmra.mxu0 %v1732
      %v1758 = vpop.f32.mrf.mxu0
      %v1759 = vadd.f32 0.0, %v1758
      %v1760 = vpop.f32.mrf.mxu0
      %v1761 = vadd.f32 0.0, %v1760
      %1762 = vdwg.mxu0
      %v1763 = vadd.f32 %v1214, %v1744
      %v1764 = vadd.f32 %v1216, %v1746
      %v1765 = vadd.f32 %v1219, %v1749
      %v1766 = vadd.f32 %v1221, %v1751
      %v1767 = vadd.f32 %v1224, %v1754
      %v1768 = vadd.f32 %v1226, %v1756
      %v1769 = vadd.f32 %v1229, %v1759
      %v1770 = vadd.f32 %v1231, %v1761
      %s1771 = scalar_lea.vmem %s165, 24
      %v1772 = vld [vmem:[%s1771] sm:$0x3]
      %v1773 = vld [vmem:[%s1771 + $0x4] sm:$0x3]
      %v1774 = vld [vmem:[%s1771 + $0x8] sm:$0x3]
      %v1775 = vld [vmem:[%s1771 + $0xc] sm:$0x3]
      %v1776 = vld [vmem:[%s1771 + $0x18] sm:$0x3]
      %v1777 = vld [vmem:[%s1771 + $0x1c] sm:$0x3]
      %v1778 = vld [vmem:[%s1771 + $0x20] sm:$0x3]
      %v1779 = vld [vmem:[%s1771 + $0x24] sm:$0x3]
      %v1780 = vld [vmem:[%s1771 + $0x30] sm:$0x3]
      %v1781 = vld [vmem:[%s1771 + $0x34] sm:$0x3]
      %v1782 = vld [vmem:[%s1771 + $0x38] sm:$0x3]
      %v1783 = vld [vmem:[%s1771 + $0x3c] sm:$0x3]
      %v1784 = vld [vmem:[%s1771 + $0x48] sm:$0x3]
      %v1785 = vld [vmem:[%s1771 + $0x4c] sm:$0x3]
      %v1786 = vld [vmem:[%s1771 + $0x50] sm:$0x3]
      %v1787 = vld [vmem:[%s1771 + $0x54] sm:$0x3]
      %v1788 = vld [vmem:[%s1771] sm:$0x7]
      %v1789 = vld [vmem:[%s1771 + $0x4] sm:$0x7]
      %v1790 = vld [vmem:[%s1771 + $0x8] sm:$0x7]
      %v1791 = vld [vmem:[%s1771 + $0xc] sm:$0x7]
      %v1792 = vld [vmem:[%s1771 + $0x18] sm:$0x7]
      %v1793 = vld [vmem:[%s1771 + $0x1c] sm:$0x7]
      %v1794 = vld [vmem:[%s1771 + $0x20] sm:$0x7]
      %v1795 = vld [vmem:[%s1771 + $0x24] sm:$0x7]
      %v1796 = vld [vmem:[%s1771 + $0x30] sm:$0x7]
      %v1797 = vld [vmem:[%s1771 + $0x34] sm:$0x7]
      %v1798 = vld [vmem:[%s1771 + $0x38] sm:$0x7]
      %v1799 = vld [vmem:[%s1771 + $0x3c] sm:$0x7]
      %v1800 = vld [vmem:[%s1771 + $0x48] sm:$0x7]
      %v1801 = vld [vmem:[%s1771 + $0x4c] sm:$0x7]
      %v1802 = vld [vmem:[%s1771 + $0x50] sm:$0x7]
      %v1803 = vld [vmem:[%s1771 + $0x54] sm:$0x7]
      %v1804 = vld [vmem:[%s1771] sm:$0x6]
      %v1805 = vld [vmem:[%s1771 + $0x4] sm:$0x6]
      %v1806 = vld [vmem:[%s1771 + $0x8] sm:$0x6]
      %v1807 = vld [vmem:[%s1771 + $0xc] sm:$0x6]
      %v1808 = vld [vmem:[%s1771 + $0x18] sm:$0x6]
      %v1809 = vld [vmem:[%s1771 + $0x1c] sm:$0x6]
      %v1810 = vld [vmem:[%s1771 + $0x20] sm:$0x6]
      %v1811 = vld [vmem:[%s1771 + $0x24] sm:$0x6]
      %v1812 = vld [vmem:[%s1771 + $0x30] sm:$0x6]
      %v1813 = vld [vmem:[%s1771 + $0x34] sm:$0x6]
      %v1814 = vld [vmem:[%s1771 + $0x38] sm:$0x6]
      %v1815 = vld [vmem:[%s1771 + $0x3c] sm:$0x6]
      %v1816 = vld [vmem:[%s1771 + $0x48] sm:$0x6]
      %v1817 = vld [vmem:[%s1771 + $0x4c] sm:$0x6]
      %v1818 = vld [vmem:[%s1771 + $0x50] sm:$0x6]
      %v1819 = vld [vmem:[%s1771 + $0x54] sm:$0x6]
      %v1836 = vunpack.c.l.b16 %v1788
      %v1837 = vunpack.c.l.b16 %v1789
      %v1838 = vunpack.c.l.b16 %v1790
      %v1839 = vunpack.c.l.b16 %v1791
      %v1840 = vunpack.c.l.b16 %v1792
      %v1841 = vunpack.c.l.b16 %v1793
      %v1842 = vunpack.c.l.b16 %v1794
      %v1843 = vunpack.c.l.b16 %v1795
      %v1844 = vunpack.c.l.b16 %v1796
      %v1845 = vunpack.c.l.b16 %v1797
      %v1846 = vunpack.c.l.b16 %v1798
      %v1847 = vunpack.c.l.b16 %v1799
      %v1848 = vunpack.c.l.b16 %v1800
      %v1849 = vunpack.c.l.b16 %v1801
      %v1850 = vunpack.c.l.b16 %v1802
      %v1851 = vunpack.c.l.b16 %v1803
      %v1852 = vpack.c.b16 %v1836, %v1836
      %v1853 = vpack.c.b16 %v1837, %v1837
      %v1854 = vpack.c.b16 %v1838, %v1838
      %v1855 = vpack.c.b16 %v1839, %v1839
      %v1856 = vpack.c.b16 %v1840, %v1840
      %v1857 = vpack.c.b16 %v1841, %v1841
      %v1858 = vpack.c.b16 %v1842, %v1842
      %v1859 = vpack.c.b16 %v1843, %v1843
      %v1860 = vpack.c.b16 %v1844, %v1844
      %v1861 = vpack.c.b16 %v1845, %v1845
      %v1862 = vpack.c.b16 %v1846, %v1846
      %v1863 = vpack.c.b16 %v1847, %v1847
      %v1864 = vpack.c.b16 %v1848, %v1848
      %v1865 = vpack.c.b16 %v1849, %v1849
      %v1866 = vpack.c.b16 %v1850, %v1850
      %v1867 = vpack.c.b16 %v1851, %v1851
      %v1869 = vshrl.u32 %v1852, 16
      %v1871 = vshll.u32 %v1852, 16
      %v1873 = vrot.slane %v1871, 1
      %v1874 = vor.u32 %v1869, %v1873
      %v1876 = vshrl.u32 %v1853, 16
      %v1878 = vshll.u32 %v1853, 16
      %v1880 = vrot.slane %v1878, 1
      %v1881 = vor.u32 %v1876, %v1880
      %v1883 = vshrl.u32 %v1854, 16
      %v1885 = vshll.u32 %v1854, 16
      %v1887 = vrot.slane %v1885, 1
      %v1888 = vor.u32 %v1883, %v1887
      %v1890 = vshrl.u32 %v1855, 16
      %v1892 = vshll.u32 %v1855, 16
      %v1894 = vrot.slane %v1892, 1
      %v1895 = vor.u32 %v1890, %v1894
      %v1897 = vshrl.u32 %v1856, 16
      %v1899 = vshll.u32 %v1856, 16
      %v1901 = vrot.slane %v1899, 1
      %v1902 = vor.u32 %v1897, %v1901
      %v1904 = vshrl.u32 %v1857, 16
      %v1906 = vshll.u32 %v1857, 16
      %v1908 = vrot.slane %v1906, 1
      %v1909 = vor.u32 %v1904, %v1908
      %v1911 = vshrl.u32 %v1858, 16
      %v1913 = vshll.u32 %v1858, 16
      %v1915 = vrot.slane %v1913, 1
      %v1916 = vor.u32 %v1911, %v1915
      %v1918 = vshrl.u32 %v1859, 16
      %v1920 = vshll.u32 %v1859, 16
      %v1922 = vrot.slane %v1920, 1
      %v1923 = vor.u32 %v1918, %v1922
      %v1925 = vshrl.u32 %v1860, 16
      %v1927 = vshll.u32 %v1860, 16
      %v1929 = vrot.slane %v1927, 1
      %v1930 = vor.u32 %v1925, %v1929
      %v1932 = vshrl.u32 %v1861, 16
      %v1934 = vshll.u32 %v1861, 16
      %v1936 = vrot.slane %v1934, 1
      %v1937 = vor.u32 %v1932, %v1936
      %v1939 = vshrl.u32 %v1862, 16
      %v1941 = vshll.u32 %v1862, 16
      %v1943 = vrot.slane %v1941, 1
      %v1944 = vor.u32 %v1939, %v1943
      %v1946 = vshrl.u32 %v1863, 16
      %v1948 = vshll.u32 %v1863, 16
      %v1950 = vrot.slane %v1948, 1
      %v1951 = vor.u32 %v1946, %v1950
      %v1953 = vshrl.u32 %v1864, 16
      %v1955 = vshll.u32 %v1864, 16
      %v1957 = vrot.slane %v1955, 1
      %v1958 = vor.u32 %v1953, %v1957
      %v1960 = vshrl.u32 %v1865, 16
      %v1962 = vshll.u32 %v1865, 16
      %v1964 = vrot.slane %v1962, 1
      %v1965 = vor.u32 %v1960, %v1964
      %v1967 = vshrl.u32 %v1866, 16
      %v1969 = vshll.u32 %v1866, 16
      %v1971 = vrot.slane %v1969, 1
      %v1972 = vor.u32 %v1967, %v1971
      %v1974 = vshrl.u32 %v1867, 16
      %v1976 = vshll.u32 %v1867, 16
      %v1978 = vrot.slane %v1976, 1
      %v1979 = vor.u32 %v1974, %v1978
      %1980 = vrot.lane.b32.xlu0 %v1874, 32
      %v1981 = vpop.permute.xlu0 %1980
      %1982 = vrot.lane.b32.xlu0 %v1881, 32
      %v1983 = vpop.permute.xlu0 %1982
      %1984 = vrot.lane.b32.xlu0 %v1888, 32
      %v1985 = vpop.permute.xlu0 %1984
      %1986 = vrot.lane.b32.xlu0 %v1895, 32
      %v1987 = vpop.permute.xlu0 %1986
      %1988 = vrot.lane.b32.xlu0 %v1902, 32
      %v1989 = vpop.permute.xlu0 %1988
      %1990 = vrot.lane.b32.xlu0 %v1909, 32
      %v1991 = vpop.permute.xlu0 %1990
      %1992 = vrot.lane.b32.xlu0 %v1916, 32
      %v1993 = vpop.permute.xlu0 %1992
      %1994 = vrot.lane.b32.xlu0 %v1923, 32
      %v1995 = vpop.permute.xlu0 %1994
      %1996 = vrot.lane.b32.xlu0 %v1930, 32
      %v1997 = vpop.permute.xlu0 %1996
      %1998 = vrot.lane.b32.xlu0 %v1937, 32
      %v1999 = vpop.permute.xlu0 %1998
      %2000 = vrot.lane.b32.xlu0 %v1944, 32
      %v2001 = vpop.permute.xlu0 %2000
      %2002 = vrot.lane.b32.xlu0 %v1951, 32
      %v2003 = vpop.permute.xlu0 %2002
      %2004 = vrot.lane.b32.xlu0 %v1958, 32
      %v2005 = vpop.permute.xlu0 %2004
      %2006 = vrot.lane.b32.xlu0 %v1965, 32
      %v2007 = vpop.permute.xlu0 %2006
      %2008 = vrot.lane.b32.xlu0 %v1972, 32
      %v2009 = vpop.permute.xlu0 %2008
      %2010 = vrot.lane.b32.xlu0 %v1979, 32
      %v2011 = vpop.permute.xlu0 %2010
      %v2028 = vunpack.c.l.b16 %v1804
      %v2029 = vunpack.c.l.b16 %v1805
      %v2030 = vunpack.c.l.b16 %v1806
      %v2031 = vunpack.c.l.b16 %v1807
      %v2032 = vunpack.c.l.b16 %v1808
      %v2033 = vunpack.c.l.b16 %v1809
      %v2034 = vunpack.c.l.b16 %v1810
      %v2035 = vunpack.c.l.b16 %v1811
      %v2036 = vunpack.c.l.b16 %v1812
      %v2037 = vunpack.c.l.b16 %v1813
      %v2038 = vunpack.c.l.b16 %v1814
      %v2039 = vunpack.c.l.b16 %v1815
      %v2040 = vunpack.c.l.b16 %v1816
      %v2041 = vunpack.c.l.b16 %v1817
      %v2042 = vunpack.c.l.b16 %v1818
      %v2043 = vunpack.c.l.b16 %v1819
      %v2044 = vpack.c.b16 %v2028, %v2028
      %v2045 = vpack.c.b16 %v2029, %v2029
      %v2046 = vpack.c.b16 %v2030, %v2030
      %v2047 = vpack.c.b16 %v2031, %v2031
      %v2048 = vpack.c.b16 %v2032, %v2032
      %v2049 = vpack.c.b16 %v2033, %v2033
      %v2050 = vpack.c.b16 %v2034, %v2034
      %v2051 = vpack.c.b16 %v2035, %v2035
      %v2052 = vpack.c.b16 %v2036, %v2036
      %v2053 = vpack.c.b16 %v2037, %v2037
      %v2054 = vpack.c.b16 %v2038, %v2038
      %v2055 = vpack.c.b16 %v2039, %v2039
      %v2056 = vpack.c.b16 %v2040, %v2040
      %v2057 = vpack.c.b16 %v2041, %v2041
      %v2058 = vpack.c.b16 %v2042, %v2042
      %v2059 = vpack.c.b16 %v2043, %v2043
      %v2060 = vrot.slane %v2044, 1
      %v2061 = vrot.slane %v2045, 1
      %v2062 = vrot.slane %v2046, 1
      %v2063 = vrot.slane %v2047, 1
      %v2064 = vrot.slane %v2048, 1
      %v2065 = vrot.slane %v2049, 1
      %v2066 = vrot.slane %v2050, 1
      %v2067 = vrot.slane %v2051, 1
      %v2068 = vrot.slane %v2052, 1
      %v2069 = vrot.slane %v2053, 1
      %v2070 = vrot.slane %v2054, 1
      %v2071 = vrot.slane %v2055, 1
      %v2072 = vrot.slane %v2056, 1
      %v2073 = vrot.slane %v2057, 1
      %v2074 = vrot.slane %v2058, 1
      %v2075 = vrot.slane %v2059, 1
      %2076 = vrot.lane.b32.xlu0 %v2060, 64
      %v2077 = vpop.permute.xlu0 %2076
      %2078 = vrot.lane.b32.xlu0 %v2061, 64
      %v2079 = vpop.permute.xlu0 %2078
      %2080 = vrot.lane.b32.xlu0 %v2062, 64
      %v2081 = vpop.permute.xlu0 %2080
      %2082 = vrot.lane.b32.xlu0 %v2063, 64
      %v2083 = vpop.permute.xlu0 %2082
      %2084 = vrot.lane.b32.xlu0 %v2064, 64
      %v2085 = vpop.permute.xlu0 %2084
      %2086 = vrot.lane.b32.xlu0 %v2065, 64
      %v2087 = vpop.permute.xlu0 %2086
      %2088 = vrot.lane.b32.xlu0 %v2066, 64
      %v2089 = vpop.permute.xlu0 %2088
      %2090 = vrot.lane.b32.xlu0 %v2067, 64
      %v2091 = vpop.permute.xlu0 %2090
      %2092 = vrot.lane.b32.xlu0 %v2068, 64
      %v2093 = vpop.permute.xlu0 %2092
      %2094 = vrot.lane.b32.xlu0 %v2069, 64
      %v2095 = vpop.permute.xlu0 %2094
      %2096 = vrot.lane.b32.xlu0 %v2070, 64
      %v2097 = vpop.permute.xlu0 %2096
      %2098 = vrot.lane.b32.xlu0 %v2071, 64
      %v2099 = vpop.permute.xlu0 %2098
      %2100 = vrot.lane.b32.xlu0 %v2072, 64
      %v2101 = vpop.permute.xlu0 %2100
      %2102 = vrot.lane.b32.xlu0 %v2073, 64
      %v2103 = vpop.permute.xlu0 %2102
      %2104 = vrot.lane.b32.xlu0 %v2074, 64
      %v2105 = vpop.permute.xlu0 %2104
      %2106 = vrot.lane.b32.xlu0 %v2075, 64
      %v2107 = vpop.permute.xlu0 %2106
      %v2110 = vsel %vm508, %v1772, %v1981
      %v2113 = vsel %vm508, %v1773, %v1983
      %v2116 = vsel %vm508, %v1774, %v1985
      %v2119 = vsel %vm508, %v1775, %v1987
      %v2122 = vsel %vm508, %v1776, %v1989
      %v2125 = vsel %vm508, %v1777, %v1991
      %v2128 = vsel %vm508, %v1778, %v1993
      %v2131 = vsel %vm508, %v1779, %v1995
      %v2134 = vsel %vm508, %v1780, %v1997
      %v2137 = vsel %vm508, %v1781, %v1999
      %v2140 = vsel %vm508, %v1782, %v2001
      %v2143 = vsel %vm508, %v1783, %v2003
      %v2146 = vsel %vm508, %v1784, %v2005
      %v2149 = vsel %vm508, %v1785, %v2007
      %v2152 = vsel %vm508, %v1786, %v2009
      %v2155 = vsel %vm508, %v1787, %v2011
      %v2157 = vsel %vm557, %v2110, %v2077
      %v2159 = vsel %vm557, %v2113, %v2079
      %v2161 = vsel %vm557, %v2116, %v2081
      %v2163 = vsel %vm557, %v2119, %v2083
      %v2165 = vsel %vm557, %v2122, %v2085
      %v2167 = vsel %vm557, %v2125, %v2087
      %v2169 = vsel %vm557, %v2128, %v2089
      %v2171 = vsel %vm557, %v2131, %v2091
      %v2173 = vsel %vm557, %v2134, %v2093
      %v2175 = vsel %vm557, %v2137, %v2095
      %v2177 = vsel %vm557, %v2140, %v2097
      %v2179 = vsel %vm557, %v2143, %v2099
      %v2181 = vsel %vm557, %v2146, %v2101
      %v2183 = vsel %vm557, %v2149, %v2103
      %v2185 = vsel %vm557, %v2152, %v2105
      %v2187 = vsel %vm557, %v2155, %v2107
      %s2188 = scalar_lea.vmem %s1, 144
      %v2189 = vld [vmem:[%s2188] sm:$0xf]
      %v2190 = vld [vmem:[%s2188 + $0x4] sm:$0xf]
      %v2191 = vld [vmem:[%s2188 + $0x8] sm:$0xf]
      %v2192 = vld [vmem:[%s2188 + $0xc] sm:$0xf]
      %v2193 = vld [vmem:[%s2188 + $0x10] sm:$0xf]
      %v2194 = vld [vmem:[%s2188 + $0x14] sm:$0xf]
      %v2195 = vld [vmem:[%s2188 + $0x18] sm:$0xf]
      %v2196 = vld [vmem:[%s2188 + $0x1c] sm:$0xf]
      %v2197 = vld [vmem:[%s2188 + $0x20] sm:$0xf]
      %v2198 = vld [vmem:[%s2188 + $0x24] sm:$0xf]
      %v2199 = vld [vmem:[%s2188 + $0x28] sm:$0xf]
      %v2200 = vld [vmem:[%s2188 + $0x2c] sm:$0xf]
      %2201 = vst [vmem:[#allocation1] ss:$4 sm:$0xff] %v2157
      %s2202 = scalar_lea.vmem [#allocation1], 1
      %2203 = vst [vmem:[%s2202] ss:$4 sm:$0xff] %v2159
      %s2204 = scalar_lea.vmem [#allocation1], 2
      %2205 = vst [vmem:[%s2204] ss:$4 sm:$0xff] %v2161
      %s2206 = scalar_lea.vmem [#allocation1], 3
      %2207 = vst [vmem:[%s2206] ss:$4 sm:$0xff] %v2163
      %s2208 = scalar_lea.vmem [#allocation1], 32
      %2209 = vst [vmem:[%s2208] ss:$4 sm:$0xff] %v2165
      %s2210 = scalar_lea.vmem [#allocation1], 33
      %2211 = vst [vmem:[%s2210] ss:$4 sm:$0xff] %v2167
      %s2212 = scalar_lea.vmem [#allocation1], 34
      %2213 = vst [vmem:[%s2212] ss:$4 sm:$0xff] %v2169
      %s2214 = scalar_lea.vmem [#allocation1], 35
      %2215 = vst [vmem:[%s2214] ss:$4 sm:$0xff] %v2171
      %v2216 = vld.sshfl [vmem:[#allocation1] sm:$0xff pattern:$0x73625140]
      %v2217 = vld.sshfl [vmem:[#allocation1 + $0x20] sm:$0xff pattern:$0x73625140]
      %2218 = vst [vmem:[#allocation1] ss:$4 sm:$0xff] %v2173
      %2219 = vst [vmem:[%s2202] ss:$4 sm:$0xff] %v2175
      %2220 = vst [vmem:[%s2204] ss:$4 sm:$0xff] %v2177
      %2221 = vst [vmem:[%s2206] ss:$4 sm:$0xff] %v2179
      %2222 = vst [vmem:[%s2208] ss:$4 sm:$0xff] %v2181
      %2223 = vst [vmem:[%s2210] ss:$4 sm:$0xff] %v2183
      %2224 = vst [vmem:[%s2212] ss:$4 sm:$0xff] %v2185
      %2225 = vst [vmem:[%s2214] ss:$4 sm:$0xff] %v2187
      %v2226 = vld.sshfl [vmem:[#allocation1] sm:$0xff pattern:$0x73625140]
      %v2227 = vld.sshfl [vmem:[#allocation1 + $0x20] sm:$0xff pattern:$0x73625140]
      %v2240 = vunpack.c.l.b16 %v2189
      %v2241 = vunpack.c.l.b16 %v2190
      %v2242 = vunpack.c.l.b16 %v2191
      %v2243 = vunpack.c.l.b16 %v2192
      %v2244 = vunpack.c.l.b16 %v2193
      %v2245 = vunpack.c.l.b16 %v2194
      %v2246 = vunpack.c.l.b16 %v2195
      %v2247 = vunpack.c.l.b16 %v2196
      %v2248 = vunpack.c.l.b16 %v2197
      %v2249 = vunpack.c.l.b16 %v2198
      %v2250 = vunpack.c.l.b16 %v2199
      %v2251 = vunpack.c.l.b16 %v2200
      %v2252 = vpack.c.b16 %v2241, %v2240
      %v2253 = vpack.c.b16 %v2243, %v2242
      %v2254 = vpack.c.b16 %v2245, %v2244
      %v2255 = vpack.c.b16 %v2247, %v2246
      %v2256 = vpack.c.b16 %v2249, %v2248
      %v2257 = vpack.c.b16 %v2251, %v2250
      %v2264 = vsel %vm1095, %v2216, 0
      %v2266 = vsel %vm1095, %v2217, 0
      %v2268 = vsel %vm1095, %v2226, 0
      %v2270 = vsel %vm1095, %v2227, 0
      %2272 = vmatpush.bf16.msra.mxu0 0
      %2273 = vmatpush.bf16.msra.mxu0 0
      %2274 = vmatpush.bf16.msra.mxu0 %v2257
      %2275 = vmatpush.bf16.msra.mxu0 %v2256
      %2276 = vmatpush.bf16.msra.mxu0 %v2255
      %2277 = vmatpush.bf16.msra.mxu0 %v2254
      %2278 = vmatpush.bf16.msra.mxu0 %v2253
      %2279 = vmatpush.bf16.msra.mxu0 %v2252
      %2280 = vmatmul.bf16.gmra.mxu0 %v2264
      %v2281 = vpop.f32.mrf.mxu0
      %v2282 = vadd.f32 0.0, %v2281
      %v2283 = vpop.f32.mrf.mxu0
      %v2284 = vadd.f32 0.0, %v2283
      %2285 = vmatmul.bf16.gmra.mxu0 %v2266
      %v2286 = vpop.f32.mrf.mxu0
      %v2287 = vadd.f32 0.0, %v2286
      %v2288 = vpop.f32.mrf.mxu0
      %v2289 = vadd.f32 0.0, %v2288
      %2290 = vmatmul.bf16.gmra.mxu0 %v2268
      %v2291 = vpop.f32.mrf.mxu0
      %v2292 = vadd.f32 0.0, %v2291
      %v2293 = vpop.f32.mrf.mxu0
      %v2294 = vadd.f32 0.0, %v2293
      %2295 = vmatmul.bf16.gmra.mxu0 %v2270
      %v2296 = vpop.f32.mrf.mxu0
      %v2297 = vadd.f32 0.0, %v2296
      %v2298 = vpop.f32.mrf.mxu0
      %v2299 = vadd.f32 0.0, %v2298
      %2300 = vdwg.mxu0
      %v2301 = vadd.f32 %v1763, %v2282
      %v2302 = vadd.f32 %v1764, %v2284
      %v2303 = vadd.f32 %v1765, %v2287
      %v2304 = vadd.f32 %v1766, %v2289
      %v2305 = vadd.f32 %v1767, %v2292
      %v2306 = vadd.f32 %v1768, %v2294
      %v2307 = vadd.f32 %v1769, %v2297
      %v2308 = vadd.f32 %v1770, %v2299
      %s2309 = scalar_lea.vmem %s165, 28
      %v2310 = vld [vmem:[%s2309] sm:$0x3]
      %v2311 = vld [vmem:[%s2309 + $0x4] sm:$0x3]
      %v2312 = vld [vmem:[%s2309 + $0x8] sm:$0x3]
      %v2313 = vld [vmem:[%s2309 + $0xc] sm:$0x3]
      %v2314 = vld [vmem:[%s2309 + $0x18] sm:$0x3]
      %v2315 = vld [vmem:[%s2309 + $0x1c] sm:$0x3]
      %v2316 = vld [vmem:[%s2309 + $0x20] sm:$0x3]
      %v2317 = vld [vmem:[%s2309 + $0x24] sm:$0x3]
      %v2318 = vld [vmem:[%s2309 + $0x30] sm:$0x3]
      %v2319 = vld [vmem:[%s2309 + $0x34] sm:$0x3]
      %v2320 = vld [vmem:[%s2309 + $0x38] sm:$0x3]
      %v2321 = vld [vmem:[%s2309 + $0x3c] sm:$0x3]
      %v2322 = vld [vmem:[%s2309 + $0x48] sm:$0x3]
      %v2323 = vld [vmem:[%s2309 + $0x4c] sm:$0x3]
      %v2324 = vld [vmem:[%s2309 + $0x50] sm:$0x3]
      %v2325 = vld [vmem:[%s2309 + $0x54] sm:$0x3]
      %v2326 = vld [vmem:[%s2309] sm:$0x7]
      %v2327 = vld [vmem:[%s2309 + $0x4] sm:$0x7]
      %v2328 = vld [vmem:[%s2309 + $0x8] sm:$0x7]
      %v2329 = vld [vmem:[%s2309 + $0xc] sm:$0x7]
      %v2330 = vld [vmem:[%s2309 + $0x18] sm:$0x7]
      %v2331 = vld [vmem:[%s2309 + $0x1c] sm:$0x7]
      %v2332 = vld [vmem:[%s2309 + $0x20] sm:$0x7]
      %v2333 = vld [vmem:[%s2309 + $0x24] sm:$0x7]
      %v2334 = vld [vmem:[%s2309 + $0x30] sm:$0x7]
      %v2335 = vld [vmem:[%s2309 + $0x34] sm:$0x7]
      %v2336 = vld [vmem:[%s2309 + $0x38] sm:$0x7]
      %v2337 = vld [vmem:[%s2309 + $0x3c] sm:$0x7]
      %v2338 = vld [vmem:[%s2309 + $0x48] sm:$0x7]
      %v2339 = vld [vmem:[%s2309 + $0x4c] sm:$0x7]
      %v2340 = vld [vmem:[%s2309 + $0x50] sm:$0x7]
      %v2341 = vld [vmem:[%s2309 + $0x54] sm:$0x7]
      %v2342 = vld [vmem:[%s2309] sm:$0x6]
      %v2343 = vld [vmem:[%s2309 + $0x4] sm:$0x6]
      %v2344 = vld [vmem:[%s2309 + $0x8] sm:$0x6]
      %v2345 = vld [vmem:[%s2309 + $0xc] sm:$0x6]
      %v2346 = vld [vmem:[%s2309 + $0x18] sm:$0x6]
      %v2347 = vld [vmem:[%s2309 + $0x1c] sm:$0x6]
      %v2348 = vld [vmem:[%s2309 + $0x20] sm:$0x6]
      %v2349 = vld [vmem:[%s2309 + $0x24] sm:$0x6]
      %v2350 = vld [vmem:[%s2309 + $0x30] sm:$0x6]
      %v2351 = vld [vmem:[%s2309 + $0x34] sm:$0x6]
      %v2352 = vld [vmem:[%s2309 + $0x38] sm:$0x6]
      %v2353 = vld [vmem:[%s2309 + $0x3c] sm:$0x6]
      %v2354 = vld [vmem:[%s2309 + $0x48] sm:$0x6]
      %v2355 = vld [vmem:[%s2309 + $0x4c] sm:$0x6]
      %v2356 = vld [vmem:[%s2309 + $0x50] sm:$0x6]
      %v2357 = vld [vmem:[%s2309 + $0x54] sm:$0x6]
      %v2374 = vunpack.c.l.b16 %v2326
      %v2375 = vunpack.c.l.b16 %v2327
      %v2376 = vunpack.c.l.b16 %v2328
      %v2377 = vunpack.c.l.b16 %v2329
      %v2378 = vunpack.c.l.b16 %v2330
      %v2379 = vunpack.c.l.b16 %v2331
      %v2380 = vunpack.c.l.b16 %v2332
      %v2381 = vunpack.c.l.b16 %v2333
      %v2382 = vunpack.c.l.b16 %v2334
      %v2383 = vunpack.c.l.b16 %v2335
      %v2384 = vunpack.c.l.b16 %v2336
      %v2385 = vunpack.c.l.b16 %v2337
      %v2386 = vunpack.c.l.b16 %v2338
      %v2387 = vunpack.c.l.b16 %v2339
      %v2388 = vunpack.c.l.b16 %v2340
      %v2389 = vunpack.c.l.b16 %v2341
      %v2390 = vpack.c.b16 %v2374, %v2374
      %v2391 = vpack.c.b16 %v2375, %v2375
      %v2392 = vpack.c.b16 %v2376, %v2376
      %v2393 = vpack.c.b16 %v2377, %v2377
      %v2394 = vpack.c.b16 %v2378, %v2378
      %v2395 = vpack.c.b16 %v2379, %v2379
      %v2396 = vpack.c.b16 %v2380, %v2380
      %v2397 = vpack.c.b16 %v2381, %v2381
      %v2398 = vpack.c.b16 %v2382, %v2382
      %v2399 = vpack.c.b16 %v2383, %v2383
      %v2400 = vpack.c.b16 %v2384, %v2384
      %v2401 = vpack.c.b16 %v2385, %v2385
      %v2402 = vpack.c.b16 %v2386, %v2386
      %v2403 = vpack.c.b16 %v2387, %v2387
      %v2404 = vpack.c.b16 %v2388, %v2388
      %v2405 = vpack.c.b16 %v2389, %v2389
      %v2407 = vshrl.u32 %v2390, 16
      %v2409 = vshll.u32 %v2390, 16
      %v2411 = vrot.slane %v2409, 1
      %v2412 = vor.u32 %v2407, %v2411
      %v2414 = vshrl.u32 %v2391, 16
      %v2416 = vshll.u32 %v2391, 16
      %v2418 = vrot.slane %v2416, 1
      %v2419 = vor.u32 %v2414, %v2418
      %v2421 = vshrl.u32 %v2392, 16
      %v2423 = vshll.u32 %v2392, 16
      %v2425 = vrot.slane %v2423, 1
      %v2426 = vor.u32 %v2421, %v2425
      %v2428 = vshrl.u32 %v2393, 16
      %v2430 = vshll.u32 %v2393, 16
      %v2432 = vrot.slane %v2430, 1
      %v2433 = vor.u32 %v2428, %v2432
      %v2435 = vshrl.u32 %v2394, 16
      %v2437 = vshll.u32 %v2394, 16
      %v2439 = vrot.slane %v2437, 1
      %v2440 = vor.u32 %v2435, %v2439
      %v2442 = vshrl.u32 %v2395, 16
      %v2444 = vshll.u32 %v2395, 16
      %v2446 = vrot.slane %v2444, 1
      %v2447 = vor.u32 %v2442, %v2446
      %v2449 = vshrl.u32 %v2396, 16
      %v2451 = vshll.u32 %v2396, 16
      %v2453 = vrot.slane %v2451, 1
      %v2454 = vor.u32 %v2449, %v2453
      %v2456 = vshrl.u32 %v2397, 16
      %v2458 = vshll.u32 %v2397, 16
      %v2460 = vrot.slane %v2458, 1
      %v2461 = vor.u32 %v2456, %v2460
      %v2463 = vshrl.u32 %v2398, 16
      %v2465 = vshll.u32 %v2398, 16
      %v2467 = vrot.slane %v2465, 1
      %v2468 = vor.u32 %v2463, %v2467
      %v2470 = vshrl.u32 %v2399, 16
      %v2472 = vshll.u32 %v2399, 16
      %v2474 = vrot.slane %v2472, 1
      %v2475 = vor.u32 %v2470, %v2474
      %v2477 = vshrl.u32 %v2400, 16
      %v2479 = vshll.u32 %v2400, 16
      %v2481 = vrot.slane %v2479, 1
      %v2482 = vor.u32 %v2477, %v2481
      %v2484 = vshrl.u32 %v2401, 16
      %v2486 = vshll.u32 %v2401, 16
      %v2488 = vrot.slane %v2486, 1
      %v2489 = vor.u32 %v2484, %v2488
      %v2491 = vshrl.u32 %v2402, 16
      %v2493 = vshll.u32 %v2402, 16
      %v2495 = vrot.slane %v2493, 1
      %v2496 = vor.u32 %v2491, %v2495
      %v2498 = vshrl.u32 %v2403, 16
      %v2500 = vshll.u32 %v2403, 16
      %v2502 = vrot.slane %v2500, 1
      %v2503 = vor.u32 %v2498, %v2502
      %v2505 = vshrl.u32 %v2404, 16
      %v2507 = vshll.u32 %v2404, 16
      %v2509 = vrot.slane %v2507, 1
      %v2510 = vor.u32 %v2505, %v2509
      %v2512 = vshrl.u32 %v2405, 16
      %v2514 = vshll.u32 %v2405, 16
      %v2516 = vrot.slane %v2514, 1
      %v2517 = vor.u32 %v2512, %v2516
      %2518 = vrot.lane.b32.xlu0 %v2412, 32
      %v2519 = vpop.permute.xlu0 %2518
      %2520 = vrot.lane.b32.xlu0 %v2419, 32
      %v2521 = vpop.permute.xlu0 %2520
      %2522 = vrot.lane.b32.xlu0 %v2426, 32
      %v2523 = vpop.permute.xlu0 %2522
      %2524 = vrot.lane.b32.xlu0 %v2433, 32
      %v2525 = vpop.permute.xlu0 %2524
      %2526 = vrot.lane.b32.xlu0 %v2440, 32
      %v2527 = vpop.permute.xlu0 %2526
      %2528 = vrot.lane.b32.xlu0 %v2447, 32
      %v2529 = vpop.permute.xlu0 %2528
      %2530 = vrot.lane.b32.xlu0 %v2454, 32
      %v2531 = vpop.permute.xlu0 %2530
      %2532 = vrot.lane.b32.xlu0 %v2461, 32
      %v2533 = vpop.permute.xlu0 %2532
      %2534 = vrot.lane.b32.xlu0 %v2468, 32
      %v2535 = vpop.permute.xlu0 %2534
      %2536 = vrot.lane.b32.xlu0 %v2475, 32
      %v2537 = vpop.permute.xlu0 %2536
      %2538 = vrot.lane.b32.xlu0 %v2482, 32
      %v2539 = vpop.permute.xlu0 %2538
      %2540 = vrot.lane.b32.xlu0 %v2489, 32
      %v2541 = vpop.permute.xlu0 %2540
      %2542 = vrot.lane.b32.xlu0 %v2496, 32
      %v2543 = vpop.permute.xlu0 %2542
      %2544 = vrot.lane.b32.xlu0 %v2503, 32
      %v2545 = vpop.permute.xlu0 %2544
      %2546 = vrot.lane.b32.xlu0 %v2510, 32
      %v2547 = vpop.permute.xlu0 %2546
      %2548 = vrot.lane.b32.xlu0 %v2517, 32
      %v2549 = vpop.permute.xlu0 %2548
      %v2566 = vunpack.c.l.b16 %v2342
      %v2567 = vunpack.c.l.b16 %v2343
      %v2568 = vunpack.c.l.b16 %v2344
      %v2569 = vunpack.c.l.b16 %v2345
      %v2570 = vunpack.c.l.b16 %v2346
      %v2571 = vunpack.c.l.b16 %v2347
      %v2572 = vunpack.c.l.b16 %v2348
      %v2573 = vunpack.c.l.b16 %v2349
      %v2574 = vunpack.c.l.b16 %v2350
      %v2575 = vunpack.c.l.b16 %v2351
      %v2576 = vunpack.c.l.b16 %v2352
      %v2577 = vunpack.c.l.b16 %v2353
      %v2578 = vunpack.c.l.b16 %v2354
      %v2579 = vunpack.c.l.b16 %v2355
      %v2580 = vunpack.c.l.b16 %v2356
      %v2581 = vunpack.c.l.b16 %v2357
      %v2582 = vpack.c.b16 %v2566, %v2566
      %v2583 = vpack.c.b16 %v2567, %v2567
      %v2584 = vpack.c.b16 %v2568, %v2568
      %v2585 = vpack.c.b16 %v2569, %v2569
      %v2586 = vpack.c.b16 %v2570, %v2570
      %v2587 = vpack.c.b16 %v2571, %v2571
      %v2588 = vpack.c.b16 %v2572, %v2572
      %v2589 = vpack.c.b16 %v2573, %v2573
      %v2590 = vpack.c.b16 %v2574, %v2574
      %v2591 = vpack.c.b16 %v2575, %v2575
      %v2592 = vpack.c.b16 %v2576, %v2576
      %v2593 = vpack.c.b16 %v2577, %v2577
      %v2594 = vpack.c.b16 %v2578, %v2578
      %v2595 = vpack.c.b16 %v2579, %v2579
      %v2596 = vpack.c.b16 %v2580, %v2580
      %v2597 = vpack.c.b16 %v2581, %v2581
      %v2598 = vrot.slane %v2582, 1
      %v2599 = vrot.slane %v2583, 1
      %v2600 = vrot.slane %v2584, 1
      %v2601 = vrot.slane %v2585, 1
      %v2602 = vrot.slane %v2586, 1
      %v2603 = vrot.slane %v2587, 1
      %v2604 = vrot.slane %v2588, 1
      %v2605 = vrot.slane %v2589, 1
      %v2606 = vrot.slane %v2590, 1
      %v2607 = vrot.slane %v2591, 1
      %v2608 = vrot.slane %v2592, 1
      %v2609 = vrot.slane %v2593, 1
      %v2610 = vrot.slane %v2594, 1
      %v2611 = vrot.slane %v2595, 1
      %v2612 = vrot.slane %v2596, 1
      %v2613 = vrot.slane %v2597, 1
      %2614 = vrot.lane.b32.xlu0 %v2598, 64
      %v2615 = vpop.permute.xlu0 %2614
      %2616 = vrot.lane.b32.xlu0 %v2599, 64
      %v2617 = vpop.permute.xlu0 %2616
      %2618 = vrot.lane.b32.xlu0 %v2600, 64
      %v2619 = vpop.permute.xlu0 %2618
      %2620 = vrot.lane.b32.xlu0 %v2601, 64
      %v2621 = vpop.permute.xlu0 %2620
      %2622 = vrot.lane.b32.xlu0 %v2602, 64
      %v2623 = vpop.permute.xlu0 %2622
      %2624 = vrot.lane.b32.xlu0 %v2603, 64
      %v2625 = vpop.permute.xlu0 %2624
      %2626 = vrot.lane.b32.xlu0 %v2604, 64
      %v2627 = vpop.permute.xlu0 %2626
      %2628 = vrot.lane.b32.xlu0 %v2605, 64
      %v2629 = vpop.permute.xlu0 %2628
      %2630 = vrot.lane.b32.xlu0 %v2606, 64
      %v2631 = vpop.permute.xlu0 %2630
      %2632 = vrot.lane.b32.xlu0 %v2607, 64
      %v2633 = vpop.permute.xlu0 %2632
      %2634 = vrot.lane.b32.xlu0 %v2608, 64
      %v2635 = vpop.permute.xlu0 %2634
      %2636 = vrot.lane.b32.xlu0 %v2609, 64
      %v2637 = vpop.permute.xlu0 %2636
      %2638 = vrot.lane.b32.xlu0 %v2610, 64
      %v2639 = vpop.permute.xlu0 %2638
      %2640 = vrot.lane.b32.xlu0 %v2611, 64
      %v2641 = vpop.permute.xlu0 %2640
      %2642 = vrot.lane.b32.xlu0 %v2612, 64
      %v2643 = vpop.permute.xlu0 %2642
      %2644 = vrot.lane.b32.xlu0 %v2613, 64
      %v2645 = vpop.permute.xlu0 %2644
      %v2648 = vsel %vm508, %v2310, %v2519
      %v2651 = vsel %vm508, %v2311, %v2521
      %v2654 = vsel %vm508, %v2312, %v2523
      %v2657 = vsel %vm508, %v2313, %v2525
      %v2660 = vsel %vm508, %v2314, %v2527
      %v2663 = vsel %vm508, %v2315, %v2529
      %v2666 = vsel %vm508, %v2316, %v2531
      %v2669 = vsel %vm508, %v2317, %v2533
      %v2672 = vsel %vm508, %v2318, %v2535
      %v2675 = vsel %vm508, %v2319, %v2537
      %v2678 = vsel %vm508, %v2320, %v2539
      %v2681 = vsel %vm508, %v2321, %v2541
      %v2684 = vsel %vm508, %v2322, %v2543
      %v2687 = vsel %vm508, %v2323, %v2545
      %v2690 = vsel %vm508, %v2324, %v2547
      %v2693 = vsel %vm508, %v2325, %v2549
      %v2695 = vsel %vm557, %v2648, %v2615
      %v2697 = vsel %vm557, %v2651, %v2617
      %v2699 = vsel %vm557, %v2654, %v2619
      %v2701 = vsel %vm557, %v2657, %v2621
      %v2703 = vsel %vm557, %v2660, %v2623
      %v2705 = vsel %vm557, %v2663, %v2625
      %v2707 = vsel %vm557, %v2666, %v2627
      %v2709 = vsel %vm557, %v2669, %v2629
      %v2711 = vsel %vm557, %v2672, %v2631
      %v2713 = vsel %vm557, %v2675, %v2633
      %v2715 = vsel %vm557, %v2678, %v2635
      %v2717 = vsel %vm557, %v2681, %v2637
      %v2719 = vsel %vm557, %v2684, %v2639
      %v2721 = vsel %vm557, %v2687, %v2641
      %v2723 = vsel %vm557, %v2690, %v2643
      %v2725 = vsel %vm557, %v2693, %v2645
      %s2726 = scalar_lea.vmem %s1, 192
      %v2727 = vld [vmem:[%s2726] sm:$0xf]
      %v2728 = vld [vmem:[%s2726 + $0x4] sm:$0xf]
      %v2729 = vld [vmem:[%s2726 + $0x8] sm:$0xf]
      %v2730 = vld [vmem:[%s2726 + $0xc] sm:$0xf]
      %v2731 = vld [vmem:[%s2726 + $0x10] sm:$0xf]
      %v2732 = vld [vmem:[%s2726 + $0x14] sm:$0xf]
      %v2733 = vld [vmem:[%s2726 + $0x18] sm:$0xf]
      %v2734 = vld [vmem:[%s2726 + $0x1c] sm:$0xf]
      %v2735 = vld [vmem:[%s2726 + $0x20] sm:$0xf]
      %v2736 = vld [vmem:[%s2726 + $0x24] sm:$0xf]
      %v2737 = vld [vmem:[%s2726 + $0x28] sm:$0xf]
      %v2738 = vld [vmem:[%s2726 + $0x2c] sm:$0xf]
      %2739 = vst [vmem:[#allocation1] ss:$4 sm:$0xff] %v2695
      %s2740 = scalar_lea.vmem [#allocation1], 1
      %2741 = vst [vmem:[%s2740] ss:$4 sm:$0xff] %v2697
      %s2742 = scalar_lea.vmem [#allocation1], 2
      %2743 = vst [vmem:[%s2742] ss:$4 sm:$0xff] %v2699
      %s2744 = scalar_lea.vmem [#allocation1], 3
      %2745 = vst [vmem:[%s2744] ss:$4 sm:$0xff] %v2701
      %s2746 = scalar_lea.vmem [#allocation1], 32
      %2747 = vst [vmem:[%s2746] ss:$4 sm:$0xff] %v2703
      %s2748 = scalar_lea.vmem [#allocation1], 33
      %2749 = vst [vmem:[%s2748] ss:$4 sm:$0xff] %v2705
      %s2750 = scalar_lea.vmem [#allocation1], 34
      %2751 = vst [vmem:[%s2750] ss:$4 sm:$0xff] %v2707
      %s2752 = scalar_lea.vmem [#allocation1], 35
      %2753 = vst [vmem:[%s2752] ss:$4 sm:$0xff] %v2709
      %v2754 = vld.sshfl [vmem:[#allocation1] sm:$0xff pattern:$0x73625140]
      %v2755 = vld.sshfl [vmem:[#allocation1 + $0x20] sm:$0xff pattern:$0x73625140]
      %2756 = vst [vmem:[#allocation1] ss:$4 sm:$0xff] %v2711
      %2757 = vst [vmem:[%s2740] ss:$4 sm:$0xff] %v2713
      %2758 = vst [vmem:[%s2742] ss:$4 sm:$0xff] %v2715
      %2759 = vst [vmem:[%s2744] ss:$4 sm:$0xff] %v2717
      %2760 = vst [vmem:[%s2746] ss:$4 sm:$0xff] %v2719
      %2761 = vst [vmem:[%s2748] ss:$4 sm:$0xff] %v2721
      %2762 = vst [vmem:[%s2750] ss:$4 sm:$0xff] %v2723
      %2763 = vst [vmem:[%s2752] ss:$4 sm:$0xff] %v2725
      %v2764 = vld.sshfl [vmem:[#allocation1] sm:$0xff pattern:$0x73625140]
      %v2765 = vld.sshfl [vmem:[#allocation1 + $0x20] sm:$0xff pattern:$0x73625140]
      %v2778 = vunpack.c.l.b16 %v2727
      %v2779 = vunpack.c.l.b16 %v2728
      %v2780 = vunpack.c.l.b16 %v2729
      %v2781 = vunpack.c.l.b16 %v2730
      %v2782 = vunpack.c.l.b16 %v2731
      %v2783 = vunpack.c.l.b16 %v2732
      %v2784 = vunpack.c.l.b16 %v2733
      %v2785 = vunpack.c.l.b16 %v2734
      %v2786 = vunpack.c.l.b16 %v2735
      %v2787 = vunpack.c.l.b16 %v2736
      %v2788 = vunpack.c.l.b16 %v2737
      %v2789 = vunpack.c.l.b16 %v2738
      %v2790 = vpack.c.b16 %v2779, %v2778
      %v2791 = vpack.c.b16 %v2781, %v2780
      %v2792 = vpack.c.b16 %v2783, %v2782
      %v2793 = vpack.c.b16 %v2785, %v2784
      %v2794 = vpack.c.b16 %v2787, %v2786
      %v2795 = vpack.c.b16 %v2789, %v2788
      %v2802 = vsel %vm1095, %v2754, 0
      %v2804 = vsel %vm1095, %v2755, 0
      %v2806 = vsel %vm1095, %v2764, 0
      %v2808 = vsel %vm1095, %v2765, 0
      %2810 = vmatpush.bf16.msra.mxu0 0
      %2811 = vmatpush.bf16.msra.mxu0 0
      %2812 = vmatpush.bf16.msra.mxu0 %v2795
      %2813 = vmatpush.bf16.msra.mxu0 %v2794
      %2814 = vmatpush.bf16.msra.mxu0 %v2793
      %2815 = vmatpush.bf16.msra.mxu0 %v2792
      %2816 = vmatpush.bf16.msra.mxu0 %v2791
      %2817 = vmatpush.bf16.msra.mxu0 %v2790
      %2818 = vmatmul.bf16.gmra.mxu0 %v2802
      %v2819 = vpop.f32.mrf.mxu0
      %v2820 = vadd.f32 0.0, %v2819
      %v2821 = vpop.f32.mrf.mxu0
      %v2822 = vadd.f32 0.0, %v2821
      %2823 = vmatmul.bf16.gmra.mxu0 %v2804
      %v2824 = vpop.f32.mrf.mxu0
      %v2825 = vadd.f32 0.0, %v2824
      %v2826 = vpop.f32.mrf.mxu0
      %v2827 = vadd.f32 0.0, %v2826
      %2828 = vmatmul.bf16.gmra.mxu0 %v2806
      %v2829 = vpop.f32.mrf.mxu0
      %v2830 = vadd.f32 0.0, %v2829
      %v2831 = vpop.f32.mrf.mxu0
      %v2832 = vadd.f32 0.0, %v2831
      %2833 = vmatmul.bf16.gmra.mxu0 %v2808
      %v2834 = vpop.f32.mrf.mxu0
      %v2835 = vadd.f32 0.0, %v2834
      %v2836 = vpop.f32.mrf.mxu0
      %v2837 = vadd.f32 0.0, %v2836
      %2838 = vdwg.mxu0
      %v2839 = vadd.f32 %v2301, %v2820
      %v2840 = vadd.f32 %v2302, %v2822
      %v2841 = vadd.f32 %v2303, %v2825
      %v2842 = vadd.f32 %v2304, %v2827
      %v2843 = vadd.f32 %v2305, %v2830
      %v2844 = vadd.f32 %v2306, %v2832
      %v2845 = vadd.f32 %v2307, %v2835
      %v2846 = vadd.f32 %v2308, %v2837
      %s2847 = scalar_lea.vmem %s165, 32
      %v2848 = vld [vmem:[%s2847] sm:$0x3]
      %v2849 = vld [vmem:[%s2847 + $0x4] sm:$0x3]
      %v2850 = vld [vmem:[%s2847 + $0x8] sm:$0x3]
      %v2851 = vld [vmem:[%s2847 + $0xc] sm:$0x3]
      %v2852 = vld [vmem:[%s2847 + $0x18] sm:$0x3]
      %v2853 = vld [vmem:[%s2847 + $0x1c] sm:$0x3]
      %v2854 = vld [vmem:[%s2847 + $0x20] sm:$0x3]
      %v2855 = vld [vmem:[%s2847 + $0x24] sm:$0x3]
      %v2856 = vld [vmem:[%s2847 + $0x30] sm:$0x3]
      %v2857 = vld [vmem:[%s2847 + $0x34] sm:$0x3]
      %v2858 = vld [vmem:[%s2847 + $0x38] sm:$0x3]
      %v2859 = vld [vmem:[%s2847 + $0x3c] sm:$0x3]
      %v2860 = vld [vmem:[%s2847 + $0x48] sm:$0x3]
      %v2861 = vld [vmem:[%s2847 + $0x4c] sm:$0x3]
      %v2862 = vld [vmem:[%s2847 + $0x50] sm:$0x3]
      %v2863 = vld [vmem:[%s2847 + $0x54] sm:$0x3]
      %v2864 = vld [vmem:[%s2847] sm:$0x7]
      %v2865 = vld [vmem:[%s2847 + $0x4] sm:$0x7]
      %v2866 = vld [vmem:[%s2847 + $0x8] sm:$0x7]
      %v2867 = vld [vmem:[%s2847 + $0xc] sm:$0x7]
      %v2868 = vld [vmem:[%s2847 + $0x18] sm:$0x7]
      %v2869 = vld [vmem:[%s2847 + $0x1c] sm:$0x7]
      %v2870 = vld [vmem:[%s2847 + $0x20] sm:$0x7]
      %v2871 = vld [vmem:[%s2847 + $0x24] sm:$0x7]
      %v2872 = vld [vmem:[%s2847 + $0x30] sm:$0x7]
      %v2873 = vld [vmem:[%s2847 + $0x34] sm:$0x7]
      %v2874 = vld [vmem:[%s2847 + $0x38] sm:$0x7]
      %v2875 = vld [vmem:[%s2847 + $0x3c] sm:$0x7]
      %v2876 = vld [vmem:[%s2847 + $0x48] sm:$0x7]
      %v2877 = vld [vmem:[%s2847 + $0x4c] sm:$0x7]
      %v2878 = vld [vmem:[%s2847 + $0x50] sm:$0x7]
      %v2879 = vld [vmem:[%s2847 + $0x54] sm:$0x7]
      %v2880 = vld [vmem:[%s2847] sm:$0x6]
      %v2881 = vld [vmem:[%s2847 + $0x4] sm:$0x6]
      %v2882 = vld [vmem:[%s2847 + $0x8] sm:$0x6]
      %v2883 = vld [vmem:[%s2847 + $0xc] sm:$0x6]
      %v2884 = vld [vmem:[%s2847 + $0x18] sm:$0x6]
      %v2885 = vld [vmem:[%s2847 + $0x1c] sm:$0x6]
      %v2886 = vld [vmem:[%s2847 + $0x20] sm:$0x6]
      %v2887 = vld [vmem:[%s2847 + $0x24] sm:$0x6]
      %v2888 = vld [vmem:[%s2847 + $0x30] sm:$0x6]
      %v2889 = vld [vmem:[%s2847 + $0x34] sm:$0x6]
      %v2890 = vld [vmem:[%s2847 + $0x38] sm:$0x6]
      %v2891 = vld [vmem:[%s2847 + $0x3c] sm:$0x6]
      %v2892 = vld [vmem:[%s2847 + $0x48] sm:$0x6]
      %v2893 = vld [vmem:[%s2847 + $0x4c] sm:$0x6]
      %v2894 = vld [vmem:[%s2847 + $0x50] sm:$0x6]
      %v2895 = vld [vmem:[%s2847 + $0x54] sm:$0x6]
      %v2912 = vunpack.c.l.b16 %v2864
      %v2913 = vunpack.c.l.b16 %v2865
      %v2914 = vunpack.c.l.b16 %v2866
      %v2915 = vunpack.c.l.b16 %v2867
      %v2916 = vunpack.c.l.b16 %v2868
      %v2917 = vunpack.c.l.b16 %v2869
      %v2918 = vunpack.c.l.b16 %v2870
      %v2919 = vunpack.c.l.b16 %v2871
      %v2920 = vunpack.c.l.b16 %v2872
      %v2921 = vunpack.c.l.b16 %v2873
      %v2922 = vunpack.c.l.b16 %v2874
      %v2923 = vunpack.c.l.b16 %v2875
      %v2924 = vunpack.c.l.b16 %v2876
      %v2925 = vunpack.c.l.b16 %v2877
      %v2926 = vunpack.c.l.b16 %v2878
      %v2927 = vunpack.c.l.b16 %v2879
      %v2928 = vpack.c.b16 %v2912, %v2912
      %v2929 = vpack.c.b16 %v2913, %v2913
      %v2930 = vpack.c.b16 %v2914, %v2914
      %v2931 = vpack.c.b16 %v2915, %v2915
      %v2932 = vpack.c.b16 %v2916, %v2916
      %v2933 = vpack.c.b16 %v2917, %v2917
      %v2934 = vpack.c.b16 %v2918, %v2918
      %v2935 = vpack.c.b16 %v2919, %v2919
      %v2936 = vpack.c.b16 %v2920, %v2920
      %v2937 = vpack.c.b16 %v2921, %v2921
      %v2938 = vpack.c.b16 %v2922, %v2922
      %v2939 = vpack.c.b16 %v2923, %v2923
      %v2940 = vpack.c.b16 %v2924, %v2924
      %v2941 = vpack.c.b16 %v2925, %v2925
      %v2942 = vpack.c.b16 %v2926, %v2926
      %v2943 = vpack.c.b16 %v2927, %v2927
      %v2945 = vshrl.u32 %v2928, 16
      %v2947 = vshll.u32 %v2928, 16
      %v2949 = vrot.slane %v2947, 1
      %v2950 = vor.u32 %v2945, %v2949
      %v2952 = vshrl.u32 %v2929, 16
      %v2954 = vshll.u32 %v2929, 16
      %v2956 = vrot.slane %v2954, 1
      %v2957 = vor.u32 %v2952, %v2956
      %v2959 = vshrl.u32 %v2930, 16
      %v2961 = vshll.u32 %v2930, 16
      %v2963 = vrot.slane %v2961, 1
      %v2964 = vor.u32 %v2959, %v2963
      %v2966 = vshrl.u32 %v2931, 16
      %v2968 = vshll.u32 %v2931, 16
      %v2970 = vrot.slane %v2968, 1
      %v2971 = vor.u32 %v2966, %v2970
      %v2973 = vshrl.u32 %v2932, 16
      %v2975 = vshll.u32 %v2932, 16
      %v2977 = vrot.slane %v2975, 1
      %v2978 = vor.u32 %v2973, %v2977
      %v2980 = vshrl.u32 %v2933, 16
      %v2982 = vshll.u32 %v2933, 16
      %v2984 = vrot.slane %v2982, 1
      %v2985 = vor.u32 %v2980, %v2984
      %v2987 = vshrl.u32 %v2934, 16
      %v2989 = vshll.u32 %v2934, 16
      %v2991 = vrot.slane %v2989, 1
      %v2992 = vor.u32 %v2987, %v2991
      %v2994 = vshrl.u32 %v2935, 16
      %v2996 = vshll.u32 %v2935, 16
      %v2998 = vrot.slane %v2996, 1
      %v2999 = vor.u32 %v2994, %v2998
      %v3001 = vshrl.u32 %v2936, 16
      %v3003 = vshll.u32 %v2936, 16
      %v3005 = vrot.slane %v3003, 1
      %v3006 = vor.u32 %v3001, %v3005
      %v3008 = vshrl.u32 %v2937, 16
      %v3010 = vshll.u32 %v2937, 16
      %v3012 = vrot.slane %v3010, 1
      %v3013 = vor.u32 %v3008, %v3012
      %v3015 = vshrl.u32 %v2938, 16
      %v3017 = vshll.u32 %v2938, 16
      %v3019 = vrot.slane %v3017, 1
      %v3020 = vor.u32 %v3015, %v3019
      %v3022 = vshrl.u32 %v2939, 16
      %v3024 = vshll.u32 %v2939, 16
      %v3026 = vrot.slane %v3024, 1
      %v3027 = vor.u32 %v3022, %v3026
      %v3029 = vshrl.u32 %v2940, 16
      %v3031 = vshll.u32 %v2940, 16
      %v3033 = vrot.slane %v3031, 1
      %v3034 = vor.u32 %v3029, %v3033
      %v3036 = vshrl.u32 %v2941, 16
      %v3038 = vshll.u32 %v2941, 16
      %v3040 = vrot.slane %v3038, 1
      %v3041 = vor.u32 %v3036, %v3040
      %v3043 = vshrl.u32 %v2942, 16
      %v3045 = vshll.u32 %v2942, 16
      %v3047 = vrot.slane %v3045, 1
      %v3048 = vor.u32 %v3043, %v3047
      %v3050 = vshrl.u32 %v2943, 16
      %v3052 = vshll.u32 %v2943, 16
      %v3054 = vrot.slane %v3052, 1
      %v3055 = vor.u32 %v3050, %v3054
      %3056 = vrot.lane.b32.xlu0 %v2950, 32
      %v3057 = vpop.permute.xlu0 %3056
      %3058 = vrot.lane.b32.xlu0 %v2957, 32
      %v3059 = vpop.permute.xlu0 %3058
      %3060 = vrot.lane.b32.xlu0 %v2964, 32
      %v3061 = vpop.permute.xlu0 %3060
      %3062 = vrot.lane.b32.xlu0 %v2971, 32
      %v3063 = vpop.permute.xlu0 %3062
      %3064 = vrot.lane.b32.xlu0 %v2978, 32
      %v3065 = vpop.permute.xlu0 %3064
      %3066 = vrot.lane.b32.xlu0 %v2985, 32
      %v3067 = vpop.permute.xlu0 %3066
      %3068 = vrot.lane.b32.xlu0 %v2992, 32
      %v3069 = vpop.permute.xlu0 %3068
      %3070 = vrot.lane.b32.xlu0 %v2999, 32
      %v3071 = vpop.permute.xlu0 %3070
      %3072 = vrot.lane.b32.xlu0 %v3006, 32
      %v3073 = vpop.permute.xlu0 %3072
      %3074 = vrot.lane.b32.xlu0 %v3013, 32
      %v3075 = vpop.permute.xlu0 %3074
      %3076 = vrot.lane.b32.xlu0 %v3020, 32
      %v3077 = vpop.permute.xlu0 %3076
      %3078 = vrot.lane.b32.xlu0 %v3027, 32
      %v3079 = vpop.permute.xlu0 %3078
      %3080 = vrot.lane.b32.xlu0 %v3034, 32
      %v3081 = vpop.permute.xlu0 %3080
      %3082 = vrot.lane.b32.xlu0 %v3041, 32
      %v3083 = vpop.permute.xlu0 %3082
      %3084 = vrot.lane.b32.xlu0 %v3048, 32
      %v3085 = vpop.permute.xlu0 %3084
      %3086 = vrot.lane.b32.xlu0 %v3055, 32
      %v3087 = vpop.permute.xlu0 %3086
      %v3104 = vunpack.c.l.b16 %v2880
      %v3105 = vunpack.c.l.b16 %v2881
      %v3106 = vunpack.c.l.b16 %v2882
      %v3107 = vunpack.c.l.b16 %v2883
      %v3108 = vunpack.c.l.b16 %v2884
      %v3109 = vunpack.c.l.b16 %v2885
      %v3110 = vunpack.c.l.b16 %v2886
      %v3111 = vunpack.c.l.b16 %v2887
      %v3112 = vunpack.c.l.b16 %v2888
      %v3113 = vunpack.c.l.b16 %v2889
      %v3114 = vunpack.c.l.b16 %v2890
      %v3115 = vunpack.c.l.b16 %v2891
      %v3116 = vunpack.c.l.b16 %v2892
      %v3117 = vunpack.c.l.b16 %v2893
      %v3118 = vunpack.c.l.b16 %v2894
      %v3119 = vunpack.c.l.b16 %v2895
      %v3120 = vpack.c.b16 %v3104, %v3104
      %v3121 = vpack.c.b16 %v3105, %v3105
      %v3122 = vpack.c.b16 %v3106, %v3106
      %v3123 = vpack.c.b16 %v3107, %v3107
      %v3124 = vpack.c.b16 %v3108, %v3108
      %v3125 = vpack.c.b16 %v3109, %v3109
      %v3126 = vpack.c.b16 %v3110, %v3110
      %v3127 = vpack.c.b16 %v3111, %v3111
      %v3128 = vpack.c.b16 %v3112, %v3112
      %v3129 = vpack.c.b16 %v3113, %v3113
      %v3130 = vpack.c.b16 %v3114, %v3114
      %v3131 = vpack.c.b16 %v3115, %v3115
      %v3132 = vpack.c.b16 %v3116, %v3116
      %v3133 = vpack.c.b16 %v3117, %v3117
      %v3134 = vpack.c.b16 %v3118, %v3118
      %v3135 = vpack.c.b16 %v3119, %v3119
      %v3136 = vrot.slane %v3120, 1
      %v3137 = vrot.slane %v3121, 1
      %v3138 = vrot.slane %v3122, 1
      %v3139 = vrot.slane %v3123, 1
      %v3140 = vrot.slane %v3124, 1
      %v3141 = vrot.slane %v3125, 1
      %v3142 = vrot.slane %v3126, 1
      %v3143 = vrot.slane %v3127, 1
      %v3144 = vrot.slane %v3128, 1
      %v3145 = vrot.slane %v3129, 1
      %v3146 = vrot.slane %v3130, 1
      %v3147 = vrot.slane %v3131, 1
      %v3148 = vrot.slane %v3132, 1
      %v3149 = vrot.slane %v3133, 1
      %v3150 = vrot.slane %v3134, 1
      %v3151 = vrot.slane %v3135, 1
      %3152 = vrot.lane.b32.xlu0 %v3136, 64
      %v3153 = vpop.permute.xlu0 %3152
      %3154 = vrot.lane.b32.xlu0 %v3137, 64
      %v3155 = vpop.permute.xlu0 %3154
      %3156 = vrot.lane.b32.xlu0 %v3138, 64
      %v3157 = vpop.permute.xlu0 %3156
      %3158 = vrot.lane.b32.xlu0 %v3139, 64
      %v3159 = vpop.permute.xlu0 %3158
      %3160 = vrot.lane.b32.xlu0 %v3140, 64
      %v3161 = vpop.permute.xlu0 %3160
      %3162 = vrot.lane.b32.xlu0 %v3141, 64
      %v3163 = vpop.permute.xlu0 %3162
      %3164 = vrot.lane.b32.xlu0 %v3142, 64
      %v3165 = vpop.permute.xlu0 %3164
      %3166 = vrot.lane.b32.xlu0 %v3143, 64
      %v3167 = vpop.permute.xlu0 %3166
      %3168 = vrot.lane.b32.xlu0 %v3144, 64
      %v3169 = vpop.permute.xlu0 %3168
      %3170 = vrot.lane.b32.xlu0 %v3145, 64
      %v3171 = vpop.permute.xlu0 %3170
      %3172 = vrot.lane.b32.xlu0 %v3146, 64
      %v3173 = vpop.permute.xlu0 %3172
      %3174 = vrot.lane.b32.xlu0 %v3147, 64
      %v3175 = vpop.permute.xlu0 %3174
      %3176 = vrot.lane.b32.xlu0 %v3148, 64
      %v3177 = vpop.permute.xlu0 %3176
      %3178 = vrot.lane.b32.xlu0 %v3149, 64
      %v3179 = vpop.permute.xlu0 %3178
      %3180 = vrot.lane.b32.xlu0 %v3150, 64
      %v3181 = vpop.permute.xlu0 %3180
      %3182 = vrot.lane.b32.xlu0 %v3151, 64
      %v3183 = vpop.permute.xlu0 %3182
      %v3186 = vsel %vm508, %v2848, %v3057
      %v3189 = vsel %vm508, %v2849, %v3059
      %v3192 = vsel %vm508, %v2850, %v3061
      %v3195 = vsel %vm508, %v2851, %v3063
      %v3198 = vsel %vm508, %v2852, %v3065
      %v3201 = vsel %vm508, %v2853, %v3067
      %v3204 = vsel %vm508, %v2854, %v3069
      %v3207 = vsel %vm508, %v2855, %v3071
      %v3210 = vsel %vm508, %v2856, %v3073
      %v3213 = vsel %vm508, %v2857, %v3075
      %v3216 = vsel %vm508, %v2858, %v3077
      %v3219 = vsel %vm508, %v2859, %v3079
      %v3222 = vsel %vm508, %v2860, %v3081
      %v3225 = vsel %vm508, %v2861, %v3083
      %v3228 = vsel %vm508, %v2862, %v3085
      %v3231 = vsel %vm508, %v2863, %v3087
      %v3233 = vsel %vm557, %v3186, %v3153
      %v3235 = vsel %vm557, %v3189, %v3155
      %v3237 = vsel %vm557, %v3192, %v3157
      %v3239 = vsel %vm557, %v3195, %v3159
      %v3241 = vsel %vm557, %v3198, %v3161
      %v3243 = vsel %vm557, %v3201, %v3163
      %v3245 = vsel %vm557, %v3204, %v3165
      %v3247 = vsel %vm557, %v3207, %v3167
      %v3249 = vsel %vm557, %v3210, %v3169
      %v3251 = vsel %vm557, %v3213, %v3171
      %v3253 = vsel %vm557, %v3216, %v3173
      %v3255 = vsel %vm557, %v3219, %v3175
      %v3257 = vsel %vm557, %v3222, %v3177
      %v3259 = vsel %vm557, %v3225, %v3179
      %v3261 = vsel %vm557, %v3228, %v3181
      %v3263 = vsel %vm557, %v3231, %v3183
      %s3264 = scalar_lea.vmem %s1, 240
      %v3265 = vld [vmem:[%s3264] sm:$0xf]
      %v3266 = vld [vmem:[%s3264 + $0x4] sm:$0xf]
      %v3267 = vld [vmem:[%s3264 + $0x8] sm:$0xf]
      %v3268 = vld [vmem:[%s3264 + $0xc] sm:$0xf]
      %v3269 = vld [vmem:[%s3264 + $0x10] sm:$0xf]
      %v3270 = vld [vmem:[%s3264 + $0x14] sm:$0xf]
      %v3271 = vld [vmem:[%s3264 + $0x18] sm:$0xf]
      %v3272 = vld [vmem:[%s3264 + $0x1c] sm:$0xf]
      %v3273 = vld [vmem:[%s3264 + $0x20] sm:$0xf]
      %v3274 = vld [vmem:[%s3264 + $0x24] sm:$0xf]
      %v3275 = vld [vmem:[%s3264 + $0x28] sm:$0xf]
      %v3276 = vld [vmem:[%s3264 + $0x2c] sm:$0xf]
      %3277 = vst [vmem:[#allocation1] ss:$4 sm:$0xff] %v3233
      %s3278 = scalar_lea.vmem [#allocation1], 1
      %3279 = vst [vmem:[%s3278] ss:$4 sm:$0xff] %v3235
      %s3280 = scalar_lea.vmem [#allocation1], 2
      %3281 = vst [vmem:[%s3280] ss:$4 sm:$0xff] %v3237
      %s3282 = scalar_lea.vmem [#allocation1], 3
      %3283 = vst [vmem:[%s3282] ss:$4 sm:$0xff] %v3239
      %s3284 = scalar_lea.vmem [#allocation1], 32
      %3285 = vst [vmem:[%s3284] ss:$4 sm:$0xff] %v3241
      %s3286 = scalar_lea.vmem [#allocation1], 33
      %3287 = vst [vmem:[%s3286] ss:$4 sm:$0xff] %v3243
      %s3288 = scalar_lea.vmem [#allocation1], 34
      %3289 = vst [vmem:[%s3288] ss:$4 sm:$0xff] %v3245
      %s3290 = scalar_lea.vmem [#allocation1], 35
      %3291 = vst [vmem:[%s3290] ss:$4 sm:$0xff] %v3247
      %v3292 = vld.sshfl [vmem:[#allocation1] sm:$0xff pattern:$0x73625140]
      %v3293 = vld.sshfl [vmem:[#allocation1 + $0x20] sm:$0xff pattern:$0x73625140]
      %3294 = vst [vmem:[#allocation1] ss:$4 sm:$0xff] %v3249
      %3295 = vst [vmem:[%s3278] ss:$4 sm:$0xff] %v3251
      %3296 = vst [vmem:[%s3280] ss:$4 sm:$0xff] %v3253
      %3297 = vst [vmem:[%s3282] ss:$4 sm:$0xff] %v3255
      %3298 = vst [vmem:[%s3284] ss:$4 sm:$0xff] %v3257
      %3299 = vst [vmem:[%s3286] ss:$4 sm:$0xff] %v3259
      %3300 = vst [vmem:[%s3288] ss:$4 sm:$0xff] %v3261
      %3301 = vst [vmem:[%s3290] ss:$4 sm:$0xff] %v3263
      %v3302 = vld.sshfl [vmem:[#allocation1] sm:$0xff pattern:$0x73625140]
      %v3303 = vld.sshfl [vmem:[#allocation1 + $0x20] sm:$0xff pattern:$0x73625140]
      %v3316 = vunpack.c.l.b16 %v3265
      %v3317 = vunpack.c.l.b16 %v3266
      %v3318 = vunpack.c.l.b16 %v3267
      %v3319 = vunpack.c.l.b16 %v3268
      %v3320 = vunpack.c.l.b16 %v3269
      %v3321 = vunpack.c.l.b16 %v3270
      %v3322 = vunpack.c.l.b16 %v3271
      %v3323 = vunpack.c.l.b16 %v3272
      %v3324 = vunpack.c.l.b16 %v3273
      %v3325 = vunpack.c.l.b16 %v3274
      %v3326 = vunpack.c.l.b16 %v3275
      %v3327 = vunpack.c.l.b16 %v3276
      %v3328 = vpack.c.b16 %v3317, %v3316
      %v3329 = vpack.c.b16 %v3319, %v3318
      %v3330 = vpack.c.b16 %v3321, %v3320
      %v3331 = vpack.c.b16 %v3323, %v3322
      %v3332 = vpack.c.b16 %v3325, %v3324
      %v3333 = vpack.c.b16 %v3327, %v3326
      %v3340 = vsel %vm1095, %v3292, 0
      %v3342 = vsel %vm1095, %v3293, 0
      %v3344 = vsel %vm1095, %v3302, 0
      %v3346 = vsel %vm1095, %v3303, 0
      %3348 = vmatpush.bf16.msra.mxu0 0
      %3349 = vmatpush.bf16.msra.mxu0 0
      %3350 = vmatpush.bf16.msra.mxu0 %v3333
      %3351 = vmatpush.bf16.msra.mxu0 %v3332
      %3352 = vmatpush.bf16.msra.mxu0 %v3331
      %3353 = vmatpush.bf16.msra.mxu0 %v3330
      %3354 = vmatpush.bf16.msra.mxu0 %v3329
      %3355 = vmatpush.bf16.msra.mxu0 %v3328
      %3356 = vmatmul.bf16.gmra.mxu0 %v3340
      %v3357 = vpop.f32.mrf.mxu0
      %v3358 = vadd.f32 0.0, %v3357
      %v3359 = vpop.f32.mrf.mxu0
      %v3360 = vadd.f32 0.0, %v3359
      %3361 = vmatmul.bf16.gmra.mxu0 %v3342
      %v3362 = vpop.f32.mrf.mxu0
      %v3363 = vadd.f32 0.0, %v3362
      %v3364 = vpop.f32.mrf.mxu0
      %v3365 = vadd.f32 0.0, %v3364
      %3366 = vmatmul.bf16.gmra.mxu0 %v3344
      %v3367 = vpop.f32.mrf.mxu0
      %v3368 = vadd.f32 0.0, %v3367
      %v3369 = vpop.f32.mrf.mxu0
      %v3370 = vadd.f32 0.0, %v3369
      %3371 = vmatmul.bf16.gmra.mxu0 %v3346
      %v3372 = vpop.f32.mrf.mxu0
      %v3373 = vadd.f32 0.0, %v3372
      %v3374 = vpop.f32.mrf.mxu0
      %v3375 = vadd.f32 0.0, %v3374
      %3376 = vdwg.mxu0
      %v3377 = vadd.f32 %v2839, %v3358
      %v3378 = vadd.f32 %v2840, %v3360
      %v3379 = vadd.f32 %v2841, %v3363
      %v3380 = vadd.f32 %v2842, %v3365
      %v3381 = vadd.f32 %v2843, %v3368
      %v3382 = vadd.f32 %v2844, %v3370
      %v3383 = vadd.f32 %v2845, %v3373
      %v3384 = vadd.f32 %v2846, %v3375
      %s3385 = scalar_lea.vmem %s165, 48
      %v3386 = vld [vmem:[%s3385] sm:$0x3]
      %v3387 = vld [vmem:[%s3385 + $0x4] sm:$0x3]
      %v3388 = vld [vmem:[%s3385 + $0x8] sm:$0x3]
      %v3389 = vld [vmem:[%s3385 + $0xc] sm:$0x3]
      %v3390 = vld [vmem:[%s3385 + $0x18] sm:$0x3]
      %v3391 = vld [vmem:[%s3385 + $0x1c] sm:$0x3]
      %v3392 = vld [vmem:[%s3385 + $0x20] sm:$0x3]
      %v3393 = vld [vmem:[%s3385 + $0x24] sm:$0x3]
      %v3394 = vld [vmem:[%s3385 + $0x30] sm:$0x3]
      %v3395 = vld [vmem:[%s3385 + $0x34] sm:$0x3]
      %v3396 = vld [vmem:[%s3385 + $0x38] sm:$0x3]
      %v3397 = vld [vmem:[%s3385 + $0x3c] sm:$0x3]
      %v3398 = vld [vmem:[%s3385 + $0x48] sm:$0x3]
      %v3399 = vld [vmem:[%s3385 + $0x4c] sm:$0x3]
      %v3400 = vld [vmem:[%s3385 + $0x50] sm:$0x3]
      %v3401 = vld [vmem:[%s3385 + $0x54] sm:$0x3]
      %v3402 = vld [vmem:[%s3385] sm:$0x7]
      %v3403 = vld [vmem:[%s3385 + $0x4] sm:$0x7]
      %v3404 = vld [vmem:[%s3385 + $0x8] sm:$0x7]
      %v3405 = vld [vmem:[%s3385 + $0xc] sm:$0x7]
      %v3406 = vld [vmem:[%s3385 + $0x18] sm:$0x7]
      %v3407 = vld [vmem:[%s3385 + $0x1c] sm:$0x7]
      %v3408 = vld [vmem:[%s3385 + $0x20] sm:$0x7]
      %v3409 = vld [vmem:[%s3385 + $0x24] sm:$0x7]
      %v3410 = vld [vmem:[%s3385 + $0x30] sm:$0x7]
      %v3411 = vld [vmem:[%s3385 + $0x34] sm:$0x7]
      %v3412 = vld [vmem:[%s3385 + $0x38] sm:$0x7]
      %v3413 = vld [vmem:[%s3385 + $0x3c] sm:$0x7]
      %v3414 = vld [vmem:[%s3385 + $0x48] sm:$0x7]
      %v3415 = vld [vmem:[%s3385 + $0x4c] sm:$0x7]
      %v3416 = vld [vmem:[%s3385 + $0x50] sm:$0x7]
      %v3417 = vld [vmem:[%s3385 + $0x54] sm:$0x7]
      %v3418 = vld [vmem:[%s3385] sm:$0x6]
      %v3419 = vld [vmem:[%s3385 + $0x4] sm:$0x6]
      %v3420 = vld [vmem:[%s3385 + $0x8] sm:$0x6]
      %v3421 = vld [vmem:[%s3385 + $0xc] sm:$0x6]
      %v3422 = vld [vmem:[%s3385 + $0x18] sm:$0x6]
      %v3423 = vld [vmem:[%s3385 + $0x1c] sm:$0x6]
      %v3424 = vld [vmem:[%s3385 + $0x20] sm:$0x6]
      %v3425 = vld [vmem:[%s3385 + $0x24] sm:$0x6]
      %v3426 = vld [vmem:[%s3385 + $0x30] sm:$0x6]
      %v3427 = vld [vmem:[%s3385 + $0x34] sm:$0x6]
      %v3428 = vld [vmem:[%s3385 + $0x38] sm:$0x6]
      %v3429 = vld [vmem:[%s3385 + $0x3c] sm:$0x6]
      %v3430 = vld [vmem:[%s3385 + $0x48] sm:$0x6]
      %v3431 = vld [vmem:[%s3385 + $0x4c] sm:$0x6]
      %v3432 = vld [vmem:[%s3385 + $0x50] sm:$0x6]
      %v3433 = vld [vmem:[%s3385 + $0x54] sm:$0x6]
      %v3450 = vunpack.c.l.b16 %v3402
      %v3451 = vunpack.c.l.b16 %v3403
      %v3452 = vunpack.c.l.b16 %v3404
      %v3453 = vunpack.c.l.b16 %v3405
      %v3454 = vunpack.c.l.b16 %v3406
      %v3455 = vunpack.c.l.b16 %v3407
      %v3456 = vunpack.c.l.b16 %v3408
      %v3457 = vunpack.c.l.b16 %v3409
      %v3458 = vunpack.c.l.b16 %v3410
      %v3459 = vunpack.c.l.b16 %v3411
      %v3460 = vunpack.c.l.b16 %v3412
      %v3461 = vunpack.c.l.b16 %v3413
      %v3462 = vunpack.c.l.b16 %v3414
      %v3463 = vunpack.c.l.b16 %v3415
      %v3464 = vunpack.c.l.b16 %v3416
      %v3465 = vunpack.c.l.b16 %v3417
      %v3466 = vpack.c.b16 %v3450, %v3450
      %v3467 = vpack.c.b16 %v3451, %v3451
      %v3468 = vpack.c.b16 %v3452, %v3452
      %v3469 = vpack.c.b16 %v3453, %v3453
      %v3470 = vpack.c.b16 %v3454, %v3454
      %v3471 = vpack.c.b16 %v3455, %v3455
      %v3472 = vpack.c.b16 %v3456, %v3456
      %v3473 = vpack.c.b16 %v3457, %v3457
      %v3474 = vpack.c.b16 %v3458, %v3458
      %v3475 = vpack.c.b16 %v3459, %v3459
      %v3476 = vpack.c.b16 %v3460, %v3460
      %v3477 = vpack.c.b16 %v3461, %v3461
      %v3478 = vpack.c.b16 %v3462, %v3462
      %v3479 = vpack.c.b16 %v3463, %v3463
      %v3480 = vpack.c.b16 %v3464, %v3464
      %v3481 = vpack.c.b16 %v3465, %v3465
      %v3483 = vshrl.u32 %v3466, 16
      %v3485 = vshll.u32 %v3466, 16
      %v3487 = vrot.slane %v3485, 1
      %v3488 = vor.u32 %v3483, %v3487
      %v3490 = vshrl.u32 %v3467, 16
      %v3492 = vshll.u32 %v3467, 16
      %v3494 = vrot.slane %v3492, 1
      %v3495 = vor.u32 %v3490, %v3494
      %v3497 = vshrl.u32 %v3468, 16
      %v3499 = vshll.u32 %v3468, 16
      %v3501 = vrot.slane %v3499, 1
      %v3502 = vor.u32 %v3497, %v3501
      %v3504 = vshrl.u32 %v3469, 16
      %v3506 = vshll.u32 %v3469, 16
      %v3508 = vrot.slane %v3506, 1
      %v3509 = vor.u32 %v3504, %v3508
      %v3511 = vshrl.u32 %v3470, 16
      %v3513 = vshll.u32 %v3470, 16
      %v3515 = vrot.slane %v3513, 1
      %v3516 = vor.u32 %v3511, %v3515
      %v3518 = vshrl.u32 %v3471, 16
      %v3520 = vshll.u32 %v3471, 16
      %v3522 = vrot.slane %v3520, 1
      %v3523 = vor.u32 %v3518, %v3522
      %v3525 = vshrl.u32 %v3472, 16
      %v3527 = vshll.u32 %v3472, 16
      %v3529 = vrot.slane %v3527, 1
      %v3530 = vor.u32 %v3525, %v3529
      %v3532 = vshrl.u32 %v3473, 16
      %v3534 = vshll.u32 %v3473, 16
      %v3536 = vrot.slane %v3534, 1
      %v3537 = vor.u32 %v3532, %v3536
      %v3539 = vshrl.u32 %v3474, 16
      %v3541 = vshll.u32 %v3474, 16
      %v3543 = vrot.slane %v3541, 1
      %v3544 = vor.u32 %v3539, %v3543
      %v3546 = vshrl.u32 %v3475, 16
      %v3548 = vshll.u32 %v3475, 16
      %v3550 = vrot.slane %v3548, 1
      %v3551 = vor.u32 %v3546, %v3550
      %v3553 = vshrl.u32 %v3476, 16
      %v3555 = vshll.u32 %v3476, 16
      %v3557 = vrot.slane %v3555, 1
      %v3558 = vor.u32 %v3553, %v3557
      %v3560 = vshrl.u32 %v3477, 16
      %v3562 = vshll.u32 %v3477, 16
      %v3564 = vrot.slane %v3562, 1
      %v3565 = vor.u32 %v3560, %v3564
      %v3567 = vshrl.u32 %v3478, 16
      %v3569 = vshll.u32 %v3478, 16
      %v3571 = vrot.slane %v3569, 1
      %v3572 = vor.u32 %v3567, %v3571
      %v3574 = vshrl.u32 %v3479, 16
      %v3576 = vshll.u32 %v3479, 16
      %v3578 = vrot.slane %v3576, 1
      %v3579 = vor.u32 %v3574, %v3578
      %v3581 = vshrl.u32 %v3480, 16
      %v3583 = vshll.u32 %v3480, 16
      %v3585 = vrot.slane %v3583, 1
      %v3586 = vor.u32 %v3581, %v3585
      %v3588 = vshrl.u32 %v3481, 16
      %v3590 = vshll.u32 %v3481, 16
      %v3592 = vrot.slane %v3590, 1
      %v3593 = vor.u32 %v3588, %v3592
      %3594 = vrot.lane.b32.xlu0 %v3488, 32
      %v3595 = vpop.permute.xlu0 %3594
      %3596 = vrot.lane.b32.xlu0 %v3495, 32
      %v3597 = vpop.permute.xlu0 %3596
      %3598 = vrot.lane.b32.xlu0 %v3502, 32
      %v3599 = vpop.permute.xlu0 %3598
      %3600 = vrot.lane.b32.xlu0 %v3509, 32
      %v3601 = vpop.permute.xlu0 %3600
      %3602 = vrot.lane.b32.xlu0 %v3516, 32
      %v3603 = vpop.permute.xlu0 %3602
      %3604 = vrot.lane.b32.xlu0 %v3523, 32
      %v3605 = vpop.permute.xlu0 %3604
      %3606 = vrot.lane.b32.xlu0 %v3530, 32
      %v3607 = vpop.permute.xlu0 %3606
      %3608 = vrot.lane.b32.xlu0 %v3537, 32
      %v3609 = vpop.permute.xlu0 %3608
      %3610 = vrot.lane.b32.xlu0 %v3544, 32
      %v3611 = vpop.permute.xlu0 %3610
      %3612 = vrot.lane.b32.xlu0 %v3551, 32
      %v3613 = vpop.permute.xlu0 %3612
      %3614 = vrot.lane.b32.xlu0 %v3558, 32
      %v3615 = vpop.permute.xlu0 %3614
      %3616 = vrot.lane.b32.xlu0 %v3565, 32
      %v3617 = vpop.permute.xlu0 %3616
      %3618 = vrot.lane.b32.xlu0 %v3572, 32
      %v3619 = vpop.permute.xlu0 %3618
      %3620 = vrot.lane.b32.xlu0 %v3579, 32
      %v3621 = vpop.permute.xlu0 %3620
      %3622 = vrot.lane.b32.xlu0 %v3586, 32
      %v3623 = vpop.permute.xlu0 %3622
      %3624 = vrot.lane.b32.xlu0 %v3593, 32
      %v3625 = vpop.permute.xlu0 %3624
      %v3642 = vunpack.c.l.b16 %v3418
      %v3643 = vunpack.c.l.b16 %v3419
      %v3644 = vunpack.c.l.b16 %v3420
      %v3645 = vunpack.c.l.b16 %v3421
      %v3646 = vunpack.c.l.b16 %v3422
      %v3647 = vunpack.c.l.b16 %v3423
      %v3648 = vunpack.c.l.b16 %v3424
      %v3649 = vunpack.c.l.b16 %v3425
      %v3650 = vunpack.c.l.b16 %v3426
      %v3651 = vunpack.c.l.b16 %v3427
      %v3652 = vunpack.c.l.b16 %v3428
      %v3653 = vunpack.c.l.b16 %v3429
      %v3654 = vunpack.c.l.b16 %v3430
      %v3655 = vunpack.c.l.b16 %v3431
      %v3656 = vunpack.c.l.b16 %v3432
      %v3657 = vunpack.c.l.b16 %v3433
      %v3658 = vpack.c.b16 %v3642, %v3642
      %v3659 = vpack.c.b16 %v3643, %v3643
      %v3660 = vpack.c.b16 %v3644, %v3644
      %v3661 = vpack.c.b16 %v3645, %v3645
      %v3662 = vpack.c.b16 %v3646, %v3646
      %v3663 = vpack.c.b16 %v3647, %v3647
      %v3664 = vpack.c.b16 %v3648, %v3648
      %v3665 = vpack.c.b16 %v3649, %v3649
      %v3666 = vpack.c.b16 %v3650, %v3650
      %v3667 = vpack.c.b16 %v3651, %v3651
      %v3668 = vpack.c.b16 %v3652, %v3652
      %v3669 = vpack.c.b16 %v3653, %v3653
      %v3670 = vpack.c.b16 %v3654, %v3654
      %v3671 = vpack.c.b16 %v3655, %v3655
      %v3672 = vpack.c.b16 %v3656, %v3656
      %v3673 = vpack.c.b16 %v3657, %v3657
      %v3674 = vrot.slane %v3658, 1
      %v3675 = vrot.slane %v3659, 1
      %v3676 = vrot.slane %v3660, 1
      %v3677 = vrot.slane %v3661, 1
      %v3678 = vrot.slane %v3662, 1
      %v3679 = vrot.slane %v3663, 1
      %v3680 = vrot.slane %v3664, 1
      %v3681 = vrot.slane %v3665, 1
      %v3682 = vrot.slane %v3666, 1
      %v3683 = vrot.slane %v3667, 1
      %v3684 = vrot.slane %v3668, 1
      %v3685 = vrot.slane %v3669, 1
      %v3686 = vrot.slane %v3670, 1
      %v3687 = vrot.slane %v3671, 1
      %v3688 = vrot.slane %v3672, 1
      %v3689 = vrot.slane %v3673, 1
      %3690 = vrot.lane.b32.xlu0 %v3674, 64
      %v3691 = vpop.permute.xlu0 %3690
      %3692 = vrot.lane.b32.xlu0 %v3675, 64
      %v3693 = vpop.permute.xlu0 %3692
      %3694 = vrot.lane.b32.xlu0 %v3676, 64
      %v3695 = vpop.permute.xlu0 %3694
      %3696 = vrot.lane.b32.xlu0 %v3677, 64
      %v3697 = vpop.permute.xlu0 %3696
      %3698 = vrot.lane.b32.xlu0 %v3678, 64
      %v3699 = vpop.permute.xlu0 %3698
      %3700 = vrot.lane.b32.xlu0 %v3679, 64
      %v3701 = vpop.permute.xlu0 %3700
      %3702 = vrot.lane.b32.xlu0 %v3680, 64
      %v3703 = vpop.permute.xlu0 %3702
      %3704 = vrot.lane.b32.xlu0 %v3681, 64
      %v3705 = vpop.permute.xlu0 %3704
      %3706 = vrot.lane.b32.xlu0 %v3682, 64
      %v3707 = vpop.permute.xlu0 %3706
      %3708 = vrot.lane.b32.xlu0 %v3683, 64
      %v3709 = vpop.permute.xlu0 %3708
      %3710 = vrot.lane.b32.xlu0 %v3684, 64
      %v3711 = vpop.permute.xlu0 %3710
      %3712 = vrot.lane.b32.xlu0 %v3685, 64
      %v3713 = vpop.permute.xlu0 %3712
      %3714 = vrot.lane.b32.xlu0 %v3686, 64
      %v3715 = vpop.permute.xlu0 %3714
      %3716 = vrot.lane.b32.xlu0 %v3687, 64
      %v3717 = vpop.permute.xlu0 %3716
      %3718 = vrot.lane.b32.xlu0 %v3688, 64
      %v3719 = vpop.permute.xlu0 %3718
      %3720 = vrot.lane.b32.xlu0 %v3689, 64
      %v3721 = vpop.permute.xlu0 %3720
      %v3724 = vsel %vm508, %v3386, %v3595
      %v3727 = vsel %vm508, %v3387, %v3597
      %v3730 = vsel %vm508, %v3388, %v3599
      %v3733 = vsel %vm508, %v3389, %v3601
      %v3736 = vsel %vm508, %v3390, %v3603
      %v3739 = vsel %vm508, %v3391, %v3605
      %v3742 = vsel %vm508, %v3392, %v3607
      %v3745 = vsel %vm508, %v3393, %v3609
      %v3748 = vsel %vm508, %v3394, %v3611
      %v3751 = vsel %vm508, %v3395, %v3613
      %v3754 = vsel %vm508, %v3396, %v3615
      %v3757 = vsel %vm508, %v3397, %v3617
      %v3760 = vsel %vm508, %v3398, %v3619
      %v3763 = vsel %vm508, %v3399, %v3621
      %v3766 = vsel %vm508, %v3400, %v3623
      %v3769 = vsel %vm508, %v3401, %v3625
      %v3771 = vsel %vm557, %v3724, %v3691
      %v3773 = vsel %vm557, %v3727, %v3693
      %v3775 = vsel %vm557, %v3730, %v3695
      %v3777 = vsel %vm557, %v3733, %v3697
      %v3779 = vsel %vm557, %v3736, %v3699
      %v3781 = vsel %vm557, %v3739, %v3701
      %v3783 = vsel %vm557, %v3742, %v3703
      %v3785 = vsel %vm557, %v3745, %v3705
      %v3787 = vsel %vm557, %v3748, %v3707
      %v3789 = vsel %vm557, %v3751, %v3709
      %v3791 = vsel %vm557, %v3754, %v3711
      %v3793 = vsel %vm557, %v3757, %v3713
      %v3795 = vsel %vm557, %v3760, %v3715
      %v3797 = vsel %vm557, %v3763, %v3717
      %v3799 = vsel %vm557, %v3766, %v3719
      %v3801 = vsel %vm557, %v3769, %v3721
      %s3802 = scalar_lea.vmem %s1, 288
      %v3803 = vld [vmem:[%s3802] sm:$0xf]
      %v3804 = vld [vmem:[%s3802 + $0x4] sm:$0xf]
      %v3805 = vld [vmem:[%s3802 + $0x8] sm:$0xf]
      %v3806 = vld [vmem:[%s3802 + $0xc] sm:$0xf]
      %v3807 = vld [vmem:[%s3802 + $0x10] sm:$0xf]
      %v3808 = vld [vmem:[%s3802 + $0x14] sm:$0xf]
      %v3809 = vld [vmem:[%s3802 + $0x18] sm:$0xf]
      %v3810 = vld [vmem:[%s3802 + $0x1c] sm:$0xf]
      %v3811 = vld [vmem:[%s3802 + $0x20] sm:$0xf]
      %v3812 = vld [vmem:[%s3802 + $0x24] sm:$0xf]
      %v3813 = vld [vmem:[%s3802 + $0x28] sm:$0xf]
      %v3814 = vld [vmem:[%s3802 + $0x2c] sm:$0xf]
      %3815 = vst [vmem:[#allocation1] ss:$4 sm:$0xff] %v3771
      %s3816 = scalar_lea.vmem [#allocation1], 1
      %3817 = vst [vmem:[%s3816] ss:$4 sm:$0xff] %v3773
      %s3818 = scalar_lea.vmem [#allocation1], 2
      %3819 = vst [vmem:[%s3818] ss:$4 sm:$0xff] %v3775
      %s3820 = scalar_lea.vmem [#allocation1], 3
      %3821 = vst [vmem:[%s3820] ss:$4 sm:$0xff] %v3777
      %s3822 = scalar_lea.vmem [#allocation1], 32
      %3823 = vst [vmem:[%s3822] ss:$4 sm:$0xff] %v3779
      %s3824 = scalar_lea.vmem [#allocation1], 33
      %3825 = vst [vmem:[%s3824] ss:$4 sm:$0xff] %v3781
      %s3826 = scalar_lea.vmem [#allocation1], 34
      %3827 = vst [vmem:[%s3826] ss:$4 sm:$0xff] %v3783
      %s3828 = scalar_lea.vmem [#allocation1], 35
      %3829 = vst [vmem:[%s3828] ss:$4 sm:$0xff] %v3785
      %v3830 = vld.sshfl [vmem:[#allocation1] sm:$0xff pattern:$0x73625140]
      %v3831 = vld.sshfl [vmem:[#allocation1 + $0x20] sm:$0xff pattern:$0x73625140]
      %3832 = vst [vmem:[#allocation1] ss:$4 sm:$0xff] %v3787
      %3833 = vst [vmem:[%s3816] ss:$4 sm:$0xff] %v3789
      %3834 = vst [vmem:[%s3818] ss:$4 sm:$0xff] %v3791
      %3835 = vst [vmem:[%s3820] ss:$4 sm:$0xff] %v3793
      %3836 = vst [vmem:[%s3822] ss:$4 sm:$0xff] %v3795
      %3837 = vst [vmem:[%s3824] ss:$4 sm:$0xff] %v3797
      %3838 = vst [vmem:[%s3826] ss:$4 sm:$0xff] %v3799
      %3839 = vst [vmem:[%s3828] ss:$4 sm:$0xff] %v3801
      %v3840 = vld.sshfl [vmem:[#allocation1] sm:$0xff pattern:$0x73625140]
      %v3841 = vld.sshfl [vmem:[#allocation1 + $0x20] sm:$0xff pattern:$0x73625140]
      %v3854 = vunpack.c.l.b16 %v3803
      %v3855 = vunpack.c.l.b16 %v3804
      %v3856 = vunpack.c.l.b16 %v3805
      %v3857 = vunpack.c.l.b16 %v3806
      %v3858 = vunpack.c.l.b16 %v3807
      %v3859 = vunpack.c.l.b16 %v3808
      %v3860 = vunpack.c.l.b16 %v3809
      %v3861 = vunpack.c.l.b16 %v3810
      %v3862 = vunpack.c.l.b16 %v3811
      %v3863 = vunpack.c.l.b16 %v3812
      %v3864 = vunpack.c.l.b16 %v3813
      %v3865 = vunpack.c.l.b16 %v3814
      %v3866 = vpack.c.b16 %v3855, %v3854
      %v3867 = vpack.c.b16 %v3857, %v3856
      %v3868 = vpack.c.b16 %v3859, %v3858
      %v3869 = vpack.c.b16 %v3861, %v3860
      %v3870 = vpack.c.b16 %v3863, %v3862
      %v3871 = vpack.c.b16 %v3865, %v3864
      %v3878 = vsel %vm1095, %v3830, 0
      %v3880 = vsel %vm1095, %v3831, 0
      %v3882 = vsel %vm1095, %v3840, 0
      %v3884 = vsel %vm1095, %v3841, 0
      %3886 = vmatpush.bf16.msra.mxu0 0
      %3887 = vmatpush.bf16.msra.mxu0 0
      %3888 = vmatpush.bf16.msra.mxu0 %v3871
      %3889 = vmatpush.bf16.msra.mxu0 %v3870
      %3890 = vmatpush.bf16.msra.mxu0 %v3869
      %3891 = vmatpush.bf16.msra.mxu0 %v3868
      %3892 = vmatpush.bf16.msra.mxu0 %v3867
      %3893 = vmatpush.bf16.msra.mxu0 %v3866
      %3894 = vmatmul.bf16.gmra.mxu0 %v3878
      %v3895 = vpop.f32.mrf.mxu0
      %v3896 = vadd.f32 0.0, %v3895
      %v3897 = vpop.f32.mrf.mxu0
      %v3898 = vadd.f32 0.0, %v3897
      %3899 = vmatmul.bf16.gmra.mxu0 %v3880
      %v3900 = vpop.f32.mrf.mxu0
      %v3901 = vadd.f32 0.0, %v3900
      %v3902 = vpop.f32.mrf.mxu0
      %v3903 = vadd.f32 0.0, %v3902
      %3904 = vmatmul.bf16.gmra.mxu0 %v3882
      %v3905 = vpop.f32.mrf.mxu0
      %v3906 = vadd.f32 0.0, %v3905
      %v3907 = vpop.f32.mrf.mxu0
      %v3908 = vadd.f32 0.0, %v3907
      %3909 = vmatmul.bf16.gmra.mxu0 %v3884
      %v3910 = vpop.f32.mrf.mxu0
      %v3911 = vadd.f32 0.0, %v3910
      %v3912 = vpop.f32.mrf.mxu0
      %v3913 = vadd.f32 0.0, %v3912
      %3914 = vdwg.mxu0
      %v3915 = vadd.f32 %v3377, %v3896
      %v3916 = vadd.f32 %v3378, %v3898
      %v3917 = vadd.f32 %v3379, %v3901
      %v3918 = vadd.f32 %v3380, %v3903
      %v3919 = vadd.f32 %v3381, %v3906
      %v3920 = vadd.f32 %v3382, %v3908
      %v3921 = vadd.f32 %v3383, %v3911
      %v3922 = vadd.f32 %v3384, %v3913
      %s3923 = scalar_lea.vmem %s165, 52
      %v3924 = vld [vmem:[%s3923] sm:$0x3]
      %v3925 = vld [vmem:[%s3923 + $0x4] sm:$0x3]
      %v3926 = vld [vmem:[%s3923 + $0x8] sm:$0x3]
      %v3927 = vld [vmem:[%s3923 + $0xc] sm:$0x3]
      %v3928 = vld [vmem:[%s3923 + $0x18] sm:$0x3]
      %v3929 = vld [vmem:[%s3923 + $0x1c] sm:$0x3]
      %v3930 = vld [vmem:[%s3923 + $0x20] sm:$0x3]
      %v3931 = vld [vmem:[%s3923 + $0x24] sm:$0x3]
      %v3932 = vld [vmem:[%s3923 + $0x30] sm:$0x3]
      %v3933 = vld [vmem:[%s3923 + $0x34] sm:$0x3]
      %v3934 = vld [vmem:[%s3923 + $0x38] sm:$0x3]
      %v3935 = vld [vmem:[%s3923 + $0x3c] sm:$0x3]
      %v3936 = vld [vmem:[%s3923 + $0x48] sm:$0x3]
      %v3937 = vld [vmem:[%s3923 + $0x4c] sm:$0x3]
      %v3938 = vld [vmem:[%s3923 + $0x50] sm:$0x3]
      %v3939 = vld [vmem:[%s3923 + $0x54] sm:$0x3]
      %v3940 = vld [vmem:[%s3923] sm:$0x7]
      %v3941 = vld [vmem:[%s3923 + $0x4] sm:$0x7]
      %v3942 = vld [vmem:[%s3923 + $0x8] sm:$0x7]
      %v3943 = vld [vmem:[%s3923 + $0xc] sm:$0x7]
      %v3944 = vld [vmem:[%s3923 + $0x18] sm:$0x7]
      %v3945 = vld [vmem:[%s3923 + $0x1c] sm:$0x7]
      %v3946 = vld [vmem:[%s3923 + $0x20] sm:$0x7]
      %v3947 = vld [vmem:[%s3923 + $0x24] sm:$0x7]
      %v3948 = vld [vmem:[%s3923 + $0x30] sm:$0x7]
      %v3949 = vld [vmem:[%s3923 + $0x34] sm:$0x7]
      %v3950 = vld [vmem:[%s3923 + $0x38] sm:$0x7]
      %v3951 = vld [vmem:[%s3923 + $0x3c] sm:$0x7]
      %v3952 = vld [vmem:[%s3923 + $0x48] sm:$0x7]
      %v3953 = vld [vmem:[%s3923 + $0x4c] sm:$0x7]
      %v3954 = vld [vmem:[%s3923 + $0x50] sm:$0x7]
      %v3955 = vld [vmem:[%s3923 + $0x54] sm:$0x7]
      %v3956 = vld [vmem:[%s3923] sm:$0x6]
      %v3957 = vld [vmem:[%s3923 + $0x4] sm:$0x6]
      %v3958 = vld [vmem:[%s3923 + $0x8] sm:$0x6]
      %v3959 = vld [vmem:[%s3923 + $0xc] sm:$0x6]
      %v3960 = vld [vmem:[%s3923 + $0x18] sm:$0x6]
      %v3961 = vld [vmem:[%s3923 + $0x1c] sm:$0x6]
      %v3962 = vld [vmem:[%s3923 + $0x20] sm:$0x6]
      %v3963 = vld [vmem:[%s3923 + $0x24] sm:$0x6]
      %v3964 = vld [vmem:[%s3923 + $0x30] sm:$0x6]
      %v3965 = vld [vmem:[%s3923 + $0x34] sm:$0x6]
      %v3966 = vld [vmem:[%s3923 + $0x38] sm:$0x6]
      %v3967 = vld [vmem:[%s3923 + $0x3c] sm:$0x6]
      %v3968 = vld [vmem:[%s3923 + $0x48] sm:$0x6]
      %v3969 = vld [vmem:[%s3923 + $0x4c] sm:$0x6]
      %v3970 = vld [vmem:[%s3923 + $0x50] sm:$0x6]
      %v3971 = vld [vmem:[%s3923 + $0x54] sm:$0x6]
      %v3988 = vunpack.c.l.b16 %v3940
      %v3989 = vunpack.c.l.b16 %v3941
      %v3990 = vunpack.c.l.b16 %v3942
      %v3991 = vunpack.c.l.b16 %v3943
      %v3992 = vunpack.c.l.b16 %v3944
      %v3993 = vunpack.c.l.b16 %v3945
      %v3994 = vunpack.c.l.b16 %v3946
      %v3995 = vunpack.c.l.b16 %v3947
      %v3996 = vunpack.c.l.b16 %v3948
      %v3997 = vunpack.c.l.b16 %v3949
      %v3998 = vunpack.c.l.b16 %v3950
      %v3999 = vunpack.c.l.b16 %v3951
      %v4000 = vunpack.c.l.b16 %v3952
      %v4001 = vunpack.c.l.b16 %v3953
      %v4002 = vunpack.c.l.b16 %v3954
      %v4003 = vunpack.c.l.b16 %v3955
      %v4004 = vpack.c.b16 %v3988, %v3988
      %v4005 = vpack.c.b16 %v3989, %v3989
      %v4006 = vpack.c.b16 %v3990, %v3990
      %v4007 = vpack.c.b16 %v3991, %v3991
      %v4008 = vpack.c.b16 %v3992, %v3992
      %v4009 = vpack.c.b16 %v3993, %v3993
      %v4010 = vpack.c.b16 %v3994, %v3994
      %v4011 = vpack.c.b16 %v3995, %v3995
      %v4012 = vpack.c.b16 %v3996, %v3996
      %v4013 = vpack.c.b16 %v3997, %v3997
      %v4014 = vpack.c.b16 %v3998, %v3998
      %v4015 = vpack.c.b16 %v3999, %v3999
      %v4016 = vpack.c.b16 %v4000, %v4000
      %v4017 = vpack.c.b16 %v4001, %v4001
      %v4018 = vpack.c.b16 %v4002, %v4002
      %v4019 = vpack.c.b16 %v4003, %v4003
      %v4021 = vshrl.u32 %v4004, 16
      %v4023 = vshll.u32 %v4004, 16
      %v4025 = vrot.slane %v4023, 1
      %v4026 = vor.u32 %v4021, %v4025
      %v4028 = vshrl.u32 %v4005, 16
      %v4030 = vshll.u32 %v4005, 16
      %v4032 = vrot.slane %v4030, 1
      %v4033 = vor.u32 %v4028, %v4032
      %v4035 = vshrl.u32 %v4006, 16
      %v4037 = vshll.u32 %v4006, 16
      %v4039 = vrot.slane %v4037, 1
      %v4040 = vor.u32 %v4035, %v4039
      %v4042 = vshrl.u32 %v4007, 16
      %v4044 = vshll.u32 %v4007, 16
      %v4046 = vrot.slane %v4044, 1
      %v4047 = vor.u32 %v4042, %v4046
      %v4049 = vshrl.u32 %v4008, 16
      %v4051 = vshll.u32 %v4008, 16
      %v4053 = vrot.slane %v4051, 1
      %v4054 = vor.u32 %v4049, %v4053
      %v4056 = vshrl.u32 %v4009, 16
      %v4058 = vshll.u32 %v4009, 16
      %v4060 = vrot.slane %v4058, 1
      %v4061 = vor.u32 %v4056, %v4060
      %v4063 = vshrl.u32 %v4010, 16
      %v4065 = vshll.u32 %v4010, 16
      %v4067 = vrot.slane %v4065, 1
      %v4068 = vor.u32 %v4063, %v4067
      %v4070 = vshrl.u32 %v4011, 16
      %v4072 = vshll.u32 %v4011, 16
      %v4074 = vrot.slane %v4072, 1
      %v4075 = vor.u32 %v4070, %v4074
      %v4077 = vshrl.u32 %v4012, 16
      %v4079 = vshll.u32 %v4012, 16
      %v4081 = vrot.slane %v4079, 1
      %v4082 = vor.u32 %v4077, %v4081
      %v4084 = vshrl.u32 %v4013, 16
      %v4086 = vshll.u32 %v4013, 16
      %v4088 = vrot.slane %v4086, 1
      %v4089 = vor.u32 %v4084, %v4088
      %v4091 = vshrl.u32 %v4014, 16
      %v4093 = vshll.u32 %v4014, 16
      %v4095 = vrot.slane %v4093, 1
      %v4096 = vor.u32 %v4091, %v4095
      %v4098 = vshrl.u32 %v4015, 16
      %v4100 = vshll.u32 %v4015, 16
      %v4102 = vrot.slane %v4100, 1
      %v4103 = vor.u32 %v4098, %v4102
      %v4105 = vshrl.u32 %v4016, 16
      %v4107 = vshll.u32 %v4016, 16
      %v4109 = vrot.slane %v4107, 1
      %v4110 = vor.u32 %v4105, %v4109
      %v4112 = vshrl.u32 %v4017, 16
      %v4114 = vshll.u32 %v4017, 16
      %v4116 = vrot.slane %v4114, 1
      %v4117 = vor.u32 %v4112, %v4116
      %v4119 = vshrl.u32 %v4018, 16
      %v4121 = vshll.u32 %v4018, 16
      %v4123 = vrot.slane %v4121, 1
      %v4124 = vor.u32 %v4119, %v4123
      %v4126 = vshrl.u32 %v4019, 16
      %v4128 = vshll.u32 %v4019, 16
      %v4130 = vrot.slane %v4128, 1
      %v4131 = vor.u32 %v4126, %v4130
      %4132 = vrot.lane.b32.xlu0 %v4026, 32
      %v4133 = vpop.permute.xlu0 %4132
      %4134 = vrot.lane.b32.xlu0 %v4033, 32
      %v4135 = vpop.permute.xlu0 %4134
      %4136 = vrot.lane.b32.xlu0 %v4040, 32
      %v4137 = vpop.permute.xlu0 %4136
      %4138 = vrot.lane.b32.xlu0 %v4047, 32
      %v4139 = vpop.permute.xlu0 %4138
      %4140 = vrot.lane.b32.xlu0 %v4054, 32
      %v4141 = vpop.permute.xlu0 %4140
      %4142 = vrot.lane.b32.xlu0 %v4061, 32
      %v4143 = vpop.permute.xlu0 %4142
      %4144 = vrot.lane.b32.xlu0 %v4068, 32
      %v4145 = vpop.permute.xlu0 %4144
      %4146 = vrot.lane.b32.xlu0 %v4075, 32
      %v4147 = vpop.permute.xlu0 %4146
      %4148 = vrot.lane.b32.xlu0 %v4082, 32
      %v4149 = vpop.permute.xlu0 %4148
      %4150 = vrot.lane.b32.xlu0 %v4089, 32
      %v4151 = vpop.permute.xlu0 %4150
      %4152 = vrot.lane.b32.xlu0 %v4096, 32
      %v4153 = vpop.permute.xlu0 %4152
      %4154 = vrot.lane.b32.xlu0 %v4103, 32
      %v4155 = vpop.permute.xlu0 %4154
      %4156 = vrot.lane.b32.xlu0 %v4110, 32
      %v4157 = vpop.permute.xlu0 %4156
      %4158 = vrot.lane.b32.xlu0 %v4117, 32
      %v4159 = vpop.permute.xlu0 %4158
      %4160 = vrot.lane.b32.xlu0 %v4124, 32
      %v4161 = vpop.permute.xlu0 %4160
      %4162 = vrot.lane.b32.xlu0 %v4131, 32
      %v4163 = vpop.permute.xlu0 %4162
      %v4180 = vunpack.c.l.b16 %v3956
      %v4181 = vunpack.c.l.b16 %v3957
      %v4182 = vunpack.c.l.b16 %v3958
      %v4183 = vunpack.c.l.b16 %v3959
      %v4184 = vunpack.c.l.b16 %v3960
      %v4185 = vunpack.c.l.b16 %v3961
      %v4186 = vunpack.c.l.b16 %v3962
      %v4187 = vunpack.c.l.b16 %v3963
      %v4188 = vunpack.c.l.b16 %v3964
      %v4189 = vunpack.c.l.b16 %v3965
      %v4190 = vunpack.c.l.b16 %v3966
      %v4191 = vunpack.c.l.b16 %v3967
      %v4192 = vunpack.c.l.b16 %v3968
      %v4193 = vunpack.c.l.b16 %v3969
      %v4194 = vunpack.c.l.b16 %v3970
      %v4195 = vunpack.c.l.b16 %v3971
      %v4196 = vpack.c.b16 %v4180, %v4180
      %v4197 = vpack.c.b16 %v4181, %v4181
      %v4198 = vpack.c.b16 %v4182, %v4182
      %v4199 = vpack.c.b16 %v4183, %v4183
      %v4200 = vpack.c.b16 %v4184, %v4184
      %v4201 = vpack.c.b16 %v4185, %v4185
      %v4202 = vpack.c.b16 %v4186, %v4186
      %v4203 = vpack.c.b16 %v4187, %v4187
      %v4204 = vpack.c.b16 %v4188, %v4188
      %v4205 = vpack.c.b16 %v4189, %v4189
      %v4206 = vpack.c.b16 %v4190, %v4190
      %v4207 = vpack.c.b16 %v4191, %v4191
      %v4208 = vpack.c.b16 %v4192, %v4192
      %v4209 = vpack.c.b16 %v4193, %v4193
      %v4210 = vpack.c.b16 %v4194, %v4194
      %v4211 = vpack.c.b16 %v4195, %v4195
      %v4212 = vrot.slane %v4196, 1
      %v4213 = vrot.slane %v4197, 1
      %v4214 = vrot.slane %v4198, 1
      %v4215 = vrot.slane %v4199, 1
      %v4216 = vrot.slane %v4200, 1
      %v4217 = vrot.slane %v4201, 1
      %v4218 = vrot.slane %v4202, 1
      %v4219 = vrot.slane %v4203, 1
      %v4220 = vrot.slane %v4204, 1
      %v4221 = vrot.slane %v4205, 1
      %v4222 = vrot.slane %v4206, 1
      %v4223 = vrot.slane %v4207, 1
      %v4224 = vrot.slane %v4208, 1
      %v4225 = vrot.slane %v4209, 1
      %v4226 = vrot.slane %v4210, 1
      %v4227 = vrot.slane %v4211, 1
      %4228 = vrot.lane.b32.xlu0 %v4212, 64
      %v4229 = vpop.permute.xlu0 %4228
      %4230 = vrot.lane.b32.xlu0 %v4213, 64
      %v4231 = vpop.permute.xlu0 %4230
      %4232 = vrot.lane.b32.xlu0 %v4214, 64
      %v4233 = vpop.permute.xlu0 %4232
      %4234 = vrot.lane.b32.xlu0 %v4215, 64
      %v4235 = vpop.permute.xlu0 %4234
      %4236 = vrot.lane.b32.xlu0 %v4216, 64
      %v4237 = vpop.permute.xlu0 %4236
      %4238 = vrot.lane.b32.xlu0 %v4217, 64
      %v4239 = vpop.permute.xlu0 %4238
      %4240 = vrot.lane.b32.xlu0 %v4218, 64
      %v4241 = vpop.permute.xlu0 %4240
      %4242 = vrot.lane.b32.xlu0 %v4219, 64
      %v4243 = vpop.permute.xlu0 %4242
      %4244 = vrot.lane.b32.xlu0 %v4220, 64
      %v4245 = vpop.permute.xlu0 %4244
      %4246 = vrot.lane.b32.xlu0 %v4221, 64
      %v4247 = vpop.permute.xlu0 %4246
      %4248 = vrot.lane.b32.xlu0 %v4222, 64
      %v4249 = vpop.permute.xlu0 %4248
      %4250 = vrot.lane.b32.xlu0 %v4223, 64
      %v4251 = vpop.permute.xlu0 %4250
      %4252 = vrot.lane.b32.xlu0 %v4224, 64
      %v4253 = vpop.permute.xlu0 %4252
      %4254 = vrot.lane.b32.xlu0 %v4225, 64
      %v4255 = vpop.permute.xlu0 %4254
      %4256 = vrot.lane.b32.xlu0 %v4226, 64
      %v4257 = vpop.permute.xlu0 %4256
      %4258 = vrot.lane.b32.xlu0 %v4227, 64
      %v4259 = vpop.permute.xlu0 %4258
      %v4262 = vsel %vm508, %v3924, %v4133
      %v4265 = vsel %vm508, %v3925, %v4135
      %v4268 = vsel %vm508, %v3926, %v4137
      %v4271 = vsel %vm508, %v3927, %v4139
      %v4274 = vsel %vm508, %v3928, %v4141
      %v4277 = vsel %vm508, %v3929, %v4143
      %v4280 = vsel %vm508, %v3930, %v4145
      %v4283 = vsel %vm508, %v3931, %v4147
      %v4286 = vsel %vm508, %v3932, %v4149
      %v4289 = vsel %vm508, %v3933, %v4151
      %v4292 = vsel %vm508, %v3934, %v4153
      %v4295 = vsel %vm508, %v3935, %v4155
      %v4298 = vsel %vm508, %v3936, %v4157
      %v4301 = vsel %vm508, %v3937, %v4159
      %v4304 = vsel %vm508, %v3938, %v4161
      %v4307 = vsel %vm508, %v3939, %v4163
      %v4309 = vsel %vm557, %v4262, %v4229
      %v4311 = vsel %vm557, %v4265, %v4231
      %v4313 = vsel %vm557, %v4268, %v4233
      %v4315 = vsel %vm557, %v4271, %v4235
      %v4317 = vsel %vm557, %v4274, %v4237
      %v4319 = vsel %vm557, %v4277, %v4239
      %v4321 = vsel %vm557, %v4280, %v4241
      %v4323 = vsel %vm557, %v4283, %v4243
      %v4325 = vsel %vm557, %v4286, %v4245
      %v4327 = vsel %vm557, %v4289, %v4247
      %v4329 = vsel %vm557, %v4292, %v4249
      %v4331 = vsel %vm557, %v4295, %v4251
      %v4333 = vsel %vm557, %v4298, %v4253
      %v4335 = vsel %vm557, %v4301, %v4255
      %v4337 = vsel %vm557, %v4304, %v4257
      %v4339 = vsel %vm557, %v4307, %v4259
      %s4340 = scalar_lea.vmem %s1, 336
      %v4341 = vld [vmem:[%s4340] sm:$0xf]
      %v4342 = vld [vmem:[%s4340 + $0x4] sm:$0xf]
      %v4343 = vld [vmem:[%s4340 + $0x8] sm:$0xf]
      %v4344 = vld [vmem:[%s4340 + $0xc] sm:$0xf]
      %v4345 = vld [vmem:[%s4340 + $0x10] sm:$0xf]
      %v4346 = vld [vmem:[%s4340 + $0x14] sm:$0xf]
      %v4347 = vld [vmem:[%s4340 + $0x18] sm:$0xf]
      %v4348 = vld [vmem:[%s4340 + $0x1c] sm:$0xf]
      %v4349 = vld [vmem:[%s4340 + $0x20] sm:$0xf]
      %v4350 = vld [vmem:[%s4340 + $0x24] sm:$0xf]
      %v4351 = vld [vmem:[%s4340 + $0x28] sm:$0xf]
      %v4352 = vld [vmem:[%s4340 + $0x2c] sm:$0xf]
      %4353 = vst [vmem:[#allocation1] ss:$4 sm:$0xff] %v4309
      %s4354 = scalar_lea.vmem [#allocation1], 1
      %4355 = vst [vmem:[%s4354] ss:$4 sm:$0xff] %v4311
      %s4356 = scalar_lea.vmem [#allocation1], 2
      %4357 = vst [vmem:[%s4356] ss:$4 sm:$0xff] %v4313
      %s4358 = scalar_lea.vmem [#allocation1], 3
      %4359 = vst [vmem:[%s4358] ss:$4 sm:$0xff] %v4315
      %s4360 = scalar_lea.vmem [#allocation1], 32
      %4361 = vst [vmem:[%s4360] ss:$4 sm:$0xff] %v4317
      %s4362 = scalar_lea.vmem [#allocation1], 33
      %4363 = vst [vmem:[%s4362] ss:$4 sm:$0xff] %v4319
      %s4364 = scalar_lea.vmem [#allocation1], 34
      %4365 = vst [vmem:[%s4364] ss:$4 sm:$0xff] %v4321
      %s4366 = scalar_lea.vmem [#allocation1], 35
      %4367 = vst [vmem:[%s4366] ss:$4 sm:$0xff] %v4323
      %v4368 = vld.sshfl [vmem:[#allocation1] sm:$0xff pattern:$0x73625140]
      %v4369 = vld.sshfl [vmem:[#allocation1 + $0x20] sm:$0xff pattern:$0x73625140]
      %4370 = vst [vmem:[#allocation1] ss:$4 sm:$0xff] %v4325
      %4371 = vst [vmem:[%s4354] ss:$4 sm:$0xff] %v4327
      %4372 = vst [vmem:[%s4356] ss:$4 sm:$0xff] %v4329
      %4373 = vst [vmem:[%s4358] ss:$4 sm:$0xff] %v4331
      %4374 = vst [vmem:[%s4360] ss:$4 sm:$0xff] %v4333
      %4375 = vst [vmem:[%s4362] ss:$4 sm:$0xff] %v4335
      %4376 = vst [vmem:[%s4364] ss:$4 sm:$0xff] %v4337
      %4377 = vst [vmem:[%s4366] ss:$4 sm:$0xff] %v4339
      %v4378 = vld.sshfl [vmem:[#allocation1] sm:$0xff pattern:$0x73625140]
      %v4379 = vld.sshfl [vmem:[#allocation1 + $0x20] sm:$0xff pattern:$0x73625140]
      %v4392 = vunpack.c.l.b16 %v4341
      %v4393 = vunpack.c.l.b16 %v4342
      %v4394 = vunpack.c.l.b16 %v4343
      %v4395 = vunpack.c.l.b16 %v4344
      %v4396 = vunpack.c.l.b16 %v4345
      %v4397 = vunpack.c.l.b16 %v4346
      %v4398 = vunpack.c.l.b16 %v4347
      %v4399 = vunpack.c.l.b16 %v4348
      %v4400 = vunpack.c.l.b16 %v4349
      %v4401 = vunpack.c.l.b16 %v4350
      %v4402 = vunpack.c.l.b16 %v4351
      %v4403 = vunpack.c.l.b16 %v4352
      %v4404 = vpack.c.b16 %v4393, %v4392
      %v4405 = vpack.c.b16 %v4395, %v4394
      %v4406 = vpack.c.b16 %v4397, %v4396
      %v4407 = vpack.c.b16 %v4399, %v4398
      %v4408 = vpack.c.b16 %v4401, %v4400
      %v4409 = vpack.c.b16 %v4403, %v4402
      %v4416 = vsel %vm1095, %v4368, 0
      %v4418 = vsel %vm1095, %v4369, 0
      %v4420 = vsel %vm1095, %v4378, 0
      %v4422 = vsel %vm1095, %v4379, 0
      %4424 = vmatpush.bf16.msra.mxu0 0
      %4425 = vmatpush.bf16.msra.mxu0 0
      %4426 = vmatpush.bf16.msra.mxu0 %v4409
      %4427 = vmatpush.bf16.msra.mxu0 %v4408
      %4428 = vmatpush.bf16.msra.mxu0 %v4407
      %4429 = vmatpush.bf16.msra.mxu0 %v4406
      %4430 = vmatpush.bf16.msra.mxu0 %v4405
      %4431 = vmatpush.bf16.msra.mxu0 %v4404
      %4432 = vmatmul.bf16.gmra.mxu0 %v4416
      %v4433 = vpop.f32.mrf.mxu0
      %v4434 = vadd.f32 0.0, %v4433
      %v4435 = vpop.f32.mrf.mxu0
      %v4436 = vadd.f32 0.0, %v4435
      %4437 = vmatmul.bf16.gmra.mxu0 %v4418
      %v4438 = vpop.f32.mrf.mxu0
      %v4439 = vadd.f32 0.0, %v4438
      %v4440 = vpop.f32.mrf.mxu0
      %v4441 = vadd.f32 0.0, %v4440
      %4442 = vmatmul.bf16.gmra.mxu0 %v4420
      %v4443 = vpop.f32.mrf.mxu0
      %v4444 = vadd.f32 0.0, %v4443
      %v4445 = vpop.f32.mrf.mxu0
      %v4446 = vadd.f32 0.0, %v4445
      %4447 = vmatmul.bf16.gmra.mxu0 %v4422
      %v4448 = vpop.f32.mrf.mxu0
      %v4449 = vadd.f32 0.0, %v4448
      %v4450 = vpop.f32.mrf.mxu0
      %v4451 = vadd.f32 0.0, %v4450
      %4452 = vdwg.mxu0
      %v4453 = vadd.f32 %v3915, %v4434
      %v4454 = vadd.f32 %v3916, %v4436
      %v4455 = vadd.f32 %v3917, %v4439
      %v4456 = vadd.f32 %v3918, %v4441
      %v4457 = vadd.f32 %v3919, %v4444
      %v4458 = vadd.f32 %v3920, %v4446
      %v4459 = vadd.f32 %v3921, %v4449
      %v4460 = vadd.f32 %v3922, %v4451
      %s4461 = scalar_lea.vmem %s165, 56
      %v4462 = vld [vmem:[%s4461] sm:$0x3]
      %v4463 = vld [vmem:[%s4461 + $0x4] sm:$0x3]
      %v4464 = vld [vmem:[%s4461 + $0x8] sm:$0x3]
      %v4465 = vld [vmem:[%s4461 + $0xc] sm:$0x3]
      %v4466 = vld [vmem:[%s4461 + $0x18] sm:$0x3]
      %v4467 = vld [vmem:[%s4461 + $0x1c] sm:$0x3]
      %v4468 = vld [vmem:[%s4461 + $0x20] sm:$0x3]
      %v4469 = vld [vmem:[%s4461 + $0x24] sm:$0x3]
      %v4470 = vld [vmem:[%s4461 + $0x30] sm:$0x3]
      %v4471 = vld [vmem:[%s4461 + $0x34] sm:$0x3]
      %v4472 = vld [vmem:[%s4461 + $0x38] sm:$0x3]
      %v4473 = vld [vmem:[%s4461 + $0x3c] sm:$0x3]
      %v4474 = vld [vmem:[%s4461 + $0x48] sm:$0x3]
      %v4475 = vld [vmem:[%s4461 + $0x4c] sm:$0x3]
      %v4476 = vld [vmem:[%s4461 + $0x50] sm:$0x3]
      %v4477 = vld [vmem:[%s4461 + $0x54] sm:$0x3]
      %v4478 = vld [vmem:[%s4461] sm:$0x7]
      %v4479 = vld [vmem:[%s4461 + $0x4] sm:$0x7]
      %v4480 = vld [vmem:[%s4461 + $0x8] sm:$0x7]
      %v4481 = vld [vmem:[%s4461 + $0xc] sm:$0x7]
      %v4482 = vld [vmem:[%s4461 + $0x18] sm:$0x7]
      %v4483 = vld [vmem:[%s4461 + $0x1c] sm:$0x7]
      %v4484 = vld [vmem:[%s4461 + $0x20] sm:$0x7]
      %v4485 = vld [vmem:[%s4461 + $0x24] sm:$0x7]
      %v4486 = vld [vmem:[%s4461 + $0x30] sm:$0x7]
      %v4487 = vld [vmem:[%s4461 + $0x34] sm:$0x7]
      %v4488 = vld [vmem:[%s4461 + $0x38] sm:$0x7]
      %v4489 = vld [vmem:[%s4461 + $0x3c] sm:$0x7]
      %v4490 = vld [vmem:[%s4461 + $0x48] sm:$0x7]
      %v4491 = vld [vmem:[%s4461 + $0x4c] sm:$0x7]
      %v4492 = vld [vmem:[%s4461 + $0x50] sm:$0x7]
      %v4493 = vld [vmem:[%s4461 + $0x54] sm:$0x7]
      %v4494 = vld [vmem:[%s4461] sm:$0x6]
      %v4495 = vld [vmem:[%s4461 + $0x4] sm:$0x6]
      %v4496 = vld [vmem:[%s4461 + $0x8] sm:$0x6]
      %v4497 = vld [vmem:[%s4461 + $0xc] sm:$0x6]
      %v4498 = vld [vmem:[%s4461 + $0x18] sm:$0x6]
      %v4499 = vld [vmem:[%s4461 + $0x1c] sm:$0x6]
      %v4500 = vld [vmem:[%s4461 + $0x20] sm:$0x6]
      %v4501 = vld [vmem:[%s4461 + $0x24] sm:$0x6]
      %v4502 = vld [vmem:[%s4461 + $0x30] sm:$0x6]
      %v4503 = vld [vmem:[%s4461 + $0x34] sm:$0x6]
      %v4504 = vld [vmem:[%s4461 + $0x38] sm:$0x6]
      %v4505 = vld [vmem:[%s4461 + $0x3c] sm:$0x6]
      %v4506 = vld [vmem:[%s4461 + $0x48] sm:$0x6]
      %v4507 = vld [vmem:[%s4461 + $0x4c] sm:$0x6]
      %v4508 = vld [vmem:[%s4461 + $0x50] sm:$0x6]
      %v4509 = vld [vmem:[%s4461 + $0x54] sm:$0x6]
      %v4526 = vunpack.c.l.b16 %v4478
      %v4527 = vunpack.c.l.b16 %v4479
      %v4528 = vunpack.c.l.b16 %v4480
      %v4529 = vunpack.c.l.b16 %v4481
      %v4530 = vunpack.c.l.b16 %v4482
      %v4531 = vunpack.c.l.b16 %v4483
      %v4532 = vunpack.c.l.b16 %v4484
      %v4533 = vunpack.c.l.b16 %v4485
      %v4534 = vunpack.c.l.b16 %v4486
      %v4535 = vunpack.c.l.b16 %v4487
      %v4536 = vunpack.c.l.b16 %v4488
      %v4537 = vunpack.c.l.b16 %v4489
      %v4538 = vunpack.c.l.b16 %v4490
      %v4539 = vunpack.c.l.b16 %v4491
      %v4540 = vunpack.c.l.b16 %v4492
      %v4541 = vunpack.c.l.b16 %v4493
      %v4542 = vpack.c.b16 %v4526, %v4526
      %v4543 = vpack.c.b16 %v4527, %v4527
      %v4544 = vpack.c.b16 %v4528, %v4528
      %v4545 = vpack.c.b16 %v4529, %v4529
      %v4546 = vpack.c.b16 %v4530, %v4530
      %v4547 = vpack.c.b16 %v4531, %v4531
      %v4548 = vpack.c.b16 %v4532, %v4532
      %v4549 = vpack.c.b16 %v4533, %v4533
      %v4550 = vpack.c.b16 %v4534, %v4534
      %v4551 = vpack.c.b16 %v4535, %v4535
      %v4552 = vpack.c.b16 %v4536, %v4536
      %v4553 = vpack.c.b16 %v4537, %v4537
      %v4554 = vpack.c.b16 %v4538, %v4538
      %v4555 = vpack.c.b16 %v4539, %v4539
      %v4556 = vpack.c.b16 %v4540, %v4540
      %v4557 = vpack.c.b16 %v4541, %v4541
      %v4559 = vshrl.u32 %v4542, 16
      %v4561 = vshll.u32 %v4542, 16
      %v4563 = vrot.slane %v4561, 1
      %v4564 = vor.u32 %v4559, %v4563
      %v4566 = vshrl.u32 %v4543, 16
      %v4568 = vshll.u32 %v4543, 16
      %v4570 = vrot.slane %v4568, 1
      %v4571 = vor.u32 %v4566, %v4570
      %v4573 = vshrl.u32 %v4544, 16
      %v4575 = vshll.u32 %v4544, 16
      %v4577 = vrot.slane %v4575, 1
      %v4578 = vor.u32 %v4573, %v4577
      %v4580 = vshrl.u32 %v4545, 16
      %v4582 = vshll.u32 %v4545, 16
      %v4584 = vrot.slane %v4582, 1
      %v4585 = vor.u32 %v4580, %v4584
      %v4587 = vshrl.u32 %v4546, 16
      %v4589 = vshll.u32 %v4546, 16
      %v4591 = vrot.slane %v4589, 1
      %v4592 = vor.u32 %v4587, %v4591
      %v4594 = vshrl.u32 %v4547, 16
      %v4596 = vshll.u32 %v4547, 16
      %v4598 = vrot.slane %v4596, 1
      %v4599 = vor.u32 %v4594, %v4598
      %v4601 = vshrl.u32 %v4548, 16
      %v4603 = vshll.u32 %v4548, 16
      %v4605 = vrot.slane %v4603, 1
      %v4606 = vor.u32 %v4601, %v4605
      %v4608 = vshrl.u32 %v4549, 16
      %v4610 = vshll.u32 %v4549, 16
      %v4612 = vrot.slane %v4610, 1
      %v4613 = vor.u32 %v4608, %v4612
      %v4615 = vshrl.u32 %v4550, 16
      %v4617 = vshll.u32 %v4550, 16
      %v4619 = vrot.slane %v4617, 1
      %v4620 = vor.u32 %v4615, %v4619
      %v4622 = vshrl.u32 %v4551, 16
      %v4624 = vshll.u32 %v4551, 16
      %v4626 = vrot.slane %v4624, 1
      %v4627 = vor.u32 %v4622, %v4626
      %v4629 = vshrl.u32 %v4552, 16
      %v4631 = vshll.u32 %v4552, 16
      %v4633 = vrot.slane %v4631, 1
      %v4634 = vor.u32 %v4629, %v4633
      %v4636 = vshrl.u32 %v4553, 16
      %v4638 = vshll.u32 %v4553, 16
      %v4640 = vrot.slane %v4638, 1
      %v4641 = vor.u32 %v4636, %v4640
      %v4643 = vshrl.u32 %v4554, 16
      %v4645 = vshll.u32 %v4554, 16
      %v4647 = vrot.slane %v4645, 1
      %v4648 = vor.u32 %v4643, %v4647
      %v4650 = vshrl.u32 %v4555, 16
      %v4652 = vshll.u32 %v4555, 16
      %v4654 = vrot.slane %v4652, 1
      %v4655 = vor.u32 %v4650, %v4654
      %v4657 = vshrl.u32 %v4556, 16
      %v4659 = vshll.u32 %v4556, 16
      %v4661 = vrot.slane %v4659, 1
      %v4662 = vor.u32 %v4657, %v4661
      %v4664 = vshrl.u32 %v4557, 16
      %v4666 = vshll.u32 %v4557, 16
      %v4668 = vrot.slane %v4666, 1
      %v4669 = vor.u32 %v4664, %v4668
      %4670 = vrot.lane.b32.xlu0 %v4564, 32
      %v4671 = vpop.permute.xlu0 %4670
      %4672 = vrot.lane.b32.xlu0 %v4571, 32
      %v4673 = vpop.permute.xlu0 %4672
      %4674 = vrot.lane.b32.xlu0 %v4578, 32
      %v4675 = vpop.permute.xlu0 %4674
      %4676 = vrot.lane.b32.xlu0 %v4585, 32
      %v4677 = vpop.permute.xlu0 %4676
      %4678 = vrot.lane.b32.xlu0 %v4592, 32
      %v4679 = vpop.permute.xlu0 %4678
      %4680 = vrot.lane.b32.xlu0 %v4599, 32
      %v4681 = vpop.permute.xlu0 %4680
      %4682 = vrot.lane.b32.xlu0 %v4606, 32
      %v4683 = vpop.permute.xlu0 %4682
      %4684 = vrot.lane.b32.xlu0 %v4613, 32
      %v4685 = vpop.permute.xlu0 %4684
      %4686 = vrot.lane.b32.xlu0 %v4620, 32
      %v4687 = vpop.permute.xlu0 %4686
      %4688 = vrot.lane.b32.xlu0 %v4627, 32
      %v4689 = vpop.permute.xlu0 %4688
      %4690 = vrot.lane.b32.xlu0 %v4634, 32
      %v4691 = vpop.permute.xlu0 %4690
      %4692 = vrot.lane.b32.xlu0 %v4641, 32
      %v4693 = vpop.permute.xlu0 %4692
      %4694 = vrot.lane.b32.xlu0 %v4648, 32
      %v4695 = vpop.permute.xlu0 %4694
      %4696 = vrot.lane.b32.xlu0 %v4655, 32
      %v4697 = vpop.permute.xlu0 %4696
      %4698 = vrot.lane.b32.xlu0 %v4662, 32
      %v4699 = vpop.permute.xlu0 %4698
      %4700 = vrot.lane.b32.xlu0 %v4669, 32
      %v4701 = vpop.permute.xlu0 %4700
      %v4718 = vunpack.c.l.b16 %v4494
      %v4719 = vunpack.c.l.b16 %v4495
      %v4720 = vunpack.c.l.b16 %v4496
      %v4721 = vunpack.c.l.b16 %v4497
      %v4722 = vunpack.c.l.b16 %v4498
      %v4723 = vunpack.c.l.b16 %v4499
      %v4724 = vunpack.c.l.b16 %v4500
      %v4725 = vunpack.c.l.b16 %v4501
      %v4726 = vunpack.c.l.b16 %v4502
      %v4727 = vunpack.c.l.b16 %v4503
      %v4728 = vunpack.c.l.b16 %v4504
      %v4729 = vunpack.c.l.b16 %v4505
      %v4730 = vunpack.c.l.b16 %v4506
      %v4731 = vunpack.c.l.b16 %v4507
      %v4732 = vunpack.c.l.b16 %v4508
      %v4733 = vunpack.c.l.b16 %v4509
      %v4734 = vpack.c.b16 %v4718, %v4718
      %v4735 = vpack.c.b16 %v4719, %v4719
      %v4736 = vpack.c.b16 %v4720, %v4720
      %v4737 = vpack.c.b16 %v4721, %v4721
      %v4738 = vpack.c.b16 %v4722, %v4722
      %v4739 = vpack.c.b16 %v4723, %v4723
      %v4740 = vpack.c.b16 %v4724, %v4724
      %v4741 = vpack.c.b16 %v4725, %v4725
      %v4742 = vpack.c.b16 %v4726, %v4726
      %v4743 = vpack.c.b16 %v4727, %v4727
      %v4744 = vpack.c.b16 %v4728, %v4728
      %v4745 = vpack.c.b16 %v4729, %v4729
      %v4746 = vpack.c.b16 %v4730, %v4730
      %v4747 = vpack.c.b16 %v4731, %v4731
      %v4748 = vpack.c.b16 %v4732, %v4732
      %v4749 = vpack.c.b16 %v4733, %v4733
      %v4750 = vrot.slane %v4734, 1
      %v4751 = vrot.slane %v4735, 1
      %v4752 = vrot.slane %v4736, 1
      %v4753 = vrot.slane %v4737, 1
      %v4754 = vrot.slane %v4738, 1
      %v4755 = vrot.slane %v4739, 1
      %v4756 = vrot.slane %v4740, 1
      %v4757 = vrot.slane %v4741, 1
      %v4758 = vrot.slane %v4742, 1
      %v4759 = vrot.slane %v4743, 1
      %v4760 = vrot.slane %v4744, 1
      %v4761 = vrot.slane %v4745, 1
      %v4762 = vrot.slane %v4746, 1
      %v4763 = vrot.slane %v4747, 1
      %v4764 = vrot.slane %v4748, 1
      %v4765 = vrot.slane %v4749, 1
      %4766 = vrot.lane.b32.xlu0 %v4750, 64
      %v4767 = vpop.permute.xlu0 %4766
      %4768 = vrot.lane.b32.xlu0 %v4751, 64
      %v4769 = vpop.permute.xlu0 %4768
      %4770 = vrot.lane.b32.xlu0 %v4752, 64
      %v4771 = vpop.permute.xlu0 %4770
      %4772 = vrot.lane.b32.xlu0 %v4753, 64
      %v4773 = vpop.permute.xlu0 %4772
      %4774 = vrot.lane.b32.xlu0 %v4754, 64
      %v4775 = vpop.permute.xlu0 %4774
      %4776 = vrot.lane.b32.xlu0 %v4755, 64
      %v4777 = vpop.permute.xlu0 %4776
      %4778 = vrot.lane.b32.xlu0 %v4756, 64
      %v4779 = vpop.permute.xlu0 %4778
      %4780 = vrot.lane.b32.xlu0 %v4757, 64
      %v4781 = vpop.permute.xlu0 %4780
      %4782 = vrot.lane.b32.xlu0 %v4758, 64
      %v4783 = vpop.permute.xlu0 %4782
      %4784 = vrot.lane.b32.xlu0 %v4759, 64
      %v4785 = vpop.permute.xlu0 %4784
      %4786 = vrot.lane.b32.xlu0 %v4760, 64
      %v4787 = vpop.permute.xlu0 %4786
      %4788 = vrot.lane.b32.xlu0 %v4761, 64
      %v4789 = vpop.permute.xlu0 %4788
      %4790 = vrot.lane.b32.xlu0 %v4762, 64
      %v4791 = vpop.permute.xlu0 %4790
      %4792 = vrot.lane.b32.xlu0 %v4763, 64
      %v4793 = vpop.permute.xlu0 %4792
      %4794 = vrot.lane.b32.xlu0 %v4764, 64
      %v4795 = vpop.permute.xlu0 %4794
      %4796 = vrot.lane.b32.xlu0 %v4765, 64
      %v4797 = vpop.permute.xlu0 %4796
      %v4800 = vsel %vm508, %v4462, %v4671
      %v4803 = vsel %vm508, %v4463, %v4673
      %v4806 = vsel %vm508, %v4464, %v4675
      %v4809 = vsel %vm508, %v4465, %v4677
      %v4812 = vsel %vm508, %v4466, %v4679
      %v4815 = vsel %vm508, %v4467, %v4681
      %v4818 = vsel %vm508, %v4468, %v4683
      %v4821 = vsel %vm508, %v4469, %v4685
      %v4824 = vsel %vm508, %v4470, %v4687
      %v4827 = vsel %vm508, %v4471, %v4689
      %v4830 = vsel %vm508, %v4472, %v4691
      %v4833 = vsel %vm508, %v4473, %v4693
      %v4836 = vsel %vm508, %v4474, %v4695
      %v4839 = vsel %vm508, %v4475, %v4697
      %v4842 = vsel %vm508, %v4476, %v4699
      %v4845 = vsel %vm508, %v4477, %v4701
      %v4847 = vsel %vm557, %v4800, %v4767
      %v4849 = vsel %vm557, %v4803, %v4769
      %v4851 = vsel %vm557, %v4806, %v4771
      %v4853 = vsel %vm557, %v4809, %v4773
      %v4855 = vsel %vm557, %v4812, %v4775
      %v4857 = vsel %vm557, %v4815, %v4777
      %v4859 = vsel %vm557, %v4818, %v4779
      %v4861 = vsel %vm557, %v4821, %v4781
      %v4863 = vsel %vm557, %v4824, %v4783
      %v4865 = vsel %vm557, %v4827, %v4785
      %v4867 = vsel %vm557, %v4830, %v4787
      %v4869 = vsel %vm557, %v4833, %v4789
      %v4871 = vsel %vm557, %v4836, %v4791
      %v4873 = vsel %vm557, %v4839, %v4793
      %v4875 = vsel %vm557, %v4842, %v4795
      %v4877 = vsel %vm557, %v4845, %v4797
      %s4878 = scalar_lea.vmem %s1, 384
      %v4879 = vld [vmem:[%s4878] sm:$0xf]
      %v4880 = vld [vmem:[%s4878 + $0x4] sm:$0xf]
      %v4881 = vld [vmem:[%s4878 + $0x8] sm:$0xf]
      %v4882 = vld [vmem:[%s4878 + $0xc] sm:$0xf]
      %v4883 = vld [vmem:[%s4878 + $0x10] sm:$0xf]
      %v4884 = vld [vmem:[%s4878 + $0x14] sm:$0xf]
      %v4885 = vld [vmem:[%s4878 + $0x18] sm:$0xf]
      %v4886 = vld [vmem:[%s4878 + $0x1c] sm:$0xf]
      %v4887 = vld [vmem:[%s4878 + $0x20] sm:$0xf]
      %v4888 = vld [vmem:[%s4878 + $0x24] sm:$0xf]
      %v4889 = vld [vmem:[%s4878 + $0x28] sm:$0xf]
      %v4890 = vld [vmem:[%s4878 + $0x2c] sm:$0xf]
      %4891 = vst [vmem:[#allocation1] ss:$4 sm:$0xff] %v4847
      %s4892 = scalar_lea.vmem [#allocation1], 1
      %4893 = vst [vmem:[%s4892] ss:$4 sm:$0xff] %v4849
      %s4894 = scalar_lea.vmem [#allocation1], 2
      %4895 = vst [vmem:[%s4894] ss:$4 sm:$0xff] %v4851
      %s4896 = scalar_lea.vmem [#allocation1], 3
      %4897 = vst [vmem:[%s4896] ss:$4 sm:$0xff] %v4853
      %s4898 = scalar_lea.vmem [#allocation1], 32
      %4899 = vst [vmem:[%s4898] ss:$4 sm:$0xff] %v4855
      %s4900 = scalar_lea.vmem [#allocation1], 33
      %4901 = vst [vmem:[%s4900] ss:$4 sm:$0xff] %v4857
      %s4902 = scalar_lea.vmem [#allocation1], 34
      %4903 = vst [vmem:[%s4902] ss:$4 sm:$0xff] %v4859
      %s4904 = scalar_lea.vmem [#allocation1], 35
      %4905 = vst [vmem:[%s4904] ss:$4 sm:$0xff] %v4861
      %v4906 = vld.sshfl [vmem:[#allocation1] sm:$0xff pattern:$0x73625140]
      %v4907 = vld.sshfl [vmem:[#allocation1 + $0x20] sm:$0xff pattern:$0x73625140]
      %4908 = vst [vmem:[#allocation1] ss:$4 sm:$0xff] %v4863
      %4909 = vst [vmem:[%s4892] ss:$4 sm:$0xff] %v4865
      %4910 = vst [vmem:[%s4894] ss:$4 sm:$0xff] %v4867
      %4911 = vst [vmem:[%s4896] ss:$4 sm:$0xff] %v4869
      %4912 = vst [vmem:[%s4898] ss:$4 sm:$0xff] %v4871
      %4913 = vst [vmem:[%s4900] ss:$4 sm:$0xff] %v4873
      %4914 = vst [vmem:[%s4902] ss:$4 sm:$0xff] %v4875
      %4915 = vst [vmem:[%s4904] ss:$4 sm:$0xff] %v4877
      %v4916 = vld.sshfl [vmem:[#allocation1] sm:$0xff pattern:$0x73625140]
      %v4917 = vld.sshfl [vmem:[#allocation1 + $0x20] sm:$0xff pattern:$0x73625140]
      %v4930 = vunpack.c.l.b16 %v4879
      %v4931 = vunpack.c.l.b16 %v4880
      %v4932 = vunpack.c.l.b16 %v4881
      %v4933 = vunpack.c.l.b16 %v4882
      %v4934 = vunpack.c.l.b16 %v4883
      %v4935 = vunpack.c.l.b16 %v4884
      %v4936 = vunpack.c.l.b16 %v4885
      %v4937 = vunpack.c.l.b16 %v4886
      %v4938 = vunpack.c.l.b16 %v4887
      %v4939 = vunpack.c.l.b16 %v4888
      %v4940 = vunpack.c.l.b16 %v4889
      %v4941 = vunpack.c.l.b16 %v4890
      %v4942 = vpack.c.b16 %v4931, %v4930
      %v4943 = vpack.c.b16 %v4933, %v4932
      %v4944 = vpack.c.b16 %v4935, %v4934
      %v4945 = vpack.c.b16 %v4937, %v4936
      %v4946 = vpack.c.b16 %v4939, %v4938
      %v4947 = vpack.c.b16 %v4941, %v4940
      %v4954 = vsel %vm1095, %v4906, 0
      %v4956 = vsel %vm1095, %v4907, 0
      %v4958 = vsel %vm1095, %v4916, 0
      %v4960 = vsel %vm1095, %v4917, 0
      %4962 = vmatpush.bf16.msra.mxu0 0
      %4963 = vmatpush.bf16.msra.mxu0 0
      %4964 = vmatpush.bf16.msra.mxu0 %v4947
      %4965 = vmatpush.bf16.msra.mxu0 %v4946
      %4966 = vmatpush.bf16.msra.mxu0 %v4945
      %4967 = vmatpush.bf16.msra.mxu0 %v4944
      %4968 = vmatpush.bf16.msra.mxu0 %v4943
      %4969 = vmatpush.bf16.msra.mxu0 %v4942
      %4970 = vmatmul.bf16.gmra.mxu0 %v4954
      %v4971 = vpop.f32.mrf.mxu0
      %v4972 = vadd.f32 0.0, %v4971
      %v4973 = vpop.f32.mrf.mxu0
      %v4974 = vadd.f32 0.0, %v4973
      %4975 = vmatmul.bf16.gmra.mxu0 %v4956
      %v4976 = vpop.f32.mrf.mxu0
      %v4977 = vadd.f32 0.0, %v4976
      %v4978 = vpop.f32.mrf.mxu0
      %v4979 = vadd.f32 0.0, %v4978
      %4980 = vmatmul.bf16.gmra.mxu0 %v4958
      %v4981 = vpop.f32.mrf.mxu0
      %v4982 = vadd.f32 0.0, %v4981
      %v4983 = vpop.f32.mrf.mxu0
      %v4984 = vadd.f32 0.0, %v4983
      %4985 = vmatmul.bf16.gmra.mxu0 %v4960
      %v4986 = vpop.f32.mrf.mxu0
      %v4987 = vadd.f32 0.0, %v4986
      %v4988 = vpop.f32.mrf.mxu0
      %v4989 = vadd.f32 0.0, %v4988
      %4990 = vdwg.mxu0
      %v4991 = vadd.f32 %v4453, %v4972
      %v4992 = vadd.f32 %v4454, %v4974
      %v4993 = vadd.f32 %v4455, %v4977
      %v4994 = vadd.f32 %v4456, %v4979
      %v4995 = vadd.f32 %v4457, %v4982
      %v4996 = vadd.f32 %v4458, %v4984
      %v4997 = vadd.f32 %v4459, %v4987
      %v4998 = vadd.f32 %v4460, %v4989
      %v4999 = vld [vmem:[%s2] sm:$0x1]
      %v5001 = vperm.slane %v4999, 0
      %v5003 = vadd.f32 %v4991, %v5001
      %v5004 = vadd.f32 %v4992, %v5001
      %v5005 = vadd.f32 %v4993, %v5001
      %v5006 = vadd.f32 %v4994, %v5001
      %v5007 = vadd.f32 %v4995, %v5001
      %v5008 = vadd.f32 %v4996, %v5001
      %v5009 = vadd.f32 %v4997, %v5001
      %v5010 = vadd.f32 %v4998, %v5001
      %vm5011 = vcmp.gt.f32.partialorder %v5003, 0.0
      %vm5012 = vcmp.gt.f32.partialorder %v5004, 0.0
      %vm5013 = vcmp.gt.f32.partialorder %v5005, 0.0
      %vm5014 = vcmp.gt.f32.partialorder %v5006, 0.0
      %vm5015 = vcmp.gt.f32.partialorder %v5007, 0.0
      %vm5016 = vcmp.gt.f32.partialorder %v5008, 0.0
      %vm5017 = vcmp.gt.f32.partialorder %v5009, 0.0
      %vm5018 = vcmp.gt.f32.partialorder %v5010, 0.0
      %v5019 = vmul.f32 %v5003, 0.01
      %v5020 = vmul.f32 %v5004, 0.01
      %v5021 = vmul.f32 %v5005, 0.01
      %v5022 = vmul.f32 %v5006, 0.01
      %v5023 = vmul.f32 %v5007, 0.01
      %v5024 = vmul.f32 %v5008, 0.01
      %v5025 = vmul.f32 %v5009, 0.01
      %v5026 = vmul.f32 %v5010, 0.01
      %v5027 = vsel %vm5011, %v5003, %v5019
      %v5028 = vsel %vm5012, %v5004, %v5020
      %v5029 = vsel %vm5013, %v5005, %v5021
      %v5030 = vsel %vm5014, %v5006, %v5022
      %v5031 = vsel %vm5015, %v5007, %v5023
      %v5032 = vsel %vm5016, %v5008, %v5024
      %v5033 = vsel %vm5017, %v5009, %v5025
      %v5034 = vsel %vm5018, %v5010, %v5026
      %v5043 = vrot.slane %v5027, 4
      %v5044 = vrot.slane %v5028, 4
      %v5045 = vrot.slane %v5029, 4
      %v5046 = vrot.slane %v5030, 4
      %v5047 = vrot.slane %v5031, 4
      %v5048 = vrot.slane %v5032, 4
      %v5049 = vrot.slane %v5033, 4
      %v5050 = vrot.slane %v5034, 4
      %v5059 = vpack.c.bf16 %v5027, %v5027
      %v5060 = vpack.c.bf16 %v5043, %v5043
      %v5061 = vpack.c.bf16 %v5028, %v5028
      %v5062 = vpack.c.bf16 %v5044, %v5044
      %v5063 = vpack.c.bf16 %v5029, %v5029
      %v5064 = vpack.c.bf16 %v5045, %v5045
      %v5065 = vpack.c.bf16 %v5030, %v5030
      %v5066 = vpack.c.bf16 %v5046, %v5046
      %v5067 = vpack.c.bf16 %v5031, %v5031
      %v5068 = vpack.c.bf16 %v5047, %v5047
      %v5069 = vpack.c.bf16 %v5032, %v5032
      %v5070 = vpack.c.bf16 %v5048, %v5048
      %v5071 = vpack.c.bf16 %v5033, %v5033
      %v5072 = vpack.c.bf16 %v5049, %v5049
      %v5073 = vpack.c.bf16 %v5034, %v5034
      %v5074 = vpack.c.bf16 %v5050, %v5050
      %vm5075 = vcmask 254976
      %5076 = vst.msk [vmem:[%s170] sm:$0x3] %vm5075, %v5059
      %5077 = vst.msk [vmem:[%s170 + $0x2] sm:$0x3] %vm5075, %v5060
      %5078 = vst.msk [vmem:[%s170 + $0x4] sm:$0x3] %vm5075, %v5061
      %5079 = vst.msk [vmem:[%s170 + $0x6] sm:$0x3] %vm5075, %v5062
      %5080 = vst.msk [vmem:[%s170 + $0x8] sm:$0x3] %vm5075, %v5063
      %5081 = vst.msk [vmem:[%s170 + $0xa] sm:$0x3] %vm5075, %v5064
      %5082 = vst.msk [vmem:[%s170 + $0xc] sm:$0x3] %vm5075, %v5065
      %5083 = vst.msk [vmem:[%s170 + $0xe] sm:$0x3] %vm5075, %v5066
      %5084 = vst.msk [vmem:[%s170 + $0x10] sm:$0x3] %vm5075, %v5067
      %5085 = vst.msk [vmem:[%s170 + $0x12] sm:$0x3] %vm5075, %v5068
      %5086 = vst.msk [vmem:[%s170 + $0x14] sm:$0x3] %vm5075, %v5069
      %5087 = vst.msk [vmem:[%s170 + $0x16] sm:$0x3] %vm5075, %v5070
      %5088 = vst.msk [vmem:[%s170 + $0x18] sm:$0x3] %vm5075, %v5071
      %5089 = vst.msk [vmem:[%s170 + $0x1a] sm:$0x3] %vm5075, %v5072
      %5090 = vst.msk [vmem:[%s170 + $0x1c] sm:$0x3] %vm5075, %v5073
      %5091 = vst.msk [vmem:[%s170 + $0x1e] sm:$0x3] %vm5075, %v5074
      %p5092 = scmp.lt.s32.totalorder %s14, 1
      %s5093 = scalar_select %p5092, %s14, 1
      %s5094 = smul.addr %s5093, 16
      %s5095 = smul.addr %s5094, 2
      %s5096 = scalar_lea.vmem %s3, %s5095
      // Predicated region
      $region33: #{voxnet_forward.5} parent=31 // pred_check
        %p5097 = pneg %p100
      $region34: #{voxnet_forward.5} parent=31 // pred_check_branch
        %5099 = sbr.rel (%p5097) target = $region36
      $region35: #{voxnet_forward.5} parent=31 // pred_region
        _
      $region36: #{voxnet_forward.5} parent=31 // pred_fallthru
        _
    $region32: #{voxnet_forward.5} parent=5 // pred_fallthru
      _
    %p5100 = scmp.le.s32.totalorder 2, %s9
    // Predicated region
    $region37: #{voxnet_forward.5} parent=5 // pred_check
      %p5101 = pneg %p5100
    $region38: #{voxnet_forward.5} parent=5 // pred_check_branch
      %5103 = sbr.rel (%p5101) target = $region40
    $region39: #{voxnet_forward.5} parent=5 // pred_region
      %s5104 = ssub.s32 %s9, 2
      // Predicated region
      $region41: #{voxnet_forward.5} parent=39 // pred_check
        %p5105 = pneg %p106
      $region42: #{voxnet_forward.5} parent=39 // pred_check_branch
        %5107 = sbr.rel (%p5105) target = $region44
      $region43: #{voxnet_forward.5} parent=39 // pred_region
        %p5108 = scmp.lt.s32.totalorder %s15, 1
        %s5109 = scalar_select %p5108, %s15, 1
        %s5110 = smul.addr %s5109, 16
        %s5111 = smul.addr %s5110, 2
        %s5112 = scalar_lea.vmem %s3, %s5111
      $region44: #{voxnet_forward.5} parent=39 // pred_fallthru
        _
    $region40: #{voxnet_forward.5} parent=5 // pred_fallthru
      _
  $region6: #{voxnet_forward.5} parent=0 // loop_footer
    %s13 = sadd.s32 1, %s9
  $region7: #{voxnet_forward.5} parent=0 // loop_footer_branch
    %8 = sbr.rel target = $region3
  $region8: #{voxnet_forward.5} parent=0 // loop_exit
    _

</llo_original>
